<compile_context>
chip_gen: v5e
topology: v5e:2x2
jax: 0.10.0
libtpu: 0.0.40
codegen_flags: <defaults>
</compile_context>

<pallas_src>
import jax
import jax.numpy as jnp
from jax import lax
from jax.experimental import pallas as pl
from jax.experimental.pallas import tpu as pltpu


def _round_up(x, m):
    return ((x + m - 1) // m) * m


# ------------------------------ fused kernel --------------------------------

def _make_block_kernel(H, W, Ho, Wo, stride, equal, cin_p, cout_p, pb1, pb2):
    """Builds the fused BasicBlock kernel; all shape parameters are static."""
    wsrc = stride * (Wo - 1) + 1   # contiguous source width covering a strided row

    def kernel(x_ref, w1_ref, w2_ref, ws_ref, s1_ref, b1_ref, b2_ref,
               y_ref, hflat_ref, o1flat_ref, acc1_ref, acc2_ref):
        f32 = jnp.float32
        bf16 = jnp.bfloat16

        # ---- zero padded scratches / accumulators --------------------------
        hflat_ref[...] = jnp.zeros(hflat_ref.shape, hflat_ref.dtype)
        o1flat_ref[...] = jnp.zeros(o1flat_ref.shape, o1flat_ref.dtype)
        acc1_ref[...] = jnp.zeros(acc1_ref.shape, acc1_ref.dtype)
        acc2_ref[...] = jnp.zeros(acc2_ref.shape, acc2_ref.dtype)

        s1v = s1_ref[...]            # (1, cin_p)
        b1v = b1_ref[...]            # (1, cin_p)
        b2v = b2_ref[...]            # (1, cout_p)

        # stride-2 column-selection matrix (0/1), built once from iota
        if stride != 1:
            rj = lax.broadcasted_iota(jnp.int32, (Wo, wsrc), 0)
            rx = lax.broadcasted_iota(jnp.int32, (Wo, wsrc), 1)
            sel = jnp.where(rx == stride * rj, 1.0, 0.0).astype(f32)

        # ---- bn1 + relu1, packed into the zero-padded flat conv1 input -----
        # hflat[(y + 2) * pb1 + x, :] = relu(x[y, x, :] * s1 + b1)
        for y in range(H):
            xr = x_ref[pl.ds(y * W, W), :]                      # (W, cin_p) f32
            hflat_ref[pl.ds((y + 2) * pb1, W), :] = jnp.maximum(
                xr * s1v + b1v, 0.0)

        # ---- conv1 (3x3 "same", evaluated at stride 1) ----------------------
        # bn2 scale is pre-folded into w1; accumulate 9 shifted matmuls.
        for ky in range(3):
            for kx in range(3):
                off = 2 * pb1 + (ky - 1) * pb1 + (kx - 1)
                lhs = hflat_ref[pl.ds(off, H * pb1), :].astype(bf16)
                wt = w1_ref[pl.ds((ky * 3 + kx) * cin_p, cin_p), :]
                acc1_ref[...] += jnp.dot(lhs, wt, preferred_element_type=f32)

        # ---- bias2 + relu2 (+ stride-s subsample) -> padded conv2 input -----
        for yi in range(Ho):
            if stride == 1:
                v = jnp.maximum(acc1_ref[pl.ds(yi * pb1, Wo), :] + b2v, 0.0)
            else:
                src = acc1_ref[pl.ds(stride * yi * pb1, wsrc), :]
                v = jnp.dot(sel, jnp.maximum(src + b2v, 0.0),
                            preferred_element_type=f32)
            o1flat_ref[pl.ds((yi + 2) * pb2, Wo), :] = v

        # ---- conv2 (3x3 "same", stride 1) ------------------------------------
        for ky in range(3):
            for kx in range(3):
                off = 2 * pb2 + (ky - 1) * pb2 + (kx - 1)
                lhs = o1flat_ref[pl.ds(off, Ho * pb2), :].astype(bf16)
                wt = w2_ref[pl.ds((ky * 3 + kx) * cout_p, cout_p), :]
                acc2_ref[...] += jnp.dot(lhs, wt, preferred_element_type=f32)

        # ---- shortcut + residual add + lane-dense store ----------------------
        if not equal:
            wsv = ws_ref[...]                                   # (cin_p, cout_p) bf16
        for yo in range(Ho):
            conv_out = acc2_ref[pl.ds(yo * pb2, Wo), :]          # (Wo, cout_p) f32
            if equal:
                # identity shortcut adds the ORIGINAL (pre-BN) input.
                res = x_ref[pl.ds(yo * W, W), :]
            else:
                if stride == 1:
                    hs = hflat_ref[pl.ds((yo + 2) * pb1, Wo), :]
                else:
                    src = hflat_ref[pl.ds((stride * yo + 2) * pb1, wsrc), :]
                    hs = jnp.dot(sel, src, preferred_element_type=f32)
                res = jnp.dot(hs.astype(bf16), wsv, preferred_element_type=f32)
            y_ref[pl.ds(yo * Wo, Wo), :] = conv_out + res

    return kernel


# ------------------------------- public wrapper ------------------------------

def basic_block_forward(params, x_nchw, stride):
    eps = 1e-5
    x_nchw = x_nchw.astype(jnp.float32)
    N, in_planes, H, W = x_nchw.shape
    out_planes = params["conv1_w"].shape[0]
    equal = in_planes == out_planes
    if equal and stride != 1:
        raise ValueError("identity shortcut requires stride == 1 "
                         "(same shape constraint as the PyTorch module)")

    Ho = (H - 1) // stride + 1
    Wo = (W - 1) // stride + 1
    cin_p = _round_up(in_planes, 128)
    cout_p = _round_up(out_planes, 128)
    pb1 = _round_up(W + 2, 8)        # flat row pitch for the conv1 input grid
    pb2 = _round_up(Wo + 2, 8)       # flat row pitch for the conv2 input grid

    # ---- BN affine params (inference mode), zero-padded channels -----------
    s1 = params["bn1_gamma"] / jnp.sqrt(params["bn1_var"] + eps)
    b1 = params["bn1_beta"] - params["bn1_mean"] * s1
    s2 = params["bn2_gamma"] / jnp.sqrt(params["bn2_var"] + eps)
    b2 = params["bn2_beta"] - params["bn2_mean"] * s2

    def pad_vec(v, cp):
        return jnp.zeros((1, cp), jnp.float32).at[0, : v.shape[0]].set(v)

    s1p, b1p, b2p = pad_vec(s1, cin_p), pad_vec(b1, cin_p), pad_vec(b2, cout_p)

    # ---- weights: (ky, kx, cin, cout) layout, bn2 scale folded into w1 -----
    def pack_w3x3(w, cinp, coutp, col_scale=None):
        w = jnp.transpose(w, (2, 3, 1, 0))                 # (3, 3, cin, cout)
        if col_scale is not None:
            w = w * col_scale[None, None, None, :]
        cin, cout = w.shape[2], w.shape[3]
        wp = jnp.zeros((3, 3, cinp, coutp), jnp.float32)
        wp = wp.at[:, :, :cin, :cout].set(w)
        return wp.reshape(9 * cinp, coutp).astype(jnp.bfloat16)

    w1 = pack_w3x3(params["conv1_w"], cin_p, cout_p, col_scale=s2)
    w2 = pack_w3x3(params["conv2_w"], cout_p, cout_p)

    if equal:
        ws = jnp.zeros((cin_p, cout_p), jnp.bfloat16)       # unused by the kernel
    else:
        w = params["convs_w"].reshape(out_planes, in_planes).T   # (cin, cout)
        ws = jnp.zeros((cin_p, cout_p), jnp.float32)
        ws = ws.at[:in_planes, :out_planes].set(w).astype(jnp.bfloat16)

    # ---- activations: NHWC, channel-padded, flattened to 2-D ----------------
    x_nhwc = jnp.transpose(x_nchw, (0, 2, 3, 1))
    x2 = jnp.zeros((N, H, W, cin_p), jnp.float32).at[..., :in_planes].set(x_nhwc)
    x2 = x2.reshape(N * H * W, cin_p)

    kernel = _make_block_kernel(H, W, Ho, Wo, stride, equal,
                                cin_p, cout_p, pb1, pb2)

    flops = 2 * N * (H * W * 9 * cin_p * cout_p            # conv1 (full res)
                     + Ho * Wo * 9 * cout_p * cout_p        # conv2
                     + Ho * Wo * cin_p * cout_p)            # shortcut
    bytes_accessed = (x2.size * 4 + w1.size * 2 + w2.size * 2 + ws.size * 2
                      + N * Ho * Wo * cout_p * 4)

    y2 = pl.pallas_call(
        kernel,
        out_shape=jax.ShapeDtypeStruct((N * Ho * Wo, cout_p), jnp.float32),
        grid=(N,),
        in_specs=[
            pl.BlockSpec((H * W, cin_p), lambda i: (i, 0)),         # x (per image)
            pl.BlockSpec((9 * cin_p, cout_p), lambda i: (0, 0)),    # w1 (constant)
            pl.BlockSpec((9 * cout_p, cout_p), lambda i: (0, 0)),   # w2 (constant)
            pl.BlockSpec((cin_p, cout_p), lambda i: (0, 0)),        # ws (constant)
            pl.BlockSpec((1, cin_p), lambda i: (0, 0)),             # bn1 scale
            pl.BlockSpec((1, cin_p), lambda i: (0, 0)),             # bn1 bias
            pl.BlockSpec((1, cout_p), lambda i: (0, 0)),            # bn2 bias
        ],
        out_specs=pl.BlockSpec((Ho * Wo, cout_p), lambda i: (i, 0)),
        scratch_shapes=[
            pltpu.VMEM(((H + 4) * pb1, cin_p), jnp.float32),    # padded conv1 input
            pltpu.VMEM(((Ho + 4) * pb2, cout_p), jnp.float32),  # padded conv2 input
            pltpu.VMEM((H * pb1, cout_p), jnp.float32),         # conv1 accumulator
            pltpu.VMEM((Ho * pb2, cout_p), jnp.float32),        # conv2 accumulator
        ],
        compiler_params=pltpu.CompilerParams(
            dimension_semantics=("parallel",)),
        cost_estimate=pl.CostEstimate(flops=flops, transcendentals=0,
                                      bytes_accessed=bytes_accessed),
    )(x2, w1, w2, ws, s1p, b1p, b2p)

    y = y2.reshape(N, Ho, Wo, cout_p)[..., :out_planes]
    return jnp.transpose(y, (0, 3, 1, 2))                    # back to NCHW


# ------------------------------ parameter init --------------------------------

def init_basic_block_params(key, in_planes, out_planes):
    ks = jax.random.split(key, 11)

    def conv_w(k, cout, cin, kh, kw):
        fan = cin * kh * kw
        return jax.random.normal(k, (cout, cin, kh, kw), jnp.float32) * (2.0 / fan) ** 0.5

    p = {
        "conv1_w": conv_w(ks[0], out_planes, in_planes, 3, 3),
        "conv2_w": conv_w(ks[1], out_planes, out_planes, 3, 3),
        "bn1_gamma": 1.0 + 0.1 * jax.random.normal(ks[2], (in_planes,), jnp.float32),
        "bn1_beta": 0.1 * jax.random.normal(ks[3], (in_planes,), jnp.float32),
        "bn1_mean": 0.1 * jax.random.normal(ks[4], (in_planes,), jnp.float32),
        "bn1_var": jnp.abs(jax.random.normal(ks[5], (in_planes,), jnp.float32)) + 0.5,
        "bn2_gamma": 1.0 + 0.1 * jax.random.normal(ks[6], (out_planes,), jnp.float32),
        "bn2_beta": 0.1 * jax.random.normal(ks[7], (out_planes,), jnp.float32),
        "bn2_mean": 0.1 * jax.random.normal(ks[8], (out_planes,), jnp.float32),
        "bn2_var": jnp.abs(jax.random.normal(ks[9], (out_planes,), jnp.float32)) + 0.5,
    }
    if in_planes != out_planes:
        p["convs_w"] = conv_w(ks[10], out_planes, in_planes, 1, 1)
    return p


# ----------------------------- pure-JAX reference -----------------------------

def reference_forward(params, x_nchw, stride):
    eps = 1e-5

    def bn(x, g, b, m, v):
        inv = g / jnp.sqrt(v + eps)
        return x * inv[None, :, None, None] + (b - m * inv)[None, :, None, None]

    def conv(x, w, s, pad):
        return jax.lax.conv_general_dilated(
            x, w, (s, s), [(pad, pad), (pad, pad)],
            dimension_numbers=("NCHW", "OIHW", "NCHW"))

    in_planes = x_nchw.shape[1]
    out_planes = params["conv1_w"].shape[0]
    equal = in_planes == out_planes

    h = jax.nn.relu(bn(x_nchw, params["bn1_gamma"], params["bn1_beta"],
                       params["bn1_mean"], params["bn1_var"]))
    out = conv(h, params["conv1_w"], stride, 1)
    out = jax.nn.relu(bn(out, params["bn2_gamma"], params["bn2_beta"],
                         params["bn2_mean"], params["bn2_var"]))
    out = conv(out, params["conv2_w"], 1, 1)
    short = x_nchw if equal else conv(h, params["convs_w"], stride, 0)
    return short + out


# ---------------------------------- main ---------------------------------------

if __name__ == "__main__":
    key = jax.random.PRNGKey(0)
    kx, kp1, kp2 = jax.random.split(key, 3)

    # Tolerance sized for bf16 MXU operands with f32 accumulation.
    def check(y, y_ref, tag):
        err = float(jnp.max(jnp.abs(y - y_ref)))
        tol = 3e-2 * float(1.0 + jnp.max(jnp.abs(y_ref)))
        assert err <= tol, f"{tag} mismatch: max_err={err}, tol={tol}"

    # Case 1: downsampling block (in != out, stride 2, 1x1 conv shortcut).
    x1 = jax.random.normal(kx, (2, 4, 16, 16), jnp.float32)
    p1 = init_basic_block_params(kp1, 4, 8)
    y1 = jax.block_until_ready(basic_block_forward(p1, x1, 2))
    r1 = reference_forward(p1, x1, 2)
    assert y1.shape == r1.shape == (2, 8, 8, 8), (y1.shape, r1.shape)
    check(y1, r1, "case1")

    # Case 2: identity-shortcut block (in == out, stride 1).
    x2 = jax.random.normal(kx, (2, 8, 16, 16), jnp.float32)
    p2 = init_basic_block_params(kp2, 8, 8)
    y2 = jax.block_until_ready(basic_block_forward(p2, x2, 1))
    r2 = reference_forward(p2, x2, 1)
    assert y2.shape == r2.shape == (2, 8, 16, 16), (y2.shape, r2.shape)
    check(y2, r2, "case2")

    print("KERNEL_OK")
</pallas_src>

<mosaic_0001>
module attributes {stable_mosaic.version = 11 : i64} {
  func.func @kernel(%arg0: i32, %arg1: memref<256x128xf32, #tpu.memory_space<vmem>>, %arg2: memref<1152x128xbf16, #tpu.memory_space<vmem>>, %arg3: memref<1152x128xbf16, #tpu.memory_space<vmem>>, %arg4: memref<128x128xbf16, #tpu.memory_space<vmem>>, %arg5: memref<1x128xf32, #tpu.memory_space<vmem>>, %arg6: memref<1x128xf32, #tpu.memory_space<vmem>>, %arg7: memref<1x128xf32, #tpu.memory_space<vmem>>, %arg8: memref<64x128xf32, #tpu.memory_space<vmem>>, %arg9: memref<480x128xf32, #tpu.memory_space<vmem>>, %arg10: memref<192x128xf32, #tpu.memory_space<vmem>>, %arg11: memref<384x128xf32, #tpu.memory_space<vmem>>, %arg12: memref<128x128xf32, #tpu.memory_space<vmem>>) attributes {dimension_semantics = [#tpu.dimension_semantics<parallel>], iteration_bounds = array<i64: 2>, scalar_prefetch = 0 : i64, scratch_operands = 4 : i64, tpu.core_type = #tpu.core_type<tc>, window_params = [{transform_indices = @transform_0, window_bounds = array<i64: 256, 128>}, {pipeline_mode = #tpu.pipeline_mode<synchronous>, transform_indices = @transform_1, window_bounds = array<i64: 1152, 128>}, {pipeline_mode = #tpu.pipeline_mode<synchronous>, transform_indices = @transform_2, window_bounds = array<i64: 1152, 128>}, {pipeline_mode = #tpu.pipeline_mode<synchronous>, transform_indices = @transform_3, window_bounds = array<i64: 128, 128>}, {pipeline_mode = #tpu.pipeline_mode<synchronous>, transform_indices = @transform_4, window_bounds = array<i64: 1, 128>}, {pipeline_mode = #tpu.pipeline_mode<synchronous>, transform_indices = @transform_5, window_bounds = array<i64: 1, 128>}, {pipeline_mode = #tpu.pipeline_mode<synchronous>, transform_indices = @transform_6, window_bounds = array<i64: 1, 128>}, {transform_indices = @transform_7, window_bounds = array<i64: 64, 128>}]} {
    %cst = arith.constant 0.000000e+00 : f32
    %0 = vector.broadcast %cst : f32 to vector<480x128xf32>
    %c0 = arith.constant 0 : index
    %c0_0 = arith.constant 0 : index
    %1 = vector.load %arg9[%c0, %c0_0] : memref<480x128xf32, #tpu.memory_space<vmem>>, vector<480x128xf32>
    tpu.vector_store %arg9[%c0, %c0_0], %0 {strides = array<i32>} : memref<480x128xf32, #tpu.memory_space<vmem>>, vector<480x128xf32>,
    %cst_1 = arith.constant 0.000000e+00 : f32
    %2 = vector.broadcast %cst_1 : f32 to vector<192x128xf32>
    %c0_2 = arith.constant 0 : index
    %c0_3 = arith.constant 0 : index
    %3 = vector.load %arg10[%c0_2, %c0_3] : memref<192x128xf32, #tpu.memory_space<vmem>>, vector<192x128xf32>
    tpu.vector_store %arg10[%c0_2, %c0_3], %2 {strides = array<i32>} : memref<192x128xf32, #tpu.memory_space<vmem>>, vector<192x128xf32>,
    %cst_4 = arith.constant 0.000000e+00 : f32
    %4 = vector.broadcast %cst_4 : f32 to vector<384x128xf32>
    %c0_5 = arith.constant 0 : index
    %c0_6 = arith.constant 0 : index
    %5 = vector.load %arg11[%c0_5, %c0_6] : memref<384x128xf32, #tpu.memory_space<vmem>>, vector<384x128xf32>
    tpu.vector_store %arg11[%c0_5, %c0_6], %4 {strides = array<i32>} : memref<384x128xf32, #tpu.memory_space<vmem>>, vector<384x128xf32>,
    %cst_7 = arith.constant 0.000000e+00 : f32
    %6 = vector.broadcast %cst_7 : f32 to vector<128x128xf32>
    %c0_8 = arith.constant 0 : index
    %c0_9 = arith.constant 0 : index
    %7 = vector.load %arg12[%c0_8, %c0_9] : memref<128x128xf32, #tpu.memory_space<vmem>>, vector<128x128xf32>
    tpu.vector_store %arg12[%c0_8, %c0_9], %6 {strides = array<i32>} : memref<128x128xf32, #tpu.memory_space<vmem>>, vector<128x128xf32>,
    %c0_10 = arith.constant 0 : index
    %c0_11 = arith.constant 0 : index
    %8 = vector.load %arg5[%c0_10, %c0_11] : memref<1x128xf32, #tpu.memory_space<vmem>>, vector<1x128xf32>
    %c0_12 = arith.constant 0 : index
    %c0_13 = arith.constant 0 : index
    %9 = vector.load %arg6[%c0_12, %c0_13] : memref<1x128xf32, #tpu.memory_space<vmem>>, vector<1x128xf32>
    %c0_14 = arith.constant 0 : index
    %c0_15 = arith.constant 0 : index
    %10 = vector.load %arg7[%c0_14, %c0_15] : memref<1x128xf32, #tpu.memory_space<vmem>>, vector<1x128xf32>
    %11 = tpu.iota {dimensions = array<i32: 0>} : vector<8x15xi32>
    %12 = tpu.iota {dimensions = array<i32: 1>} : vector<8x15xi32>
    %c2_i32 = arith.constant 2 : i32
    %13 = vector.broadcast %c2_i32 : i32 to vector<8x15xi32>
    %14 = arith.muli %13, %11 : vector<8x15xi32>
    %15 = arith.cmpi eq, %12, %14 : vector<8x15xi32>
    %cst_16 = arith.constant 1.000000e+00 : f32
    %cst_17 = arith.constant 0.000000e+00 : f32
    %16 = vector.broadcast %cst_16 : f32 to vector<8x15xf32>
    %17 = vector.broadcast %cst_17 : f32 to vector<8x15xf32>
    %18 = arith.select %15, %16, %17 : vector<8x15xi1>, vector<8x15xf32>
    %c0_18 = arith.constant 0 : index
    %c0_19 = arith.constant 0 : index
    %19 = vector.load %arg1[%c0_18, %c0_19] : memref<256x128xf32, #tpu.memory_space<vmem>>, vector<16x128xf32>
    %20 = vector.broadcast %8 : vector<1x128xf32> to vector<16x128xf32>
    %21 = arith.mulf %19, %20 : vector<16x128xf32>
    %22 = vector.broadcast %9 : vector<1x128xf32> to vector<16x128xf32>
    %23 = arith.addf %21, %22 : vector<16x128xf32>
    %cst_20 = arith.constant 0.000000e+00 : f32
    %24 = vector.broadcast %cst_20 : f32 to vector<16x128xf32>
    %25 = arith.maximumf %23, %24 : vector<16x128xf32>
    %c48 = arith.constant 48 : index
    %c0_21 = arith.constant 0 : index
    %26 = vector.load %arg9[%c48, %c0_21] : memref<480x128xf32, #tpu.memory_space<vmem>>, vector<16x128xf32>
    tpu.vector_store %arg9[%c48, %c0_21], %25 {strides = array<i32>} : memref<480x128xf32, #tpu.memory_space<vmem>>, vector<16x128xf32>,
    %c16 = arith.constant 16 : index
    %c0_22 = arith.constant 0 : index
    %27 = vector.load %arg1[%c16, %c0_22] : memref<256x128xf32, #tpu.memory_space<vmem>>, vector<16x128xf32>
    %28 = vector.broadcast %8 : vector<1x128xf32> to vector<16x128xf32>
    %29 = arith.mulf %27, %28 : vector<16x128xf32>
    %30 = vector.broadcast %9 : vector<1x128xf32> to vector<16x128xf32>
    %31 = arith.addf %29, %30 : vector<16x128xf32>
    %cst_23 = arith.constant 0.000000e+00 : f32
    %32 = vector.broadcast %cst_23 : f32 to vector<16x128xf32>
    %33 = arith.maximumf %31, %32 : vector<16x128xf32>
    %c72 = arith.constant 72 : index
    %c0_24 = arith.constant 0 : index
    %34 = vector.load %arg9[%c72, %c0_24] : memref<480x128xf32, #tpu.memory_space<vmem>>, vector<16x128xf32>
    tpu.vector_store %arg9[%c72, %c0_24], %33 {strides = array<i32>} : memref<480x128xf32, #tpu.memory_space<vmem>>, vector<16x128xf32>,
    %c32 = arith.constant 32 : index
    %c0_25 = arith.constant 0 : index
    %35 = vector.load %arg1[%c32, %c0_25] : memref<256x128xf32, #tpu.memory_space<vmem>>, vector<16x128xf32>
    %36 = vector.broadcast %8 : vector<1x128xf32> to vector<16x128xf32>
    %37 = arith.mulf %35, %36 : vector<16x128xf32>
    %38 = vector.broadcast %9 : vector<1x128xf32> to vector<16x128xf32>
    %39 = arith.addf %37, %38 : vector<16x128xf32>
    %cst_26 = arith.constant 0.000000e+00 : f32
    %40 = vector.broadcast %cst_26 : f32 to vector<16x128xf32>
    %41 = arith.maximumf %39, %40 : vector<16x128xf32>
    %c96 = arith.constant 96 : index
    %c0_27 = arith.constant 0 : index
    %42 = vector.load %arg9[%c96, %c0_27] : memref<480x128xf32, #tpu.memory_space<vmem>>, vector<16x128xf32>
    tpu.vector_store %arg9[%c96, %c0_27], %41 {strides = array<i32>} : memref<480x128xf32, #tpu.memory_space<vmem>>, vector<16x128xf32>,
    %c48_28 = arith.constant 48 : index
    %c0_29 = arith.constant 0 : index
    %43 = vector.load %arg1[%c48_28, %c0_29] : memref<256x128xf32, #tpu.memory_space<vmem>>, vector<16x128xf32>
    %44 = vector.broadcast %8 : vector<1x128xf32> to vector<16x128xf32>
    %45 = arith.mulf %43, %44 : vector<16x128xf32>
    %46 = vector.broadcast %9 : vector<1x128xf32> to vector<16x128xf32>
    %47 = arith.addf %45, %46 : vector<16x128xf32>
    %cst_30 = arith.constant 0.000000e+00 : f32
    %48 = vector.broadcast %cst_30 : f32 to vector<16x128xf32>
    %49 = arith.maximumf %47, %48 : vector<16x128xf32>
    %c120 = arith.constant 120 : index
    %c0_31 = arith.constant 0 : index
    %50 = vector.load %arg9[%c120, %c0_31] : memref<480x128xf32, #tpu.memory_space<vmem>>, vector<16x128xf32>
    tpu.vector_store %arg9[%c120, %c0_31], %49 {strides = array<i32>} : memref<480x128xf32, #tpu.memory_space<vmem>>, vector<16x128xf32>,
    %c64 = arith.constant 64 : index
    %c0_32 = arith.constant 0 : index
    %51 = vector.load %arg1[%c64, %c0_32] : memref<256x128xf32, #tpu.memory_space<vmem>>, vector<16x128xf32>
    %52 = vector.broadcast %8 : vector<1x128xf32> to vector<16x128xf32>
    %53 = arith.mulf %51, %52 : vector<16x128xf32>
    %54 = vector.broadcast %9 : vector<1x128xf32> to vector<16x128xf32>
    %55 = arith.addf %53, %54 : vector<16x128xf32>
    %cst_33 = arith.constant 0.000000e+00 : f32
    %56 = vector.broadcast %cst_33 : f32 to vector<16x128xf32>
    %57 = arith.maximumf %55, %56 : vector<16x128xf32>
    %c144 = arith.constant 144 : index
    %c0_34 = arith.constant 0 : index
    %58 = vector.load %arg9[%c144, %c0_34] : memref<480x128xf32, #tpu.memory_space<vmem>>, vector<16x128xf32>
    tpu.vector_store %arg9[%c144, %c0_34], %57 {strides = array<i32>} : memref<480x128xf32, #tpu.memory_space<vmem>>, vector<16x128xf32>,
    %c80 = arith.constant 80 : index
    %c0_35 = arith.constant 0 : index
    %59 = vector.load %arg1[%c80, %c0_35] : memref<256x128xf32, #tpu.memory_space<vmem>>, vector<16x128xf32>
    %60 = vector.broadcast %8 : vector<1x128xf32> to vector<16x128xf32>
    %61 = arith.mulf %59, %60 : vector<16x128xf32>
    %62 = vector.broadcast %9 : vector<1x128xf32> to vector<16x128xf32>
    %63 = arith.addf %61, %62 : vector<16x128xf32>
    %cst_36 = arith.constant 0.000000e+00 : f32
    %64 = vector.broadcast %cst_36 : f32 to vector<16x128xf32>
    %65 = arith.maximumf %63, %64 : vector<16x128xf32>
    %c168 = arith.constant 168 : index
    %c0_37 = arith.constant 0 : index
    %66 = vector.load %arg9[%c168, %c0_37] : memref<480x128xf32, #tpu.memory_space<vmem>>, vector<16x128xf32>
    tpu.vector_store %arg9[%c168, %c0_37], %65 {strides = array<i32>} : memref<480x128xf32, #tpu.memory_space<vmem>>, vector<16x128xf32>,
    %c96_38 = arith.constant 96 : index
    %c0_39 = arith.constant 0 : index
    %67 = vector.load %arg1[%c96_38, %c0_39] : memref<256x128xf32, #tpu.memory_space<vmem>>, vector<16x128xf32>
    %68 = vector.broadcast %8 : vector<1x128xf32> to vector<16x128xf32>
    %69 = arith.mulf %67, %68 : vector<16x128xf32>
    %70 = vector.broadcast %9 : vector<1x128xf32> to vector<16x128xf32>
    %71 = arith.addf %69, %70 : vector<16x128xf32>
    %cst_40 = arith.constant 0.000000e+00 : f32
    %72 = vector.broadcast %cst_40 : f32 to vector<16x128xf32>
    %73 = arith.maximumf %71, %72 : vector<16x128xf32>
    %c192 = arith.constant 192 : index
    %c0_41 = arith.constant 0 : index
    %74 = vector.load %arg9[%c192, %c0_41] : memref<480x128xf32, #tpu.memory_space<vmem>>, vector<16x128xf32>
    tpu.vector_store %arg9[%c192, %c0_41], %73 {strides = array<i32>} : memref<480x128xf32, #tpu.memory_space<vmem>>, vector<16x128xf32>,
    %c112 = arith.constant 112 : index
    %c0_42 = arith.constant 0 : index
    %75 = vector.load %arg1[%c112, %c0_42] : memref<256x128xf32, #tpu.memory_space<vmem>>, vector<16x128xf32>
    %76 = vector.broadcast %8 : vector<1x128xf32> to vector<16x128xf32>
    %77 = arith.mulf %75, %76 : vector<16x128xf32>
    %78 = vector.broadcast %9 : vector<1x128xf32> to vector<16x128xf32>
    %79 = arith.addf %77, %78 : vector<16x128xf32>
    %cst_43 = arith.constant 0.000000e+00 : f32
    %80 = vector.broadcast %cst_43 : f32 to vector<16x128xf32>
    %81 = arith.maximumf %79, %80 : vector<16x128xf32>
    %c216 = arith.constant 216 : index
    %c0_44 = arith.constant 0 : index
    %82 = vector.load %arg9[%c216, %c0_44] : memref<480x128xf32, #tpu.memory_space<vmem>>, vector<16x128xf32>
    tpu.vector_store %arg9[%c216, %c0_44], %81 {strides = array<i32>} : memref<480x128xf32, #tpu.memory_space<vmem>>, vector<16x128xf32>,
    %c128 = arith.constant 128 : index
    %c0_45 = arith.constant 0 : index
    %83 = vector.load %arg1[%c128, %c0_45] : memref<256x128xf32, #tpu.memory_space<vmem>>, vector<16x128xf32>
    %84 = vector.broadcast %8 : vector<1x128xf32> to vector<16x128xf32>
    %85 = arith.mulf %83, %84 : vector<16x128xf32>
    %86 = vector.broadcast %9 : vector<1x128xf32> to vector<16x128xf32>
    %87 = arith.addf %85, %86 : vector<16x128xf32>
    %cst_46 = arith.constant 0.000000e+00 : f32
    %88 = vector.broadcast %cst_46 : f32 to vector<16x128xf32>
    %89 = arith.maximumf %87, %88 : vector<16x128xf32>
    %c240 = arith.constant 240 : index
    %c0_47 = arith.constant 0 : index
    %90 = vector.load %arg9[%c240, %c0_47] : memref<480x128xf32, #tpu.memory_space<vmem>>, vector<16x128xf32>
    tpu.vector_store %arg9[%c240, %c0_47], %89 {strides = array<i32>} : memref<480x128xf32, #tpu.memory_space<vmem>>, vector<16x128xf32>,
    %c144_48 = arith.constant 144 : index
    %c0_49 = arith.constant 0 : index
    %91 = vector.load %arg1[%c144_48, %c0_49] : memref<256x128xf32, #tpu.memory_space<vmem>>, vector<16x128xf32>
    %92 = vector.broadcast %8 : vector<1x128xf32> to vector<16x128xf32>
    %93 = arith.mulf %91, %92 : vector<16x128xf32>
    %94 = vector.broadcast %9 : vector<1x128xf32> to vector<16x128xf32>
    %95 = arith.addf %93, %94 : vector<16x128xf32>
    %cst_50 = arith.constant 0.000000e+00 : f32
    %96 = vector.broadcast %cst_50 : f32 to vector<16x128xf32>
    %97 = arith.maximumf %95, %96 : vector<16x128xf32>
    %c264 = arith.constant 264 : index
    %c0_51 = arith.constant 0 : index
    %98 = vector.load %arg9[%c264, %c0_51] : memref<480x128xf32, #tpu.memory_space<vmem>>, vector<16x128xf32>
    tpu.vector_store %arg9[%c264, %c0_51], %97 {strides = array<i32>} : memref<480x128xf32, #tpu.memory_space<vmem>>, vector<16x128xf32>,
    %c160 = arith.constant 160 : index
    %c0_52 = arith.constant 0 : index
    %99 = vector.load %arg1[%c160, %c0_52] : memref<256x128xf32, #tpu.memory_space<vmem>>, vector<16x128xf32>
    %100 = vector.broadcast %8 : vector<1x128xf32> to vector<16x128xf32>
    %101 = arith.mulf %99, %100 : vector<16x128xf32>
    %102 = vector.broadcast %9 : vector<1x128xf32> to vector<16x128xf32>
    %103 = arith.addf %101, %102 : vector<16x128xf32>
    %cst_53 = arith.constant 0.000000e+00 : f32
    %104 = vector.broadcast %cst_53 : f32 to vector<16x128xf32>
    %105 = arith.maximumf %103, %104 : vector<16x128xf32>
    %c288 = arith.constant 288 : index
    %c0_54 = arith.constant 0 : index
    %106 = vector.load %arg9[%c288, %c0_54] : memref<480x128xf32, #tpu.memory_space<vmem>>, vector<16x128xf32>
    tpu.vector_store %arg9[%c288, %c0_54], %105 {strides = array<i32>} : memref<480x128xf32, #tpu.memory_space<vmem>>, vector<16x128xf32>,
    %c176 = arith.constant 176 : index
    %c0_55 = arith.constant 0 : index
    %107 = vector.load %arg1[%c176, %c0_55] : memref<256x128xf32, #tpu.memory_space<vmem>>, vector<16x128xf32>
    %108 = vector.broadcast %8 : vector<1x128xf32> to vector<16x128xf32>
    %109 = arith.mulf %107, %108 : vector<16x128xf32>
    %110 = vector.broadcast %9 : vector<1x128xf32> to vector<16x128xf32>
    %111 = arith.addf %109, %110 : vector<16x128xf32>
    %cst_56 = arith.constant 0.000000e+00 : f32
    %112 = vector.broadcast %cst_56 : f32 to vector<16x128xf32>
    %113 = arith.maximumf %111, %112 : vector<16x128xf32>
    %c312 = arith.constant 312 : index
    %c0_57 = arith.constant 0 : index
    %114 = vector.load %arg9[%c312, %c0_57] : memref<480x128xf32, #tpu.memory_space<vmem>>, vector<16x128xf32>
    tpu.vector_store %arg9[%c312, %c0_57], %113 {strides = array<i32>} : memref<480x128xf32, #tpu.memory_space<vmem>>, vector<16x128xf32>,
    %c192_58 = arith.constant 192 : index
    %c0_59 = arith.constant 0 : index
    %115 = vector.load %arg1[%c192_58, %c0_59] : memref<256x128xf32, #tpu.memory_space<vmem>>, vector<16x128xf32>
    %116 = vector.broadcast %8 : vector<1x128xf32> to vector<16x128xf32>
    %117 = arith.mulf %115, %116 : vector<16x128xf32>
    %118 = vector.broadcast %9 : vector<1x128xf32> to vector<16x128xf32>
    %119 = arith.addf %117, %118 : vector<16x128xf32>
    %cst_60 = arith.constant 0.000000e+00 : f32
    %120 = vector.broadcast %cst_60 : f32 to vector<16x128xf32>
    %121 = arith.maximumf %119, %120 : vector<16x128xf32>
    %c336 = arith.constant 336 : index
    %c0_61 = arith.constant 0 : index
    %122 = vector.load %arg9[%c336, %c0_61] : memref<480x128xf32, #tpu.memory_space<vmem>>, vector<16x128xf32>
    tpu.vector_store %arg9[%c336, %c0_61], %121 {strides = array<i32>} : memref<480x128xf32, #tpu.memory_space<vmem>>, vector<16x128xf32>,
    %c208 = arith.constant 208 : index
    %c0_62 = arith.constant 0 : index
    %123 = vector.load %arg1[%c208, %c0_62] : memref<256x128xf32, #tpu.memory_space<vmem>>, vector<16x128xf32>
    %124 = vector.broadcast %8 : vector<1x128xf32> to vector<16x128xf32>
    %125 = arith.mulf %123, %124 : vector<16x128xf32>
    %126 = vector.broadcast %9 : vector<1x128xf32> to vector<16x128xf32>
    %127 = arith.addf %125, %126 : vector<16x128xf32>
    %cst_63 = arith.constant 0.000000e+00 : f32
    %128 = vector.broadcast %cst_63 : f32 to vector<16x128xf32>
    %129 = arith.maximumf %127, %128 : vector<16x128xf32>
    %c360 = arith.constant 360 : index
    %c0_64 = arith.constant 0 : index
    %130 = vector.load %arg9[%c360, %c0_64] : memref<480x128xf32, #tpu.memory_space<vmem>>, vector<16x128xf32>
    tpu.vector_store %arg9[%c360, %c0_64], %129 {strides = array<i32>} : memref<480x128xf32, #tpu.memory_space<vmem>>, vector<16x128xf32>,
    %c224 = arith.constant 224 : index
    %c0_65 = arith.constant 0 : index
    %131 = vector.load %arg1[%c224, %c0_65] : memref<256x128xf32, #tpu.memory_space<vmem>>, vector<16x128xf32>
    %132 = vector.broadcast %8 : vector<1x128xf32> to vector<16x128xf32>
    %133 = arith.mulf %131, %132 : vector<16x128xf32>
    %134 = vector.broadcast %9 : vector<1x128xf32> to vector<16x128xf32>
    %135 = arith.addf %133, %134 : vector<16x128xf32>
    %cst_66 = arith.constant 0.000000e+00 : f32
    %136 = vector.broadcast %cst_66 : f32 to vector<16x128xf32>
    %137 = arith.maximumf %135, %136 : vector<16x128xf32>
    %c384 = arith.constant 384 : index
    %c0_67 = arith.constant 0 : index
    %138 = vector.load %arg9[%c384, %c0_67] : memref<480x128xf32, #tpu.memory_space<vmem>>, vector<16x128xf32>
    tpu.vector_store %arg9[%c384, %c0_67], %137 {strides = array<i32>} : memref<480x128xf32, #tpu.memory_space<vmem>>, vector<16x128xf32>,
    %c240_68 = arith.constant 240 : index
    %c0_69 = arith.constant 0 : index
    %139 = vector.load %arg1[%c240_68, %c0_69] : memref<256x128xf32, #tpu.memory_space<vmem>>, vector<16x128xf32>
    %140 = vector.broadcast %8 : vector<1x128xf32> to vector<16x128xf32>
    %141 = arith.mulf %139, %140 : vector<16x128xf32>
    %142 = vector.broadcast %9 : vector<1x128xf32> to vector<16x128xf32>
    %143 = arith.addf %141, %142 : vector<16x128xf32>
    %cst_70 = arith.constant 0.000000e+00 : f32
    %144 = vector.broadcast %cst_70 : f32 to vector<16x128xf32>
    %145 = arith.maximumf %143, %144 : vector<16x128xf32>
    %c408 = arith.constant 408 : index
    %c0_71 = arith.constant 0 : index
    %146 = vector.load %arg9[%c408, %c0_71] : memref<480x128xf32, #tpu.memory_space<vmem>>, vector<16x128xf32>
    tpu.vector_store %arg9[%c408, %c0_71], %145 {strides = array<i32>} : memref<480x128xf32, #tpu.memory_space<vmem>>, vector<16x128xf32>,
    %c23 = arith.constant 23 : index
    %c0_72 = arith.constant 0 : index
    %147 = vector.load %arg9[%c23, %c0_72] : memref<480x128xf32, #tpu.memory_space<vmem>>, vector<384x128xf32>
    %148 = arith.truncf %147 : vector<384x128xf32> to vector<384x128xbf16>
    %c0_73 = arith.constant 0 : index
    %c0_74 = arith.constant 0 : index
    %149 = vector.load %arg2[%c0_73, %c0_74] : memref<1152x128xbf16, #tpu.memory_space<vmem>>, vector<128x128xbf16>
    %c0_75 = arith.constant 0 : index
    %c0_76 = arith.constant 0 : index
    %150 = vector.load %arg11[%c0_75, %c0_76] : memref<384x128xf32, #tpu.memory_space<vmem>>, vector<384x128xf32>
    %cst_77 = arith.constant dense<0.000000e+00> : vector<384x128xf32>
    %151 = tpu.matmul %148, %149, %cst_77 {dimension_numbers = #tpu.dot_dimension_numbers<[1], [0], [0], [1], [0, 0, 1, 1], [], []>} : vector<384x128xbf16>, vector<128x128xbf16>, vector<384x128xf32> -> vector<384x128xf32>
    %152 = arith.addf %150, %151 : vector<384x128xf32>
    %c0_78 = arith.constant 0 : index
    %c0_79 = arith.constant 0 : index
    %153 = vector.load %arg11[%c0_78, %c0_79] : memref<384x128xf32, #tpu.memory_space<vmem>>, vector<384x128xf32>
    tpu.vector_store %arg11[%c0_78, %c0_79], %152 {strides = array<i32>} : memref<384x128xf32, #tpu.memory_space<vmem>>, vector<384x128xf32>,
    %c24 = arith.constant 24 : index
    %c0_80 = arith.constant 0 : index
    %154 = vector.load %arg9[%c24, %c0_80] : memref<480x128xf32, #tpu.memory_space<vmem>>, vector<384x128xf32>
    %155 = arith.truncf %154 : vector<384x128xf32> to vector<384x128xbf16>
    %c128_81 = arith.constant 128 : index
    %c0_82 = arith.constant 0 : index
    %156 = vector.load %arg2[%c128_81, %c0_82] : memref<1152x128xbf16, #tpu.memory_space<vmem>>, vector<128x128xbf16>
    %c0_83 = arith.constant 0 : index
    %c0_84 = arith.constant 0 : index
    %157 = vector.load %arg11[%c0_83, %c0_84] : memref<384x128xf32, #tpu.memory_space<vmem>>, vector<384x128xf32>
    %cst_85 = arith.constant dense<0.000000e+00> : vector<384x128xf32>
    %158 = tpu.matmul %155, %156, %cst_85 {dimension_numbers = #tpu.dot_dimension_numbers<[1], [0], [0], [1], [0, 0, 1, 1], [], []>} : vector<384x128xbf16>, vector<128x128xbf16>, vector<384x128xf32> -> vector<384x128xf32>
    %159 = arith.addf %157, %158 : vector<384x128xf32>
    %c0_86 = arith.constant 0 : index
    %c0_87 = arith.constant 0 : index
    %160 = vector.load %arg11[%c0_86, %c0_87] : memref<384x128xf32, #tpu.memory_space<vmem>>, vector<384x128xf32>
    tpu.vector_store %arg11[%c0_86, %c0_87], %159 {strides = array<i32>} : memref<384x128xf32, #tpu.memory_space<vmem>>, vector<384x128xf32>,
    %c25 = arith.constant 25 : index
    %c0_88 = arith.constant 0 : index
    %161 = vector.load %arg9[%c25, %c0_88] : memref<480x128xf32, #tpu.memory_space<vmem>>, vector<384x128xf32>
    %162 = arith.truncf %161 : vector<384x128xf32> to vector<384x128xbf16>
    %c256 = arith.constant 256 : index
    %c0_89 = arith.constant 0 : index
    %163 = vector.load %arg2[%c256, %c0_89] : memref<1152x128xbf16, #tpu.memory_space<vmem>>, vector<128x128xbf16>
    %c0_90 = arith.constant 0 : index
    %c0_91 = arith.constant 0 : index
    %164 = vector.load %arg11[%c0_90, %c0_91] : memref<384x128xf32, #tpu.memory_space<vmem>>, vector<384x128xf32>
    %cst_92 = arith.constant dense<0.000000e+00> : vector<384x128xf32>
    %165 = tpu.matmul %162, %163, %cst_92 {dimension_numbers = #tpu.dot_dimension_numbers<[1], [0], [0], [1], [0, 0, 1, 1], [], []>} : vector<384x128xbf16>, vector<128x128xbf16>, vector<384x128xf32> -> vector<384x128xf32>
    %166 = arith.addf %164, %165 : vector<384x128xf32>
    %c0_93 = arith.constant 0 : index
    %c0_94 = arith.constant 0 : index
    %167 = vector.load %arg11[%c0_93, %c0_94] : memref<384x128xf32, #tpu.memory_space<vmem>>, vector<384x128xf32>
    tpu.vector_store %arg11[%c0_93, %c0_94], %166 {strides = array<i32>} : memref<384x128xf32, #tpu.memory_space<vmem>>, vector<384x128xf32>,
    %c47 = arith.constant 47 : index
    %c0_95 = arith.constant 0 : index
    %168 = vector.load %arg9[%c47, %c0_95] : memref<480x128xf32, #tpu.memory_space<vmem>>, vector<384x128xf32>
    %169 = arith.truncf %168 : vector<384x128xf32> to vector<384x128xbf16>
    %c384_96 = arith.constant 384 : index
    %c0_97 = arith.constant 0 : index
    %170 = vector.load %arg2[%c384_96, %c0_97] : memref<1152x128xbf16, #tpu.memory_space<vmem>>, vector<128x128xbf16>
    %c0_98 = arith.constant 0 : index
    %c0_99 = arith.constant 0 : index
    %171 = vector.load %arg11[%c0_98, %c0_99] : memref<384x128xf32, #tpu.memory_space<vmem>>, vector<384x128xf32>
    %cst_100 = arith.constant dense<0.000000e+00> : vector<384x128xf32>
    %172 = tpu.matmul %169, %170, %cst_100 {dimension_numbers = #tpu.dot_dimension_numbers<[1], [0], [0], [1], [0, 0, 1, 1], [], []>} : vector<384x128xbf16>, vector<128x128xbf16>, vector<384x128xf32> -> vector<384x128xf32>
    %173 = arith.addf %171, %172 : vector<384x128xf32>
    %c0_101 = arith.constant 0 : index
    %c0_102 = arith.constant 0 : index
    %174 = vector.load %arg11[%c0_101, %c0_102] : memref<384x128xf32, #tpu.memory_space<vmem>>, vector<384x128xf32>
    tpu.vector_store %arg11[%c0_101, %c0_102], %173 {strides = array<i32>} : memref<384x128xf32, #tpu.memory_space<vmem>>, vector<384x128xf32>,
    %c48_103 = arith.constant 48 : index
    %c0_104 = arith.constant 0 : index
    %175 = vector.load %arg9[%c48_103, %c0_104] : memref<480x128xf32, #tpu.memory_space<vmem>>, vector<384x128xf32>
    %176 = arith.truncf %175 : vector<384x128xf32> to vector<384x128xbf16>
    %c512 = arith.constant 512 : index
    %c0_105 = arith.constant 0 : index
    %177 = vector.load %arg2[%c512, %c0_105] : memref<1152x128xbf16, #tpu.memory_space<vmem>>, vector<128x128xbf16>
    %c0_106 = arith.constant 0 : index
    %c0_107 = arith.constant 0 : index
    %178 = vector.load %arg11[%c0_106, %c0_107] : memref<384x128xf32, #tpu.memory_space<vmem>>, vector<384x128xf32>
    %cst_108 = arith.constant dense<0.000000e+00> : vector<384x128xf32>
    %179 = tpu.matmul %176, %177, %cst_108 {dimension_numbers = #tpu.dot_dimension_numbers<[1], [0], [0], [1], [0, 0, 1, 1], [], []>} : vector<384x128xbf16>, vector<128x128xbf16>, vector<384x128xf32> -> vector<384x128xf32>
    %180 = arith.addf %178, %179 : vector<384x128xf32>
    %c0_109 = arith.constant 0 : index
    %c0_110 = arith.constant 0 : index
    %181 = vector.load %arg11[%c0_109, %c0_110] : memref<384x128xf32, #tpu.memory_space<vmem>>, vector<384x128xf32>
    tpu.vector_store %arg11[%c0_109, %c0_110], %180 {strides = array<i32>} : memref<384x128xf32, #tpu.memory_space<vmem>>, vector<384x128xf32>,
    %c49 = arith.constant 49 : index
    %c0_111 = arith.constant 0 : index
    %182 = vector.load %arg9[%c49, %c0_111] : memref<480x128xf32, #tpu.memory_space<vmem>>, vector<384x128xf32>
    %183 = arith.truncf %182 : vector<384x128xf32> to vector<384x128xbf16>
    %c640 = arith.constant 640 : index
    %c0_112 = arith.constant 0 : index
    %184 = vector.load %arg2[%c640, %c0_112] : memref<1152x128xbf16, #tpu.memory_space<vmem>>, vector<128x128xbf16>
    %c0_113 = arith.constant 0 : index
    %c0_114 = arith.constant 0 : index
    %185 = vector.load %arg11[%c0_113, %c0_114] : memref<384x128xf32, #tpu.memory_space<vmem>>, vector<384x128xf32>
    %cst_115 = arith.constant dense<0.000000e+00> : vector<384x128xf32>
    %186 = tpu.matmul %183, %184, %cst_115 {dimension_numbers = #tpu.dot_dimension_numbers<[1], [0], [0], [1], [0, 0, 1, 1], [], []>} : vector<384x128xbf16>, vector<128x128xbf16>, vector<384x128xf32> -> vector<384x128xf32>
    %187 = arith.addf %185, %186 : vector<384x128xf32>
    %c0_116 = arith.constant 0 : index
    %c0_117 = arith.constant 0 : index
    %188 = vector.load %arg11[%c0_116, %c0_117] : memref<384x128xf32, #tpu.memory_space<vmem>>, vector<384x128xf32>
    tpu.vector_store %arg11[%c0_116, %c0_117], %187 {strides = array<i32>} : memref<384x128xf32, #tpu.memory_space<vmem>>, vector<384x128xf32>,
    %c71 = arith.constant 71 : index
    %c0_118 = arith.constant 0 : index
    %189 = vector.load %arg9[%c71, %c0_118] : memref<480x128xf32, #tpu.memory_space<vmem>>, vector<384x128xf32>
    %190 = arith.truncf %189 : vector<384x128xf32> to vector<384x128xbf16>
    %c768 = arith.constant 768 : index
    %c0_119 = arith.constant 0 : index
    %191 = vector.load %arg2[%c768, %c0_119] : memref<1152x128xbf16, #tpu.memory_space<vmem>>, vector<128x128xbf16>
    %c0_120 = arith.constant 0 : index
    %c0_121 = arith.constant 0 : index
    %192 = vector.load %arg11[%c0_120, %c0_121] : memref<384x128xf32, #tpu.memory_space<vmem>>, vector<384x128xf32>
    %cst_122 = arith.constant dense<0.000000e+00> : vector<384x128xf32>
    %193 = tpu.matmul %190, %191, %cst_122 {dimension_numbers = #tpu.dot_dimension_numbers<[1], [0], [0], [1], [0, 0, 1, 1], [], []>} : vector<384x128xbf16>, vector<128x128xbf16>, vector<384x128xf32> -> vector<384x128xf32>
    %194 = arith.addf %192, %193 : vector<384x128xf32>
    %c0_123 = arith.constant 0 : index
    %c0_124 = arith.constant 0 : index
    %195 = vector.load %arg11[%c0_123, %c0_124] : memref<384x128xf32, #tpu.memory_space<vmem>>, vector<384x128xf32>
    tpu.vector_store %arg11[%c0_123, %c0_124], %194 {strides = array<i32>} : memref<384x128xf32, #tpu.memory_space<vmem>>, vector<384x128xf32>,
    %c72_125 = arith.constant 72 : index
    %c0_126 = arith.constant 0 : index
    %196 = vector.load %arg9[%c72_125, %c0_126] : memref<480x128xf32, #tpu.memory_space<vmem>>, vector<384x128xf32>
    %197 = arith.truncf %196 : vector<384x128xf32> to vector<384x128xbf16>
    %c896 = arith.constant 896 : index
    %c0_127 = arith.constant 0 : index
    %198 = vector.load %arg2[%c896, %c0_127] : memref<1152x128xbf16, #tpu.memory_space<vmem>>, vector<128x128xbf16>
    %c0_128 = arith.constant 0 : index
    %c0_129 = arith.constant 0 : index
    %199 = vector.load %arg11[%c0_128, %c0_129] : memref<384x128xf32, #tpu.memory_space<vmem>>, vector<384x128xf32>
    %cst_130 = arith.constant dense<0.000000e+00> : vector<384x128xf32>
    %200 = tpu.matmul %197, %198, %cst_130 {dimension_numbers = #tpu.dot_dimension_numbers<[1], [0], [0], [1], [0, 0, 1, 1], [], []>} : vector<384x128xbf16>, vector<128x128xbf16>, vector<384x128xf32> -> vector<384x128xf32>
    %201 = arith.addf %199, %200 : vector<384x128xf32>
    %c0_131 = arith.constant 0 : index
    %c0_132 = arith.constant 0 : index
    %202 = vector.load %arg11[%c0_131, %c0_132] : memref<384x128xf32, #tpu.memory_space<vmem>>, vector<384x128xf32>
    tpu.vector_store %arg11[%c0_131, %c0_132], %201 {strides = array<i32>} : memref<384x128xf32, #tpu.memory_space<vmem>>, vector<384x128xf32>,
    %c73 = arith.constant 73 : index
    %c0_133 = arith.constant 0 : index
    %203 = vector.load %arg9[%c73, %c0_133] : memref<480x128xf32, #tpu.memory_space<vmem>>, vector<384x128xf32>
    %204 = arith.truncf %203 : vector<384x128xf32> to vector<384x128xbf16>
    %c1024 = arith.constant 1024 : index
    %c0_134 = arith.constant 0 : index
    %205 = vector.load %arg2[%c1024, %c0_134] : memref<1152x128xbf16, #tpu.memory_space<vmem>>, vector<128x128xbf16>
    %c0_135 = arith.constant 0 : index
    %c0_136 = arith.constant 0 : index
    %206 = vector.load %arg11[%c0_135, %c0_136] : memref<384x128xf32, #tpu.memory_space<vmem>>, vector<384x128xf32>
    %cst_137 = arith.constant dense<0.000000e+00> : vector<384x128xf32>
    %207 = tpu.matmul %204, %205, %cst_137 {dimension_numbers = #tpu.dot_dimension_numbers<[1], [0], [0], [1], [0, 0, 1, 1], [], []>} : vector<384x128xbf16>, vector<128x128xbf16>, vector<384x128xf32> -> vector<384x128xf32>
    %208 = arith.addf %206, %207 : vector<384x128xf32>
    %c0_138 = arith.constant 0 : index
    %c0_139 = arith.constant 0 : index
    %209 = vector.load %arg11[%c0_138, %c0_139] : memref<384x128xf32, #tpu.memory_space<vmem>>, vector<384x128xf32>
    tpu.vector_store %arg11[%c0_138, %c0_139], %208 {strides = array<i32>} : memref<384x128xf32, #tpu.memory_space<vmem>>, vector<384x128xf32>,
    %c0_140 = arith.constant 0 : index
    %c0_141 = arith.constant 0 : index
    %210 = vector.load %arg11[%c0_140, %c0_141] : memref<384x128xf32, #tpu.memory_space<vmem>>, vector<15x128xf32>
    %211 = vector.broadcast %10 : vector<1x128xf32> to vector<15x128xf32>
    %212 = arith.addf %210, %211 : vector<15x128xf32>
    %cst_142 = arith.constant 0.000000e+00 : f32
    %213 = vector.broadcast %cst_142 : f32 to vector<15x128xf32>
    %214 = arith.maximumf %212, %213 : vector<15x128xf32>
    %cst_143 = arith.constant dense<0.000000e+00> : vector<8x128xf32>
    %215 = tpu.matmul %18, %214, %cst_143 {dimension_numbers = #tpu.dot_dimension_numbers<[1], [0], [0], [1], [0, 0, 1, 1], [], []>} : vector<8x15xf32>, vector<15x128xf32>, vector<8x128xf32> -> vector<8x128xf32>
    %c32_144 = arith.constant 32 : index
    %c0_145 = arith.constant 0 : index
    %216 = vector.load %arg10[%c32_144, %c0_145] : memref<192x128xf32, #tpu.memory_space<vmem>>, vector<8x128xf32>
    tpu.vector_store %arg10[%c32_144, %c0_145], %215 {strides = array<i32>} : memref<192x128xf32, #tpu.memory_space<vmem>>, vector<8x128xf32>,
    %c48_146 = arith.constant 48 : index
    %c0_147 = arith.constant 0 : index
    %217 = vector.load %arg11[%c48_146, %c0_147] : memref<384x128xf32, #tpu.memory_space<vmem>>, vector<15x128xf32>
    %218 = vector.broadcast %10 : vector<1x128xf32> to vector<15x128xf32>
    %219 = arith.addf %217, %218 : vector<15x128xf32>
    %cst_148 = arith.constant 0.000000e+00 : f32
    %220 = vector.broadcast %cst_148 : f32 to vector<15x128xf32>
    %221 = arith.maximumf %219, %220 : vector<15x128xf32>
    %cst_149 = arith.constant dense<0.000000e+00> : vector<8x128xf32>
    %222 = tpu.matmul %18, %221, %cst_149 {dimension_numbers = #tpu.dot_dimension_numbers<[1], [0], [0], [1], [0, 0, 1, 1], [], []>} : vector<8x15xf32>, vector<15x128xf32>, vector<8x128xf32> -> vector<8x128xf32>
    %c48_150 = arith.constant 48 : index
    %c0_151 = arith.constant 0 : index
    %223 = vector.load %arg10[%c48_150, %c0_151] : memref<192x128xf32, #tpu.memory_space<vmem>>, vector<8x128xf32>
    tpu.vector_store %arg10[%c48_150, %c0_151], %222 {strides = array<i32>} : memref<192x128xf32, #tpu.memory_space<vmem>>, vector<8x128xf32>,
    %c96_152 = arith.constant 96 : index
    %c0_153 = arith.constant 0 : index
    %224 = vector.load %arg11[%c96_152, %c0_153] : memref<384x128xf32, #tpu.memory_space<vmem>>, vector<15x128xf32>
    %225 = vector.broadcast %10 : vector<1x128xf32> to vector<15x128xf32>
    %226 = arith.addf %224, %225 : vector<15x128xf32>
    %cst_154 = arith.constant 0.000000e+00 : f32
    %227 = vector.broadcast %cst_154 : f32 to vector<15x128xf32>
    %228 = arith.maximumf %226, %227 : vector<15x128xf32>
    %cst_155 = arith.constant dense<0.000000e+00> : vector<8x128xf32>
    %229 = tpu.matmul %18, %228, %cst_155 {dimension_numbers = #tpu.dot_dimension_numbers<[1], [0], [0], [1], [0, 0, 1, 1], [], []>} : vector<8x15xf32>, vector<15x128xf32>, vector<8x128xf32> -> vector<8x128xf32>
    %c64_156 = arith.constant 64 : index
    %c0_157 = arith.constant 0 : index
    %230 = vector.load %arg10[%c64_156, %c0_157] : memref<192x128xf32, #tpu.memory_space<vmem>>, vector<8x128xf32>
    tpu.vector_store %arg10[%c64_156, %c0_157], %229 {strides = array<i32>} : memref<192x128xf32, #tpu.memory_space<vmem>>, vector<8x128xf32>,
    %c144_158 = arith.constant 144 : index
    %c0_159 = arith.constant 0 : index
    %231 = vector.load %arg11[%c144_158, %c0_159] : memref<384x128xf32, #tpu.memory_space<vmem>>, vector<15x128xf32>
    %232 = vector.broadcast %10 : vector<1x128xf32> to vector<15x128xf32>
    %233 = arith.addf %231, %232 : vector<15x128xf32>
    %cst_160 = arith.constant 0.000000e+00 : f32
    %234 = vector.broadcast %cst_160 : f32 to vector<15x128xf32>
    %235 = arith.maximumf %233, %234 : vector<15x128xf32>
    %cst_161 = arith.constant dense<0.000000e+00> : vector<8x128xf32>
    %236 = tpu.matmul %18, %235, %cst_161 {dimension_numbers = #tpu.dot_dimension_numbers<[1], [0], [0], [1], [0, 0, 1, 1], [], []>} : vector<8x15xf32>, vector<15x128xf32>, vector<8x128xf32> -> vector<8x128xf32>
    %c80_162 = arith.constant 80 : index
    %c0_163 = arith.constant 0 : index
    %237 = vector.load %arg10[%c80_162, %c0_163] : memref<192x128xf32, #tpu.memory_space<vmem>>, vector<8x128xf32>
    tpu.vector_store %arg10[%c80_162, %c0_163], %236 {strides = array<i32>} : memref<192x128xf32, #tpu.memory_space<vmem>>, vector<8x128xf32>,
    %c192_164 = arith.constant 192 : index
    %c0_165 = arith.constant 0 : index
    %238 = vector.load %arg11[%c192_164, %c0_165] : memref<384x128xf32, #tpu.memory_space<vmem>>, vector<15x128xf32>
    %239 = vector.broadcast %10 : vector<1x128xf32> to vector<15x128xf32>
    %240 = arith.addf %238, %239 : vector<15x128xf32>
    %cst_166 = arith.constant 0.000000e+00 : f32
    %241 = vector.broadcast %cst_166 : f32 to vector<15x128xf32>
    %242 = arith.maximumf %240, %241 : vector<15x128xf32>
    %cst_167 = arith.constant dense<0.000000e+00> : vector<8x128xf32>
    %243 = tpu.matmul %18, %242, %cst_167 {dimension_numbers = #tpu.dot_dimension_numbers<[1], [0], [0], [1], [0, 0, 1, 1], [], []>} : vector<8x15xf32>, vector<15x128xf32>, vector<8x128xf32> -> vector<8x128xf32>
    %c96_168 = arith.constant 96 : index
    %c0_169 = arith.constant 0 : index
    %244 = vector.load %arg10[%c96_168, %c0_169] : memref<192x128xf32, #tpu.memory_space<vmem>>, vector<8x128xf32>
    tpu.vector_store %arg10[%c96_168, %c0_169], %243 {strides = array<i32>} : memref<192x128xf32, #tpu.memory_space<vmem>>, vector<8x128xf32>,
    %c240_170 = arith.constant 240 : index
    %c0_171 = arith.constant 0 : index
    %245 = vector.load %arg11[%c240_170, %c0_171] : memref<384x128xf32, #tpu.memory_space<vmem>>, vector<15x128xf32>
    %246 = vector.broadcast %10 : vector<1x128xf32> to vector<15x128xf32>
    %247 = arith.addf %245, %246 : vector<15x128xf32>
    %cst_172 = arith.constant 0.000000e+00 : f32
    %248 = vector.broadcast %cst_172 : f32 to vector<15x128xf32>
    %249 = arith.maximumf %247, %248 : vector<15x128xf32>
    %cst_173 = arith.constant dense<0.000000e+00> : vector<8x128xf32>
    %250 = tpu.matmul %18, %249, %cst_173 {dimension_numbers = #tpu.dot_dimension_numbers<[1], [0], [0], [1], [0, 0, 1, 1], [], []>} : vector<8x15xf32>, vector<15x128xf32>, vector<8x128xf32> -> vector<8x128xf32>
    %c112_174 = arith.constant 112 : index
    %c0_175 = arith.constant 0 : index
    %251 = vector.load %arg10[%c112_174, %c0_175] : memref<192x128xf32, #tpu.memory_space<vmem>>, vector<8x128xf32>
    tpu.vector_store %arg10[%c112_174, %c0_175], %250 {strides = array<i32>} : memref<192x128xf32, #tpu.memory_space<vmem>>, vector<8x128xf32>,
    %c288_176 = arith.constant 288 : index
    %c0_177 = arith.constant 0 : index
    %252 = vector.load %arg11[%c288_176, %c0_177] : memref<384x128xf32, #tpu.memory_space<vmem>>, vector<15x128xf32>
    %253 = vector.broadcast %10 : vector<1x128xf32> to vector<15x128xf32>
    %254 = arith.addf %252, %253 : vector<15x128xf32>
    %cst_178 = arith.constant 0.000000e+00 : f32
    %255 = vector.broadcast %cst_178 : f32 to vector<15x128xf32>
    %256 = arith.maximumf %254, %255 : vector<15x128xf32>
    %cst_179 = arith.constant dense<0.000000e+00> : vector<8x128xf32>
    %257 = tpu.matmul %18, %256, %cst_179 {dimension_numbers = #tpu.dot_dimension_numbers<[1], [0], [0], [1], [0, 0, 1, 1], [], []>} : vector<8x15xf32>, vector<15x128xf32>, vector<8x128xf32> -> vector<8x128xf32>
    %c128_180 = arith.constant 128 : index
    %c0_181 = arith.constant 0 : index
    %258 = vector.load %arg10[%c128_180, %c0_181] : memref<192x128xf32, #tpu.memory_space<vmem>>, vector<8x128xf32>
    tpu.vector_store %arg10[%c128_180, %c0_181], %257 {strides = array<i32>} : memref<192x128xf32, #tpu.memory_space<vmem>>, vector<8x128xf32>,
    %c336_182 = arith.constant 336 : index
    %c0_183 = arith.constant 0 : index
    %259 = vector.load %arg11[%c336_182, %c0_183] : memref<384x128xf32, #tpu.memory_space<vmem>>, vector<15x128xf32>
    %260 = vector.broadcast %10 : vector<1x128xf32> to vector<15x128xf32>
    %261 = arith.addf %259, %260 : vector<15x128xf32>
    %cst_184 = arith.constant 0.000000e+00 : f32
    %262 = vector.broadcast %cst_184 : f32 to vector<15x128xf32>
    %263 = arith.maximumf %261, %262 : vector<15x128xf32>
    %cst_185 = arith.constant dense<0.000000e+00> : vector<8x128xf32>
    %264 = tpu.matmul %18, %263, %cst_185 {dimension_numbers = #tpu.dot_dimension_numbers<[1], [0], [0], [1], [0, 0, 1, 1], [], []>} : vector<8x15xf32>, vector<15x128xf32>, vector<8x128xf32> -> vector<8x128xf32>
    %c144_186 = arith.constant 144 : index
    %c0_187 = arith.constant 0 : index
    %265 = vector.load %arg10[%c144_186, %c0_187] : memref<192x128xf32, #tpu.memory_space<vmem>>, vector<8x128xf32>
    tpu.vector_store %arg10[%c144_186, %c0_187], %264 {strides = array<i32>} : memref<192x128xf32, #tpu.memory_space<vmem>>, vector<8x128xf32>,
    %c15 = arith.constant 15 : index
    %c0_188 = arith.constant 0 : index
    %266 = vector.load %arg10[%c15, %c0_188] : memref<192x128xf32, #tpu.memory_space<vmem>>, vector<128x128xf32>
    %267 = arith.truncf %266 : vector<128x128xf32> to vector<128x128xbf16>
    %c0_189 = arith.constant 0 : index
    %c0_190 = arith.constant 0 : index
    %268 = vector.load %arg3[%c0_189, %c0_190] : memref<1152x128xbf16, #tpu.memory_space<vmem>>, vector<128x128xbf16>
    %c0_191 = arith.constant 0 : index
    %c0_192 = arith.constant 0 : index
    %269 = vector.load %arg12[%c0_191, %c0_192] : memref<128x128xf32, #tpu.memory_space<vmem>>, vector<128x128xf32>
    %cst_193 = arith.constant dense<0.000000e+00> : vector<128x128xf32>
    %270 = tpu.matmul %267, %268, %cst_193 {dimension_numbers = #tpu.dot_dimension_numbers<[1], [0], [0], [1], [0, 0, 1, 1], [], []>} : vector<128x128xbf16>, vector<128x128xbf16>, vector<128x128xf32> -> vector<128x128xf32>
    %271 = arith.addf %269, %270 : vector<128x128xf32>
    %c0_194 = arith.constant 0 : index
    %c0_195 = arith.constant 0 : index
    %272 = vector.load %arg12[%c0_194, %c0_195] : memref<128x128xf32, #tpu.memory_space<vmem>>, vector<128x128xf32>
    tpu.vector_store %arg12[%c0_194, %c0_195], %271 {strides = array<i32>} : memref<128x128xf32, #tpu.memory_space<vmem>>, vector<128x128xf32>,
    %c16_196 = arith.constant 16 : index
    %c0_197 = arith.constant 0 : index
    %273 = vector.load %arg10[%c16_196, %c0_197] : memref<192x128xf32, #tpu.memory_space<vmem>>, vector<128x128xf32>
    %274 = arith.truncf %273 : vector<128x128xf32> to vector<128x128xbf16>
    %c128_198 = arith.constant 128 : index
    %c0_199 = arith.constant 0 : index
    %275 = vector.load %arg3[%c128_198, %c0_199] : memref<1152x128xbf16, #tpu.memory_space<vmem>>, vector<128x128xbf16>
    %c0_200 = arith.constant 0 : index
    %c0_201 = arith.constant 0 : index
    %276 = vector.load %arg12[%c0_200, %c0_201] : memref<128x128xf32, #tpu.memory_space<vmem>>, vector<128x128xf32>
    %cst_202 = arith.constant dense<0.000000e+00> : vector<128x128xf32>
    %277 = tpu.matmul %274, %275, %cst_202 {dimension_numbers = #tpu.dot_dimension_numbers<[1], [0], [0], [1], [0, 0, 1, 1], [], []>} : vector<128x128xbf16>, vector<128x128xbf16>, vector<128x128xf32> -> vector<128x128xf32>
    %278 = arith.addf %276, %277 : vector<128x128xf32>
    %c0_203 = arith.constant 0 : index
    %c0_204 = arith.constant 0 : index
    %279 = vector.load %arg12[%c0_203, %c0_204] : memref<128x128xf32, #tpu.memory_space<vmem>>, vector<128x128xf32>
    tpu.vector_store %arg12[%c0_203, %c0_204], %278 {strides = array<i32>} : memref<128x128xf32, #tpu.memory_space<vmem>>, vector<128x128xf32>,
    %c17 = arith.constant 17 : index
    %c0_205 = arith.constant 0 : index
    %280 = vector.load %arg10[%c17, %c0_205] : memref<192x128xf32, #tpu.memory_space<vmem>>, vector<128x128xf32>
    %281 = arith.truncf %280 : vector<128x128xf32> to vector<128x128xbf16>
    %c256_206 = arith.constant 256 : index
    %c0_207 = arith.constant 0 : index
    %282 = vector.load %arg3[%c256_206, %c0_207] : memref<1152x128xbf16, #tpu.memory_space<vmem>>, vector<128x128xbf16>
    %c0_208 = arith.constant 0 : index
    %c0_209 = arith.constant 0 : index
    %283 = vector.load %arg12[%c0_208, %c0_209] : memref<128x128xf32, #tpu.memory_space<vmem>>, vector<128x128xf32>
    %cst_210 = arith.constant dense<0.000000e+00> : vector<128x128xf32>
    %284 = tpu.matmul %281, %282, %cst_210 {dimension_numbers = #tpu.dot_dimension_numbers<[1], [0], [0], [1], [0, 0, 1, 1], [], []>} : vector<128x128xbf16>, vector<128x128xbf16>, vector<128x128xf32> -> vector<128x128xf32>
    %285 = arith.addf %283, %284 : vector<128x128xf32>
    %c0_211 = arith.constant 0 : index
    %c0_212 = arith.constant 0 : index
    %286 = vector.load %arg12[%c0_211, %c0_212] : memref<128x128xf32, #tpu.memory_space<vmem>>, vector<128x128xf32>
    tpu.vector_store %arg12[%c0_211, %c0_212], %285 {strides = array<i32>} : memref<128x128xf32, #tpu.memory_space<vmem>>, vector<128x128xf32>,
    %c31 = arith.constant 31 : index
    %c0_213 = arith.constant 0 : index
    %287 = vector.load %arg10[%c31, %c0_213] : memref<192x128xf32, #tpu.memory_space<vmem>>, vector<128x128xf32>
    %288 = arith.truncf %287 : vector<128x128xf32> to vector<128x128xbf16>
    %c384_214 = arith.constant 384 : index
    %c0_215 = arith.constant 0 : index
    %289 = vector.load %arg3[%c384_214, %c0_215] : memref<1152x128xbf16, #tpu.memory_space<vmem>>, vector<128x128xbf16>
    %c0_216 = arith.constant 0 : index
    %c0_217 = arith.constant 0 : index
    %290 = vector.load %arg12[%c0_216, %c0_217] : memref<128x128xf32, #tpu.memory_space<vmem>>, vector<128x128xf32>
    %cst_218 = arith.constant dense<0.000000e+00> : vector<128x128xf32>
    %291 = tpu.matmul %288, %289, %cst_218 {dimension_numbers = #tpu.dot_dimension_numbers<[1], [0], [0], [1], [0, 0, 1, 1], [], []>} : vector<128x128xbf16>, vector<128x128xbf16>, vector<128x128xf32> -> vector<128x128xf32>
    %292 = arith.addf %290, %291 : vector<128x128xf32>
    %c0_219 = arith.constant 0 : index
    %c0_220 = arith.constant 0 : index
    %293 = vector.load %arg12[%c0_219, %c0_220] : memref<128x128xf32, #tpu.memory_space<vmem>>, vector<128x128xf32>
    tpu.vector_store %arg12[%c0_219, %c0_220], %292 {strides = array<i32>} : memref<128x128xf32, #tpu.memory_space<vmem>>, vector<128x128xf32>,
    %c32_221 = arith.constant 32 : index
    %c0_222 = arith.constant 0 : index
    %294 = vector.load %arg10[%c32_221, %c0_222] : memref<192x128xf32, #tpu.memory_space<vmem>>, vector<128x128xf32>
    %295 = arith.truncf %294 : vector<128x128xf32> to vector<128x128xbf16>
    %c512_223 = arith.constant 512 : index
    %c0_224 = arith.constant 0 : index
    %296 = vector.load %arg3[%c512_223, %c0_224] : memref<1152x128xbf16, #tpu.memory_space<vmem>>, vector<128x128xbf16>
    %c0_225 = arith.constant 0 : index
    %c0_226 = arith.constant 0 : index
    %297 = vector.load %arg12[%c0_225, %c0_226] : memref<128x128xf32, #tpu.memory_space<vmem>>, vector<128x128xf32>
    %cst_227 = arith.constant dense<0.000000e+00> : vector<128x128xf32>
    %298 = tpu.matmul %295, %296, %cst_227 {dimension_numbers = #tpu.dot_dimension_numbers<[1], [0], [0], [1], [0, 0, 1, 1], [], []>} : vector<128x128xbf16>, vector<128x128xbf16>, vector<128x128xf32> -> vector<128x128xf32>
    %299 = arith.addf %297, %298 : vector<128x128xf32>
    %c0_228 = arith.constant 0 : index
    %c0_229 = arith.constant 0 : index
    %300 = vector.load %arg12[%c0_228, %c0_229] : memref<128x128xf32, #tpu.memory_space<vmem>>, vector<128x128xf32>
    tpu.vector_store %arg12[%c0_228, %c0_229], %299 {strides = array<i32>} : memref<128x128xf32, #tpu.memory_space<vmem>>, vector<128x128xf32>,
    %c33 = arith.constant 33 : index
    %c0_230 = arith.constant 0 : index
    %301 = vector.load %arg10[%c33, %c0_230] : memref<192x128xf32, #tpu.memory_space<vmem>>, vector<128x128xf32>
    %302 = arith.truncf %301 : vector<128x128xf32> to vector<128x128xbf16>
    %c640_231 = arith.constant 640 : index
    %c0_232 = arith.constant 0 : index
    %303 = vector.load %arg3[%c640_231, %c0_232] : memref<1152x128xbf16, #tpu.memory_space<vmem>>, vector<128x128xbf16>
    %c0_233 = arith.constant 0 : index
    %c0_234 = arith.constant 0 : index
    %304 = vector.load %arg12[%c0_233, %c0_234] : memref<128x128xf32, #tpu.memory_space<vmem>>, vector<128x128xf32>
    %cst_235 = arith.constant dense<0.000000e+00> : vector<128x128xf32>
    %305 = tpu.matmul %302, %303, %cst_235 {dimension_numbers = #tpu.dot_dimension_numbers<[1], [0], [0], [1], [0, 0, 1, 1], [], []>} : vector<128x128xbf16>, vector<128x128xbf16>, vector<128x128xf32> -> vector<128x128xf32>
    %306 = arith.addf %304, %305 : vector<128x128xf32>
    %c0_236 = arith.constant 0 : index
    %c0_237 = arith.constant 0 : index
    %307 = vector.load %arg12[%c0_236, %c0_237] : memref<128x128xf32, #tpu.memory_space<vmem>>, vector<128x128xf32>
    tpu.vector_store %arg12[%c0_236, %c0_237], %306 {strides = array<i32>} : memref<128x128xf32, #tpu.memory_space<vmem>>, vector<128x128xf32>,
    %c47_238 = arith.constant 47 : index
    %c0_239 = arith.constant 0 : index
    %308 = vector.load %arg10[%c47_238, %c0_239] : memref<192x128xf32, #tpu.memory_space<vmem>>, vector<128x128xf32>
    %309 = arith.truncf %308 : vector<128x128xf32> to vector<128x128xbf16>
    %c768_240 = arith.constant 768 : index
    %c0_241 = arith.constant 0 : index
    %310 = vector.load %arg3[%c768_240, %c0_241] : memref<1152x128xbf16, #tpu.memory_space<vmem>>, vector<128x128xbf16>
    %c0_242 = arith.constant 0 : index
    %c0_243 = arith.constant 0 : index
    %311 = vector.load %arg12[%c0_242, %c0_243] : memref<128x128xf32, #tpu.memory_space<vmem>>, vector<128x128xf32>
    %cst_244 = arith.constant dense<0.000000e+00> : vector<128x128xf32>
    %312 = tpu.matmul %309, %310, %cst_244 {dimension_numbers = #tpu.dot_dimension_numbers<[1], [0], [0], [1], [0, 0, 1, 1], [], []>} : vector<128x128xbf16>, vector<128x128xbf16>, vector<128x128xf32> -> vector<128x128xf32>
    %313 = arith.addf %311, %312 : vector<128x128xf32>
    %c0_245 = arith.constant 0 : index
    %c0_246 = arith.constant 0 : index
    %314 = vector.load %arg12[%c0_245, %c0_246] : memref<128x128xf32, #tpu.memory_space<vmem>>, vector<128x128xf32>
    tpu.vector_store %arg12[%c0_245, %c0_246], %313 {strides = array<i32>} : memref<128x128xf32, #tpu.memory_space<vmem>>, vector<128x128xf32>,
    %c48_247 = arith.constant 48 : index
    %c0_248 = arith.constant 0 : index
    %315 = vector.load %arg10[%c48_247, %c0_248] : memref<192x128xf32, #tpu.memory_space<vmem>>, vector<128x128xf32>
    %316 = arith.truncf %315 : vector<128x128xf32> to vector<128x128xbf16>
    %c896_249 = arith.constant 896 : index
    %c0_250 = arith.constant 0 : index
    %317 = vector.load %arg3[%c896_249, %c0_250] : memref<1152x128xbf16, #tpu.memory_space<vmem>>, vector<128x128xbf16>
    %c0_251 = arith.constant 0 : index
    %c0_252 = arith.constant 0 : index
    %318 = vector.load %arg12[%c0_251, %c0_252] : memref<128x128xf32, #tpu.memory_space<vmem>>, vector<128x128xf32>
    %cst_253 = arith.constant dense<0.000000e+00> : vector<128x128xf32>
    %319 = tpu.matmul %316, %317, %cst_253 {dimension_numbers = #tpu.dot_dimension_numbers<[1], [0], [0], [1], [0, 0, 1, 1], [], []>} : vector<128x128xbf16>, vector<128x128xbf16>, vector<128x128xf32> -> vector<128x128xf32>
    %320 = arith.addf %318, %319 : vector<128x128xf32>
    %c0_254 = arith.constant 0 : index
    %c0_255 = arith.constant 0 : index
    %321 = vector.load %arg12[%c0_254, %c0_255] : memref<128x128xf32, #tpu.memory_space<vmem>>, vector<128x128xf32>
    tpu.vector_store %arg12[%c0_254, %c0_255], %320 {strides = array<i32>} : memref<128x128xf32, #tpu.memory_space<vmem>>, vector<128x128xf32>,
    %c49_256 = arith.constant 49 : index
    %c0_257 = arith.constant 0 : index
    %322 = vector.load %arg10[%c49_256, %c0_257] : memref<192x128xf32, #tpu.memory_space<vmem>>, vector<128x128xf32>
    %323 = arith.truncf %322 : vector<128x128xf32> to vector<128x128xbf16>
    %c1024_258 = arith.constant 1024 : index
    %c0_259 = arith.constant 0 : index
    %324 = vector.load %arg3[%c1024_258, %c0_259] : memref<1152x128xbf16, #tpu.memory_space<vmem>>, vector<128x128xbf16>
    %c0_260 = arith.constant 0 : index
    %c0_261 = arith.constant 0 : index
    %325 = vector.load %arg12[%c0_260, %c0_261] : memref<128x128xf32, #tpu.memory_space<vmem>>, vector<128x128xf32>
    %cst_262 = arith.constant dense<0.000000e+00> : vector<128x128xf32>
    %326 = tpu.matmul %323, %324, %cst_262 {dimension_numbers = #tpu.dot_dimension_numbers<[1], [0], [0], [1], [0, 0, 1, 1], [], []>} : vector<128x128xbf16>, vector<128x128xbf16>, vector<128x128xf32> -> vector<128x128xf32>
    %327 = arith.addf %325, %326 : vector<128x128xf32>
    %c0_263 = arith.constant 0 : index
    %c0_264 = arith.constant 0 : index
    %328 = vector.load %arg12[%c0_263, %c0_264] : memref<128x128xf32, #tpu.memory_space<vmem>>, vector<128x128xf32>
    tpu.vector_store %arg12[%c0_263, %c0_264], %327 {strides = array<i32>} : memref<128x128xf32, #tpu.memory_space<vmem>>, vector<128x128xf32>,
    %c0_265 = arith.constant 0 : index
    %c0_266 = arith.constant 0 : index
    %329 = vector.load %arg4[%c0_265, %c0_266] : memref<128x128xbf16, #tpu.memory_space<vmem>>, vector<128x128xbf16>
    %c0_267 = arith.constant 0 : index
    %c0_268 = arith.constant 0 : index
    %330 = vector.load %arg12[%c0_267, %c0_268] : memref<128x128xf32, #tpu.memory_space<vmem>>, vector<8x128xf32>
    %c48_269 = arith.constant 48 : index
    %c0_270 = arith.constant 0 : index
    %331 = vector.load %arg9[%c48_269, %c0_270] : memref<480x128xf32, #tpu.memory_space<vmem>>, vector<15x128xf32>
    %cst_271 = arith.constant dense<0.000000e+00> : vector<8x128xf32>
    %332 = tpu.matmul %18, %331, %cst_271 {dimension_numbers = #tpu.dot_dimension_numbers<[1], [0], [0], [1], [0, 0, 1, 1], [], []>} : vector<8x15xf32>, vector<15x128xf32>, vector<8x128xf32> -> vector<8x128xf32>
    %333 = arith.truncf %332 : vector<8x128xf32> to vector<8x128xbf16>
    %cst_272 = arith.constant dense<0.000000e+00> : vector<8x128xf32>
    %334 = tpu.matmul %333, %329, %cst_272 {dimension_numbers = #tpu.dot_dimension_numbers<[1], [0], [0], [1], [0, 0, 1, 1], [], []>} : vector<8x128xbf16>, vector<128x128xbf16>, vector<8x128xf32> -> vector<8x128xf32>
    %335 = arith.addf %330, %334 : vector<8x128xf32>
    %c0_273 = arith.constant 0 : index
    %c0_274 = arith.constant 0 : index
    %336 = vector.load %arg8[%c0_273, %c0_274] : memref<64x128xf32, #tpu.memory_space<vmem>>, vector<8x128xf32>
    tpu.vector_store %arg8[%c0_273, %c0_274], %335 {strides = array<i32>} : memref<64x128xf32, #tpu.memory_space<vmem>>, vector<8x128xf32>,
    %c16_275 = arith.constant 16 : index
    %c0_276 = arith.constant 0 : index
    %337 = vector.load %arg12[%c16_275, %c0_276] : memref<128x128xf32, #tpu.memory_space<vmem>>, vector<8x128xf32>
    %c96_277 = arith.constant 96 : index
    %c0_278 = arith.constant 0 : index
    %338 = vector.load %arg9[%c96_277, %c0_278] : memref<480x128xf32, #tpu.memory_space<vmem>>, vector<15x128xf32>
    %cst_279 = arith.constant dense<0.000000e+00> : vector<8x128xf32>
    %339 = tpu.matmul %18, %338, %cst_279 {dimension_numbers = #tpu.dot_dimension_numbers<[1], [0], [0], [1], [0, 0, 1, 1], [], []>} : vector<8x15xf32>, vector<15x128xf32>, vector<8x128xf32> -> vector<8x128xf32>
    %340 = arith.truncf %339 : vector<8x128xf32> to vector<8x128xbf16>
    %cst_280 = arith.constant dense<0.000000e+00> : vector<8x128xf32>
    %341 = tpu.matmul %340, %329, %cst_280 {dimension_numbers = #tpu.dot_dimension_numbers<[1], [0], [0], [1], [0, 0, 1, 1], [], []>} : vector<8x128xbf16>, vector<128x128xbf16>, vector<8x128xf32> -> vector<8x128xf32>
    %342 = arith.addf %337, %341 : vector<8x128xf32>
    %c8 = arith.constant 8 : index
    %c0_281 = arith.constant 0 : index
    %343 = vector.load %arg8[%c8, %c0_281] : memref<64x128xf32, #tpu.memory_space<vmem>>, vector<8x128xf32>
    tpu.vector_store %arg8[%c8, %c0_281], %342 {strides = array<i32>} : memref<64x128xf32, #tpu.memory_space<vmem>>, vector<8x128xf32>,
    %c32_282 = arith.constant 32 : index
    %c0_283 = arith.constant 0 : index
    %344 = vector.load %arg12[%c32_282, %c0_283] : memref<128x128xf32, #tpu.memory_space<vmem>>, vector<8x128xf32>
    %c144_284 = arith.constant 144 : index
    %c0_285 = arith.constant 0 : index
    %345 = vector.load %arg9[%c144_284, %c0_285] : memref<480x128xf32, #tpu.memory_space<vmem>>, vector<15x128xf32>
    %cst_286 = arith.constant dense<0.000000e+00> : vector<8x128xf32>
    %346 = tpu.matmul %18, %345, %cst_286 {dimension_numbers = #tpu.dot_dimension_numbers<[1], [0], [0], [1], [0, 0, 1, 1], [], []>} : vector<8x15xf32>, vector<15x128xf32>, vector<8x128xf32> -> vector<8x128xf32>
    %347 = arith.truncf %346 : vector<8x128xf32> to vector<8x128xbf16>
    %cst_287 = arith.constant dense<0.000000e+00> : vector<8x128xf32>
    %348 = tpu.matmul %347, %329, %cst_287 {dimension_numbers = #tpu.dot_dimension_numbers<[1], [0], [0], [1], [0, 0, 1, 1], [], []>} : vector<8x128xbf16>, vector<128x128xbf16>, vector<8x128xf32> -> vector<8x128xf32>
    %349 = arith.addf %344, %348 : vector<8x128xf32>
    %c16_288 = arith.constant 16 : index
    %c0_289 = arith.constant 0 : index
    %350 = vector.load %arg8[%c16_288, %c0_289] : memref<64x128xf32, #tpu.memory_space<vmem>>, vector<8x128xf32>
    tpu.vector_store %arg8[%c16_288, %c0_289], %349 {strides = array<i32>} : memref<64x128xf32, #tpu.memory_space<vmem>>, vector<8x128xf32>,
    %c48_290 = arith.constant 48 : index
    %c0_291 = arith.constant 0 : index
    %351 = vector.load %arg12[%c48_290, %c0_291] : memref<128x128xf32, #tpu.memory_space<vmem>>, vector<8x128xf32>
    %c192_292 = arith.constant 192 : index
    %c0_293 = arith.constant 0 : index
    %352 = vector.load %arg9[%c192_292, %c0_293] : memref<480x128xf32, #tpu.memory_space<vmem>>, vector<15x128xf32>
    %cst_294 = arith.constant dense<0.000000e+00> : vector<8x128xf32>
    %353 = tpu.matmul %18, %352, %cst_294 {dimension_numbers = #tpu.dot_dimension_numbers<[1], [0], [0], [1], [0, 0, 1, 1], [], []>} : vector<8x15xf32>, vector<15x128xf32>, vector<8x128xf32> -> vector<8x128xf32>
    %354 = arith.truncf %353 : vector<8x128xf32> to vector<8x128xbf16>
    %cst_295 = arith.constant dense<0.000000e+00> : vector<8x128xf32>
    %355 = tpu.matmul %354, %329, %cst_295 {dimension_numbers = #tpu.dot_dimension_numbers<[1], [0], [0], [1], [0, 0, 1, 1], [], []>} : vector<8x128xbf16>, vector<128x128xbf16>, vector<8x128xf32> -> vector<8x128xf32>
    %356 = arith.addf %351, %355 : vector<8x128xf32>
    %c24_296 = arith.constant 24 : index
    %c0_297 = arith.constant 0 : index
    %357 = vector.load %arg8[%c24_296, %c0_297] : memref<64x128xf32, #tpu.memory_space<vmem>>, vector<8x128xf32>
    tpu.vector_store %arg8[%c24_296, %c0_297], %356 {strides = array<i32>} : memref<64x128xf32, #tpu.memory_space<vmem>>, vector<8x128xf32>,
    %c64_298 = arith.constant 64 : index
    %c0_299 = arith.constant 0 : index
    %358 = vector.load %arg12[%c64_298, %c0_299] : memref<128x128xf32, #tpu.memory_space<vmem>>, vector<8x128xf32>
    %c240_300 = arith.constant 240 : index
    %c0_301 = arith.constant 0 : index
    %359 = vector.load %arg9[%c240_300, %c0_301] : memref<480x128xf32, #tpu.memory_space<vmem>>, vector<15x128xf32>
    %cst_302 = arith.constant dense<0.000000e+00> : vector<8x128xf32>
    %360 = tpu.matmul %18, %359, %cst_302 {dimension_numbers = #tpu.dot_dimension_numbers<[1], [0], [0], [1], [0, 0, 1, 1], [], []>} : vector<8x15xf32>, vector<15x128xf32>, vector<8x128xf32> -> vector<8x128xf32>
    %361 = arith.truncf %360 : vector<8x128xf32> to vector<8x128xbf16>
    %cst_303 = arith.constant dense<0.000000e+00> : vector<8x128xf32>
    %362 = tpu.matmul %361, %329, %cst_303 {dimension_numbers = #tpu.dot_dimension_numbers<[1], [0], [0], [1], [0, 0, 1, 1], [], []>} : vector<8x128xbf16>, vector<128x128xbf16>, vector<8x128xf32> -> vector<8x128xf32>
    %363 = arith.addf %358, %362 : vector<8x128xf32>
    %c32_304 = arith.constant 32 : index
    %c0_305 = arith.constant 0 : index
    %364 = vector.load %arg8[%c32_304, %c0_305] : memref<64x128xf32, #tpu.memory_space<vmem>>, vector<8x128xf32>
    tpu.vector_store %arg8[%c32_304, %c0_305], %363 {strides = array<i32>} : memref<64x128xf32, #tpu.memory_space<vmem>>, vector<8x128xf32>,
    %c80_306 = arith.constant 80 : index
    %c0_307 = arith.constant 0 : index
    %365 = vector.load %arg12[%c80_306, %c0_307] : memref<128x128xf32, #tpu.memory_space<vmem>>, vector<8x128xf32>
    %c288_308 = arith.constant 288 : index
    %c0_309 = arith.constant 0 : index
    %366 = vector.load %arg9[%c288_308, %c0_309] : memref<480x128xf32, #tpu.memory_space<vmem>>, vector<15x128xf32>
    %cst_310 = arith.constant dense<0.000000e+00> : vector<8x128xf32>
    %367 = tpu.matmul %18, %366, %cst_310 {dimension_numbers = #tpu.dot_dimension_numbers<[1], [0], [0], [1], [0, 0, 1, 1], [], []>} : vector<8x15xf32>, vector<15x128xf32>, vector<8x128xf32> -> vector<8x128xf32>
    %368 = arith.truncf %367 : vector<8x128xf32> to vector<8x128xbf16>
    %cst_311 = arith.constant dense<0.000000e+00> : vector<8x128xf32>
    %369 = tpu.matmul %368, %329, %cst_311 {dimension_numbers = #tpu.dot_dimension_numbers<[1], [0], [0], [1], [0, 0, 1, 1], [], []>} : vector<8x128xbf16>, vector<128x128xbf16>, vector<8x128xf32> -> vector<8x128xf32>
    %370 = arith.addf %365, %369 : vector<8x128xf32>
    %c40 = arith.constant 40 : index
    %c0_312 = arith.constant 0 : index
    %371 = vector.load %arg8[%c40, %c0_312] : memref<64x128xf32, #tpu.memory_space<vmem>>, vector<8x128xf32>
    tpu.vector_store %arg8[%c40, %c0_312], %370 {strides = array<i32>} : memref<64x128xf32, #tpu.memory_space<vmem>>, vector<8x128xf32>,
    %c96_313 = arith.constant 96 : index
    %c0_314 = arith.constant 0 : index
    %372 = vector.load %arg12[%c96_313, %c0_314] : memref<128x128xf32, #tpu.memory_space<vmem>>, vector<8x128xf32>
    %c336_315 = arith.constant 336 : index
    %c0_316 = arith.constant 0 : index
    %373 = vector.load %arg9[%c336_315, %c0_316] : memref<480x128xf32, #tpu.memory_space<vmem>>, vector<15x128xf32>
    %cst_317 = arith.constant dense<0.000000e+00> : vector<8x128xf32>
    %374 = tpu.matmul %18, %373, %cst_317 {dimension_numbers = #tpu.dot_dimension_numbers<[1], [0], [0], [1], [0, 0, 1, 1], [], []>} : vector<8x15xf32>, vector<15x128xf32>, vector<8x128xf32> -> vector<8x128xf32>
    %375 = arith.truncf %374 : vector<8x128xf32> to vector<8x128xbf16>
    %cst_318 = arith.constant dense<0.000000e+00> : vector<8x128xf32>
    %376 = tpu.matmul %375, %329, %cst_318 {dimension_numbers = #tpu.dot_dimension_numbers<[1], [0], [0], [1], [0, 0, 1, 1], [], []>} : vector<8x128xbf16>, vector<128x128xbf16>, vector<8x128xf32> -> vector<8x128xf32>
    %377 = arith.addf %372, %376 : vector<8x128xf32>
    %c48_319 = arith.constant 48 : index
    %c0_320 = arith.constant 0 : index
    %378 = vector.load %arg8[%c48_319, %c0_320] : memref<64x128xf32, #tpu.memory_space<vmem>>, vector<8x128xf32>
    tpu.vector_store %arg8[%c48_319, %c0_320], %377 {strides = array<i32>} : memref<64x128xf32, #tpu.memory_space<vmem>>, vector<8x128xf32>,
    %c112_321 = arith.constant 112 : index
    %c0_322 = arith.constant 0 : index
    %379 = vector.load %arg12[%c112_321, %c0_322] : memref<128x128xf32, #tpu.memory_space<vmem>>, vector<8x128xf32>
    %c384_323 = arith.constant 384 : index
    %c0_324 = arith.constant 0 : index
    %380 = vector.load %arg9[%c384_323, %c0_324] : memref<480x128xf32, #tpu.memory_space<vmem>>, vector<15x128xf32>
    %cst_325 = arith.constant dense<0.000000e+00> : vector<8x128xf32>
    %381 = tpu.matmul %18, %380, %cst_325 {dimension_numbers = #tpu.dot_dimension_numbers<[1], [0], [0], [1], [0, 0, 1, 1], [], []>} : vector<8x15xf32>, vector<15x128xf32>, vector<8x128xf32> -> vector<8x128xf32>
    %382 = arith.truncf %381 : vector<8x128xf32> to vector<8x128xbf16>
    %cst_326 = arith.constant dense<0.000000e+00> : vector<8x128xf32>
    %383 = tpu.matmul %382, %329, %cst_326 {dimension_numbers = #tpu.dot_dimension_numbers<[1], [0], [0], [1], [0, 0, 1, 1], [], []>} : vector<8x128xbf16>, vector<128x128xbf16>, vector<8x128xf32> -> vector<8x128xf32>
    %384 = arith.addf %379, %383 : vector<8x128xf32>
    %c56 = arith.constant 56 : index
    %c0_327 = arith.constant 0 : index
    %385 = vector.load %arg8[%c56, %c0_327] : memref<64x128xf32, #tpu.memory_space<vmem>>, vector<8x128xf32>
    tpu.vector_store %arg8[%c56, %c0_327], %384 {strides = array<i32>} : memref<64x128xf32, #tpu.memory_space<vmem>>, vector<8x128xf32>,
    return
  }
  func.func @transform_0(%arg0: i32) -> (i32, i32) {
    %c0_i32 = arith.constant 0 : i32
    %c0_i32_0 = arith.constant 0 : i32
    return %arg0, %c0_i32 : i32, i32
  }
  func.func @transform_1(%arg0: i32) -> (i32, i32) {
    %c0_i32 = arith.constant 0 : i32
    %c0_i32_0 = arith.constant 0 : i32
    %c0_i32_1 = arith.constant 0 : i32
    return %c0_i32, %c0_i32_0 : i32, i32
  }
  func.func @transform_2(%arg0: i32) -> (i32, i32) {
    %c0_i32 = arith.constant 0 : i32
    %c0_i32_0 = arith.constant 0 : i32
    %c0_i32_1 = arith.constant 0 : i32
    return %c0_i32, %c0_i32_0 : i32, i32
  }
  func.func @transform_3(%arg0: i32) -> (i32, i32) {
    %c0_i32 = arith.constant 0 : i32
    %c0_i32_0 = arith.constant 0 : i32
    %c0_i32_1 = arith.constant 0 : i32
    return %c0_i32, %c0_i32_0 : i32, i32
  }
  func.func @transform_4(%arg0: i32) -> (i32, i32) {
    %c0_i32 = arith.constant 0 : i32
    %c0_i32_0 = arith.constant 0 : i32
    %c0_i32_1 = arith.constant 0 : i32
    return %c0_i32, %c0_i32_0 : i32, i32
  }
  func.func @transform_5(%arg0: i32) -> (i32, i32) {
    %c0_i32 = arith.constant 0 : i32
    %c0_i32_0 = arith.constant 0 : i32
    %c0_i32_1 = arith.constant 0 : i32
    return %c0_i32, %c0_i32_0 : i32, i32
  }
  func.func @transform_6(%arg0: i32) -> (i32, i32) {
    %c0_i32 = arith.constant 0 : i32
    %c0_i32_0 = arith.constant 0 : i32
    %c0_i32_1 = arith.constant 0 : i32
    return %c0_i32, %c0_i32_0 : i32, i32
  }
  func.func @transform_7(%arg0: i32) -> (i32, i32) {
    %c0_i32 = arith.constant 0 : i32
    %c0_i32_0 = arith.constant 0 : i32
    return %arg0, %c0_i32 : i32, i32
  }
}

</mosaic_0001>

<llo_original>
// kernel: tpu_custom_call.1
$region0: #{tpu_custom_call.1}
  #allocation0 [shape = 'u32[]', space=smem, size = 0x4, offset = 0x4, fixed_abs, tag = 'smem constant byte address 0x4 - core index']
  #allocation1 [shape = 'u32[72,128]{1,0:T(1,128)}', space=vmem, size = 0x9000, scoped, tag = 'internal scratch']
  #allocation2 [shape = 'f32[480,128]{1,0:T(8,128)}', space=vmem, size = 0x3c000, scoped, tag = 'scratch operand']
  #allocation3 [shape = 'f32[192,128]{1,0:T(8,128)}', space=vmem, size = 0x18000, scoped, tag = 'scratch operand']
  #allocation4 [shape = 'f32[384,128]{1,0:T(8,128)}', space=vmem, size = 0x30000, scoped, tag = 'scratch operand']
  #allocation5 [shape = 'f32[128,128]{1,0:T(8,128)}', space=vmem, size = 0x10000, scoped, tag = 'scratch operand']
  %s0 = inlined_call_operand.hbm [shape: f32[512,128], index: 0, kind: input, shape index: {}]
  %s1 = inlined_call_operand.hbm [shape: bf16[1152,128], index: 1, kind: input, shape index: {}]
  %s2 = inlined_call_operand.hbm [shape: bf16[1152,128], index: 2, kind: input, shape index: {}]
  %s3 = inlined_call_operand.hbm [shape: bf16[128,128], index: 3, kind: input, shape index: {}]
  %s4 = inlined_call_operand.vmem [shape: f32[1,128], index: 4, kind: input, shape index: {}]
  %s5 = inlined_call_operand.vmem [shape: f32[1,128], index: 5, kind: input, shape index: {}]
  %s6 = inlined_call_operand.vmem [shape: f32[1,128], index: 6, kind: input, shape index: {}]
  %s7 = inlined_call_operand.hbm [shape: f32[128,128], index: 7, kind: output, shape index: {}]
  %s8 = sld [smem:[#allocation0]]
  $region77: #{tpu_custom_call.1} parent=0
    _
  %s10 = ssub.s32 1, %s8
  %s11 = scalar_select 0, %s10, %s8
  $region1: #{tpu_custom_call.1} parent=0
    #allocation6 [shape = 'u8[262144]{0}', space=vmem, size = 0x40000, scoped, tag = 'input window, operand 0']
    #allocation7 [shape = 's32[2]{0}', space=sflag, size = 0x8, scoped, tag = 'scoped memory for tpu_custom_call.1']
    #allocation8 [shape = 's32[2]{0}', space=sflag, size = 0x8, scoped, tag = 'scoped memory for tpu_custom_call.1']
    #allocation9 [shape = 'u8[294912]{0}', space=vmem, size = 0x48000, scoped, tag = 'input window, operand 1, single buffered']
    #allocation10 [shape = 's32[1]{0}', space=sflag, size = 0x4, scoped, tag = 'scoped memory for tpu_custom_call.1']
    #allocation11 [shape = 'u8[294912]{0}', space=vmem, size = 0x48000, scoped, tag = 'input window, operand 2, single buffered']
    #allocation12 [shape = 'u8[32768]{0}', space=vmem, size = 0x8000, scoped, tag = 'input window, operand 3, single buffered']
    #allocation13 [shape = 's32[1]{0}', space=sflag, size = 0x4, scoped, tag = 'scoped memory for tpu_custom_call.1']
    #allocation14 [shape = 'u8[65536]{0}', space=vmem, size = 0x10000, scoped, tag = 'output window, operand 0']
    %12 = vsyncpa [#allocation7], 0
    %s13 = scalar_lea.sflag [#allocation7], 1
    %14 = vsyncpa %s13, 0
    %15 = vsyncpa [#allocation10], 0
    %16 = vsyncpa [#allocation13], 0
    %17 = vsyncpa [#allocation8], 0
    %s18 = scalar_lea.sflag [#allocation8], 1
    %19 = vsyncpa %s18, 0
    loop: start=0, step=1, limit=4
    $region2: #{tpu_custom_call.1} parent=1 // loop_pre_header
      _
    $region3: #{tpu_custom_call.1} parent=1 // loop_header
      %s21 = sphi 0, %s25
      %p22 = scmp.ge.s32.totalorder %s21, 4
      %s31 = sphi 0, %s33
      %s34 = sphi 0, %s31
      %s35 = sphi 0, %s34
      %s51 = sphi 0, %s35
      %s55 = sphi 0, %s55
      %s57 = sphi 0, %s55
      %s58 = sphi 0, %s57
      %s72 = sphi 0, %s58
      %s76 = sphi 0, %s76
      %s78 = sphi 0, %s76
      %s79 = sphi 0, %s78
      %s93 = sphi 0, %s79
      %s97 = sphi 0, %s97
      %s99 = sphi 0, %s97
      %s100 = sphi 0, %s99
      %s114 = sphi 0, %s100
      %s118 = sphi 0, %s118
      %s120 = sphi 0, %s118
      %s121 = sphi 0, %s120
      %s135 = sphi 0, %s121
      %s139 = sphi 0, %s139
      %s141 = sphi 0, %s139
      %s142 = sphi 0, %s141
      %s156 = sphi 0, %s142
      %s160 = sphi 0, %s160
      %s162 = sphi 0, %s160
      %s163 = sphi 0, %s162
      %s177 = sphi 0, %s163
      %s183 = sphi 0, %s185
      %s186 = sphi 0, %s183
      %s187 = sphi 0, %s186
      %s203 = sphi 0, %s187
    $region4: #{tpu_custom_call.1} parent=1 // loop_header_branch
      %24 = sbr.rel (%p22) target = $region8
    $region5: #{tpu_custom_call.1} parent=1 // loop_body
      %s26 = ssub.s32 %s21, 1
      %s27 = ssub.s32 %s21, 2
      %s28 = sadd.s32 %s21, 1
      %s29 = ssub.s32 %s21, %s28
      %p30 = scmp.eq.s32.totalorder %s29, 0
      %s32 = sadd.s32 %s31, 1
      %s33 = scalar_select %p30, %s31, %s32
      %p36 = pneg %p30
      %p37 = scmp.eq.s32.totalorder %s21, 1
      %p38 = por %p36, %p37
      %p39 = scmp.ne.s32.totalorder %s31, %s34
      %p40 = scmp.eq.s32.totalorder %s21, 0
      %p41 = por %p39, %p40
      %p42 = scmp.ne.s32.totalorder %s31, %s34
      %p43 = scmp.eq.s32.totalorder %s26, 1
      %p44 = por %p42, %p43
      %p45 = scmp.ne.s32.totalorder %s34, %s35
      %p46 = scmp.eq.s32.totalorder %s26, 0
      %p47 = por %p45, %p46
      %p48 = scmp.ne.s32.totalorder %s34, %s35
      %p49 = scmp.eq.s32.totalorder %s27, 1
      %p50 = por %p48, %p49
      %p52 = scmp.ne.s32.totalorder %s35, %s51
      %p53 = scmp.eq.s32.totalorder %s27, 0
      %p54 = por %p52, %p53
      %s56 = sadd.s32 %s55, 1
      %p59 = scmp.eq.s32.totalorder %s21, 1
      %p60 = scmp.ne.s32.totalorder %s55, %s57
      %p61 = scmp.eq.s32.totalorder %s21, 0
      %p62 = por %p60, %p61
      %p63 = scmp.ne.s32.totalorder %s55, %s57
      %p64 = scmp.eq.s32.totalorder %s26, 1
      %p65 = por %p63, %p64
      %p66 = scmp.ne.s32.totalorder %s57, %s58
      %p67 = scmp.eq.s32.totalorder %s26, 0
      %p68 = por %p66, %p67
      %p69 = scmp.ne.s32.totalorder %s57, %s58
      %p70 = scmp.eq.s32.totalorder %s27, 1
      %p71 = por %p69, %p70
      %p73 = scmp.ne.s32.totalorder %s58, %s72
      %p74 = scmp.eq.s32.totalorder %s27, 0
      %p75 = por %p73, %p74
      %s77 = sadd.s32 %s76, 1
      %p80 = scmp.eq.s32.totalorder %s21, 1
      %p81 = scmp.ne.s32.totalorder %s76, %s78
      %p82 = scmp.eq.s32.totalorder %s21, 0
      %p83 = por %p81, %p82
      %p84 = scmp.ne.s32.totalorder %s76, %s78
      %p85 = scmp.eq.s32.totalorder %s26, 1
      %p86 = por %p84, %p85
      %p87 = scmp.ne.s32.totalorder %s78, %s79
      %p88 = scmp.eq.s32.totalorder %s26, 0
      %p89 = por %p87, %p88
      %p90 = scmp.ne.s32.totalorder %s78, %s79
      %p91 = scmp.eq.s32.totalorder %s27, 1
      %p92 = por %p90, %p91
      %p94 = scmp.ne.s32.totalorder %s79, %s93
      %p95 = scmp.eq.s32.totalorder %s27, 0
      %p96 = por %p94, %p95
      %s98 = sadd.s32 %s97, 1
      %p101 = scmp.eq.s32.totalorder %s21, 1
      %p102 = scmp.ne.s32.totalorder %s97, %s99
      %p103 = scmp.eq.s32.totalorder %s21, 0
      %p104 = por %p102, %p103
      %p105 = scmp.ne.s32.totalorder %s97, %s99
      %p106 = scmp.eq.s32.totalorder %s26, 1
      %p107 = por %p105, %p106
      %p108 = scmp.ne.s32.totalorder %s99, %s100
      %p109 = scmp.eq.s32.totalorder %s26, 0
      %p110 = por %p108, %p109
      %p111 = scmp.ne.s32.totalorder %s99, %s100
      %p112 = scmp.eq.s32.totalorder %s27, 1
      %p113 = por %p111, %p112
      %p115 = scmp.ne.s32.totalorder %s100, %s114
      %p116 = scmp.eq.s32.totalorder %s27, 0
      %p117 = por %p115, %p116
      %s119 = sadd.s32 %s118, 1
      %p122 = scmp.eq.s32.totalorder %s21, 1
      %p123 = scmp.ne.s32.totalorder %s118, %s120
      %p124 = scmp.eq.s32.totalorder %s21, 0
      %p125 = por %p123, %p124
      %p126 = scmp.ne.s32.totalorder %s118, %s120
      %p127 = scmp.eq.s32.totalorder %s26, 1
      %p128 = por %p126, %p127
      %p129 = scmp.ne.s32.totalorder %s120, %s121
      %p130 = scmp.eq.s32.totalorder %s26, 0
      %p131 = por %p129, %p130
      %p132 = scmp.ne.s32.totalorder %s120, %s121
      %p133 = scmp.eq.s32.totalorder %s27, 1
      %p134 = por %p132, %p133
      %p136 = scmp.ne.s32.totalorder %s121, %s135
      %p137 = scmp.eq.s32.totalorder %s27, 0
      %p138 = por %p136, %p137
      %s140 = sadd.s32 %s139, 1
      %p143 = scmp.eq.s32.totalorder %s21, 1
      %p144 = scmp.ne.s32.totalorder %s139, %s141
      %p145 = scmp.eq.s32.totalorder %s21, 0
      %p146 = por %p144, %p145
      %p147 = scmp.ne.s32.totalorder %s139, %s141
      %p148 = scmp.eq.s32.totalorder %s26, 1
      %p149 = por %p147, %p148
      %p150 = scmp.ne.s32.totalorder %s141, %s142
      %p151 = scmp.eq.s32.totalorder %s26, 0
      %p152 = por %p150, %p151
      %p153 = scmp.ne.s32.totalorder %s141, %s142
      %p154 = scmp.eq.s32.totalorder %s27, 1
      %p155 = por %p153, %p154
      %p157 = scmp.ne.s32.totalorder %s142, %s156
      %p158 = scmp.eq.s32.totalorder %s27, 0
      %p159 = por %p157, %p158
      %s161 = sadd.s32 %s160, 1
      %p164 = scmp.eq.s32.totalorder %s21, 1
      %p165 = scmp.ne.s32.totalorder %s160, %s162
      %p166 = scmp.eq.s32.totalorder %s21, 0
      %p167 = por %p165, %p166
      %p168 = scmp.ne.s32.totalorder %s160, %s162
      %p169 = scmp.eq.s32.totalorder %s26, 1
      %p170 = por %p168, %p169
      %p171 = scmp.ne.s32.totalorder %s162, %s163
      %p172 = scmp.eq.s32.totalorder %s26, 0
      %p173 = por %p171, %p172
      %p174 = scmp.ne.s32.totalorder %s162, %s163
      %p175 = scmp.eq.s32.totalorder %s27, 1
      %p176 = por %p174, %p175
      %p178 = scmp.ne.s32.totalorder %s163, %s177
      %p179 = scmp.eq.s32.totalorder %s27, 0
      %p180 = por %p178, %p179
      %s181 = ssub.s32 %s21, %s28
      %p182 = scmp.eq.s32.totalorder %s181, 0
      %s184 = sadd.s32 %s183, 1
      %s185 = scalar_select %p182, %s183, %s184
      %p188 = pneg %p182
      %p189 = scmp.eq.s32.totalorder %s21, 1
      %p190 = por %p188, %p189
      %p191 = scmp.ne.s32.totalorder %s183, %s186
      %p192 = scmp.eq.s32.totalorder %s21, 0
      %p193 = por %p191, %p192
      %p194 = scmp.ne.s32.totalorder %s183, %s186
      %p195 = scmp.eq.s32.totalorder %s26, 1
      %p196 = por %p194, %p195
      %p197 = scmp.ne.s32.totalorder %s186, %s187
      %p198 = scmp.eq.s32.totalorder %s26, 0
      %p199 = por %p197, %p198
      %p200 = scmp.ne.s32.totalorder %s186, %s187
      %p201 = scmp.eq.s32.totalorder %s27, 1
      %p202 = por %p200, %p201
      %p204 = scmp.ne.s32.totalorder %s187, %s203
      %p205 = scmp.eq.s32.totalorder %s27, 0
      %p206 = por %p204, %p205
      %p207 = scmp.le.s32.totalorder 1, %s21
      %p208 = scmp.lt.s32.totalorder %s21, 3
      %p209 = pnand %p207, %p208
      %p210 = pneg %p209
      // Predicated region
      $region9: #{tpu_custom_call.1} parent=5 // pred_check
        _
      $region10: #{tpu_custom_call.1} parent=5 // pred_check_branch
        %212 = sbr.rel (%p209) target = $region12
      $region11: #{tpu_custom_call.1} parent=5 // pred_region
        %s213 = ssub.s32 %s21, 1
        // Predicated region
        $region13: #{tpu_custom_call.1} parent=11 // pred_check
          %p214 = pneg %p68
        $region14: #{tpu_custom_call.1} parent=11 // pred_check_branch
          %216 = sbr.rel (%p214) target = $region16
        $region15: #{tpu_custom_call.1} parent=11 // pred_region
          %218 = vsyncadd [#allocation10], 0
          %s219 = sshll.u32 %s1, 4
          %s220 = int_to_ptr.hbm [resolvable:$true] %s219
          %s221 = sshll.u32 [#allocation9], 4
          %s222 = int_to_ptr.vmem [resolvable:$true] %s221
          %227 = dma.hbm_to_vmem [thread:$0]  %s220, 9216, %s222, [#allocation10], 64, 64, 4
        $region16: #{tpu_custom_call.1} parent=11 // pred_fallthru
          _
        // Predicated region
        $region17: #{tpu_custom_call.1} parent=11 // pred_check
          %p228 = pneg %p89
        $region18: #{tpu_custom_call.1} parent=11 // pred_check_branch
          %230 = sbr.rel (%p228) target = $region20
        $region19: #{tpu_custom_call.1} parent=11 // pred_region
          %232 = vsyncadd [#allocation10], 0
          %s233 = sshll.u32 %s2, 4
          %s234 = int_to_ptr.hbm [resolvable:$true] %s233
          %s235 = sshll.u32 [#allocation11], 4
          %s236 = int_to_ptr.vmem [resolvable:$true] %s235
          %241 = dma.hbm_to_vmem [thread:$0]  %s234, 9216, %s236, [#allocation10], 64, 64, 4
        $region20: #{tpu_custom_call.1} parent=11 // pred_fallthru
          _
        // Predicated region
        $region21: #{tpu_custom_call.1} parent=11 // pred_check
          %p242 = pneg %p110
        $region22: #{tpu_custom_call.1} parent=11 // pred_check_branch
          %244 = sbr.rel (%p242) target = $region24
        $region23: #{tpu_custom_call.1} parent=11 // pred_region
          %246 = vsyncadd [#allocation13], 0
          %s247 = sshll.u32 %s3, 4
          %s248 = int_to_ptr.hbm [resolvable:$true] %s247
          %s249 = sshll.u32 [#allocation12], 4
          %s250 = int_to_ptr.vmem [resolvable:$true] %s249
          %255 = dma.hbm_to_vmem [thread:$0]  %s248, 1024, %s250, [#allocation13], 64, 64, 4
        $region24: #{tpu_custom_call.1} parent=11 // pred_fallthru
          _
        // Predicated region
        $region25: #{tpu_custom_call.1} parent=11 // pred_check
          %p256 = pneg %p131
        $region26: #{tpu_custom_call.1} parent=11 // pred_check_branch
          %258 = sbr.rel (%p256) target = $region28
        $region27: #{tpu_custom_call.1} parent=11 // pred_region
          _
        $region28: #{tpu_custom_call.1} parent=11 // pred_fallthru
          _
        // Predicated region
        $region29: #{tpu_custom_call.1} parent=11 // pred_check
          %p259 = pneg %p152
        $region30: #{tpu_custom_call.1} parent=11 // pred_check_branch
          %261 = sbr.rel (%p259) target = $region32
        $region31: #{tpu_custom_call.1} parent=11 // pred_region
          _
        $region32: #{tpu_custom_call.1} parent=11 // pred_fallthru
          _
        // Predicated region
        $region33: #{tpu_custom_call.1} parent=11 // pred_check
          %p262 = pneg %p173
        $region34: #{tpu_custom_call.1} parent=11 // pred_check_branch
          %264 = sbr.rel (%p262) target = $region36
        $region35: #{tpu_custom_call.1} parent=11 // pred_region
          _
        $region36: #{tpu_custom_call.1} parent=11 // pred_fallthru
          _
      $region12: #{tpu_custom_call.1} parent=5 // pred_fallthru
        _
      %p265 = scmp.lt.s32.totalorder %s21, 2
      // Predicated region
      $region37: #{tpu_custom_call.1} parent=5 // pred_check
        %p266 = pneg %p265
      $region38: #{tpu_custom_call.1} parent=5 // pred_check_branch
        %268 = sbr.rel (%p266) target = $region40
      $region39: #{tpu_custom_call.1} parent=5 // pred_region
        // Predicated region
        $region41: #{tpu_custom_call.1} parent=39 // pred_check
          %p269 = pneg %p41
        $region42: #{tpu_custom_call.1} parent=39 // pred_check_branch
          %271 = sbr.rel (%p269) target = $region44
        $region43: #{tpu_custom_call.1} parent=39 // pred_region
          %s272 = sand.u32 %s31, 1
          %s273 = scalar_lea.sflag [#allocation7], %s272
          %s274 = sand.u32 %s31, 1
          %s275 = smul.addr %s274, 256
          %s276 = scalar_lea.vmem [#allocation6], %s275
          %s277 = smul.u32 32, %s21
          %279 = vsyncadd %s273, 0
          %s280 = smul.addr %s277, 8
          %s281 = scalar_lea.hbm %s0, %s280
          %s282 = sshll.u32 %s281, 4
          %s283 = int_to_ptr.hbm [resolvable:$true] %s282
          %s284 = sshll.u32 %s276, 4
          %s285 = int_to_ptr.vmem [resolvable:$true] %s284
          %290 = dma.hbm_to_vmem [thread:$0]  %s283, 4096, %s285, %s273, 128, 128, 8
        $region44: #{tpu_custom_call.1} parent=39 // pred_fallthru
          _
      $region40: #{tpu_custom_call.1} parent=5 // pred_fallthru
        _
      %p291 = scmp.le.s32.totalorder 1, %s21
      %p292 = scmp.lt.s32.totalorder %s21, 3
      %p293 = pnand %p291, %p292
      %p294 = pneg %p293
      // Predicated region
      $region45: #{tpu_custom_call.1} parent=5 // pred_check
        _
      $region46: #{tpu_custom_call.1} parent=5 // pred_check_branch
        %296 = sbr.rel (%p293) target = $region48
      $region47: #{tpu_custom_call.1} parent=5 // pred_region
        %s297 = ssub.s32 %s21, 1
        %s298 = sand.u32 %s34, 1
        %s299 = scalar_lea.sflag [#allocation7], %s298
        %s300 = sand.u32 %s34, 1
        %s301 = smul.addr %s300, 256
        %s302 = scalar_lea.vmem [#allocation6], %s301
        // Predicated region
        $region49: #{tpu_custom_call.1} parent=47 // pred_check
          %p303 = pneg %p47
        $region50: #{tpu_custom_call.1} parent=47 // pred_check_branch
          %305 = sbr.rel (%p303) target = $region52
        $region51: #{tpu_custom_call.1} parent=47 // pred_region
          %307 = dma.done %s299, 4096
        $region52: #{tpu_custom_call.1} parent=47 // pred_fallthru
          _
        // Predicated region
        $region53: #{tpu_custom_call.1} parent=47 // pred_check
          %p308 = pneg %p68
        $region54: #{tpu_custom_call.1} parent=47 // pred_check_branch
          %310 = sbr.rel (%p308) target = $region56
        $region55: #{tpu_custom_call.1} parent=47 // pred_region
          %312 = dma.done [#allocation10], 9216
        $region56: #{tpu_custom_call.1} parent=47 // pred_fallthru
          _
        // Predicated region
        $region57: #{tpu_custom_call.1} parent=47 // pred_check
          %p313 = pneg %p89
        $region58: #{tpu_custom_call.1} parent=47 // pred_check_branch
          %315 = sbr.rel (%p313) target = $region60
        $region59: #{tpu_custom_call.1} parent=47 // pred_region
          %317 = dma.done [#allocation10], 9216
        $region60: #{tpu_custom_call.1} parent=47 // pred_fallthru
          _
        // Predicated region
        $region61: #{tpu_custom_call.1} parent=47 // pred_check
          %p318 = pneg %p110
        $region62: #{tpu_custom_call.1} parent=47 // pred_check_branch
          %320 = sbr.rel (%p318) target = $region64
        $region63: #{tpu_custom_call.1} parent=47 // pred_region
          %322 = dma.done [#allocation13], 1024
        $region64: #{tpu_custom_call.1} parent=47 // pred_fallthru
          _
        %s323 = sand.u32 %s34, 1
        %s324 = scalar_lea.sflag [#allocation7], %s323
        %s325 = sand.u32 %s34, 1
        %s326 = smul.addr %s325, 256
        %s327 = scalar_lea.vmem [#allocation6], %s326
        %p328 = pneg %p47
        %p329 = pneg %p44
        %p330 = pneg %p68
        %p331 = pneg %p65
        %p332 = pneg %p89
        %p333 = pneg %p86
        %p334 = pneg %p110
        %p335 = pneg %p107
        %p336 = pneg %p131
        %p337 = pneg %p128
        %p338 = pneg %p152
        %p339 = pneg %p149
        %p340 = pneg %p173
        %p341 = pneg %p170
        %p342 = pneg %p199
        %p343 = pneg %p196
        %s344 = sand.u32 %s186, 1
        %s345 = scalar_lea.sflag [#allocation8], %s344
        %s346 = sand.u32 %s186, 1
        %s347 = smul.addr %s346, 64
        %s348 = scalar_lea.vmem [#allocation14], %s347
        %s349 = smul.u32 32, %s26
        %s350 = smul.u32 8, %s26
        %351 = vst [vmem:[#allocation2] sm:$0xff] 0.0
        %352 = vst [vmem:[#allocation2 + $0x8] sm:$0xff] 0.0
        %353 = vst [vmem:[#allocation2 + $0x10] sm:$0xff] 0.0
        %354 = vst [vmem:[#allocation2 + $0x18] sm:$0xff] 0.0
        %355 = vst [vmem:[#allocation2 + $0x20] sm:$0xff] 0.0
        %356 = vst [vmem:[#allocation2 + $0x28] sm:$0xff] 0.0
        %357 = vst [vmem:[#allocation2 + $0x30] sm:$0xff] 0.0
        %358 = vst [vmem:[#allocation2 + $0x38] sm:$0xff] 0.0
        %359 = vst [vmem:[#allocation2 + $0x40] sm:$0xff] 0.0
        %360 = vst [vmem:[#allocation2 + $0x48] sm:$0xff] 0.0
        %361 = vst [vmem:[#allocation2 + $0x50] sm:$0xff] 0.0
        %362 = vst [vmem:[#allocation2 + $0x58] sm:$0xff] 0.0
        %363 = vst [vmem:[#allocation2 + $0x60] sm:$0xff] 0.0
        %364 = vst [vmem:[#allocation2 + $0x68] sm:$0xff] 0.0
        %365 = vst [vmem:[#allocation2 + $0x70] sm:$0xff] 0.0
        %366 = vst [vmem:[#allocation2 + $0x78] sm:$0xff] 0.0
        %367 = vst [vmem:[#allocation2 + $0x80] sm:$0xff] 0.0
        %368 = vst [vmem:[#allocation2 + $0x88] sm:$0xff] 0.0
        %369 = vst [vmem:[#allocation2 + $0x90] sm:$0xff] 0.0
        %370 = vst [vmem:[#allocation2 + $0x98] sm:$0xff] 0.0
        %371 = vst [vmem:[#allocation2 + $0xa0] sm:$0xff] 0.0
        %372 = vst [vmem:[#allocation2 + $0xa8] sm:$0xff] 0.0
        %373 = vst [vmem:[#allocation2 + $0xb0] sm:$0xff] 0.0
        %374 = vst [vmem:[#allocation2 + $0xb8] sm:$0xff] 0.0
        %375 = vst [vmem:[#allocation2 + $0xc0] sm:$0xff] 0.0
        %376 = vst [vmem:[#allocation2 + $0xc8] sm:$0xff] 0.0
        %377 = vst [vmem:[#allocation2 + $0xd0] sm:$0xff] 0.0
        %378 = vst [vmem:[#allocation2 + $0xd8] sm:$0xff] 0.0
        %379 = vst [vmem:[#allocation2 + $0xe0] sm:$0xff] 0.0
        %380 = vst [vmem:[#allocation2 + $0xe8] sm:$0xff] 0.0
        %381 = vst [vmem:[#allocation2 + $0xf0] sm:$0xff] 0.0
        %382 = vst [vmem:[#allocation2 + $0xf8] sm:$0xff] 0.0
        %383 = vst [vmem:[#allocation2 + $0x100] sm:$0xff] 0.0
        %384 = vst [vmem:[#allocation2 + $0x108] sm:$0xff] 0.0
        %385 = vst [vmem:[#allocation2 + $0x110] sm:$0xff] 0.0
        %386 = vst [vmem:[#allocation2 + $0x118] sm:$0xff] 0.0
        %387 = vst [vmem:[#allocation2 + $0x120] sm:$0xff] 0.0
        %388 = vst [vmem:[#allocation2 + $0x128] sm:$0xff] 0.0
        %389 = vst [vmem:[#allocation2 + $0x130] sm:$0xff] 0.0
        %390 = vst [vmem:[#allocation2 + $0x138] sm:$0xff] 0.0
        %391 = vst [vmem:[#allocation2 + $0x140] sm:$0xff] 0.0
        %392 = vst [vmem:[#allocation2 + $0x148] sm:$0xff] 0.0
        %393 = vst [vmem:[#allocation2 + $0x150] sm:$0xff] 0.0
        %394 = vst [vmem:[#allocation2 + $0x158] sm:$0xff] 0.0
        %395 = vst [vmem:[#allocation2 + $0x160] sm:$0xff] 0.0
        %396 = vst [vmem:[#allocation2 + $0x168] sm:$0xff] 0.0
        %397 = vst [vmem:[#allocation2 + $0x170] sm:$0xff] 0.0
        %398 = vst [vmem:[#allocation2 + $0x178] sm:$0xff] 0.0
        %399 = vst [vmem:[#allocation2 + $0x180] sm:$0xff] 0.0
        %400 = vst [vmem:[#allocation2 + $0x188] sm:$0xff] 0.0
        %401 = vst [vmem:[#allocation2 + $0x190] sm:$0xff] 0.0
        %402 = vst [vmem:[#allocation2 + $0x198] sm:$0xff] 0.0
        %403 = vst [vmem:[#allocation2 + $0x1a0] sm:$0xff] 0.0
        %404 = vst [vmem:[#allocation2 + $0x1a8] sm:$0xff] 0.0
        %405 = vst [vmem:[#allocation2 + $0x1b0] sm:$0xff] 0.0
        %406 = vst [vmem:[#allocation2 + $0x1b8] sm:$0xff] 0.0
        %407 = vst [vmem:[#allocation2 + $0x1c0] sm:$0xff] 0.0
        %408 = vst [vmem:[#allocation2 + $0x1c8] sm:$0xff] 0.0
        %409 = vst [vmem:[#allocation2 + $0x1d0] sm:$0xff] 0.0
        %410 = vst [vmem:[#allocation2 + $0x1d8] sm:$0xff] 0.0
        %411 = vst [vmem:[#allocation3] sm:$0xff] 0.0
        %412 = vst [vmem:[#allocation3 + $0x8] sm:$0xff] 0.0
        %413 = vst [vmem:[#allocation3 + $0x10] sm:$0xff] 0.0
        %414 = vst [vmem:[#allocation3 + $0x18] sm:$0xff] 0.0
        %415 = vst [vmem:[#allocation3 + $0x20] sm:$0xff] 0.0
        %416 = vst [vmem:[#allocation3 + $0x28] sm:$0xff] 0.0
        %417 = vst [vmem:[#allocation3 + $0x30] sm:$0xff] 0.0
        %418 = vst [vmem:[#allocation3 + $0x38] sm:$0xff] 0.0
        %419 = vst [vmem:[#allocation3 + $0x40] sm:$0xff] 0.0
        %420 = vst [vmem:[#allocation3 + $0x48] sm:$0xff] 0.0
        %421 = vst [vmem:[#allocation3 + $0x50] sm:$0xff] 0.0
        %422 = vst [vmem:[#allocation3 + $0x58] sm:$0xff] 0.0
        %423 = vst [vmem:[#allocation3 + $0x60] sm:$0xff] 0.0
        %424 = vst [vmem:[#allocation3 + $0x68] sm:$0xff] 0.0
        %425 = vst [vmem:[#allocation3 + $0x70] sm:$0xff] 0.0
        %426 = vst [vmem:[#allocation3 + $0x78] sm:$0xff] 0.0
        %427 = vst [vmem:[#allocation3 + $0x80] sm:$0xff] 0.0
        %428 = vst [vmem:[#allocation3 + $0x88] sm:$0xff] 0.0
        %429 = vst [vmem:[#allocation3 + $0x90] sm:$0xff] 0.0
        %430 = vst [vmem:[#allocation3 + $0x98] sm:$0xff] 0.0
        %431 = vst [vmem:[#allocation3 + $0xa0] sm:$0xff] 0.0
        %432 = vst [vmem:[#allocation3 + $0xa8] sm:$0xff] 0.0
        %433 = vst [vmem:[#allocation3 + $0xb0] sm:$0xff] 0.0
        %434 = vst [vmem:[#allocation3 + $0xb8] sm:$0xff] 0.0
        %435 = vst [vmem:[#allocation4] sm:$0xff] 0.0
        %436 = vst [vmem:[#allocation4 + $0x8] sm:$0xff] 0.0
        %437 = vst [vmem:[#allocation4 + $0x10] sm:$0xff] 0.0
        %438 = vst [vmem:[#allocation4 + $0x18] sm:$0xff] 0.0
        %439 = vst [vmem:[#allocation4 + $0x20] sm:$0xff] 0.0
        %440 = vst [vmem:[#allocation4 + $0x28] sm:$0xff] 0.0
        %441 = vst [vmem:[#allocation4 + $0x30] sm:$0xff] 0.0
        %442 = vst [vmem:[#allocation4 + $0x38] sm:$0xff] 0.0
        %443 = vst [vmem:[#allocation4 + $0x40] sm:$0xff] 0.0
        %444 = vst [vmem:[#allocation4 + $0x48] sm:$0xff] 0.0
        %445 = vst [vmem:[#allocation4 + $0x50] sm:$0xff] 0.0
        %446 = vst [vmem:[#allocation4 + $0x58] sm:$0xff] 0.0
        %447 = vst [vmem:[#allocation4 + $0x60] sm:$0xff] 0.0
        %448 = vst [vmem:[#allocation4 + $0x68] sm:$0xff] 0.0
        %449 = vst [vmem:[#allocation4 + $0x70] sm:$0xff] 0.0
        %450 = vst [vmem:[#allocation4 + $0x78] sm:$0xff] 0.0
        %451 = vst [vmem:[#allocation4 + $0x80] sm:$0xff] 0.0
        %452 = vst [vmem:[#allocation4 + $0x88] sm:$0xff] 0.0
        %453 = vst [vmem:[#allocation4 + $0x90] sm:$0xff] 0.0
        %454 = vst [vmem:[#allocation4 + $0x98] sm:$0xff] 0.0
        %455 = vst [vmem:[#allocation4 + $0xa0] sm:$0xff] 0.0
        %456 = vst [vmem:[#allocation4 + $0xa8] sm:$0xff] 0.0
        %457 = vst [vmem:[#allocation4 + $0xb0] sm:$0xff] 0.0
        %458 = vst [vmem:[#allocation4 + $0xb8] sm:$0xff] 0.0
        %459 = vst [vmem:[#allocation4 + $0xc0] sm:$0xff] 0.0
        %460 = vst [vmem:[#allocation4 + $0xc8] sm:$0xff] 0.0
        %461 = vst [vmem:[#allocation4 + $0xd0] sm:$0xff] 0.0
        %462 = vst [vmem:[#allocation4 + $0xd8] sm:$0xff] 0.0
        %463 = vst [vmem:[#allocation4 + $0xe0] sm:$0xff] 0.0
        %464 = vst [vmem:[#allocation4 + $0xe8] sm:$0xff] 0.0
        %465 = vst [vmem:[#allocation4 + $0xf0] sm:$0xff] 0.0
        %466 = vst [vmem:[#allocation4 + $0xf8] sm:$0xff] 0.0
        %467 = vst [vmem:[#allocation4 + $0x100] sm:$0xff] 0.0
        %468 = vst [vmem:[#allocation4 + $0x108] sm:$0xff] 0.0
        %469 = vst [vmem:[#allocation4 + $0x110] sm:$0xff] 0.0
        %470 = vst [vmem:[#allocation4 + $0x118] sm:$0xff] 0.0
        %471 = vst [vmem:[#allocation4 + $0x120] sm:$0xff] 0.0
        %472 = vst [vmem:[#allocation4 + $0x128] sm:$0xff] 0.0
        %473 = vst [vmem:[#allocation4 + $0x130] sm:$0xff] 0.0
        %474 = vst [vmem:[#allocation4 + $0x138] sm:$0xff] 0.0
        %475 = vst [vmem:[#allocation4 + $0x140] sm:$0xff] 0.0
        %476 = vst [vmem:[#allocation4 + $0x148] sm:$0xff] 0.0
        %477 = vst [vmem:[#allocation4 + $0x150] sm:$0xff] 0.0
        %478 = vst [vmem:[#allocation4 + $0x158] sm:$0xff] 0.0
        %479 = vst [vmem:[#allocation4 + $0x160] sm:$0xff] 0.0
        %480 = vst [vmem:[#allocation4 + $0x168] sm:$0xff] 0.0
        %481 = vst [vmem:[#allocation4 + $0x170] sm:$0xff] 0.0
        %482 = vst [vmem:[#allocation4 + $0x178] sm:$0xff] 0.0
        %483 = vst [vmem:[#allocation5] sm:$0xff] 0.0
        %484 = vst [vmem:[#allocation5 + $0x8] sm:$0xff] 0.0
        %485 = vst [vmem:[#allocation5 + $0x10] sm:$0xff] 0.0
        %486 = vst [vmem:[#allocation5 + $0x18] sm:$0xff] 0.0
        %487 = vst [vmem:[#allocation5 + $0x20] sm:$0xff] 0.0
        %488 = vst [vmem:[#allocation5 + $0x28] sm:$0xff] 0.0
        %489 = vst [vmem:[#allocation5 + $0x30] sm:$0xff] 0.0
        %490 = vst [vmem:[#allocation5 + $0x38] sm:$0xff] 0.0
        %491 = vst [vmem:[#allocation5 + $0x40] sm:$0xff] 0.0
        %492 = vst [vmem:[#allocation5 + $0x48] sm:$0xff] 0.0
        %493 = vst [vmem:[#allocation5 + $0x50] sm:$0xff] 0.0
        %494 = vst [vmem:[#allocation5 + $0x58] sm:$0xff] 0.0
        %495 = vst [vmem:[#allocation5 + $0x60] sm:$0xff] 0.0
        %496 = vst [vmem:[#allocation5 + $0x68] sm:$0xff] 0.0
        %497 = vst [vmem:[#allocation5 + $0x70] sm:$0xff] 0.0
        %498 = vst [vmem:[#allocation5 + $0x78] sm:$0xff] 0.0
        %v499 = vld [vmem:[%s4] sm:$0x1]
        %v500 = vld [vmem:[%s5] sm:$0x1]
        %v501 = vld [vmem:[%s6] sm:$0x1]
        %v502 = vlaneseq
        %v503 = vshrl.u32 %v502, 7
        %v504 = vlaneseq
        %v505 = vand.u32 %v504, 127
        %v506 = vmul.u32 %v503, 2
        %vm507 = vcmp.eq.s32.totalorder %v505, %v506
        %v508 = vsel %vm507, 1.0, 0.0
        %v509 = vld [vmem:[%s302] sm:$0xff]
        %v510 = vld [vmem:[%s302 + $0x8] sm:$0xff]
        %v512 = vperm.slane %v499, 0
        %v514 = vmul.f32 %v509, %v512
        %v515 = vmul.f32 %v510, %v512
        %v517 = vperm.slane %v500, 0
        %v519 = vadd.f32 %v514, %v517
        %v520 = vadd.f32 %v515, %v517
        %v521 = vmax.f32 %v519, 0.0
        %v522 = vmax.f32 %v520, 0.0
        %523 = vst [vmem:[#allocation2 + $0x30] sm:$0xff] %v521
        %524 = vst [vmem:[#allocation2 + $0x38] sm:$0xff] %v522
        %v525 = vld [vmem:[%s302 + $0x10] sm:$0xff]
        %v526 = vld [vmem:[%s302 + $0x18] sm:$0xff]
        %v527 = vmul.f32 %v525, %v512
        %v528 = vmul.f32 %v526, %v512
        %v529 = vadd.f32 %v527, %v517
        %v530 = vadd.f32 %v528, %v517
        %v531 = vmax.f32 %v529, 0.0
        %v532 = vmax.f32 %v530, 0.0
        %533 = vst [vmem:[#allocation2 + $0x48] sm:$0xff] %v531
        %534 = vst [vmem:[#allocation2 + $0x50] sm:$0xff] %v532
        %v535 = vld [vmem:[%s302 + $0x20] sm:$0xff]
        %v536 = vld [vmem:[%s302 + $0x28] sm:$0xff]
        %v537 = vmul.f32 %v535, %v512
        %v538 = vmul.f32 %v536, %v512
        %v539 = vadd.f32 %v537, %v517
        %v540 = vadd.f32 %v538, %v517
        %v541 = vmax.f32 %v539, 0.0
        %v542 = vmax.f32 %v540, 0.0
        %543 = vst [vmem:[#allocation2 + $0x60] sm:$0xff] %v541
        %544 = vst [vmem:[#allocation2 + $0x68] sm:$0xff] %v542
        %v545 = vld [vmem:[%s302 + $0x30] sm:$0xff]
        %v546 = vld [vmem:[%s302 + $0x38] sm:$0xff]
        %v547 = vmul.f32 %v545, %v512
        %v548 = vmul.f32 %v546, %v512
        %v549 = vadd.f32 %v547, %v517
        %v550 = vadd.f32 %v548, %v517
        %v551 = vmax.f32 %v549, 0.0
        %v552 = vmax.f32 %v550, 0.0
        %553 = vst [vmem:[#allocation2 + $0x78] sm:$0xff] %v551
        %554 = vst [vmem:[#allocation2 + $0x80] sm:$0xff] %v552
        %v555 = vld [vmem:[%s302 + $0x40] sm:$0xff]
        %v556 = vld [vmem:[%s302 + $0x48] sm:$0xff]
        %v557 = vmul.f32 %v555, %v512
        %v558 = vmul.f32 %v556, %v512
        %v559 = vadd.f32 %v557, %v517
        %v560 = vadd.f32 %v558, %v517
        %v561 = vmax.f32 %v559, 0.0
        %v562 = vmax.f32 %v560, 0.0
        %563 = vst [vmem:[#allocation2 + $0x90] sm:$0xff] %v561
        %564 = vst [vmem:[#allocation2 + $0x98] sm:$0xff] %v562
        %v565 = vld [vmem:[%s302 + $0x50] sm:$0xff]
        %v566 = vld [vmem:[%s302 + $0x58] sm:$0xff]
        %v567 = vmul.f32 %v565, %v512
        %v568 = vmul.f32 %v566, %v512
        %v569 = vadd.f32 %v567, %v517
        %v570 = vadd.f32 %v568, %v517
        %v571 = vmax.f32 %v569, 0.0
        %v572 = vmax.f32 %v570, 0.0
        %573 = vst [vmem:[#allocation2 + $0xa8] sm:$0xff] %v571
        %574 = vst [vmem:[#allocation2 + $0xb0] sm:$0xff] %v572
        %v575 = vld [vmem:[%s302 + $0x60] sm:$0xff]
        %v576 = vld [vmem:[%s302 + $0x68] sm:$0xff]
        %v577 = vmul.f32 %v575, %v512
        %v578 = vmul.f32 %v576, %v512
        %v579 = vadd.f32 %v577, %v517
        %v580 = vadd.f32 %v578, %v517
        %v581 = vmax.f32 %v579, 0.0
        %v582 = vmax.f32 %v580, 0.0
        %583 = vst [vmem:[#allocation2 + $0xc0] sm:$0xff] %v581
        %584 = vst [vmem:[#allocation2 + $0xc8] sm:$0xff] %v582
        %v585 = vld [vmem:[%s302 + $0x70] sm:$0xff]
        %v586 = vld [vmem:[%s302 + $0x78] sm:$0xff]
        %v587 = vmul.f32 %v585, %v512
        %v588 = vmul.f32 %v586, %v512
        %v589 = vadd.f32 %v587, %v517
        %v590 = vadd.f32 %v588, %v517
        %v591 = vmax.f32 %v589, 0.0
        %v592 = vmax.f32 %v590, 0.0
        %593 = vst [vmem:[#allocation2 + $0xd8] sm:$0xff] %v591
        %594 = vst [vmem:[#allocation2 + $0xe0] sm:$0xff] %v592
        %v595 = vld [vmem:[%s302 + $0x80] sm:$0xff]
        %v596 = vld [vmem:[%s302 + $0x88] sm:$0xff]
        %v597 = vmul.f32 %v595, %v512
        %v598 = vmul.f32 %v596, %v512
        %v599 = vadd.f32 %v597, %v517
        %v600 = vadd.f32 %v598, %v517
        %v601 = vmax.f32 %v599, 0.0
        %v602 = vmax.f32 %v600, 0.0
        %603 = vst [vmem:[#allocation2 + $0xf0] sm:$0xff] %v601
        %604 = vst [vmem:[#allocation2 + $0xf8] sm:$0xff] %v602
        %v605 = vld [vmem:[%s302 + $0x90] sm:$0xff]
        %v606 = vld [vmem:[%s302 + $0x98] sm:$0xff]
        %v607 = vmul.f32 %v605, %v512
        %v608 = vmul.f32 %v606, %v512
        %v609 = vadd.f32 %v607, %v517
        %v610 = vadd.f32 %v608, %v517
        %v611 = vmax.f32 %v609, 0.0
        %v612 = vmax.f32 %v610, 0.0
        %613 = vst [vmem:[#allocation2 + $0x108] sm:$0xff] %v611
        %614 = vst [vmem:[#allocation2 + $0x110] sm:$0xff] %v612
        %v615 = vld [vmem:[%s302 + $0xa0] sm:$0xff]
        %v616 = vld [vmem:[%s302 + $0xa8] sm:$0xff]
        %v617 = vmul.f32 %v615, %v512
        %v618 = vmul.f32 %v616, %v512
        %v619 = vadd.f32 %v617, %v517
        %v620 = vadd.f32 %v618, %v517
        %v621 = vmax.f32 %v619, 0.0
        %v622 = vmax.f32 %v620, 0.0
        %623 = vst [vmem:[#allocation2 + $0x120] sm:$0xff] %v621
        %624 = vst [vmem:[#allocation2 + $0x128] sm:$0xff] %v622
        %v625 = vld [vmem:[%s302 + $0xb0] sm:$0xff]
        %v626 = vld [vmem:[%s302 + $0xb8] sm:$0xff]
        %v627 = vmul.f32 %v625, %v512
        %v628 = vmul.f32 %v626, %v512
        %v629 = vadd.f32 %v627, %v517
        %v630 = vadd.f32 %v628, %v517
        %v631 = vmax.f32 %v629, 0.0
        %v632 = vmax.f32 %v630, 0.0
        %633 = vst [vmem:[#allocation2 + $0x138] sm:$0xff] %v631
        %634 = vst [vmem:[#allocation2 + $0x140] sm:$0xff] %v632
        %v635 = vld [vmem:[%s302 + $0xc0] sm:$0xff]
        %v636 = vld [vmem:[%s302 + $0xc8] sm:$0xff]
        %v637 = vmul.f32 %v635, %v512
        %v638 = vmul.f32 %v636, %v512
        %v639 = vadd.f32 %v637, %v517
        %v640 = vadd.f32 %v638, %v517
        %v641 = vmax.f32 %v639, 0.0
        %v642 = vmax.f32 %v640, 0.0
        %643 = vst [vmem:[#allocation2 + $0x150] sm:$0xff] %v641
        %644 = vst [vmem:[#allocation2 + $0x158] sm:$0xff] %v642
        %v645 = vld [vmem:[%s302 + $0xd0] sm:$0xff]
        %v646 = vld [vmem:[%s302 + $0xd8] sm:$0xff]
        %v647 = vmul.f32 %v645, %v512
        %v648 = vmul.f32 %v646, %v512
        %v649 = vadd.f32 %v647, %v517
        %v650 = vadd.f32 %v648, %v517
        %v651 = vmax.f32 %v649, 0.0
        %v652 = vmax.f32 %v650, 0.0
        %653 = vst [vmem:[#allocation2 + $0x168] sm:$0xff] %v651
        %654 = vst [vmem:[#allocation2 + $0x170] sm:$0xff] %v652
        %v655 = vld [vmem:[%s302 + $0xe0] sm:$0xff]
        %v656 = vld [vmem:[%s302 + $0xe8] sm:$0xff]
        %v657 = vmul.f32 %v655, %v512
        %v658 = vmul.f32 %v656, %v512
        %v659 = vadd.f32 %v657, %v517
        %v660 = vadd.f32 %v658, %v517
        %v661 = vmax.f32 %v659, 0.0
        %v662 = vmax.f32 %v660, 0.0
        %663 = vst [vmem:[#allocation2 + $0x180] sm:$0xff] %v661
        %664 = vst [vmem:[#allocation2 + $0x188] sm:$0xff] %v662
        %v665 = vld [vmem:[%s302 + $0xf0] sm:$0xff]
        %v666 = vld [vmem:[%s302 + $0xf8] sm:$0xff]
        %v667 = vmul.f32 %v665, %v512
        %v668 = vmul.f32 %v666, %v512
        %v669 = vadd.f32 %v667, %v517
        %v670 = vadd.f32 %v668, %v517
        %v671 = vmax.f32 %v669, 0.0
        %v672 = vmax.f32 %v670, 0.0
        %673 = vst [vmem:[#allocation2 + $0x198] sm:$0xff] %v671
        %674 = vst [vmem:[#allocation2 + $0x1a0] sm:$0xff] %v672
        %v675 = vld [vmem:[#allocation2 + $0x17] sm:$0xff]
        %v676 = vld [vmem:[#allocation2 + $0x1f] sm:$0xff]
        %v677 = vld [vmem:[#allocation2 + $0x27] sm:$0xff]
        %v678 = vld [vmem:[#allocation2 + $0x2f] sm:$0xff]
        %v679 = vld [vmem:[#allocation2 + $0x37] sm:$0xff]
        %v680 = vld [vmem:[#allocation2 + $0x3f] sm:$0xff]
        %v681 = vld [vmem:[#allocation2 + $0x47] sm:$0xff]
        %v682 = vld [vmem:[#allocation2 + $0x4f] sm:$0xff]
        %v683 = vld [vmem:[#allocation2 + $0x57] sm:$0xff]
        %v684 = vld [vmem:[#allocation2 + $0x5f] sm:$0xff]
        %v685 = vld [vmem:[#allocation2 + $0x67] sm:$0xff]
        %v686 = vld [vmem:[#allocation2 + $0x6f] sm:$0xff]
        %v687 = vld [vmem:[#allocation2 + $0x77] sm:$0xff]
        %v688 = vld [vmem:[#allocation2 + $0x7f] sm:$0xff]
        %v689 = vld [vmem:[#allocation2 + $0x87] sm:$0xff]
        %v690 = vld [vmem:[#allocation2 + $0x8f] sm:$0xff]
        %v691 = vld [vmem:[#allocation2 + $0x97] sm:$0xff]
        %v692 = vld [vmem:[#allocation2 + $0x9f] sm:$0xff]
        %v693 = vld [vmem:[#allocation2 + $0xa7] sm:$0xff]
        %v694 = vld [vmem:[#allocation2 + $0xaf] sm:$0xff]
        %v695 = vld [vmem:[#allocation2 + $0xb7] sm:$0xff]
        %v696 = vld [vmem:[#allocation2 + $0xbf] sm:$0xff]
        %v697 = vld [vmem:[#allocation2 + $0xc7] sm:$0xff]
        %v698 = vld [vmem:[#allocation2 + $0xcf] sm:$0xff]
        %v699 = vld [vmem:[#allocation2 + $0xd7] sm:$0xff]
        %v700 = vld [vmem:[#allocation2 + $0xdf] sm:$0xff]
        %v701 = vld [vmem:[#allocation2 + $0xe7] sm:$0xff]
        %v702 = vld [vmem:[#allocation2 + $0xef] sm:$0xff]
        %v703 = vld [vmem:[#allocation2 + $0xf7] sm:$0xff]
        %v704 = vld [vmem:[#allocation2 + $0xff] sm:$0xff]
        %v705 = vld [vmem:[#allocation2 + $0x107] sm:$0xff]
        %v706 = vld [vmem:[#allocation2 + $0x10f] sm:$0xff]
        %v707 = vld [vmem:[#allocation2 + $0x117] sm:$0xff]
        %v708 = vld [vmem:[#allocation2 + $0x11f] sm:$0xff]
        %v709 = vld [vmem:[#allocation2 + $0x127] sm:$0xff]
        %v710 = vld [vmem:[#allocation2 + $0x12f] sm:$0xff]
        %v711 = vld [vmem:[#allocation2 + $0x137] sm:$0xff]
        %v712 = vld [vmem:[#allocation2 + $0x13f] sm:$0xff]
        %v713 = vld [vmem:[#allocation2 + $0x147] sm:$0xff]
        %v714 = vld [vmem:[#allocation2 + $0x14f] sm:$0xff]
        %v715 = vld [vmem:[#allocation2 + $0x157] sm:$0xff]
        %v716 = vld [vmem:[#allocation2 + $0x15f] sm:$0xff]
        %v717 = vld [vmem:[#allocation2 + $0x167] sm:$0xff]
        %v718 = vld [vmem:[#allocation2 + $0x16f] sm:$0xff]
        %v719 = vld [vmem:[#allocation2 + $0x177] sm:$0xff]
        %v720 = vld [vmem:[#allocation2 + $0x17f] sm:$0xff]
        %v721 = vld [vmem:[#allocation2 + $0x187] sm:$0xff]
        %v722 = vld [vmem:[#allocation2 + $0x18f] sm:$0xff]
        %v723 = vpack.c.bf16 %v676, %v675
        %v724 = vpack.c.bf16 %v678, %v677
        %v725 = vpack.c.bf16 %v680, %v679
        %v726 = vpack.c.bf16 %v682, %v681
        %v727 = vpack.c.bf16 %v684, %v683
        %v728 = vpack.c.bf16 %v686, %v685
        %v729 = vpack.c.bf16 %v688, %v687
        %v730 = vpack.c.bf16 %v690, %v689
        %v731 = vpack.c.bf16 %v692, %v691
        %v732 = vpack.c.bf16 %v694, %v693
        %v733 = vpack.c.bf16 %v696, %v695
        %v734 = vpack.c.bf16 %v698, %v697
        %v735 = vpack.c.bf16 %v700, %v699
        %v736 = vpack.c.bf16 %v702, %v701
        %v737 = vpack.c.bf16 %v704, %v703
        %v738 = vpack.c.bf16 %v706, %v705
        %v739 = vpack.c.bf16 %v708, %v707
        %v740 = vpack.c.bf16 %v710, %v709
        %v741 = vpack.c.bf16 %v712, %v711
        %v742 = vpack.c.bf16 %v714, %v713
        %v743 = vpack.c.bf16 %v716, %v715
        %v744 = vpack.c.bf16 %v718, %v717
        %v745 = vpack.c.bf16 %v720, %v719
        %v746 = vpack.c.bf16 %v722, %v721
        %v747 = vld [vmem:[#allocation9] sm:$0xf]
        %v748 = vld [vmem:[#allocation9 + $0x4] sm:$0xf]
        %v749 = vld [vmem:[#allocation9 + $0x8] sm:$0xf]
        %v750 = vld [vmem:[#allocation9 + $0xc] sm:$0xf]
        %v751 = vld [vmem:[#allocation9 + $0x10] sm:$0xf]
        %v752 = vld [vmem:[#allocation9 + $0x14] sm:$0xf]
        %v753 = vld [vmem:[#allocation9 + $0x18] sm:$0xf]
        %v754 = vld [vmem:[#allocation9 + $0x1c] sm:$0xf]
        %v755 = vld [vmem:[#allocation9 + $0x20] sm:$0xf]
        %v756 = vld [vmem:[#allocation9 + $0x24] sm:$0xf]
        %v757 = vld [vmem:[#allocation9 + $0x28] sm:$0xf]
        %v758 = vld [vmem:[#allocation9 + $0x2c] sm:$0xf]
        %v759 = vld [vmem:[#allocation9 + $0x30] sm:$0xf]
        %v760 = vld [vmem:[#allocation9 + $0x34] sm:$0xf]
        %v761 = vld [vmem:[#allocation9 + $0x38] sm:$0xf]
        %v762 = vld [vmem:[#allocation9 + $0x3c] sm:$0xf]
        %v763 = vld [vmem:[#allocation4] sm:$0xff]
        %v764 = vld [vmem:[#allocation4 + $0x8] sm:$0xff]
        %v765 = vld [vmem:[#allocation4 + $0x10] sm:$0xff]
        %v766 = vld [vmem:[#allocation4 + $0x18] sm:$0xff]
        %v767 = vld [vmem:[#allocation4 + $0x20] sm:$0xff]
        %v768 = vld [vmem:[#allocation4 + $0x28] sm:$0xff]
        %v769 = vld [vmem:[#allocation4 + $0x30] sm:$0xff]
        %v770 = vld [vmem:[#allocation4 + $0x38] sm:$0xff]
        %v771 = vld [vmem:[#allocation4 + $0x40] sm:$0xff]
        %v772 = vld [vmem:[#allocation4 + $0x48] sm:$0xff]
        %v773 = vld [vmem:[#allocation4 + $0x50] sm:$0xff]
        %v774 = vld [vmem:[#allocation4 + $0x58] sm:$0xff]
        %v775 = vld [vmem:[#allocation4 + $0x60] sm:$0xff]
        %v776 = vld [vmem:[#allocation4 + $0x68] sm:$0xff]
        %v777 = vld [vmem:[#allocation4 + $0x70] sm:$0xff]
        %v778 = vld [vmem:[#allocation4 + $0x78] sm:$0xff]
        %v779 = vld [vmem:[#allocation4 + $0x80] sm:$0xff]
        %v780 = vld [vmem:[#allocation4 + $0x88] sm:$0xff]
        %v781 = vld [vmem:[#allocation4 + $0x90] sm:$0xff]
        %v782 = vld [vmem:[#allocation4 + $0x98] sm:$0xff]
        %v783 = vld [vmem:[#allocation4 + $0xa0] sm:$0xff]
        %v784 = vld [vmem:[#allocation4 + $0xa8] sm:$0xff]
        %v785 = vld [vmem:[#allocation4 + $0xb0] sm:$0xff]
        %v786 = vld [vmem:[#allocation4 + $0xb8] sm:$0xff]
        %v787 = vld [vmem:[#allocation4 + $0xc0] sm:$0xff]
        %v788 = vld [vmem:[#allocation4 + $0xc8] sm:$0xff]
        %v789 = vld [vmem:[#allocation4 + $0xd0] sm:$0xff]
        %v790 = vld [vmem:[#allocation4 + $0xd8] sm:$0xff]
        %v791 = vld [vmem:[#allocation4 + $0xe0] sm:$0xff]
        %v792 = vld [vmem:[#allocation4 + $0xe8] sm:$0xff]
        %v793 = vld [vmem:[#allocation4 + $0xf0] sm:$0xff]
        %v794 = vld [vmem:[#allocation4 + $0xf8] sm:$0xff]
        %v795 = vld [vmem:[#allocation4 + $0x100] sm:$0xff]
        %v796 = vld [vmem:[#allocation4 + $0x108] sm:$0xff]
        %v797 = vld [vmem:[#allocation4 + $0x110] sm:$0xff]
        %v798 = vld [vmem:[#allocation4 + $0x118] sm:$0xff]
        %v799 = vld [vmem:[#allocation4 + $0x120] sm:$0xff]
        %v800 = vld [vmem:[#allocation4 + $0x128] sm:$0xff]
        %v801 = vld [vmem:[#allocation4 + $0x130] sm:$0xff]
        %v802 = vld [vmem:[#allocation4 + $0x138] sm:$0xff]
        %v803 = vld [vmem:[#allocation4 + $0x140] sm:$0xff]
        %v804 = vld [vmem:[#allocation4 + $0x148] sm:$0xff]
        %v805 = vld [vmem:[#allocation4 + $0x150] sm:$0xff]
        %v806 = vld [vmem:[#allocation4 + $0x158] sm:$0xff]
        %v807 = vld [vmem:[#allocation4 + $0x160] sm:$0xff]
        %v808 = vld [vmem:[#allocation4 + $0x168] sm:$0xff]
        %v809 = vld [vmem:[#allocation4 + $0x170] sm:$0xff]
        %v810 = vld [vmem:[#allocation4 + $0x178] sm:$0xff]
        %v827 = vunpack.c.l.b16 %v747
        %v828 = vunpack.c.l.b16 %v748
        %v829 = vunpack.c.l.b16 %v749
        %v830 = vunpack.c.l.b16 %v750
        %v831 = vunpack.c.l.b16 %v751
        %v832 = vunpack.c.l.b16 %v752
        %v833 = vunpack.c.l.b16 %v753
        %v834 = vunpack.c.l.b16 %v754
        %v835 = vunpack.c.l.b16 %v755
        %v836 = vunpack.c.l.b16 %v756
        %v837 = vunpack.c.l.b16 %v757
        %v838 = vunpack.c.l.b16 %v758
        %v839 = vunpack.c.l.b16 %v759
        %v840 = vunpack.c.l.b16 %v760
        %v841 = vunpack.c.l.b16 %v761
        %v842 = vunpack.c.l.b16 %v762
        %v843 = vpack.c.b16 %v828, %v827
        %v844 = vpack.c.b16 %v830, %v829
        %v845 = vpack.c.b16 %v832, %v831
        %v846 = vpack.c.b16 %v834, %v833
        %v847 = vpack.c.b16 %v836, %v835
        %v848 = vpack.c.b16 %v838, %v837
        %v849 = vpack.c.b16 %v840, %v839
        %v850 = vpack.c.b16 %v842, %v841
        %859 = vmatpush.bf16.msra.mxu0 %v850
        %860 = vmatpush.bf16.msra.mxu0 %v849
        %861 = vmatpush.bf16.msra.mxu0 %v848
        %862 = vmatpush.bf16.msra.mxu0 %v847
        %863 = vmatpush.bf16.msra.mxu0 %v846
        %864 = vmatpush.bf16.msra.mxu0 %v845
        %865 = vmatpush.bf16.msra.mxu0 %v844
        %866 = vmatpush.bf16.msra.mxu0 %v843
        %867 = vmatmul.bf16.gmra.mxu0 %v723
        %v868 = vpop.f32.mrf.mxu0
        %v869 = vadd.f32 0.0, %v868
        %v870 = vpop.f32.mrf.mxu0
        %v871 = vadd.f32 0.0, %v870
        %872 = vmatmul.bf16.gmra.mxu0 %v724
        %v873 = vpop.f32.mrf.mxu0
        %v874 = vadd.f32 0.0, %v873
        %v875 = vpop.f32.mrf.mxu0
        %v876 = vadd.f32 0.0, %v875
        %877 = vmatmul.bf16.gmra.mxu0 %v725
        %v878 = vpop.f32.mrf.mxu0
        %v879 = vadd.f32 0.0, %v878
        %v880 = vpop.f32.mrf.mxu0
        %v881 = vadd.f32 0.0, %v880
        %882 = vmatmul.bf16.gmra.mxu0 %v726
        %v883 = vpop.f32.mrf.mxu0
        %v884 = vadd.f32 0.0, %v883
        %v885 = vpop.f32.mrf.mxu0
        %v886 = vadd.f32 0.0, %v885
        %887 = vmatmul.bf16.gmra.mxu0 %v727
        %v888 = vpop.f32.mrf.mxu0
        %v889 = vadd.f32 0.0, %v888
        %v890 = vpop.f32.mrf.mxu0
        %v891 = vadd.f32 0.0, %v890
        %892 = vmatmul.bf16.gmra.mxu0 %v728
        %v893 = vpop.f32.mrf.mxu0
        %v894 = vadd.f32 0.0, %v893
        %v895 = vpop.f32.mrf.mxu0
        %v896 = vadd.f32 0.0, %v895
        %897 = vmatmul.bf16.gmra.mxu0 %v729
        %v898 = vpop.f32.mrf.mxu0
        %v899 = vadd.f32 0.0, %v898
        %v900 = vpop.f32.mrf.mxu0
        %v901 = vadd.f32 0.0, %v900
        %902 = vmatmul.bf16.gmra.mxu0 %v730
        %v903 = vpop.f32.mrf.mxu0
        %v904 = vadd.f32 0.0, %v903
        %v905 = vpop.f32.mrf.mxu0
        %v906 = vadd.f32 0.0, %v905
        %907 = vmatmul.bf16.gmra.mxu0 %v731
        %v908 = vpop.f32.mrf.mxu0
        %v909 = vadd.f32 0.0, %v908
        %v910 = vpop.f32.mrf.mxu0
        %v911 = vadd.f32 0.0, %v910
        %912 = vmatmul.bf16.gmra.mxu0 %v732
        %v913 = vpop.f32.mrf.mxu0
        %v914 = vadd.f32 0.0, %v913
        %v915 = vpop.f32.mrf.mxu0
        %v916 = vadd.f32 0.0, %v915
        %917 = vmatmul.bf16.gmra.mxu0 %v733
        %v918 = vpop.f32.mrf.mxu0
        %v919 = vadd.f32 0.0, %v918
        %v920 = vpop.f32.mrf.mxu0
        %v921 = vadd.f32 0.0, %v920
        %922 = vmatmul.bf16.gmra.mxu0 %v734
        %v923 = vpop.f32.mrf.mxu0
        %v924 = vadd.f32 0.0, %v923
        %v925 = vpop.f32.mrf.mxu0
        %v926 = vadd.f32 0.0, %v925
        %927 = vmatmul.bf16.gmra.mxu0 %v735
        %v928 = vpop.f32.mrf.mxu0
        %v929 = vadd.f32 0.0, %v928
        %v930 = vpop.f32.mrf.mxu0
        %v931 = vadd.f32 0.0, %v930
        %932 = vmatmul.bf16.gmra.mxu0 %v736
        %v933 = vpop.f32.mrf.mxu0
        %v934 = vadd.f32 0.0, %v933
        %v935 = vpop.f32.mrf.mxu0
        %v936 = vadd.f32 0.0, %v935
        %937 = vmatmul.bf16.gmra.mxu0 %v737
        %v938 = vpop.f32.mrf.mxu0
        %v939 = vadd.f32 0.0, %v938
        %v940 = vpop.f32.mrf.mxu0
        %v941 = vadd.f32 0.0, %v940
        %942 = vmatmul.bf16.gmra.mxu0 %v738
        %v943 = vpop.f32.mrf.mxu0
        %v944 = vadd.f32 0.0, %v943
        %v945 = vpop.f32.mrf.mxu0
        %v946 = vadd.f32 0.0, %v945
        %947 = vmatmul.bf16.gmra.mxu0 %v739
        %v948 = vpop.f32.mrf.mxu0
        %v949 = vadd.f32 0.0, %v948
        %v950 = vpop.f32.mrf.mxu0
        %v951 = vadd.f32 0.0, %v950
        %952 = vmatmul.bf16.gmra.mxu0 %v740
        %v953 = vpop.f32.mrf.mxu0
        %v954 = vadd.f32 0.0, %v953
        %v955 = vpop.f32.mrf.mxu0
        %v956 = vadd.f32 0.0, %v955
        %957 = vmatmul.bf16.gmra.mxu0 %v741
        %v958 = vpop.f32.mrf.mxu0
        %v959 = vadd.f32 0.0, %v958
        %v960 = vpop.f32.mrf.mxu0
        %v961 = vadd.f32 0.0, %v960
        %962 = vmatmul.bf16.gmra.mxu0 %v742
        %v963 = vpop.f32.mrf.mxu0
        %v964 = vadd.f32 0.0, %v963
        %v965 = vpop.f32.mrf.mxu0
        %v966 = vadd.f32 0.0, %v965
        %967 = vmatmul.bf16.gmra.mxu0 %v743
        %v968 = vpop.f32.mrf.mxu0
        %v969 = vadd.f32 0.0, %v968
        %v970 = vpop.f32.mrf.mxu0
        %v971 = vadd.f32 0.0, %v970
        %972 = vmatmul.bf16.gmra.mxu0 %v744
        %v973 = vpop.f32.mrf.mxu0
        %v974 = vadd.f32 0.0, %v973
        %v975 = vpop.f32.mrf.mxu0
        %v976 = vadd.f32 0.0, %v975
        %977 = vmatmul.bf16.gmra.mxu0 %v745
        %v978 = vpop.f32.mrf.mxu0
        %v979 = vadd.f32 0.0, %v978
        %v980 = vpop.f32.mrf.mxu0
        %v981 = vadd.f32 0.0, %v980
        %982 = vmatmul.bf16.gmra.mxu0 %v746
        %v983 = vpop.f32.mrf.mxu0
        %v984 = vadd.f32 0.0, %v983
        %v985 = vpop.f32.mrf.mxu0
        %v986 = vadd.f32 0.0, %v985
        %987 = vdwg.mxu0
        %v988 = vadd.f32 %v763, %v869
        %v989 = vadd.f32 %v764, %v871
        %v990 = vadd.f32 %v765, %v874
        %v991 = vadd.f32 %v766, %v876
        %v992 = vadd.f32 %v767, %v879
        %v993 = vadd.f32 %v768, %v881
        %v994 = vadd.f32 %v769, %v884
        %v995 = vadd.f32 %v770, %v886
        %v996 = vadd.f32 %v771, %v889
        %v997 = vadd.f32 %v772, %v891
        %v998 = vadd.f32 %v773, %v894
        %v999 = vadd.f32 %v774, %v896
        %v1000 = vadd.f32 %v775, %v899
        %v1001 = vadd.f32 %v776, %v901
        %v1002 = vadd.f32 %v777, %v904
        %v1003 = vadd.f32 %v778, %v906
        %v1004 = vadd.f32 %v779, %v909
        %v1005 = vadd.f32 %v780, %v911
        %v1006 = vadd.f32 %v781, %v914
        %v1007 = vadd.f32 %v782, %v916
        %v1008 = vadd.f32 %v783, %v919
        %v1009 = vadd.f32 %v784, %v921
        %v1010 = vadd.f32 %v785, %v924
        %v1011 = vadd.f32 %v786, %v926
        %v1012 = vadd.f32 %v787, %v929
        %v1013 = vadd.f32 %v788, %v931
        %v1014 = vadd.f32 %v789, %v934
        %v1015 = vadd.f32 %v790, %v936
        %v1016 = vadd.f32 %v791, %v939
        %v1017 = vadd.f32 %v792, %v941
        %v1018 = vadd.f32 %v793, %v944
        %v1019 = vadd.f32 %v794, %v946
        %v1020 = vadd.f32 %v795, %v949
        %v1021 = vadd.f32 %v796, %v951
        %v1022 = vadd.f32 %v797, %v954
        %v1023 = vadd.f32 %v798, %v956
        %v1024 = vadd.f32 %v799, %v959
        %v1025 = vadd.f32 %v800, %v961
        %v1026 = vadd.f32 %v801, %v964
        %v1027 = vadd.f32 %v802, %v966
        %v1028 = vadd.f32 %v803, %v969
        %v1029 = vadd.f32 %v804, %v971
        %v1030 = vadd.f32 %v805, %v974
        %v1031 = vadd.f32 %v806, %v976
        %v1032 = vadd.f32 %v807, %v979
        %v1033 = vadd.f32 %v808, %v981
        %v1034 = vadd.f32 %v809, %v984
        %v1035 = vadd.f32 %v810, %v986
        %1036 = vst [vmem:[#allocation4] sm:$0xff] %v988
        %1037 = vst [vmem:[#allocation4 + $0x8] sm:$0xff] %v989
        %1038 = vst [vmem:[#allocation4 + $0x10] sm:$0xff] %v990
        %1039 = vst [vmem:[#allocation4 + $0x18] sm:$0xff] %v991
        %1040 = vst [vmem:[#allocation4 + $0x20] sm:$0xff] %v992
        %1041 = vst [vmem:[#allocation4 + $0x28] sm:$0xff] %v993
        %1042 = vst [vmem:[#allocation4 + $0x30] sm:$0xff] %v994
        %1043 = vst [vmem:[#allocation4 + $0x38] sm:$0xff] %v995
        %1044 = vst [vmem:[#allocation4 + $0x40] sm:$0xff] %v996
        %1045 = vst [vmem:[#allocation4 + $0x48] sm:$0xff] %v997
        %1046 = vst [vmem:[#allocation4 + $0x50] sm:$0xff] %v998
        %1047 = vst [vmem:[#allocation4 + $0x58] sm:$0xff] %v999
        %1048 = vst [vmem:[#allocation4 + $0x60] sm:$0xff] %v1000
        %1049 = vst [vmem:[#allocation4 + $0x68] sm:$0xff] %v1001
        %1050 = vst [vmem:[#allocation4 + $0x70] sm:$0xff] %v1002
        %1051 = vst [vmem:[#allocation4 + $0x78] sm:$0xff] %v1003
        %1052 = vst [vmem:[#allocation4 + $0x80] sm:$0xff] %v1004
        %1053 = vst [vmem:[#allocation4 + $0x88] sm:$0xff] %v1005
        %1054 = vst [vmem:[#allocation4 + $0x90] sm:$0xff] %v1006
        %1055 = vst [vmem:[#allocation4 + $0x98] sm:$0xff] %v1007
        %1056 = vst [vmem:[#allocation4 + $0xa0] sm:$0xff] %v1008
        %1057 = vst [vmem:[#allocation4 + $0xa8] sm:$0xff] %v1009
        %1058 = vst [vmem:[#allocation4 + $0xb0] sm:$0xff] %v1010
        %1059 = vst [vmem:[#allocation4 + $0xb8] sm:$0xff] %v1011
        %1060 = vst [vmem:[#allocation4 + $0xc0] sm:$0xff] %v1012
        %1061 = vst [vmem:[#allocation4 + $0xc8] sm:$0xff] %v1013
        %1062 = vst [vmem:[#allocation4 + $0xd0] sm:$0xff] %v1014
        %1063 = vst [vmem:[#allocation4 + $0xd8] sm:$0xff] %v1015
        %1064 = vst [vmem:[#allocation4 + $0xe0] sm:$0xff] %v1016
        %1065 = vst [vmem:[#allocation4 + $0xe8] sm:$0xff] %v1017
        %1066 = vst [vmem:[#allocation4 + $0xf0] sm:$0xff] %v1018
        %1067 = vst [vmem:[#allocation4 + $0xf8] sm:$0xff] %v1019
        %1068 = vst [vmem:[#allocation4 + $0x100] sm:$0xff] %v1020
        %1069 = vst [vmem:[#allocation4 + $0x108] sm:$0xff] %v1021
        %1070 = vst [vmem:[#allocation4 + $0x110] sm:$0xff] %v1022
        %1071 = vst [vmem:[#allocation4 + $0x118] sm:$0xff] %v1023
        %1072 = vst [vmem:[#allocation4 + $0x120] sm:$0xff] %v1024
        %1073 = vst [vmem:[#allocation4 + $0x128] sm:$0xff] %v1025
        %1074 = vst [vmem:[#allocation4 + $0x130] sm:$0xff] %v1026
        %1075 = vst [vmem:[#allocation4 + $0x138] sm:$0xff] %v1027
        %1076 = vst [vmem:[#allocation4 + $0x140] sm:$0xff] %v1028
        %1077 = vst [vmem:[#allocation4 + $0x148] sm:$0xff] %v1029
        %1078 = vst [vmem:[#allocation4 + $0x150] sm:$0xff] %v1030
        %1079 = vst [vmem:[#allocation4 + $0x158] sm:$0xff] %v1031
        %1080 = vst [vmem:[#allocation4 + $0x160] sm:$0xff] %v1032
        %1081 = vst [vmem:[#allocation4 + $0x168] sm:$0xff] %v1033
        %1082 = vst [vmem:[#allocation4 + $0x170] sm:$0xff] %v1034
        %1083 = vst [vmem:[#allocation4 + $0x178] sm:$0xff] %v1035
        %v1084 = vld [vmem:[#allocation2 + $0x18] sm:$0xff]
        %v1085 = vld [vmem:[#allocation2 + $0x20] sm:$0xff]
        %v1086 = vld [vmem:[#allocation2 + $0x28] sm:$0xff]
        %v1087 = vld [vmem:[#allocation2 + $0x30] sm:$0xff]
        %v1088 = vld [vmem:[#allocation2 + $0x38] sm:$0xff]
        %v1089 = vld [vmem:[#allocation2 + $0x40] sm:$0xff]
        %v1090 = vld [vmem:[#allocation2 + $0x48] sm:$0xff]
        %v1091 = vld [vmem:[#allocation2 + $0x50] sm:$0xff]
        %v1092 = vld [vmem:[#allocation2 + $0x58] sm:$0xff]
        %v1093 = vld [vmem:[#allocation2 + $0x60] sm:$0xff]
        %v1094 = vld [vmem:[#allocation2 + $0x68] sm:$0xff]
        %v1095 = vld [vmem:[#allocation2 + $0x70] sm:$0xff]
        %v1096 = vld [vmem:[#allocation2 + $0x78] sm:$0xff]
        %v1097 = vld [vmem:[#allocation2 + $0x80] sm:$0xff]
        %v1098 = vld [vmem:[#allocation2 + $0x88] sm:$0xff]
        %v1099 = vld [vmem:[#allocation2 + $0x90] sm:$0xff]
        %v1100 = vld [vmem:[#allocation2 + $0x98] sm:$0xff]
        %v1101 = vld [vmem:[#allocation2 + $0xa0] sm:$0xff]
        %v1102 = vld [vmem:[#allocation2 + $0xa8] sm:$0xff]
        %v1103 = vld [vmem:[#allocation2 + $0xb0] sm:$0xff]
        %v1104 = vld [vmem:[#allocation2 + $0xb8] sm:$0xff]
        %v1105 = vld [vmem:[#allocation2 + $0xc0] sm:$0xff]
        %v1106 = vld [vmem:[#allocation2 + $0xc8] sm:$0xff]
        %v1107 = vld [vmem:[#allocation2 + $0xd0] sm:$0xff]
        %v1108 = vld [vmem:[#allocation2 + $0xd8] sm:$0xff]
        %v1109 = vld [vmem:[#allocation2 + $0xe0] sm:$0xff]
        %v1110 = vld [vmem:[#allocation2 + $0xe8] sm:$0xff]
        %v1111 = vld [vmem:[#allocation2 + $0xf0] sm:$0xff]
        %v1112 = vld [vmem:[#allocation2 + $0xf8] sm:$0xff]
        %v1113 = vld [vmem:[#allocation2 + $0x100] sm:$0xff]
        %v1114 = vld [vmem:[#allocation2 + $0x108] sm:$0xff]
        %v1115 = vld [vmem:[#allocation2 + $0x110] sm:$0xff]
        %v1116 = vld [vmem:[#allocation2 + $0x118] sm:$0xff]
        %v1117 = vld [vmem:[#allocation2 + $0x120] sm:$0xff]
        %v1118 = vld [vmem:[#allocation2 + $0x128] sm:$0xff]
        %v1119 = vld [vmem:[#allocation2 + $0x130] sm:$0xff]
        %v1120 = vld [vmem:[#allocation2 + $0x138] sm:$0xff]
        %v1121 = vld [vmem:[#allocation2 + $0x140] sm:$0xff]
        %v1122 = vld [vmem:[#allocation2 + $0x148] sm:$0xff]
        %v1123 = vld [vmem:[#allocation2 + $0x150] sm:$0xff]
        %v1124 = vld [vmem:[#allocation2 + $0x158] sm:$0xff]
        %v1125 = vld [vmem:[#allocation2 + $0x160] sm:$0xff]
        %v1126 = vld [vmem:[#allocation2 + $0x168] sm:$0xff]
        %v1127 = vld [vmem:[#allocation2 + $0x170] sm:$0xff]
        %v1128 = vld [vmem:[#allocation2 + $0x178] sm:$0xff]
        %v1129 = vld [vmem:[#allocation2 + $0x180] sm:$0xff]
        %v1130 = vld [vmem:[#allocation2 + $0x188] sm:$0xff]
        %v1131 = vld [vmem:[#allocation2 + $0x190] sm:$0xff]
        %v1132 = vpack.c.bf16 %v1085, %v1084
        %v1133 = vpack.c.bf16 %v1087, %v1086
        %v1134 = vpack.c.bf16 %v1089, %v1088
        %v1135 = vpack.c.bf16 %v1091, %v1090
        %v1136 = vpack.c.bf16 %v1093, %v1092
        %v1137 = vpack.c.bf16 %v1095, %v1094
        %v1138 = vpack.c.bf16 %v1097, %v1096
        %v1139 = vpack.c.bf16 %v1099, %v1098
        %v1140 = vpack.c.bf16 %v1101, %v1100
        %v1141 = vpack.c.bf16 %v1103, %v1102
        %v1142 = vpack.c.bf16 %v1105, %v1104
        %v1143 = vpack.c.bf16 %v1107, %v1106
        %v1144 = vpack.c.bf16 %v1109, %v1108
        %v1145 = vpack.c.bf16 %v1111, %v1110
        %v1146 = vpack.c.bf16 %v1113, %v1112
        %v1147 = vpack.c.bf16 %v1115, %v1114
        %v1148 = vpack.c.bf16 %v1117, %v1116
        %v1149 = vpack.c.bf16 %v1119, %v1118
        %v1150 = vpack.c.bf16 %v1121, %v1120
        %v1151 = vpack.c.bf16 %v1123, %v1122
        %v1152 = vpack.c.bf16 %v1125, %v1124
        %v1153 = vpack.c.bf16 %v1127, %v1126
        %v1154 = vpack.c.bf16 %v1129, %v1128
        %v1155 = vpack.c.bf16 %v1131, %v1130
        %v1156 = vld [vmem:[#allocation9 + $0x40] sm:$0xf]
        %v1157 = vld [vmem:[#allocation9 + $0x44] sm:$0xf]
        %v1158 = vld [vmem:[#allocation9 + $0x48] sm:$0xf]
        %v1159 = vld [vmem:[#allocation9 + $0x4c] sm:$0xf]
        %v1160 = vld [vmem:[#allocation9 + $0x50] sm:$0xf]
        %v1161 = vld [vmem:[#allocation9 + $0x54] sm:$0xf]
        %v1162 = vld [vmem:[#allocation9 + $0x58] sm:$0xf]
        %v1163 = vld [vmem:[#allocation9 + $0x5c] sm:$0xf]
        %v1164 = vld [vmem:[#allocation9 + $0x60] sm:$0xf]
        %v1165 = vld [vmem:[#allocation9 + $0x64] sm:$0xf]
        %v1166 = vld [vmem:[#allocation9 + $0x68] sm:$0xf]
        %v1167 = vld [vmem:[#allocation9 + $0x6c] sm:$0xf]
        %v1168 = vld [vmem:[#allocation9 + $0x70] sm:$0xf]
        %v1169 = vld [vmem:[#allocation9 + $0x74] sm:$0xf]
        %v1170 = vld [vmem:[#allocation9 + $0x78] sm:$0xf]
        %v1171 = vld [vmem:[#allocation9 + $0x7c] sm:$0xf]
        %v1172 = vld [vmem:[#allocation4] sm:$0xff]
        %v1173 = vld [vmem:[#allocation4 + $0x8] sm:$0xff]
        %v1174 = vld [vmem:[#allocation4 + $0x10] sm:$0xff]
        %v1175 = vld [vmem:[#allocation4 + $0x18] sm:$0xff]
        %v1176 = vld [vmem:[#allocation4 + $0x20] sm:$0xff]
        %v1177 = vld [vmem:[#allocation4 + $0x28] sm:$0xff]
        %v1178 = vld [vmem:[#allocation4 + $0x30] sm:$0xff]
        %v1179 = vld [vmem:[#allocation4 + $0x38] sm:$0xff]
        %v1180 = vld [vmem:[#allocation4 + $0x40] sm:$0xff]
        %v1181 = vld [vmem:[#allocation4 + $0x48] sm:$0xff]
        %v1182 = vld [vmem:[#allocation4 + $0x50] sm:$0xff]
        %v1183 = vld [vmem:[#allocation4 + $0x58] sm:$0xff]
        %v1184 = vld [vmem:[#allocation4 + $0x60] sm:$0xff]
        %v1185 = vld [vmem:[#allocation4 + $0x68] sm:$0xff]
        %v1186 = vld [vmem:[#allocation4 + $0x70] sm:$0xff]
        %v1187 = vld [vmem:[#allocation4 + $0x78] sm:$0xff]
        %v1188 = vld [vmem:[#allocation4 + $0x80] sm:$0xff]
        %v1189 = vld [vmem:[#allocation4 + $0x88] sm:$0xff]
        %v1190 = vld [vmem:[#allocation4 + $0x90] sm:$0xff]
        %v1191 = vld [vmem:[#allocation4 + $0x98] sm:$0xff]
        %v1192 = vld [vmem:[#allocation4 + $0xa0] sm:$0xff]
        %v1193 = vld [vmem:[#allocation4 + $0xa8] sm:$0xff]
        %v1194 = vld [vmem:[#allocation4 + $0xb0] sm:$0xff]
        %v1195 = vld [vmem:[#allocation4 + $0xb8] sm:$0xff]
        %v1196 = vld [vmem:[#allocation4 + $0xc0] sm:$0xff]
        %v1197 = vld [vmem:[#allocation4 + $0xc8] sm:$0xff]
        %v1198 = vld [vmem:[#allocation4 + $0xd0] sm:$0xff]
        %v1199 = vld [vmem:[#allocation4 + $0xd8] sm:$0xff]
        %v1200 = vld [vmem:[#allocation4 + $0xe0] sm:$0xff]
        %v1201 = vld [vmem:[#allocation4 + $0xe8] sm:$0xff]
        %v1202 = vld [vmem:[#allocation4 + $0xf0] sm:$0xff]
        %v1203 = vld [vmem:[#allocation4 + $0xf8] sm:$0xff]
        %v1204 = vld [vmem:[#allocation4 + $0x100] sm:$0xff]
        %v1205 = vld [vmem:[#allocation4 + $0x108] sm:$0xff]
        %v1206 = vld [vmem:[#allocation4 + $0x110] sm:$0xff]
        %v1207 = vld [vmem:[#allocation4 + $0x118] sm:$0xff]
        %v1208 = vld [vmem:[#allocation4 + $0x120] sm:$0xff]
        %v1209 = vld [vmem:[#allocation4 + $0x128] sm:$0xff]
        %v1210 = vld [vmem:[#allocation4 + $0x130] sm:$0xff]
        %v1211 = vld [vmem:[#allocation4 + $0x138] sm:$0xff]
        %v1212 = vld [vmem:[#allocation4 + $0x140] sm:$0xff]
        %v1213 = vld [vmem:[#allocation4 + $0x148] sm:$0xff]
        %v1214 = vld [vmem:[#allocation4 + $0x150] sm:$0xff]
        %v1215 = vld [vmem:[#allocation4 + $0x158] sm:$0xff]
        %v1216 = vld [vmem:[#allocation4 + $0x160] sm:$0xff]
        %v1217 = vld [vmem:[#allocation4 + $0x168] sm:$0xff]
        %v1218 = vld [vmem:[#allocation4 + $0x170] sm:$0xff]
        %v1219 = vld [vmem:[#allocation4 + $0x178] sm:$0xff]
        %v1236 = vunpack.c.l.b16 %v1156
        %v1237 = vunpack.c.l.b16 %v1157
        %v1238 = vunpack.c.l.b16 %v1158
        %v1239 = vunpack.c.l.b16 %v1159
        %v1240 = vunpack.c.l.b16 %v1160
        %v1241 = vunpack.c.l.b16 %v1161
        %v1242 = vunpack.c.l.b16 %v1162
        %v1243 = vunpack.c.l.b16 %v1163
        %v1244 = vunpack.c.l.b16 %v1164
        %v1245 = vunpack.c.l.b16 %v1165
        %v1246 = vunpack.c.l.b16 %v1166
        %v1247 = vunpack.c.l.b16 %v1167
        %v1248 = vunpack.c.l.b16 %v1168
        %v1249 = vunpack.c.l.b16 %v1169
        %v1250 = vunpack.c.l.b16 %v1170
        %v1251 = vunpack.c.l.b16 %v1171
        %v1252 = vpack.c.b16 %v1237, %v1236
        %v1253 = vpack.c.b16 %v1239, %v1238
        %v1254 = vpack.c.b16 %v1241, %v1240
        %v1255 = vpack.c.b16 %v1243, %v1242
        %v1256 = vpack.c.b16 %v1245, %v1244
        %v1257 = vpack.c.b16 %v1247, %v1246
        %v1258 = vpack.c.b16 %v1249, %v1248
        %v1259 = vpack.c.b16 %v1251, %v1250
        %1268 = vmatpush.bf16.msra.mxu0 %v1259
        %1269 = vmatpush.bf16.msra.mxu0 %v1258
        %1270 = vmatpush.bf16.msra.mxu0 %v1257
        %1271 = vmatpush.bf16.msra.mxu0 %v1256
        %1272 = vmatpush.bf16.msra.mxu0 %v1255
        %1273 = vmatpush.bf16.msra.mxu0 %v1254
        %1274 = vmatpush.bf16.msra.mxu0 %v1253
        %1275 = vmatpush.bf16.msra.mxu0 %v1252
        %1276 = vmatmul.bf16.gmra.mxu0 %v1132
        %v1277 = vpop.f32.mrf.mxu0
        %v1278 = vadd.f32 0.0, %v1277
        %v1279 = vpop.f32.mrf.mxu0
        %v1280 = vadd.f32 0.0, %v1279
        %1281 = vmatmul.bf16.gmra.mxu0 %v1133
        %v1282 = vpop.f32.mrf.mxu0
        %v1283 = vadd.f32 0.0, %v1282
        %v1284 = vpop.f32.mrf.mxu0
        %v1285 = vadd.f32 0.0, %v1284
        %1286 = vmatmul.bf16.gmra.mxu0 %v1134
        %v1287 = vpop.f32.mrf.mxu0
        %v1288 = vadd.f32 0.0, %v1287
        %v1289 = vpop.f32.mrf.mxu0
        %v1290 = vadd.f32 0.0, %v1289
        %1291 = vmatmul.bf16.gmra.mxu0 %v1135
        %v1292 = vpop.f32.mrf.mxu0
        %v1293 = vadd.f32 0.0, %v1292
        %v1294 = vpop.f32.mrf.mxu0
        %v1295 = vadd.f32 0.0, %v1294
        %1296 = vmatmul.bf16.gmra.mxu0 %v1136
        %v1297 = vpop.f32.mrf.mxu0
        %v1298 = vadd.f32 0.0, %v1297
        %v1299 = vpop.f32.mrf.mxu0
        %v1300 = vadd.f32 0.0, %v1299
        %1301 = vmatmul.bf16.gmra.mxu0 %v1137
        %v1302 = vpop.f32.mrf.mxu0
        %v1303 = vadd.f32 0.0, %v1302
        %v1304 = vpop.f32.mrf.mxu0
        %v1305 = vadd.f32 0.0, %v1304
        %1306 = vmatmul.bf16.gmra.mxu0 %v1138
        %v1307 = vpop.f32.mrf.mxu0
        %v1308 = vadd.f32 0.0, %v1307
        %v1309 = vpop.f32.mrf.mxu0
        %v1310 = vadd.f32 0.0, %v1309
        %1311 = vmatmul.bf16.gmra.mxu0 %v1139
        %v1312 = vpop.f32.mrf.mxu0
        %v1313 = vadd.f32 0.0, %v1312
        %v1314 = vpop.f32.mrf.mxu0
        %v1315 = vadd.f32 0.0, %v1314
        %1316 = vmatmul.bf16.gmra.mxu0 %v1140
        %v1317 = vpop.f32.mrf.mxu0
        %v1318 = vadd.f32 0.0, %v1317
        %v1319 = vpop.f32.mrf.mxu0
        %v1320 = vadd.f32 0.0, %v1319
        %1321 = vmatmul.bf16.gmra.mxu0 %v1141
        %v1322 = vpop.f32.mrf.mxu0
        %v1323 = vadd.f32 0.0, %v1322
        %v1324 = vpop.f32.mrf.mxu0
        %v1325 = vadd.f32 0.0, %v1324
        %1326 = vmatmul.bf16.gmra.mxu0 %v1142
        %v1327 = vpop.f32.mrf.mxu0
        %v1328 = vadd.f32 0.0, %v1327
        %v1329 = vpop.f32.mrf.mxu0
        %v1330 = vadd.f32 0.0, %v1329
        %1331 = vmatmul.bf16.gmra.mxu0 %v1143
        %v1332 = vpop.f32.mrf.mxu0
        %v1333 = vadd.f32 0.0, %v1332
        %v1334 = vpop.f32.mrf.mxu0
        %v1335 = vadd.f32 0.0, %v1334
        %1336 = vmatmul.bf16.gmra.mxu0 %v1144
        %v1337 = vpop.f32.mrf.mxu0
        %v1338 = vadd.f32 0.0, %v1337
        %v1339 = vpop.f32.mrf.mxu0
        %v1340 = vadd.f32 0.0, %v1339
        %1341 = vmatmul.bf16.gmra.mxu0 %v1145
        %v1342 = vpop.f32.mrf.mxu0
        %v1343 = vadd.f32 0.0, %v1342
        %v1344 = vpop.f32.mrf.mxu0
        %v1345 = vadd.f32 0.0, %v1344
        %1346 = vmatmul.bf16.gmra.mxu0 %v1146
        %v1347 = vpop.f32.mrf.mxu0
        %v1348 = vadd.f32 0.0, %v1347
        %v1349 = vpop.f32.mrf.mxu0
        %v1350 = vadd.f32 0.0, %v1349
        %1351 = vmatmul.bf16.gmra.mxu0 %v1147
        %v1352 = vpop.f32.mrf.mxu0
        %v1353 = vadd.f32 0.0, %v1352
        %v1354 = vpop.f32.mrf.mxu0
        %v1355 = vadd.f32 0.0, %v1354
        %1356 = vmatmul.bf16.gmra.mxu0 %v1148
        %v1357 = vpop.f32.mrf.mxu0
        %v1358 = vadd.f32 0.0, %v1357
        %v1359 = vpop.f32.mrf.mxu0
        %v1360 = vadd.f32 0.0, %v1359
        %1361 = vmatmul.bf16.gmra.mxu0 %v1149
        %v1362 = vpop.f32.mrf.mxu0
        %v1363 = vadd.f32 0.0, %v1362
        %v1364 = vpop.f32.mrf.mxu0
        %v1365 = vadd.f32 0.0, %v1364
        %1366 = vmatmul.bf16.gmra.mxu0 %v1150
        %v1367 = vpop.f32.mrf.mxu0
        %v1368 = vadd.f32 0.0, %v1367
        %v1369 = vpop.f32.mrf.mxu0
        %v1370 = vadd.f32 0.0, %v1369
        %1371 = vmatmul.bf16.gmra.mxu0 %v1151
        %v1372 = vpop.f32.mrf.mxu0
        %v1373 = vadd.f32 0.0, %v1372
        %v1374 = vpop.f32.mrf.mxu0
        %v1375 = vadd.f32 0.0, %v1374
        %1376 = vmatmul.bf16.gmra.mxu0 %v1152
        %v1377 = vpop.f32.mrf.mxu0
        %v1378 = vadd.f32 0.0, %v1377
        %v1379 = vpop.f32.mrf.mxu0
        %v1380 = vadd.f32 0.0, %v1379
        %1381 = vmatmul.bf16.gmra.mxu0 %v1153
        %v1382 = vpop.f32.mrf.mxu0
        %v1383 = vadd.f32 0.0, %v1382
        %v1384 = vpop.f32.mrf.mxu0
        %v1385 = vadd.f32 0.0, %v1384
        %1386 = vmatmul.bf16.gmra.mxu0 %v1154
        %v1387 = vpop.f32.mrf.mxu0
        %v1388 = vadd.f32 0.0, %v1387
        %v1389 = vpop.f32.mrf.mxu0
        %v1390 = vadd.f32 0.0, %v1389
        %1391 = vmatmul.bf16.gmra.mxu0 %v1155
        %v1392 = vpop.f32.mrf.mxu0
        %v1393 = vadd.f32 0.0, %v1392
        %v1394 = vpop.f32.mrf.mxu0
        %v1395 = vadd.f32 0.0, %v1394
        %1396 = vdwg.mxu0
        %v1397 = vadd.f32 %v1172, %v1278
        %v1398 = vadd.f32 %v1173, %v1280
        %v1399 = vadd.f32 %v1174, %v1283
        %v1400 = vadd.f32 %v1175, %v1285
        %v1401 = vadd.f32 %v1176, %v1288
        %v1402 = vadd.f32 %v1177, %v1290
        %v1403 = vadd.f32 %v1178, %v1293
        %v1404 = vadd.f32 %v1179, %v1295
        %v1405 = vadd.f32 %v1180, %v1298
        %v1406 = vadd.f32 %v1181, %v1300
        %v1407 = vadd.f32 %v1182, %v1303
        %v1408 = vadd.f32 %v1183, %v1305
        %v1409 = vadd.f32 %v1184, %v1308
        %v1410 = vadd.f32 %v1185, %v1310
        %v1411 = vadd.f32 %v1186, %v1313
        %v1412 = vadd.f32 %v1187, %v1315
        %v1413 = vadd.f32 %v1188, %v1318
        %v1414 = vadd.f32 %v1189, %v1320
        %v1415 = vadd.f32 %v1190, %v1323
        %v1416 = vadd.f32 %v1191, %v1325
        %v1417 = vadd.f32 %v1192, %v1328
        %v1418 = vadd.f32 %v1193, %v1330
        %v1419 = vadd.f32 %v1194, %v1333
        %v1420 = vadd.f32 %v1195, %v1335
        %v1421 = vadd.f32 %v1196, %v1338
        %v1422 = vadd.f32 %v1197, %v1340
        %v1423 = vadd.f32 %v1198, %v1343
        %v1424 = vadd.f32 %v1199, %v1345
        %v1425 = vadd.f32 %v1200, %v1348
        %v1426 = vadd.f32 %v1201, %v1350
        %v1427 = vadd.f32 %v1202, %v1353
        %v1428 = vadd.f32 %v1203, %v1355
        %v1429 = vadd.f32 %v1204, %v1358
        %v1430 = vadd.f32 %v1205, %v1360
        %v1431 = vadd.f32 %v1206, %v1363
        %v1432 = vadd.f32 %v1207, %v1365
        %v1433 = vadd.f32 %v1208, %v1368
        %v1434 = vadd.f32 %v1209, %v1370
        %v1435 = vadd.f32 %v1210, %v1373
        %v1436 = vadd.f32 %v1211, %v1375
        %v1437 = vadd.f32 %v1212, %v1378
        %v1438 = vadd.f32 %v1213, %v1380
        %v1439 = vadd.f32 %v1214, %v1383
        %v1440 = vadd.f32 %v1215, %v1385
        %v1441 = vadd.f32 %v1216, %v1388
        %v1442 = vadd.f32 %v1217, %v1390
        %v1443 = vadd.f32 %v1218, %v1393
        %v1444 = vadd.f32 %v1219, %v1395
        %1445 = vst [vmem:[#allocation4] sm:$0xff] %v1397
        %1446 = vst [vmem:[#allocation4 + $0x8] sm:$0xff] %v1398
        %1447 = vst [vmem:[#allocation4 + $0x10] sm:$0xff] %v1399
        %1448 = vst [vmem:[#allocation4 + $0x18] sm:$0xff] %v1400
        %1449 = vst [vmem:[#allocation4 + $0x20] sm:$0xff] %v1401
        %1450 = vst [vmem:[#allocation4 + $0x28] sm:$0xff] %v1402
        %1451 = vst [vmem:[#allocation4 + $0x30] sm:$0xff] %v1403
        %1452 = vst [vmem:[#allocation4 + $0x38] sm:$0xff] %v1404
        %1453 = vst [vmem:[#allocation4 + $0x40] sm:$0xff] %v1405
        %1454 = vst [vmem:[#allocation4 + $0x48] sm:$0xff] %v1406
        %1455 = vst [vmem:[#allocation4 + $0x50] sm:$0xff] %v1407
        %1456 = vst [vmem:[#allocation4 + $0x58] sm:$0xff] %v1408
        %1457 = vst [vmem:[#allocation4 + $0x60] sm:$0xff] %v1409
        %1458 = vst [vmem:[#allocation4 + $0x68] sm:$0xff] %v1410
        %1459 = vst [vmem:[#allocation4 + $0x70] sm:$0xff] %v1411
        %1460 = vst [vmem:[#allocation4 + $0x78] sm:$0xff] %v1412
        %1461 = vst [vmem:[#allocation4 + $0x80] sm:$0xff] %v1413
        %1462 = vst [vmem:[#allocation4 + $0x88] sm:$0xff] %v1414
        %1463 = vst [vmem:[#allocation4 + $0x90] sm:$0xff] %v1415
        %1464 = vst [vmem:[#allocation4 + $0x98] sm:$0xff] %v1416
        %1465 = vst [vmem:[#allocation4 + $0xa0] sm:$0xff] %v1417
        %1466 = vst [vmem:[#allocation4 + $0xa8] sm:$0xff] %v1418
        %1467 = vst [vmem:[#allocation4 + $0xb0] sm:$0xff] %v1419
        %1468 = vst [vmem:[#allocation4 + $0xb8] sm:$0xff] %v1420
        %1469 = vst [vmem:[#allocation4 + $0xc0] sm:$0xff] %v1421
        %1470 = vst [vmem:[#allocation4 + $0xc8] sm:$0xff] %v1422
        %1471 = vst [vmem:[#allocation4 + $0xd0] sm:$0xff] %v1423
        %1472 = vst [vmem:[#allocation4 + $0xd8] sm:$0xff] %v1424
        %1473 = vst [vmem:[#allocation4 + $0xe0] sm:$0xff] %v1425
        %1474 = vst [vmem:[#allocation4 + $0xe8] sm:$0xff] %v1426
        %1475 = vst [vmem:[#allocation4 + $0xf0] sm:$0xff] %v1427
        %1476 = vst [vmem:[#allocation4 + $0xf8] sm:$0xff] %v1428
        %1477 = vst [vmem:[#allocation4 + $0x100] sm:$0xff] %v1429
        %1478 = vst [vmem:[#allocation4 + $0x108] sm:$0xff] %v1430
        %1479 = vst [vmem:[#allocation4 + $0x110] sm:$0xff] %v1431
        %1480 = vst [vmem:[#allocation4 + $0x118] sm:$0xff] %v1432
        %1481 = vst [vmem:[#allocation4 + $0x120] sm:$0xff] %v1433
        %1482 = vst [vmem:[#allocation4 + $0x128] sm:$0xff] %v1434
        %1483 = vst [vmem:[#allocation4 + $0x130] sm:$0xff] %v1435
        %1484 = vst [vmem:[#allocation4 + $0x138] sm:$0xff] %v1436
        %1485 = vst [vmem:[#allocation4 + $0x140] sm:$0xff] %v1437
        %1486 = vst [vmem:[#allocation4 + $0x148] sm:$0xff] %v1438
        %1487 = vst [vmem:[#allocation4 + $0x150] sm:$0xff] %v1439
        %1488 = vst [vmem:[#allocation4 + $0x158] sm:$0xff] %v1440
        %1489 = vst [vmem:[#allocation4 + $0x160] sm:$0xff] %v1441
        %1490 = vst [vmem:[#allocation4 + $0x168] sm:$0xff] %v1442
        %1491 = vst [vmem:[#allocation4 + $0x170] sm:$0xff] %v1443
        %1492 = vst [vmem:[#allocation4 + $0x178] sm:$0xff] %v1444
        %v1493 = vld [vmem:[#allocation2 + $0x19] sm:$0xff]
        %v1494 = vld [vmem:[#allocation2 + $0x21] sm:$0xff]
        %v1495 = vld [vmem:[#allocation2 + $0x29] sm:$0xff]
        %v1496 = vld [vmem:[#allocation2 + $0x31] sm:$0xff]
        %v1497 = vld [vmem:[#allocation2 + $0x39] sm:$0xff]
        %v1498 = vld [vmem:[#allocation2 + $0x41] sm:$0xff]
        %v1499 = vld [vmem:[#allocation2 + $0x49] sm:$0xff]
        %v1500 = vld [vmem:[#allocation2 + $0x51] sm:$0xff]
        %v1501 = vld [vmem:[#allocation2 + $0x59] sm:$0xff]
        %v1502 = vld [vmem:[#allocation2 + $0x61] sm:$0xff]
        %v1503 = vld [vmem:[#allocation2 + $0x69] sm:$0xff]
        %v1504 = vld [vmem:[#allocation2 + $0x71] sm:$0xff]
        %v1505 = vld [vmem:[#allocation2 + $0x79] sm:$0xff]
        %v1506 = vld [vmem:[#allocation2 + $0x81] sm:$0xff]
        %v1507 = vld [vmem:[#allocation2 + $0x89] sm:$0xff]
        %v1508 = vld [vmem:[#allocation2 + $0x91] sm:$0xff]
        %v1509 = vld [vmem:[#allocation2 + $0x99] sm:$0xff]
        %v1510 = vld [vmem:[#allocation2 + $0xa1] sm:$0xff]
        %v1511 = vld [vmem:[#allocation2 + $0xa9] sm:$0xff]
        %v1512 = vld [vmem:[#allocation2 + $0xb1] sm:$0xff]
        %v1513 = vld [vmem:[#allocation2 + $0xb9] sm:$0xff]
        %v1514 = vld [vmem:[#allocation2 + $0xc1] sm:$0xff]
        %v1515 = vld [vmem:[#allocation2 + $0xc9] sm:$0xff]
        %v1516 = vld [vmem:[#allocation2 + $0xd1] sm:$0xff]
        %v1517 = vld [vmem:[#allocation2 + $0xd9] sm:$0xff]
        %v1518 = vld [vmem:[#allocation2 + $0xe1] sm:$0xff]
        %v1519 = vld [vmem:[#allocation2 + $0xe9] sm:$0xff]
        %v1520 = vld [vmem:[#allocation2 + $0xf1] sm:$0xff]
        %v1521 = vld [vmem:[#allocation2 + $0xf9] sm:$0xff]
        %v1522 = vld [vmem:[#allocation2 + $0x101] sm:$0xff]
        %v1523 = vld [vmem:[#allocation2 + $0x109] sm:$0xff]
        %v1524 = vld [vmem:[#allocation2 + $0x111] sm:$0xff]
        %v1525 = vld [vmem:[#allocation2 + $0x119] sm:$0xff]
        %v1526 = vld [vmem:[#allocation2 + $0x121] sm:$0xff]
        %v1527 = vld [vmem:[#allocation2 + $0x129] sm:$0xff]
        %v1528 = vld [vmem:[#allocation2 + $0x131] sm:$0xff]
        %v1529 = vld [vmem:[#allocation2 + $0x139] sm:$0xff]
        %v1530 = vld [vmem:[#allocation2 + $0x141] sm:$0xff]
        %v1531 = vld [vmem:[#allocation2 + $0x149] sm:$0xff]
        %v1532 = vld [vmem:[#allocation2 + $0x151] sm:$0xff]
        %v1533 = vld [vmem:[#allocation2 + $0x159] sm:$0xff]
        %v1534 = vld [vmem:[#allocation2 + $0x161] sm:$0xff]
        %v1535 = vld [vmem:[#allocation2 + $0x169] sm:$0xff]
        %v1536 = vld [vmem:[#allocation2 + $0x171] sm:$0xff]
        %v1537 = vld [vmem:[#allocation2 + $0x179] sm:$0xff]
        %v1538 = vld [vmem:[#allocation2 + $0x181] sm:$0xff]
        %v1539 = vld [vmem:[#allocation2 + $0x189] sm:$0xff]
        %v1540 = vld [vmem:[#allocation2 + $0x191] sm:$0xff]
        %v1541 = vpack.c.bf16 %v1494, %v1493
        %v1542 = vpack.c.bf16 %v1496, %v1495
        %v1543 = vpack.c.bf16 %v1498, %v1497
        %v1544 = vpack.c.bf16 %v1500, %v1499
        %v1545 = vpack.c.bf16 %v1502, %v1501
        %v1546 = vpack.c.bf16 %v1504, %v1503
        %v1547 = vpack.c.bf16 %v1506, %v1505
        %v1548 = vpack.c.bf16 %v1508, %v1507
        %v1549 = vpack.c.bf16 %v1510, %v1509
        %v1550 = vpack.c.bf16 %v1512, %v1511
        %v1551 = vpack.c.bf16 %v1514, %v1513
        %v1552 = vpack.c.bf16 %v1516, %v1515
        %v1553 = vpack.c.bf16 %v1518, %v1517
        %v1554 = vpack.c.bf16 %v1520, %v1519
        %v1555 = vpack.c.bf16 %v1522, %v1521
        %v1556 = vpack.c.bf16 %v1524, %v1523
        %v1557 = vpack.c.bf16 %v1526, %v1525
        %v1558 = vpack.c.bf16 %v1528, %v1527
        %v1559 = vpack.c.bf16 %v1530, %v1529
        %v1560 = vpack.c.bf16 %v1532, %v1531
        %v1561 = vpack.c.bf16 %v1534, %v1533
        %v1562 = vpack.c.bf16 %v1536, %v1535
        %v1563 = vpack.c.bf16 %v1538, %v1537
        %v1564 = vpack.c.bf16 %v1540, %v1539
        %v1565 = vld [vmem:[#allocation9 + $0x80] sm:$0xf]
        %v1566 = vld [vmem:[#allocation9 + $0x84] sm:$0xf]
        %v1567 = vld [vmem:[#allocation9 + $0x88] sm:$0xf]
        %v1568 = vld [vmem:[#allocation9 + $0x8c] sm:$0xf]
        %v1569 = vld [vmem:[#allocation9 + $0x90] sm:$0xf]
        %v1570 = vld [vmem:[#allocation9 + $0x94] sm:$0xf]
        %v1571 = vld [vmem:[#allocation9 + $0x98] sm:$0xf]
        %v1572 = vld [vmem:[#allocation9 + $0x9c] sm:$0xf]
        %v1573 = vld [vmem:[#allocation9 + $0xa0] sm:$0xf]
        %v1574 = vld [vmem:[#allocation9 + $0xa4] sm:$0xf]
        %v1575 = vld [vmem:[#allocation9 + $0xa8] sm:$0xf]
        %v1576 = vld [vmem:[#allocation9 + $0xac] sm:$0xf]
        %v1577 = vld [vmem:[#allocation9 + $0xb0] sm:$0xf]
        %v1578 = vld [vmem:[#allocation9 + $0xb4] sm:$0xf]
        %v1579 = vld [vmem:[#allocation9 + $0xb8] sm:$0xf]
        %v1580 = vld [vmem:[#allocation9 + $0xbc] sm:$0xf]
        %v1581 = vld [vmem:[#allocation4] sm:$0xff]
        %v1582 = vld [vmem:[#allocation4 + $0x8] sm:$0xff]
        %v1583 = vld [vmem:[#allocation4 + $0x10] sm:$0xff]
        %v1584 = vld [vmem:[#allocation4 + $0x18] sm:$0xff]
        %v1585 = vld [vmem:[#allocation4 + $0x20] sm:$0xff]
        %v1586 = vld [vmem:[#allocation4 + $0x28] sm:$0xff]
        %v1587 = vld [vmem:[#allocation4 + $0x30] sm:$0xff]
        %v1588 = vld [vmem:[#allocation4 + $0x38] sm:$0xff]
        %v1589 = vld [vmem:[#allocation4 + $0x40] sm:$0xff]
        %v1590 = vld [vmem:[#allocation4 + $0x48] sm:$0xff]
        %v1591 = vld [vmem:[#allocation4 + $0x50] sm:$0xff]
        %v1592 = vld [vmem:[#allocation4 + $0x58] sm:$0xff]
        %v1593 = vld [vmem:[#allocation4 + $0x60] sm:$0xff]
        %v1594 = vld [vmem:[#allocation4 + $0x68] sm:$0xff]
        %v1595 = vld [vmem:[#allocation4 + $0x70] sm:$0xff]
        %v1596 = vld [vmem:[#allocation4 + $0x78] sm:$0xff]
        %v1597 = vld [vmem:[#allocation4 + $0x80] sm:$0xff]
        %v1598 = vld [vmem:[#allocation4 + $0x88] sm:$0xff]
        %v1599 = vld [vmem:[#allocation4 + $0x90] sm:$0xff]
        %v1600 = vld [vmem:[#allocation4 + $0x98] sm:$0xff]
        %v1601 = vld [vmem:[#allocation4 + $0xa0] sm:$0xff]
        %v1602 = vld [vmem:[#allocation4 + $0xa8] sm:$0xff]
        %v1603 = vld [vmem:[#allocation4 + $0xb0] sm:$0xff]
        %v1604 = vld [vmem:[#allocation4 + $0xb8] sm:$0xff]
        %v1605 = vld [vmem:[#allocation4 + $0xc0] sm:$0xff]
        %v1606 = vld [vmem:[#allocation4 + $0xc8] sm:$0xff]
        %v1607 = vld [vmem:[#allocation4 + $0xd0] sm:$0xff]
        %v1608 = vld [vmem:[#allocation4 + $0xd8] sm:$0xff]
        %v1609 = vld [vmem:[#allocation4 + $0xe0] sm:$0xff]
        %v1610 = vld [vmem:[#allocation4 + $0xe8] sm:$0xff]
        %v1611 = vld [vmem:[#allocation4 + $0xf0] sm:$0xff]
        %v1612 = vld [vmem:[#allocation4 + $0xf8] sm:$0xff]
        %v1613 = vld [vmem:[#allocation4 + $0x100] sm:$0xff]
        %v1614 = vld [vmem:[#allocation4 + $0x108] sm:$0xff]
        %v1615 = vld [vmem:[#allocation4 + $0x110] sm:$0xff]
        %v1616 = vld [vmem:[#allocation4 + $0x118] sm:$0xff]
        %v1617 = vld [vmem:[#allocation4 + $0x120] sm:$0xff]
        %v1618 = vld [vmem:[#allocation4 + $0x128] sm:$0xff]
        %v1619 = vld [vmem:[#allocation4 + $0x130] sm:$0xff]
        %v1620 = vld [vmem:[#allocation4 + $0x138] sm:$0xff]
        %v1621 = vld [vmem:[#allocation4 + $0x140] sm:$0xff]
        %v1622 = vld [vmem:[#allocation4 + $0x148] sm:$0xff]
        %v1623 = vld [vmem:[#allocation4 + $0x150] sm:$0xff]
        %v1624 = vld [vmem:[#allocation4 + $0x158] sm:$0xff]
        %v1625 = vld [vmem:[#allocation4 + $0x160] sm:$0xff]
        %v1626 = vld [vmem:[#allocation4 + $0x168] sm:$0xff]
        %v1627 = vld [vmem:[#allocation4 + $0x170] sm:$0xff]
        %v1628 = vld [vmem:[#allocation4 + $0x178] sm:$0xff]
        %v1645 = vunpack.c.l.b16 %v1565
        %v1646 = vunpack.c.l.b16 %v1566
        %v1647 = vunpack.c.l.b16 %v1567
        %v1648 = vunpack.c.l.b16 %v1568
        %v1649 = vunpack.c.l.b16 %v1569
        %v1650 = vunpack.c.l.b16 %v1570
        %v1651 = vunpack.c.l.b16 %v1571
        %v1652 = vunpack.c.l.b16 %v1572
        %v1653 = vunpack.c.l.b16 %v1573
        %v1654 = vunpack.c.l.b16 %v1574
        %v1655 = vunpack.c.l.b16 %v1575
        %v1656 = vunpack.c.l.b16 %v1576
        %v1657 = vunpack.c.l.b16 %v1577
        %v1658 = vunpack.c.l.b16 %v1578
        %v1659 = vunpack.c.l.b16 %v1579
        %v1660 = vunpack.c.l.b16 %v1580
        %v1661 = vpack.c.b16 %v1646, %v1645
        %v1662 = vpack.c.b16 %v1648, %v1647
        %v1663 = vpack.c.b16 %v1650, %v1649
        %v1664 = vpack.c.b16 %v1652, %v1651
        %v1665 = vpack.c.b16 %v1654, %v1653
        %v1666 = vpack.c.b16 %v1656, %v1655
        %v1667 = vpack.c.b16 %v1658, %v1657
        %v1668 = vpack.c.b16 %v1660, %v1659
        %1677 = vmatpush.bf16.msra.mxu0 %v1668
        %1678 = vmatpush.bf16.msra.mxu0 %v1667
        %1679 = vmatpush.bf16.msra.mxu0 %v1666
        %1680 = vmatpush.bf16.msra.mxu0 %v1665
        %1681 = vmatpush.bf16.msra.mxu0 %v1664
        %1682 = vmatpush.bf16.msra.mxu0 %v1663
        %1683 = vmatpush.bf16.msra.mxu0 %v1662
        %1684 = vmatpush.bf16.msra.mxu0 %v1661
        %1685 = vmatmul.bf16.gmra.mxu0 %v1541
        %v1686 = vpop.f32.mrf.mxu0
        %v1687 = vadd.f32 0.0, %v1686
        %v1688 = vpop.f32.mrf.mxu0
        %v1689 = vadd.f32 0.0, %v1688
        %1690 = vmatmul.bf16.gmra.mxu0 %v1542
        %v1691 = vpop.f32.mrf.mxu0
        %v1692 = vadd.f32 0.0, %v1691
        %v1693 = vpop.f32.mrf.mxu0
        %v1694 = vadd.f32 0.0, %v1693
        %1695 = vmatmul.bf16.gmra.mxu0 %v1543
        %v1696 = vpop.f32.mrf.mxu0
        %v1697 = vadd.f32 0.0, %v1696
        %v1698 = vpop.f32.mrf.mxu0
        %v1699 = vadd.f32 0.0, %v1698
        %1700 = vmatmul.bf16.gmra.mxu0 %v1544
        %v1701 = vpop.f32.mrf.mxu0
        %v1702 = vadd.f32 0.0, %v1701
        %v1703 = vpop.f32.mrf.mxu0
        %v1704 = vadd.f32 0.0, %v1703
        %1705 = vmatmul.bf16.gmra.mxu0 %v1545
        %v1706 = vpop.f32.mrf.mxu0
        %v1707 = vadd.f32 0.0, %v1706
        %v1708 = vpop.f32.mrf.mxu0
        %v1709 = vadd.f32 0.0, %v1708
        %1710 = vmatmul.bf16.gmra.mxu0 %v1546
        %v1711 = vpop.f32.mrf.mxu0
        %v1712 = vadd.f32 0.0, %v1711
        %v1713 = vpop.f32.mrf.mxu0
        %v1714 = vadd.f32 0.0, %v1713
        %1715 = vmatmul.bf16.gmra.mxu0 %v1547
        %v1716 = vpop.f32.mrf.mxu0
        %v1717 = vadd.f32 0.0, %v1716
        %v1718 = vpop.f32.mrf.mxu0
        %v1719 = vadd.f32 0.0, %v1718
        %1720 = vmatmul.bf16.gmra.mxu0 %v1548
        %v1721 = vpop.f32.mrf.mxu0
        %v1722 = vadd.f32 0.0, %v1721
        %v1723 = vpop.f32.mrf.mxu0
        %v1724 = vadd.f32 0.0, %v1723
        %1725 = vmatmul.bf16.gmra.mxu0 %v1549
        %v1726 = vpop.f32.mrf.mxu0
        %v1727 = vadd.f32 0.0, %v1726
        %v1728 = vpop.f32.mrf.mxu0
        %v1729 = vadd.f32 0.0, %v1728
        %1730 = vmatmul.bf16.gmra.mxu0 %v1550
        %v1731 = vpop.f32.mrf.mxu0
        %v1732 = vadd.f32 0.0, %v1731
        %v1733 = vpop.f32.mrf.mxu0
        %v1734 = vadd.f32 0.0, %v1733
        %1735 = vmatmul.bf16.gmra.mxu0 %v1551
        %v1736 = vpop.f32.mrf.mxu0
        %v1737 = vadd.f32 0.0, %v1736
        %v1738 = vpop.f32.mrf.mxu0
        %v1739 = vadd.f32 0.0, %v1738
        %1740 = vmatmul.bf16.gmra.mxu0 %v1552
        %v1741 = vpop.f32.mrf.mxu0
        %v1742 = vadd.f32 0.0, %v1741
        %v1743 = vpop.f32.mrf.mxu0
        %v1744 = vadd.f32 0.0, %v1743
        %1745 = vmatmul.bf16.gmra.mxu0 %v1553
        %v1746 = vpop.f32.mrf.mxu0
        %v1747 = vadd.f32 0.0, %v1746
        %v1748 = vpop.f32.mrf.mxu0
        %v1749 = vadd.f32 0.0, %v1748
        %1750 = vmatmul.bf16.gmra.mxu0 %v1554
        %v1751 = vpop.f32.mrf.mxu0
        %v1752 = vadd.f32 0.0, %v1751
        %v1753 = vpop.f32.mrf.mxu0
        %v1754 = vadd.f32 0.0, %v1753
        %1755 = vmatmul.bf16.gmra.mxu0 %v1555
        %v1756 = vpop.f32.mrf.mxu0
        %v1757 = vadd.f32 0.0, %v1756
        %v1758 = vpop.f32.mrf.mxu0
        %v1759 = vadd.f32 0.0, %v1758
        %1760 = vmatmul.bf16.gmra.mxu0 %v1556
        %v1761 = vpop.f32.mrf.mxu0
        %v1762 = vadd.f32 0.0, %v1761
        %v1763 = vpop.f32.mrf.mxu0
        %v1764 = vadd.f32 0.0, %v1763
        %1765 = vmatmul.bf16.gmra.mxu0 %v1557
        %v1766 = vpop.f32.mrf.mxu0
        %v1767 = vadd.f32 0.0, %v1766
        %v1768 = vpop.f32.mrf.mxu0
        %v1769 = vadd.f32 0.0, %v1768
        %1770 = vmatmul.bf16.gmra.mxu0 %v1558
        %v1771 = vpop.f32.mrf.mxu0
        %v1772 = vadd.f32 0.0, %v1771
        %v1773 = vpop.f32.mrf.mxu0
        %v1774 = vadd.f32 0.0, %v1773
        %1775 = vmatmul.bf16.gmra.mxu0 %v1559
        %v1776 = vpop.f32.mrf.mxu0
        %v1777 = vadd.f32 0.0, %v1776
        %v1778 = vpop.f32.mrf.mxu0
        %v1779 = vadd.f32 0.0, %v1778
        %1780 = vmatmul.bf16.gmra.mxu0 %v1560
        %v1781 = vpop.f32.mrf.mxu0
        %v1782 = vadd.f32 0.0, %v1781
        %v1783 = vpop.f32.mrf.mxu0
        %v1784 = vadd.f32 0.0, %v1783
        %1785 = vmatmul.bf16.gmra.mxu0 %v1561
        %v1786 = vpop.f32.mrf.mxu0
        %v1787 = vadd.f32 0.0, %v1786
        %v1788 = vpop.f32.mrf.mxu0
        %v1789 = vadd.f32 0.0, %v1788
        %1790 = vmatmul.bf16.gmra.mxu0 %v1562
        %v1791 = vpop.f32.mrf.mxu0
        %v1792 = vadd.f32 0.0, %v1791
        %v1793 = vpop.f32.mrf.mxu0
        %v1794 = vadd.f32 0.0, %v1793
        %1795 = vmatmul.bf16.gmra.mxu0 %v1563
        %v1796 = vpop.f32.mrf.mxu0
        %v1797 = vadd.f32 0.0, %v1796
        %v1798 = vpop.f32.mrf.mxu0
        %v1799 = vadd.f32 0.0, %v1798
        %1800 = vmatmul.bf16.gmra.mxu0 %v1564
        %v1801 = vpop.f32.mrf.mxu0
        %v1802 = vadd.f32 0.0, %v1801
        %v1803 = vpop.f32.mrf.mxu0
        %v1804 = vadd.f32 0.0, %v1803
        %1805 = vdwg.mxu0
        %v1806 = vadd.f32 %v1581, %v1687
        %v1807 = vadd.f32 %v1582, %v1689
        %v1808 = vadd.f32 %v1583, %v1692
        %v1809 = vadd.f32 %v1584, %v1694
        %v1810 = vadd.f32 %v1585, %v1697
        %v1811 = vadd.f32 %v1586, %v1699
        %v1812 = vadd.f32 %v1587, %v1702
        %v1813 = vadd.f32 %v1588, %v1704
        %v1814 = vadd.f32 %v1589, %v1707
        %v1815 = vadd.f32 %v1590, %v1709
        %v1816 = vadd.f32 %v1591, %v1712
        %v1817 = vadd.f32 %v1592, %v1714
        %v1818 = vadd.f32 %v1593, %v1717
        %v1819 = vadd.f32 %v1594, %v1719
        %v1820 = vadd.f32 %v1595, %v1722
        %v1821 = vadd.f32 %v1596, %v1724
        %v1822 = vadd.f32 %v1597, %v1727
        %v1823 = vadd.f32 %v1598, %v1729
        %v1824 = vadd.f32 %v1599, %v1732
        %v1825 = vadd.f32 %v1600, %v1734
        %v1826 = vadd.f32 %v1601, %v1737
        %v1827 = vadd.f32 %v1602, %v1739
        %v1828 = vadd.f32 %v1603, %v1742
        %v1829 = vadd.f32 %v1604, %v1744
        %v1830 = vadd.f32 %v1605, %v1747
        %v1831 = vadd.f32 %v1606, %v1749
        %v1832 = vadd.f32 %v1607, %v1752
        %v1833 = vadd.f32 %v1608, %v1754
        %v1834 = vadd.f32 %v1609, %v1757
        %v1835 = vadd.f32 %v1610, %v1759
        %v1836 = vadd.f32 %v1611, %v1762
        %v1837 = vadd.f32 %v1612, %v1764
        %v1838 = vadd.f32 %v1613, %v1767
        %v1839 = vadd.f32 %v1614, %v1769
        %v1840 = vadd.f32 %v1615, %v1772
        %v1841 = vadd.f32 %v1616, %v1774
        %v1842 = vadd.f32 %v1617, %v1777
        %v1843 = vadd.f32 %v1618, %v1779
        %v1844 = vadd.f32 %v1619, %v1782
        %v1845 = vadd.f32 %v1620, %v1784
        %v1846 = vadd.f32 %v1621, %v1787
        %v1847 = vadd.f32 %v1622, %v1789
        %v1848 = vadd.f32 %v1623, %v1792
        %v1849 = vadd.f32 %v1624, %v1794
        %v1850 = vadd.f32 %v1625, %v1797
        %v1851 = vadd.f32 %v1626, %v1799
        %v1852 = vadd.f32 %v1627, %v1802
        %v1853 = vadd.f32 %v1628, %v1804
        %1854 = vst [vmem:[#allocation4] sm:$0xff] %v1806
        %1855 = vst [vmem:[#allocation4 + $0x8] sm:$0xff] %v1807
        %1856 = vst [vmem:[#allocation4 + $0x10] sm:$0xff] %v1808
        %1857 = vst [vmem:[#allocation4 + $0x18] sm:$0xff] %v1809
        %1858 = vst [vmem:[#allocation4 + $0x20] sm:$0xff] %v1810
        %1859 = vst [vmem:[#allocation4 + $0x28] sm:$0xff] %v1811
        %1860 = vst [vmem:[#allocation4 + $0x30] sm:$0xff] %v1812
        %1861 = vst [vmem:[#allocation4 + $0x38] sm:$0xff] %v1813
        %1862 = vst [vmem:[#allocation4 + $0x40] sm:$0xff] %v1814
        %1863 = vst [vmem:[#allocation4 + $0x48] sm:$0xff] %v1815
        %1864 = vst [vmem:[#allocation4 + $0x50] sm:$0xff] %v1816
        %1865 = vst [vmem:[#allocation4 + $0x58] sm:$0xff] %v1817
        %1866 = vst [vmem:[#allocation4 + $0x60] sm:$0xff] %v1818
        %1867 = vst [vmem:[#allocation4 + $0x68] sm:$0xff] %v1819
        %1868 = vst [vmem:[#allocation4 + $0x70] sm:$0xff] %v1820
        %1869 = vst [vmem:[#allocation4 + $0x78] sm:$0xff] %v1821
        %1870 = vst [vmem:[#allocation4 + $0x80] sm:$0xff] %v1822
        %1871 = vst [vmem:[#allocation4 + $0x88] sm:$0xff] %v1823
        %1872 = vst [vmem:[#allocation4 + $0x90] sm:$0xff] %v1824
        %1873 = vst [vmem:[#allocation4 + $0x98] sm:$0xff] %v1825
        %1874 = vst [vmem:[#allocation4 + $0xa0] sm:$0xff] %v1826
        %1875 = vst [vmem:[#allocation4 + $0xa8] sm:$0xff] %v1827
        %1876 = vst [vmem:[#allocation4 + $0xb0] sm:$0xff] %v1828
        %1877 = vst [vmem:[#allocation4 + $0xb8] sm:$0xff] %v1829
        %1878 = vst [vmem:[#allocation4 + $0xc0] sm:$0xff] %v1830
        %1879 = vst [vmem:[#allocation4 + $0xc8] sm:$0xff] %v1831
        %1880 = vst [vmem:[#allocation4 + $0xd0] sm:$0xff] %v1832
        %1881 = vst [vmem:[#allocation4 + $0xd8] sm:$0xff] %v1833
        %1882 = vst [vmem:[#allocation4 + $0xe0] sm:$0xff] %v1834
        %1883 = vst [vmem:[#allocation4 + $0xe8] sm:$0xff] %v1835
        %1884 = vst [vmem:[#allocation4 + $0xf0] sm:$0xff] %v1836
        %1885 = vst [vmem:[#allocation4 + $0xf8] sm:$0xff] %v1837
        %1886 = vst [vmem:[#allocation4 + $0x100] sm:$0xff] %v1838
        %1887 = vst [vmem:[#allocation4 + $0x108] sm:$0xff] %v1839
        %1888 = vst [vmem:[#allocation4 + $0x110] sm:$0xff] %v1840
        %1889 = vst [vmem:[#allocation4 + $0x118] sm:$0xff] %v1841
        %1890 = vst [vmem:[#allocation4 + $0x120] sm:$0xff] %v1842
        %1891 = vst [vmem:[#allocation4 + $0x128] sm:$0xff] %v1843
        %1892 = vst [vmem:[#allocation4 + $0x130] sm:$0xff] %v1844
        %1893 = vst [vmem:[#allocation4 + $0x138] sm:$0xff] %v1845
        %1894 = vst [vmem:[#allocation4 + $0x140] sm:$0xff] %v1846
        %1895 = vst [vmem:[#allocation4 + $0x148] sm:$0xff] %v1847
        %1896 = vst [vmem:[#allocation4 + $0x150] sm:$0xff] %v1848
        %1897 = vst [vmem:[#allocation4 + $0x158] sm:$0xff] %v1849
        %1898 = vst [vmem:[#allocation4 + $0x160] sm:$0xff] %v1850
        %1899 = vst [vmem:[#allocation4 + $0x168] sm:$0xff] %v1851
        %1900 = vst [vmem:[#allocation4 + $0x170] sm:$0xff] %v1852
        %1901 = vst [vmem:[#allocation4 + $0x178] sm:$0xff] %v1853
        %v1902 = vld [vmem:[#allocation2 + $0x2f] sm:$0xff]
        %v1903 = vld [vmem:[#allocation2 + $0x37] sm:$0xff]
        %v1904 = vld [vmem:[#allocation2 + $0x3f] sm:$0xff]
        %v1905 = vld [vmem:[#allocation2 + $0x47] sm:$0xff]
        %v1906 = vld [vmem:[#allocation2 + $0x4f] sm:$0xff]
        %v1907 = vld [vmem:[#allocation2 + $0x57] sm:$0xff]
        %v1908 = vld [vmem:[#allocation2 + $0x5f] sm:$0xff]
        %v1909 = vld [vmem:[#allocation2 + $0x67] sm:$0xff]
        %v1910 = vld [vmem:[#allocation2 + $0x6f] sm:$0xff]
        %v1911 = vld [vmem:[#allocation2 + $0x77] sm:$0xff]
        %v1912 = vld [vmem:[#allocation2 + $0x7f] sm:$0xff]
        %v1913 = vld [vmem:[#allocation2 + $0x87] sm:$0xff]
        %v1914 = vld [vmem:[#allocation2 + $0x8f] sm:$0xff]
        %v1915 = vld [vmem:[#allocation2 + $0x97] sm:$0xff]
        %v1916 = vld [vmem:[#allocation2 + $0x9f] sm:$0xff]
        %v1917 = vld [vmem:[#allocation2 + $0xa7] sm:$0xff]
        %v1918 = vld [vmem:[#allocation2 + $0xaf] sm:$0xff]
        %v1919 = vld [vmem:[#allocation2 + $0xb7] sm:$0xff]
        %v1920 = vld [vmem:[#allocation2 + $0xbf] sm:$0xff]
        %v1921 = vld [vmem:[#allocation2 + $0xc7] sm:$0xff]
        %v1922 = vld [vmem:[#allocation2 + $0xcf] sm:$0xff]
        %v1923 = vld [vmem:[#allocation2 + $0xd7] sm:$0xff]
        %v1924 = vld [vmem:[#allocation2 + $0xdf] sm:$0xff]
        %v1925 = vld [vmem:[#allocation2 + $0xe7] sm:$0xff]
        %v1926 = vld [vmem:[#allocation2 + $0xef] sm:$0xff]
        %v1927 = vld [vmem:[#allocation2 + $0xf7] sm:$0xff]
        %v1928 = vld [vmem:[#allocation2 + $0xff] sm:$0xff]
        %v1929 = vld [vmem:[#allocation2 + $0x107] sm:$0xff]
        %v1930 = vld [vmem:[#allocation2 + $0x10f] sm:$0xff]
        %v1931 = vld [vmem:[#allocation2 + $0x117] sm:$0xff]
        %v1932 = vld [vmem:[#allocation2 + $0x11f] sm:$0xff]
        %v1933 = vld [vmem:[#allocation2 + $0x127] sm:$0xff]
        %v1934 = vld [vmem:[#allocation2 + $0x12f] sm:$0xff]
        %v1935 = vld [vmem:[#allocation2 + $0x137] sm:$0xff]
        %v1936 = vld [vmem:[#allocation2 + $0x13f] sm:$0xff]
        %v1937 = vld [vmem:[#allocation2 + $0x147] sm:$0xff]
        %v1938 = vld [vmem:[#allocation2 + $0x14f] sm:$0xff]
        %v1939 = vld [vmem:[#allocation2 + $0x157] sm:$0xff]
        %v1940 = vld [vmem:[#allocation2 + $0x15f] sm:$0xff]
        %v1941 = vld [vmem:[#allocation2 + $0x167] sm:$0xff]
        %v1942 = vld [vmem:[#allocation2 + $0x16f] sm:$0xff]
        %v1943 = vld [vmem:[#allocation2 + $0x177] sm:$0xff]
        %v1944 = vld [vmem:[#allocation2 + $0x17f] sm:$0xff]
        %v1945 = vld [vmem:[#allocation2 + $0x187] sm:$0xff]
        %v1946 = vld [vmem:[#allocation2 + $0x18f] sm:$0xff]
        %v1947 = vld [vmem:[#allocation2 + $0x197] sm:$0xff]
        %v1948 = vld [vmem:[#allocation2 + $0x19f] sm:$0xff]
        %v1949 = vld [vmem:[#allocation2 + $0x1a7] sm:$0xff]
        %v1950 = vpack.c.bf16 %v1903, %v1902
        %v1951 = vpack.c.bf16 %v1905, %v1904
        %v1952 = vpack.c.bf16 %v1907, %v1906
        %v1953 = vpack.c.bf16 %v1909, %v1908
        %v1954 = vpack.c.bf16 %v1911, %v1910
        %v1955 = vpack.c.bf16 %v1913, %v1912
        %v1956 = vpack.c.bf16 %v1915, %v1914
        %v1957 = vpack.c.bf16 %v1917, %v1916
        %v1958 = vpack.c.bf16 %v1919, %v1918
        %v1959 = vpack.c.bf16 %v1921, %v1920
        %v1960 = vpack.c.bf16 %v1923, %v1922
        %v1961 = vpack.c.bf16 %v1925, %v1924
        %v1962 = vpack.c.bf16 %v1927, %v1926
        %v1963 = vpack.c.bf16 %v1929, %v1928
        %v1964 = vpack.c.bf16 %v1931, %v1930
        %v1965 = vpack.c.bf16 %v1933, %v1932
        %v1966 = vpack.c.bf16 %v1935, %v1934
        %v1967 = vpack.c.bf16 %v1937, %v1936
        %v1968 = vpack.c.bf16 %v1939, %v1938
        %v1969 = vpack.c.bf16 %v1941, %v1940
        %v1970 = vpack.c.bf16 %v1943, %v1942
        %v1971 = vpack.c.bf16 %v1945, %v1944
        %v1972 = vpack.c.bf16 %v1947, %v1946
        %v1973 = vpack.c.bf16 %v1949, %v1948
        %v1974 = vld [vmem:[#allocation9 + $0xc0] sm:$0xf]
        %v1975 = vld [vmem:[#allocation9 + $0xc4] sm:$0xf]
        %v1976 = vld [vmem:[#allocation9 + $0xc8] sm:$0xf]
        %v1977 = vld [vmem:[#allocation9 + $0xcc] sm:$0xf]
        %v1978 = vld [vmem:[#allocation9 + $0xd0] sm:$0xf]
        %v1979 = vld [vmem:[#allocation9 + $0xd4] sm:$0xf]
        %v1980 = vld [vmem:[#allocation9 + $0xd8] sm:$0xf]
        %v1981 = vld [vmem:[#allocation9 + $0xdc] sm:$0xf]
        %v1982 = vld [vmem:[#allocation9 + $0xe0] sm:$0xf]
        %v1983 = vld [vmem:[#allocation9 + $0xe4] sm:$0xf]
        %v1984 = vld [vmem:[#allocation9 + $0xe8] sm:$0xf]
        %v1985 = vld [vmem:[#allocation9 + $0xec] sm:$0xf]
        %v1986 = vld [vmem:[#allocation9 + $0xf0] sm:$0xf]
        %v1987 = vld [vmem:[#allocation9 + $0xf4] sm:$0xf]
        %v1988 = vld [vmem:[#allocation9 + $0xf8] sm:$0xf]
        %v1989 = vld [vmem:[#allocation9 + $0xfc] sm:$0xf]
        %v1990 = vld [vmem:[#allocation4] sm:$0xff]
        %v1991 = vld [vmem:[#allocation4 + $0x8] sm:$0xff]
        %v1992 = vld [vmem:[#allocation4 + $0x10] sm:$0xff]
        %v1993 = vld [vmem:[#allocation4 + $0x18] sm:$0xff]
        %v1994 = vld [vmem:[#allocation4 + $0x20] sm:$0xff]
        %v1995 = vld [vmem:[#allocation4 + $0x28] sm:$0xff]
        %v1996 = vld [vmem:[#allocation4 + $0x30] sm:$0xff]
        %v1997 = vld [vmem:[#allocation4 + $0x38] sm:$0xff]
        %v1998 = vld [vmem:[#allocation4 + $0x40] sm:$0xff]
        %v1999 = vld [vmem:[#allocation4 + $0x48] sm:$0xff]
        %v2000 = vld [vmem:[#allocation4 + $0x50] sm:$0xff]
        %v2001 = vld [vmem:[#allocation4 + $0x58] sm:$0xff]
        %v2002 = vld [vmem:[#allocation4 + $0x60] sm:$0xff]
        %v2003 = vld [vmem:[#allocation4 + $0x68] sm:$0xff]
        %v2004 = vld [vmem:[#allocation4 + $0x70] sm:$0xff]
        %v2005 = vld [vmem:[#allocation4 + $0x78] sm:$0xff]
        %v2006 = vld [vmem:[#allocation4 + $0x80] sm:$0xff]
        %v2007 = vld [vmem:[#allocation4 + $0x88] sm:$0xff]
        %v2008 = vld [vmem:[#allocation4 + $0x90] sm:$0xff]
        %v2009 = vld [vmem:[#allocation4 + $0x98] sm:$0xff]
        %v2010 = vld [vmem:[#allocation4 + $0xa0] sm:$0xff]
        %v2011 = vld [vmem:[#allocation4 + $0xa8] sm:$0xff]
        %v2012 = vld [vmem:[#allocation4 + $0xb0] sm:$0xff]
        %v2013 = vld [vmem:[#allocation4 + $0xb8] sm:$0xff]
        %v2014 = vld [vmem:[#allocation4 + $0xc0] sm:$0xff]
        %v2015 = vld [vmem:[#allocation4 + $0xc8] sm:$0xff]
        %v2016 = vld [vmem:[#allocation4 + $0xd0] sm:$0xff]
        %v2017 = vld [vmem:[#allocation4 + $0xd8] sm:$0xff]
        %v2018 = vld [vmem:[#allocation4 + $0xe0] sm:$0xff]
        %v2019 = vld [vmem:[#allocation4 + $0xe8] sm:$0xff]
        %v2020 = vld [vmem:[#allocation4 + $0xf0] sm:$0xff]
        %v2021 = vld [vmem:[#allocation4 + $0xf8] sm:$0xff]
        %v2022 = vld [vmem:[#allocation4 + $0x100] sm:$0xff]
        %v2023 = vld [vmem:[#allocation4 + $0x108] sm:$0xff]
        %v2024 = vld [vmem:[#allocation4 + $0x110] sm:$0xff]
        %v2025 = vld [vmem:[#allocation4 + $0x118] sm:$0xff]
        %v2026 = vld [vmem:[#allocation4 + $0x120] sm:$0xff]
        %v2027 = vld [vmem:[#allocation4 + $0x128] sm:$0xff]
        %v2028 = vld [vmem:[#allocation4 + $0x130] sm:$0xff]
        %v2029 = vld [vmem:[#allocation4 + $0x138] sm:$0xff]
        %v2030 = vld [vmem:[#allocation4 + $0x140] sm:$0xff]
        %v2031 = vld [vmem:[#allocation4 + $0x148] sm:$0xff]
        %v2032 = vld [vmem:[#allocation4 + $0x150] sm:$0xff]
        %v2033 = vld [vmem:[#allocation4 + $0x158] sm:$0xff]
        %v2034 = vld [vmem:[#allocation4 + $0x160] sm:$0xff]
        %v2035 = vld [vmem:[#allocation4 + $0x168] sm:$0xff]
        %v2036 = vld [vmem:[#allocation4 + $0x170] sm:$0xff]
        %v2037 = vld [vmem:[#allocation4 + $0x178] sm:$0xff]
        %v2054 = vunpack.c.l.b16 %v1974
        %v2055 = vunpack.c.l.b16 %v1975
        %v2056 = vunpack.c.l.b16 %v1976
        %v2057 = vunpack.c.l.b16 %v1977
        %v2058 = vunpack.c.l.b16 %v1978
        %v2059 = vunpack.c.l.b16 %v1979
        %v2060 = vunpack.c.l.b16 %v1980
        %v2061 = vunpack.c.l.b16 %v1981
        %v2062 = vunpack.c.l.b16 %v1982
        %v2063 = vunpack.c.l.b16 %v1983
        %v2064 = vunpack.c.l.b16 %v1984
        %v2065 = vunpack.c.l.b16 %v1985
        %v2066 = vunpack.c.l.b16 %v1986
        %v2067 = vunpack.c.l.b16 %v1987
        %v2068 = vunpack.c.l.b16 %v1988
        %v2069 = vunpack.c.l.b16 %v1989
        %v2070 = vpack.c.b16 %v2055, %v2054
        %v2071 = vpack.c.b16 %v2057, %v2056
        %v2072 = vpack.c.b16 %v2059, %v2058
        %v2073 = vpack.c.b16 %v2061, %v2060
        %v2074 = vpack.c.b16 %v2063, %v2062
        %v2075 = vpack.c.b16 %v2065, %v2064
        %v2076 = vpack.c.b16 %v2067, %v2066
        %v2077 = vpack.c.b16 %v2069, %v2068
        %2086 = vmatpush.bf16.msra.mxu0 %v2077
        %2087 = vmatpush.bf16.msra.mxu0 %v2076
        %2088 = vmatpush.bf16.msra.mxu0 %v2075
        %2089 = vmatpush.bf16.msra.mxu0 %v2074
        %2090 = vmatpush.bf16.msra.mxu0 %v2073
        %2091 = vmatpush.bf16.msra.mxu0 %v2072
        %2092 = vmatpush.bf16.msra.mxu0 %v2071
        %2093 = vmatpush.bf16.msra.mxu0 %v2070
        %2094 = vmatmul.bf16.gmra.mxu0 %v1950
        %v2095 = vpop.f32.mrf.mxu0
        %v2096 = vadd.f32 0.0, %v2095
        %v2097 = vpop.f32.mrf.mxu0
        %v2098 = vadd.f32 0.0, %v2097
        %2099 = vmatmul.bf16.gmra.mxu0 %v1951
        %v2100 = vpop.f32.mrf.mxu0
        %v2101 = vadd.f32 0.0, %v2100
        %v2102 = vpop.f32.mrf.mxu0
        %v2103 = vadd.f32 0.0, %v2102
        %2104 = vmatmul.bf16.gmra.mxu0 %v1952
        %v2105 = vpop.f32.mrf.mxu0
        %v2106 = vadd.f32 0.0, %v2105
        %v2107 = vpop.f32.mrf.mxu0
        %v2108 = vadd.f32 0.0, %v2107
        %2109 = vmatmul.bf16.gmra.mxu0 %v1953
        %v2110 = vpop.f32.mrf.mxu0
        %v2111 = vadd.f32 0.0, %v2110
        %v2112 = vpop.f32.mrf.mxu0
        %v2113 = vadd.f32 0.0, %v2112
        %2114 = vmatmul.bf16.gmra.mxu0 %v1954
        %v2115 = vpop.f32.mrf.mxu0
        %v2116 = vadd.f32 0.0, %v2115
        %v2117 = vpop.f32.mrf.mxu0
        %v2118 = vadd.f32 0.0, %v2117
        %2119 = vmatmul.bf16.gmra.mxu0 %v1955
        %v2120 = vpop.f32.mrf.mxu0
        %v2121 = vadd.f32 0.0, %v2120
        %v2122 = vpop.f32.mrf.mxu0
        %v2123 = vadd.f32 0.0, %v2122
        %2124 = vmatmul.bf16.gmra.mxu0 %v1956
        %v2125 = vpop.f32.mrf.mxu0
        %v2126 = vadd.f32 0.0, %v2125
        %v2127 = vpop.f32.mrf.mxu0
        %v2128 = vadd.f32 0.0, %v2127
        %2129 = vmatmul.bf16.gmra.mxu0 %v1957
        %v2130 = vpop.f32.mrf.mxu0
        %v2131 = vadd.f32 0.0, %v2130
        %v2132 = vpop.f32.mrf.mxu0
        %v2133 = vadd.f32 0.0, %v2132
        %2134 = vmatmul.bf16.gmra.mxu0 %v1958
        %v2135 = vpop.f32.mrf.mxu0
        %v2136 = vadd.f32 0.0, %v2135
        %v2137 = vpop.f32.mrf.mxu0
        %v2138 = vadd.f32 0.0, %v2137
        %2139 = vmatmul.bf16.gmra.mxu0 %v1959
        %v2140 = vpop.f32.mrf.mxu0
        %v2141 = vadd.f32 0.0, %v2140
        %v2142 = vpop.f32.mrf.mxu0
        %v2143 = vadd.f32 0.0, %v2142
        %2144 = vmatmul.bf16.gmra.mxu0 %v1960
        %v2145 = vpop.f32.mrf.mxu0
        %v2146 = vadd.f32 0.0, %v2145
        %v2147 = vpop.f32.mrf.mxu0
        %v2148 = vadd.f32 0.0, %v2147
        %2149 = vmatmul.bf16.gmra.mxu0 %v1961
        %v2150 = vpop.f32.mrf.mxu0
        %v2151 = vadd.f32 0.0, %v2150
        %v2152 = vpop.f32.mrf.mxu0
        %v2153 = vadd.f32 0.0, %v2152
        %2154 = vmatmul.bf16.gmra.mxu0 %v1962
        %v2155 = vpop.f32.mrf.mxu0
        %v2156 = vadd.f32 0.0, %v2155
        %v2157 = vpop.f32.mrf.mxu0
        %v2158 = vadd.f32 0.0, %v2157
        %2159 = vmatmul.bf16.gmra.mxu0 %v1963
        %v2160 = vpop.f32.mrf.mxu0
        %v2161 = vadd.f32 0.0, %v2160
        %v2162 = vpop.f32.mrf.mxu0
        %v2163 = vadd.f32 0.0, %v2162
        %2164 = vmatmul.bf16.gmra.mxu0 %v1964
        %v2165 = vpop.f32.mrf.mxu0
        %v2166 = vadd.f32 0.0, %v2165
        %v2167 = vpop.f32.mrf.mxu0
        %v2168 = vadd.f32 0.0, %v2167
        %2169 = vmatmul.bf16.gmra.mxu0 %v1965
        %v2170 = vpop.f32.mrf.mxu0
        %v2171 = vadd.f32 0.0, %v2170
        %v2172 = vpop.f32.mrf.mxu0
        %v2173 = vadd.f32 0.0, %v2172
        %2174 = vmatmul.bf16.gmra.mxu0 %v1966
        %v2175 = vpop.f32.mrf.mxu0
        %v2176 = vadd.f32 0.0, %v2175
        %v2177 = vpop.f32.mrf.mxu0
        %v2178 = vadd.f32 0.0, %v2177
        %2179 = vmatmul.bf16.gmra.mxu0 %v1967
        %v2180 = vpop.f32.mrf.mxu0
        %v2181 = vadd.f32 0.0, %v2180
        %v2182 = vpop.f32.mrf.mxu0
        %v2183 = vadd.f32 0.0, %v2182
        %2184 = vmatmul.bf16.gmra.mxu0 %v1968
        %v2185 = vpop.f32.mrf.mxu0
        %v2186 = vadd.f32 0.0, %v2185
        %v2187 = vpop.f32.mrf.mxu0
        %v2188 = vadd.f32 0.0, %v2187
        %2189 = vmatmul.bf16.gmra.mxu0 %v1969
        %v2190 = vpop.f32.mrf.mxu0
        %v2191 = vadd.f32 0.0, %v2190
        %v2192 = vpop.f32.mrf.mxu0
        %v2193 = vadd.f32 0.0, %v2192
        %2194 = vmatmul.bf16.gmra.mxu0 %v1970
        %v2195 = vpop.f32.mrf.mxu0
        %v2196 = vadd.f32 0.0, %v2195
        %v2197 = vpop.f32.mrf.mxu0
        %v2198 = vadd.f32 0.0, %v2197
        %2199 = vmatmul.bf16.gmra.mxu0 %v1971
        %v2200 = vpop.f32.mrf.mxu0
        %v2201 = vadd.f32 0.0, %v2200
        %v2202 = vpop.f32.mrf.mxu0
        %v2203 = vadd.f32 0.0, %v2202
        %2204 = vmatmul.bf16.gmra.mxu0 %v1972
        %v2205 = vpop.f32.mrf.mxu0
        %v2206 = vadd.f32 0.0, %v2205
        %v2207 = vpop.f32.mrf.mxu0
        %v2208 = vadd.f32 0.0, %v2207
        %2209 = vmatmul.bf16.gmra.mxu0 %v1973
        %v2210 = vpop.f32.mrf.mxu0
        %v2211 = vadd.f32 0.0, %v2210
        %v2212 = vpop.f32.mrf.mxu0
        %v2213 = vadd.f32 0.0, %v2212
        %2214 = vdwg.mxu0
        %v2215 = vadd.f32 %v1990, %v2096
        %v2216 = vadd.f32 %v1991, %v2098
        %v2217 = vadd.f32 %v1992, %v2101
        %v2218 = vadd.f32 %v1993, %v2103
        %v2219 = vadd.f32 %v1994, %v2106
        %v2220 = vadd.f32 %v1995, %v2108
        %v2221 = vadd.f32 %v1996, %v2111
        %v2222 = vadd.f32 %v1997, %v2113
        %v2223 = vadd.f32 %v1998, %v2116
        %v2224 = vadd.f32 %v1999, %v2118
        %v2225 = vadd.f32 %v2000, %v2121
        %v2226 = vadd.f32 %v2001, %v2123
        %v2227 = vadd.f32 %v2002, %v2126
        %v2228 = vadd.f32 %v2003, %v2128
        %v2229 = vadd.f32 %v2004, %v2131
        %v2230 = vadd.f32 %v2005, %v2133
        %v2231 = vadd.f32 %v2006, %v2136
        %v2232 = vadd.f32 %v2007, %v2138
        %v2233 = vadd.f32 %v2008, %v2141
        %v2234 = vadd.f32 %v2009, %v2143
        %v2235 = vadd.f32 %v2010, %v2146
        %v2236 = vadd.f32 %v2011, %v2148
        %v2237 = vadd.f32 %v2012, %v2151
        %v2238 = vadd.f32 %v2013, %v2153
        %v2239 = vadd.f32 %v2014, %v2156
        %v2240 = vadd.f32 %v2015, %v2158
        %v2241 = vadd.f32 %v2016, %v2161
        %v2242 = vadd.f32 %v2017, %v2163
        %v2243 = vadd.f32 %v2018, %v2166
        %v2244 = vadd.f32 %v2019, %v2168
        %v2245 = vadd.f32 %v2020, %v2171
        %v2246 = vadd.f32 %v2021, %v2173
        %v2247 = vadd.f32 %v2022, %v2176
        %v2248 = vadd.f32 %v2023, %v2178
        %v2249 = vadd.f32 %v2024, %v2181
        %v2250 = vadd.f32 %v2025, %v2183
        %v2251 = vadd.f32 %v2026, %v2186
        %v2252 = vadd.f32 %v2027, %v2188
        %v2253 = vadd.f32 %v2028, %v2191
        %v2254 = vadd.f32 %v2029, %v2193
        %v2255 = vadd.f32 %v2030, %v2196
        %v2256 = vadd.f32 %v2031, %v2198
        %v2257 = vadd.f32 %v2032, %v2201
        %v2258 = vadd.f32 %v2033, %v2203
        %v2259 = vadd.f32 %v2034, %v2206
        %v2260 = vadd.f32 %v2035, %v2208
        %v2261 = vadd.f32 %v2036, %v2211
        %v2262 = vadd.f32 %v2037, %v2213
        %2263 = vst [vmem:[#allocation4] sm:$0xff] %v2215
        %2264 = vst [vmem:[#allocation4 + $0x8] sm:$0xff] %v2216
        %2265 = vst [vmem:[#allocation4 + $0x10] sm:$0xff] %v2217
        %2266 = vst [vmem:[#allocation4 + $0x18] sm:$0xff] %v2218
        %2267 = vst [vmem:[#allocation4 + $0x20] sm:$0xff] %v2219
        %2268 = vst [vmem:[#allocation4 + $0x28] sm:$0xff] %v2220
        %2269 = vst [vmem:[#allocation4 + $0x30] sm:$0xff] %v2221
        %2270 = vst [vmem:[#allocation4 + $0x38] sm:$0xff] %v2222
        %2271 = vst [vmem:[#allocation4 + $0x40] sm:$0xff] %v2223
        %2272 = vst [vmem:[#allocation4 + $0x48] sm:$0xff] %v2224
        %2273 = vst [vmem:[#allocation4 + $0x50] sm:$0xff] %v2225
        %2274 = vst [vmem:[#allocation4 + $0x58] sm:$0xff] %v2226
        %2275 = vst [vmem:[#allocation4 + $0x60] sm:$0xff] %v2227
        %2276 = vst [vmem:[#allocation4 + $0x68] sm:$0xff] %v2228
        %2277 = vst [vmem:[#allocation4 + $0x70] sm:$0xff] %v2229
        %2278 = vst [vmem:[#allocation4 + $0x78] sm:$0xff] %v2230
        %2279 = vst [vmem:[#allocation4 + $0x80] sm:$0xff] %v2231
        %2280 = vst [vmem:[#allocation4 + $0x88] sm:$0xff] %v2232
        %2281 = vst [vmem:[#allocation4 + $0x90] sm:$0xff] %v2233
        %2282 = vst [vmem:[#allocation4 + $0x98] sm:$0xff] %v2234
        %2283 = vst [vmem:[#allocation4 + $0xa0] sm:$0xff] %v2235
        %2284 = vst [vmem:[#allocation4 + $0xa8] sm:$0xff] %v2236
        %2285 = vst [vmem:[#allocation4 + $0xb0] sm:$0xff] %v2237
        %2286 = vst [vmem:[#allocation4 + $0xb8] sm:$0xff] %v2238
        %2287 = vst [vmem:[#allocation4 + $0xc0] sm:$0xff] %v2239
        %2288 = vst [vmem:[#allocation4 + $0xc8] sm:$0xff] %v2240
        %2289 = vst [vmem:[#allocation4 + $0xd0] sm:$0xff] %v2241
        %2290 = vst [vmem:[#allocation4 + $0xd8] sm:$0xff] %v2242
        %2291 = vst [vmem:[#allocation4 + $0xe0] sm:$0xff] %v2243
        %2292 = vst [vmem:[#allocation4 + $0xe8] sm:$0xff] %v2244
        %2293 = vst [vmem:[#allocation4 + $0xf0] sm:$0xff] %v2245
        %2294 = vst [vmem:[#allocation4 + $0xf8] sm:$0xff] %v2246
        %2295 = vst [vmem:[#allocation4 + $0x100] sm:$0xff] %v2247
        %2296 = vst [vmem:[#allocation4 + $0x108] sm:$0xff] %v2248
        %2297 = vst [vmem:[#allocation4 + $0x110] sm:$0xff] %v2249
        %2298 = vst [vmem:[#allocation4 + $0x118] sm:$0xff] %v2250
        %2299 = vst [vmem:[#allocation4 + $0x120] sm:$0xff] %v2251
        %2300 = vst [vmem:[#allocation4 + $0x128] sm:$0xff] %v2252
        %2301 = vst [vmem:[#allocation4 + $0x130] sm:$0xff] %v2253
        %2302 = vst [vmem:[#allocation4 + $0x138] sm:$0xff] %v2254
        %2303 = vst [vmem:[#allocation4 + $0x140] sm:$0xff] %v2255
        %2304 = vst [vmem:[#allocation4 + $0x148] sm:$0xff] %v2256
        %2305 = vst [vmem:[#allocation4 + $0x150] sm:$0xff] %v2257
        %2306 = vst [vmem:[#allocation4 + $0x158] sm:$0xff] %v2258
        %2307 = vst [vmem:[#allocation4 + $0x160] sm:$0xff] %v2259
        %2308 = vst [vmem:[#allocation4 + $0x168] sm:$0xff] %v2260
        %2309 = vst [vmem:[#allocation4 + $0x170] sm:$0xff] %v2261
        %2310 = vst [vmem:[#allocation4 + $0x178] sm:$0xff] %v2262
        %v2311 = vld [vmem:[#allocation2 + $0x30] sm:$0xff]
        %v2312 = vld [vmem:[#allocation2 + $0x38] sm:$0xff]
        %v2313 = vld [vmem:[#allocation2 + $0x40] sm:$0xff]
        %v2314 = vld [vmem:[#allocation2 + $0x48] sm:$0xff]
        %v2315 = vld [vmem:[#allocation2 + $0x50] sm:$0xff]
        %v2316 = vld [vmem:[#allocation2 + $0x58] sm:$0xff]
        %v2317 = vld [vmem:[#allocation2 + $0x60] sm:$0xff]
        %v2318 = vld [vmem:[#allocation2 + $0x68] sm:$0xff]
        %v2319 = vld [vmem:[#allocation2 + $0x70] sm:$0xff]
        %v2320 = vld [vmem:[#allocation2 + $0x78] sm:$0xff]
        %v2321 = vld [vmem:[#allocation2 + $0x80] sm:$0xff]
        %v2322 = vld [vmem:[#allocation2 + $0x88] sm:$0xff]
        %v2323 = vld [vmem:[#allocation2 + $0x90] sm:$0xff]
        %v2324 = vld [vmem:[#allocation2 + $0x98] sm:$0xff]
        %v2325 = vld [vmem:[#allocation2 + $0xa0] sm:$0xff]
        %v2326 = vld [vmem:[#allocation2 + $0xa8] sm:$0xff]
        %v2327 = vld [vmem:[#allocation2 + $0xb0] sm:$0xff]
        %v2328 = vld [vmem:[#allocation2 + $0xb8] sm:$0xff]
        %v2329 = vld [vmem:[#allocation2 + $0xc0] sm:$0xff]
        %v2330 = vld [vmem:[#allocation2 + $0xc8] sm:$0xff]
        %v2331 = vld [vmem:[#allocation2 + $0xd0] sm:$0xff]
        %v2332 = vld [vmem:[#allocation2 + $0xd8] sm:$0xff]
        %v2333 = vld [vmem:[#allocation2 + $0xe0] sm:$0xff]
        %v2334 = vld [vmem:[#allocation2 + $0xe8] sm:$0xff]
        %v2335 = vld [vmem:[#allocation2 + $0xf0] sm:$0xff]
        %v2336 = vld [vmem:[#allocation2 + $0xf8] sm:$0xff]
        %v2337 = vld [vmem:[#allocation2 + $0x100] sm:$0xff]
        %v2338 = vld [vmem:[#allocation2 + $0x108] sm:$0xff]
        %v2339 = vld [vmem:[#allocation2 + $0x110] sm:$0xff]
        %v2340 = vld [vmem:[#allocation2 + $0x118] sm:$0xff]
        %v2341 = vld [vmem:[#allocation2 + $0x120] sm:$0xff]
        %v2342 = vld [vmem:[#allocation2 + $0x128] sm:$0xff]
        %v2343 = vld [vmem:[#allocation2 + $0x130] sm:$0xff]
        %v2344 = vld [vmem:[#allocation2 + $0x138] sm:$0xff]
        %v2345 = vld [vmem:[#allocation2 + $0x140] sm:$0xff]
        %v2346 = vld [vmem:[#allocation2 + $0x148] sm:$0xff]
        %v2347 = vld [vmem:[#allocation2 + $0x150] sm:$0xff]
        %v2348 = vld [vmem:[#allocation2 + $0x158] sm:$0xff]
        %v2349 = vld [vmem:[#allocation2 + $0x160] sm:$0xff]
        %v2350 = vld [vmem:[#allocation2 + $0x168] sm:$0xff]
        %v2351 = vld [vmem:[#allocation2 + $0x170] sm:$0xff]
        %v2352 = vld [vmem:[#allocation2 + $0x178] sm:$0xff]
        %v2353 = vld [vmem:[#allocation2 + $0x180] sm:$0xff]
        %v2354 = vld [vmem:[#allocation2 + $0x188] sm:$0xff]
        %v2355 = vld [vmem:[#allocation2 + $0x190] sm:$0xff]
        %v2356 = vld [vmem:[#allocation2 + $0x198] sm:$0xff]
        %v2357 = vld [vmem:[#allocation2 + $0x1a0] sm:$0xff]
        %v2358 = vld [vmem:[#allocation2 + $0x1a8] sm:$0xff]
        %v2359 = vpack.c.bf16 %v2312, %v2311
        %v2360 = vpack.c.bf16 %v2314, %v2313
        %v2361 = vpack.c.bf16 %v2316, %v2315
        %v2362 = vpack.c.bf16 %v2318, %v2317
        %v2363 = vpack.c.bf16 %v2320, %v2319
        %v2364 = vpack.c.bf16 %v2322, %v2321
        %v2365 = vpack.c.bf16 %v2324, %v2323
        %v2366 = vpack.c.bf16 %v2326, %v2325
        %v2367 = vpack.c.bf16 %v2328, %v2327
        %v2368 = vpack.c.bf16 %v2330, %v2329
        %v2369 = vpack.c.bf16 %v2332, %v2331
        %v2370 = vpack.c.bf16 %v2334, %v2333
        %v2371 = vpack.c.bf16 %v2336, %v2335
        %v2372 = vpack.c.bf16 %v2338, %v2337
        %v2373 = vpack.c.bf16 %v2340, %v2339
        %v2374 = vpack.c.bf16 %v2342, %v2341
        %v2375 = vpack.c.bf16 %v2344, %v2343
        %v2376 = vpack.c.bf16 %v2346, %v2345
        %v2377 = vpack.c.bf16 %v2348, %v2347
        %v2378 = vpack.c.bf16 %v2350, %v2349
        %v2379 = vpack.c.bf16 %v2352, %v2351
        %v2380 = vpack.c.bf16 %v2354, %v2353
        %v2381 = vpack.c.bf16 %v2356, %v2355
        %v2382 = vpack.c.bf16 %v2358, %v2357
        %v2383 = vld [vmem:[#allocation9 + $0x100] sm:$0xf]
        %v2384 = vld [vmem:[#allocation9 + $0x104] sm:$0xf]
        %v2385 = vld [vmem:[#allocation9 + $0x108] sm:$0xf]
        %v2386 = vld [vmem:[#allocation9 + $0x10c] sm:$0xf]
        %v2387 = vld [vmem:[#allocation9 + $0x110] sm:$0xf]
        %v2388 = vld [vmem:[#allocation9 + $0x114] sm:$0xf]
        %v2389 = vld [vmem:[#allocation9 + $0x118] sm:$0xf]
        %v2390 = vld [vmem:[#allocation9 + $0x11c] sm:$0xf]
        %v2391 = vld [vmem:[#allocation9 + $0x120] sm:$0xf]
        %v2392 = vld [vmem:[#allocation9 + $0x124] sm:$0xf]
        %v2393 = vld [vmem:[#allocation9 + $0x128] sm:$0xf]
        %v2394 = vld [vmem:[#allocation9 + $0x12c] sm:$0xf]
        %v2395 = vld [vmem:[#allocation9 + $0x130] sm:$0xf]
        %v2396 = vld [vmem:[#allocation9 + $0x134] sm:$0xf]
        %v2397 = vld [vmem:[#allocation9 + $0x138] sm:$0xf]
        %v2398 = vld [vmem:[#allocation9 + $0x13c] sm:$0xf]
        %v2399 = vld [vmem:[#allocation4] sm:$0xff]
        %v2400 = vld [vmem:[#allocation4 + $0x8] sm:$0xff]
        %v2401 = vld [vmem:[#allocation4 + $0x10] sm:$0xff]
        %v2402 = vld [vmem:[#allocation4 + $0x18] sm:$0xff]
        %v2403 = vld [vmem:[#allocation4 + $0x20] sm:$0xff]
        %v2404 = vld [vmem:[#allocation4 + $0x28] sm:$0xff]
        %v2405 = vld [vmem:[#allocation4 + $0x30] sm:$0xff]
        %v2406 = vld [vmem:[#allocation4 + $0x38] sm:$0xff]
        %v2407 = vld [vmem:[#allocation4 + $0x40] sm:$0xff]
        %v2408 = vld [vmem:[#allocation4 + $0x48] sm:$0xff]
        %v2409 = vld [vmem:[#allocation4 + $0x50] sm:$0xff]
        %v2410 = vld [vmem:[#allocation4 + $0x58] sm:$0xff]
        %v2411 = vld [vmem:[#allocation4 + $0x60] sm:$0xff]
        %v2412 = vld [vmem:[#allocation4 + $0x68] sm:$0xff]
        %v2413 = vld [vmem:[#allocation4 + $0x70] sm:$0xff]
        %v2414 = vld [vmem:[#allocation4 + $0x78] sm:$0xff]
        %v2415 = vld [vmem:[#allocation4 + $0x80] sm:$0xff]
        %v2416 = vld [vmem:[#allocation4 + $0x88] sm:$0xff]
        %v2417 = vld [vmem:[#allocation4 + $0x90] sm:$0xff]
        %v2418 = vld [vmem:[#allocation4 + $0x98] sm:$0xff]
        %v2419 = vld [vmem:[#allocation4 + $0xa0] sm:$0xff]
        %v2420 = vld [vmem:[#allocation4 + $0xa8] sm:$0xff]
        %v2421 = vld [vmem:[#allocation4 + $0xb0] sm:$0xff]
        %v2422 = vld [vmem:[#allocation4 + $0xb8] sm:$0xff]
        %v2423 = vld [vmem:[#allocation4 + $0xc0] sm:$0xff]
        %v2424 = vld [vmem:[#allocation4 + $0xc8] sm:$0xff]
        %v2425 = vld [vmem:[#allocation4 + $0xd0] sm:$0xff]
        %v2426 = vld [vmem:[#allocation4 + $0xd8] sm:$0xff]
        %v2427 = vld [vmem:[#allocation4 + $0xe0] sm:$0xff]
        %v2428 = vld [vmem:[#allocation4 + $0xe8] sm:$0xff]
        %v2429 = vld [vmem:[#allocation4 + $0xf0] sm:$0xff]
        %v2430 = vld [vmem:[#allocation4 + $0xf8] sm:$0xff]
        %v2431 = vld [vmem:[#allocation4 + $0x100] sm:$0xff]
        %v2432 = vld [vmem:[#allocation4 + $0x108] sm:$0xff]
        %v2433 = vld [vmem:[#allocation4 + $0x110] sm:$0xff]
        %v2434 = vld [vmem:[#allocation4 + $0x118] sm:$0xff]
        %v2435 = vld [vmem:[#allocation4 + $0x120] sm:$0xff]
        %v2436 = vld [vmem:[#allocation4 + $0x128] sm:$0xff]
        %v2437 = vld [vmem:[#allocation4 + $0x130] sm:$0xff]
        %v2438 = vld [vmem:[#allocation4 + $0x138] sm:$0xff]
        %v2439 = vld [vmem:[#allocation4 + $0x140] sm:$0xff]
        %v2440 = vld [vmem:[#allocation4 + $0x148] sm:$0xff]
        %v2441 = vld [vmem:[#allocation4 + $0x150] sm:$0xff]
        %v2442 = vld [vmem:[#allocation4 + $0x158] sm:$0xff]
        %v2443 = vld [vmem:[#allocation4 + $0x160] sm:$0xff]
        %v2444 = vld [vmem:[#allocation4 + $0x168] sm:$0xff]
        %v2445 = vld [vmem:[#allocation4 + $0x170] sm:$0xff]
        %v2446 = vld [vmem:[#allocation4 + $0x178] sm:$0xff]
        %v2463 = vunpack.c.l.b16 %v2383
        %v2464 = vunpack.c.l.b16 %v2384
        %v2465 = vunpack.c.l.b16 %v2385
        %v2466 = vunpack.c.l.b16 %v2386
        %v2467 = vunpack.c.l.b16 %v2387
        %v2468 = vunpack.c.l.b16 %v2388
        %v2469 = vunpack.c.l.b16 %v2389
        %v2470 = vunpack.c.l.b16 %v2390
        %v2471 = vunpack.c.l.b16 %v2391
        %v2472 = vunpack.c.l.b16 %v2392
        %v2473 = vunpack.c.l.b16 %v2393
        %v2474 = vunpack.c.l.b16 %v2394
        %v2475 = vunpack.c.l.b16 %v2395
        %v2476 = vunpack.c.l.b16 %v2396
        %v2477 = vunpack.c.l.b16 %v2397
        %v2478 = vunpack.c.l.b16 %v2398
        %v2479 = vpack.c.b16 %v2464, %v2463
        %v2480 = vpack.c.b16 %v2466, %v2465
        %v2481 = vpack.c.b16 %v2468, %v2467
        %v2482 = vpack.c.b16 %v2470, %v2469
        %v2483 = vpack.c.b16 %v2472, %v2471
        %v2484 = vpack.c.b16 %v2474, %v2473
        %v2485 = vpack.c.b16 %v2476, %v2475
        %v2486 = vpack.c.b16 %v2478, %v2477
        %2495 = vmatpush.bf16.msra.mxu0 %v2486
        %2496 = vmatpush.bf16.msra.mxu0 %v2485
        %2497 = vmatpush.bf16.msra.mxu0 %v2484
        %2498 = vmatpush.bf16.msra.mxu0 %v2483
        %2499 = vmatpush.bf16.msra.mxu0 %v2482
        %2500 = vmatpush.bf16.msra.mxu0 %v2481
        %2501 = vmatpush.bf16.msra.mxu0 %v2480
        %2502 = vmatpush.bf16.msra.mxu0 %v2479
        %2503 = vmatmul.bf16.gmra.mxu0 %v2359
        %v2504 = vpop.f32.mrf.mxu0
        %v2505 = vadd.f32 0.0, %v2504
        %v2506 = vpop.f32.mrf.mxu0
        %v2507 = vadd.f32 0.0, %v2506
        %2508 = vmatmul.bf16.gmra.mxu0 %v2360
        %v2509 = vpop.f32.mrf.mxu0
        %v2510 = vadd.f32 0.0, %v2509
        %v2511 = vpop.f32.mrf.mxu0
        %v2512 = vadd.f32 0.0, %v2511
        %2513 = vmatmul.bf16.gmra.mxu0 %v2361
        %v2514 = vpop.f32.mrf.mxu0
        %v2515 = vadd.f32 0.0, %v2514
        %v2516 = vpop.f32.mrf.mxu0
        %v2517 = vadd.f32 0.0, %v2516
        %2518 = vmatmul.bf16.gmra.mxu0 %v2362
        %v2519 = vpop.f32.mrf.mxu0
        %v2520 = vadd.f32 0.0, %v2519
        %v2521 = vpop.f32.mrf.mxu0
        %v2522 = vadd.f32 0.0, %v2521
        %2523 = vmatmul.bf16.gmra.mxu0 %v2363
        %v2524 = vpop.f32.mrf.mxu0
        %v2525 = vadd.f32 0.0, %v2524
        %v2526 = vpop.f32.mrf.mxu0
        %v2527 = vadd.f32 0.0, %v2526
        %2528 = vmatmul.bf16.gmra.mxu0 %v2364
        %v2529 = vpop.f32.mrf.mxu0
        %v2530 = vadd.f32 0.0, %v2529
        %v2531 = vpop.f32.mrf.mxu0
        %v2532 = vadd.f32 0.0, %v2531
        %2533 = vmatmul.bf16.gmra.mxu0 %v2365
        %v2534 = vpop.f32.mrf.mxu0
        %v2535 = vadd.f32 0.0, %v2534
        %v2536 = vpop.f32.mrf.mxu0
        %v2537 = vadd.f32 0.0, %v2536
        %2538 = vmatmul.bf16.gmra.mxu0 %v2366
        %v2539 = vpop.f32.mrf.mxu0
        %v2540 = vadd.f32 0.0, %v2539
        %v2541 = vpop.f32.mrf.mxu0
        %v2542 = vadd.f32 0.0, %v2541
        %2543 = vmatmul.bf16.gmra.mxu0 %v2367
        %v2544 = vpop.f32.mrf.mxu0
        %v2545 = vadd.f32 0.0, %v2544
        %v2546 = vpop.f32.mrf.mxu0
        %v2547 = vadd.f32 0.0, %v2546
        %2548 = vmatmul.bf16.gmra.mxu0 %v2368
        %v2549 = vpop.f32.mrf.mxu0
        %v2550 = vadd.f32 0.0, %v2549
        %v2551 = vpop.f32.mrf.mxu0
        %v2552 = vadd.f32 0.0, %v2551
        %2553 = vmatmul.bf16.gmra.mxu0 %v2369
        %v2554 = vpop.f32.mrf.mxu0
        %v2555 = vadd.f32 0.0, %v2554
        %v2556 = vpop.f32.mrf.mxu0
        %v2557 = vadd.f32 0.0, %v2556
        %2558 = vmatmul.bf16.gmra.mxu0 %v2370
        %v2559 = vpop.f32.mrf.mxu0
        %v2560 = vadd.f32 0.0, %v2559
        %v2561 = vpop.f32.mrf.mxu0
        %v2562 = vadd.f32 0.0, %v2561
        %2563 = vmatmul.bf16.gmra.mxu0 %v2371
        %v2564 = vpop.f32.mrf.mxu0
        %v2565 = vadd.f32 0.0, %v2564
        %v2566 = vpop.f32.mrf.mxu0
        %v2567 = vadd.f32 0.0, %v2566
        %2568 = vmatmul.bf16.gmra.mxu0 %v2372
        %v2569 = vpop.f32.mrf.mxu0
        %v2570 = vadd.f32 0.0, %v2569
        %v2571 = vpop.f32.mrf.mxu0
        %v2572 = vadd.f32 0.0, %v2571
        %2573 = vmatmul.bf16.gmra.mxu0 %v2373
        %v2574 = vpop.f32.mrf.mxu0
        %v2575 = vadd.f32 0.0, %v2574
        %v2576 = vpop.f32.mrf.mxu0
        %v2577 = vadd.f32 0.0, %v2576
        %2578 = vmatmul.bf16.gmra.mxu0 %v2374
        %v2579 = vpop.f32.mrf.mxu0
        %v2580 = vadd.f32 0.0, %v2579
        %v2581 = vpop.f32.mrf.mxu0
        %v2582 = vadd.f32 0.0, %v2581
        %2583 = vmatmul.bf16.gmra.mxu0 %v2375
        %v2584 = vpop.f32.mrf.mxu0
        %v2585 = vadd.f32 0.0, %v2584
        %v2586 = vpop.f32.mrf.mxu0
        %v2587 = vadd.f32 0.0, %v2586
        %2588 = vmatmul.bf16.gmra.mxu0 %v2376
        %v2589 = vpop.f32.mrf.mxu0
        %v2590 = vadd.f32 0.0, %v2589
        %v2591 = vpop.f32.mrf.mxu0
        %v2592 = vadd.f32 0.0, %v2591
        %2593 = vmatmul.bf16.gmra.mxu0 %v2377
        %v2594 = vpop.f32.mrf.mxu0
        %v2595 = vadd.f32 0.0, %v2594
        %v2596 = vpop.f32.mrf.mxu0
        %v2597 = vadd.f32 0.0, %v2596
        %2598 = vmatmul.bf16.gmra.mxu0 %v2378
        %v2599 = vpop.f32.mrf.mxu0
        %v2600 = vadd.f32 0.0, %v2599
        %v2601 = vpop.f32.mrf.mxu0
        %v2602 = vadd.f32 0.0, %v2601
        %2603 = vmatmul.bf16.gmra.mxu0 %v2379
        %v2604 = vpop.f32.mrf.mxu0
        %v2605 = vadd.f32 0.0, %v2604
        %v2606 = vpop.f32.mrf.mxu0
        %v2607 = vadd.f32 0.0, %v2606
        %2608 = vmatmul.bf16.gmra.mxu0 %v2380
        %v2609 = vpop.f32.mrf.mxu0
        %v2610 = vadd.f32 0.0, %v2609
        %v2611 = vpop.f32.mrf.mxu0
        %v2612 = vadd.f32 0.0, %v2611
        %2613 = vmatmul.bf16.gmra.mxu0 %v2381
        %v2614 = vpop.f32.mrf.mxu0
        %v2615 = vadd.f32 0.0, %v2614
        %v2616 = vpop.f32.mrf.mxu0
        %v2617 = vadd.f32 0.0, %v2616
        %2618 = vmatmul.bf16.gmra.mxu0 %v2382
        %v2619 = vpop.f32.mrf.mxu0
        %v2620 = vadd.f32 0.0, %v2619
        %v2621 = vpop.f32.mrf.mxu0
        %v2622 = vadd.f32 0.0, %v2621
        %2623 = vdwg.mxu0
        %v2624 = vadd.f32 %v2399, %v2505
        %v2625 = vadd.f32 %v2400, %v2507
        %v2626 = vadd.f32 %v2401, %v2510
        %v2627 = vadd.f32 %v2402, %v2512
        %v2628 = vadd.f32 %v2403, %v2515
        %v2629 = vadd.f32 %v2404, %v2517
        %v2630 = vadd.f32 %v2405, %v2520
        %v2631 = vadd.f32 %v2406, %v2522
        %v2632 = vadd.f32 %v2407, %v2525
        %v2633 = vadd.f32 %v2408, %v2527
        %v2634 = vadd.f32 %v2409, %v2530
        %v2635 = vadd.f32 %v2410, %v2532
        %v2636 = vadd.f32 %v2411, %v2535
        %v2637 = vadd.f32 %v2412, %v2537
        %v2638 = vadd.f32 %v2413, %v2540
        %v2639 = vadd.f32 %v2414, %v2542
        %v2640 = vadd.f32 %v2415, %v2545
        %v2641 = vadd.f32 %v2416, %v2547
        %v2642 = vadd.f32 %v2417, %v2550
        %v2643 = vadd.f32 %v2418, %v2552
        %v2644 = vadd.f32 %v2419, %v2555
        %v2645 = vadd.f32 %v2420, %v2557
        %v2646 = vadd.f32 %v2421, %v2560
        %v2647 = vadd.f32 %v2422, %v2562
        %v2648 = vadd.f32 %v2423, %v2565
        %v2649 = vadd.f32 %v2424, %v2567
        %v2650 = vadd.f32 %v2425, %v2570
        %v2651 = vadd.f32 %v2426, %v2572
        %v2652 = vadd.f32 %v2427, %v2575
        %v2653 = vadd.f32 %v2428, %v2577
        %v2654 = vadd.f32 %v2429, %v2580
        %v2655 = vadd.f32 %v2430, %v2582
        %v2656 = vadd.f32 %v2431, %v2585
        %v2657 = vadd.f32 %v2432, %v2587
        %v2658 = vadd.f32 %v2433, %v2590
        %v2659 = vadd.f32 %v2434, %v2592
        %v2660 = vadd.f32 %v2435, %v2595
        %v2661 = vadd.f32 %v2436, %v2597
        %v2662 = vadd.f32 %v2437, %v2600
        %v2663 = vadd.f32 %v2438, %v2602
        %v2664 = vadd.f32 %v2439, %v2605
        %v2665 = vadd.f32 %v2440, %v2607
        %v2666 = vadd.f32 %v2441, %v2610
        %v2667 = vadd.f32 %v2442, %v2612
        %v2668 = vadd.f32 %v2443, %v2615
        %v2669 = vadd.f32 %v2444, %v2617
        %v2670 = vadd.f32 %v2445, %v2620
        %v2671 = vadd.f32 %v2446, %v2622
        %2672 = vst [vmem:[#allocation4] sm:$0xff] %v2624
        %2673 = vst [vmem:[#allocation4 + $0x8] sm:$0xff] %v2625
        %2674 = vst [vmem:[#allocation4 + $0x10] sm:$0xff] %v2626
        %2675 = vst [vmem:[#allocation4 + $0x18] sm:$0xff] %v2627
        %2676 = vst [vmem:[#allocation4 + $0x20] sm:$0xff] %v2628
        %2677 = vst [vmem:[#allocation4 + $0x28] sm:$0xff] %v2629
        %2678 = vst [vmem:[#allocation4 + $0x30] sm:$0xff] %v2630
        %2679 = vst [vmem:[#allocation4 + $0x38] sm:$0xff] %v2631
        %2680 = vst [vmem:[#allocation4 + $0x40] sm:$0xff] %v2632
        %2681 = vst [vmem:[#allocation4 + $0x48] sm:$0xff] %v2633
        %2682 = vst [vmem:[#allocation4 + $0x50] sm:$0xff] %v2634
        %2683 = vst [vmem:[#allocation4 + $0x58] sm:$0xff] %v2635
        %2684 = vst [vmem:[#allocation4 + $0x60] sm:$0xff] %v2636
        %2685 = vst [vmem:[#allocation4 + $0x68] sm:$0xff] %v2637
        %2686 = vst [vmem:[#allocation4 + $0x70] sm:$0xff] %v2638
        %2687 = vst [vmem:[#allocation4 + $0x78] sm:$0xff] %v2639
        %2688 = vst [vmem:[#allocation4 + $0x80] sm:$0xff] %v2640
        %2689 = vst [vmem:[#allocation4 + $0x88] sm:$0xff] %v2641
        %2690 = vst [vmem:[#allocation4 + $0x90] sm:$0xff] %v2642
        %2691 = vst [vmem:[#allocation4 + $0x98] sm:$0xff] %v2643
        %2692 = vst [vmem:[#allocation4 + $0xa0] sm:$0xff] %v2644
        %2693 = vst [vmem:[#allocation4 + $0xa8] sm:$0xff] %v2645
        %2694 = vst [vmem:[#allocation4 + $0xb0] sm:$0xff] %v2646
        %2695 = vst [vmem:[#allocation4 + $0xb8] sm:$0xff] %v2647
        %2696 = vst [vmem:[#allocation4 + $0xc0] sm:$0xff] %v2648
        %2697 = vst [vmem:[#allocation4 + $0xc8] sm:$0xff] %v2649
        %2698 = vst [vmem:[#allocation4 + $0xd0] sm:$0xff] %v2650
        %2699 = vst [vmem:[#allocation4 + $0xd8] sm:$0xff] %v2651
        %2700 = vst [vmem:[#allocation4 + $0xe0] sm:$0xff] %v2652
        %2701 = vst [vmem:[#allocation4 + $0xe8] sm:$0xff] %v2653
        %2702 = vst [vmem:[#allocation4 + $0xf0] sm:$0xff] %v2654
        %2703 = vst [vmem:[#allocation4 + $0xf8] sm:$0xff] %v2655
        %2704 = vst [vmem:[#allocation4 + $0x100] sm:$0xff] %v2656
        %2705 = vst [vmem:[#allocation4 + $0x108] sm:$0xff] %v2657
        %2706 = vst [vmem:[#allocation4 + $0x110] sm:$0xff] %v2658
        %2707 = vst [vmem:[#allocation4 + $0x118] sm:$0xff] %v2659
        %2708 = vst [vmem:[#allocation4 + $0x120] sm:$0xff] %v2660
        %2709 = vst [vmem:[#allocation4 + $0x128] sm:$0xff] %v2661
        %2710 = vst [vmem:[#allocation4 + $0x130] sm:$0xff] %v2662
        %2711 = vst [vmem:[#allocation4 + $0x138] sm:$0xff] %v2663
        %2712 = vst [vmem:[#allocation4 + $0x140] sm:$0xff] %v2664
        %2713 = vst [vmem:[#allocation4 + $0x148] sm:$0xff] %v2665
        %2714 = vst [vmem:[#allocation4 + $0x150] sm:$0xff] %v2666
        %2715 = vst [vmem:[#allocation4 + $0x158] sm:$0xff] %v2667
        %2716 = vst [vmem:[#allocation4 + $0x160] sm:$0xff] %v2668
        %2717 = vst [vmem:[#allocation4 + $0x168] sm:$0xff] %v2669
        %2718 = vst [vmem:[#allocation4 + $0x170] sm:$0xff] %v2670
        %2719 = vst [vmem:[#allocation4 + $0x178] sm:$0xff] %v2671
        %v2720 = vld [vmem:[#allocation2 + $0x31] sm:$0xff]
        %v2721 = vld [vmem:[#allocation2 + $0x39] sm:$0xff]
        %v2722 = vld [vmem:[#allocation2 + $0x41] sm:$0xff]
        %v2723 = vld [vmem:[#allocation2 + $0x49] sm:$0xff]
        %v2724 = vld [vmem:[#allocation2 + $0x51] sm:$0xff]
        %v2725 = vld [vmem:[#allocation2 + $0x59] sm:$0xff]
        %v2726 = vld [vmem:[#allocation2 + $0x61] sm:$0xff]
        %v2727 = vld [vmem:[#allocation2 + $0x69] sm:$0xff]
        %v2728 = vld [vmem:[#allocation2 + $0x71] sm:$0xff]
        %v2729 = vld [vmem:[#allocation2 + $0x79] sm:$0xff]
        %v2730 = vld [vmem:[#allocation2 + $0x81] sm:$0xff]
        %v2731 = vld [vmem:[#allocation2 + $0x89] sm:$0xff]
        %v2732 = vld [vmem:[#allocation2 + $0x91] sm:$0xff]
        %v2733 = vld [vmem:[#allocation2 + $0x99] sm:$0xff]
        %v2734 = vld [vmem:[#allocation2 + $0xa1] sm:$0xff]
        %v2735 = vld [vmem:[#allocation2 + $0xa9] sm:$0xff]
        %v2736 = vld [vmem:[#allocation2 + $0xb1] sm:$0xff]
        %v2737 = vld [vmem:[#allocation2 + $0xb9] sm:$0xff]
        %v2738 = vld [vmem:[#allocation2 + $0xc1] sm:$0xff]
        %v2739 = vld [vmem:[#allocation2 + $0xc9] sm:$0xff]
        %v2740 = vld [vmem:[#allocation2 + $0xd1] sm:$0xff]
        %v2741 = vld [vmem:[#allocation2 + $0xd9] sm:$0xff]
        %v2742 = vld [vmem:[#allocation2 + $0xe1] sm:$0xff]
        %v2743 = vld [vmem:[#allocation2 + $0xe9] sm:$0xff]
        %v2744 = vld [vmem:[#allocation2 + $0xf1] sm:$0xff]
        %v2745 = vld [vmem:[#allocation2 + $0xf9] sm:$0xff]
        %v2746 = vld [vmem:[#allocation2 + $0x101] sm:$0xff]
        %v2747 = vld [vmem:[#allocation2 + $0x109] sm:$0xff]
        %v2748 = vld [vmem:[#allocation2 + $0x111] sm:$0xff]
        %v2749 = vld [vmem:[#allocation2 + $0x119] sm:$0xff]
        %v2750 = vld [vmem:[#allocation2 + $0x121] sm:$0xff]
        %v2751 = vld [vmem:[#allocation2 + $0x129] sm:$0xff]
        %v2752 = vld [vmem:[#allocation2 + $0x131] sm:$0xff]
        %v2753 = vld [vmem:[#allocation2 + $0x139] sm:$0xff]
        %v2754 = vld [vmem:[#allocation2 + $0x141] sm:$0xff]
        %v2755 = vld [vmem:[#allocation2 + $0x149] sm:$0xff]
        %v2756 = vld [vmem:[#allocation2 + $0x151] sm:$0xff]
        %v2757 = vld [vmem:[#allocation2 + $0x159] sm:$0xff]
        %v2758 = vld [vmem:[#allocation2 + $0x161] sm:$0xff]
        %v2759 = vld [vmem:[#allocation2 + $0x169] sm:$0xff]
        %v2760 = vld [vmem:[#allocation2 + $0x171] sm:$0xff]
        %v2761 = vld [vmem:[#allocation2 + $0x179] sm:$0xff]
        %v2762 = vld [vmem:[#allocation2 + $0x181] sm:$0xff]
        %v2763 = vld [vmem:[#allocation2 + $0x189] sm:$0xff]
        %v2764 = vld [vmem:[#allocation2 + $0x191] sm:$0xff]
        %v2765 = vld [vmem:[#allocation2 + $0x199] sm:$0xff]
        %v2766 = vld [vmem:[#allocation2 + $0x1a1] sm:$0xff]
        %v2767 = vld [vmem:[#allocation2 + $0x1a9] sm:$0xff]
        %v2768 = vpack.c.bf16 %v2721, %v2720
        %v2769 = vpack.c.bf16 %v2723, %v2722
        %v2770 = vpack.c.bf16 %v2725, %v2724
        %v2771 = vpack.c.bf16 %v2727, %v2726
        %v2772 = vpack.c.bf16 %v2729, %v2728
        %v2773 = vpack.c.bf16 %v2731, %v2730
        %v2774 = vpack.c.bf16 %v2733, %v2732
        %v2775 = vpack.c.bf16 %v2735, %v2734
        %v2776 = vpack.c.bf16 %v2737, %v2736
        %v2777 = vpack.c.bf16 %v2739, %v2738
        %v2778 = vpack.c.bf16 %v2741, %v2740
        %v2779 = vpack.c.bf16 %v2743, %v2742
        %v2780 = vpack.c.bf16 %v2745, %v2744
        %v2781 = vpack.c.bf16 %v2747, %v2746
        %v2782 = vpack.c.bf16 %v2749, %v2748
        %v2783 = vpack.c.bf16 %v2751, %v2750
        %v2784 = vpack.c.bf16 %v2753, %v2752
        %v2785 = vpack.c.bf16 %v2755, %v2754
        %v2786 = vpack.c.bf16 %v2757, %v2756
        %v2787 = vpack.c.bf16 %v2759, %v2758
        %v2788 = vpack.c.bf16 %v2761, %v2760
        %v2789 = vpack.c.bf16 %v2763, %v2762
        %v2790 = vpack.c.bf16 %v2765, %v2764
        %v2791 = vpack.c.bf16 %v2767, %v2766
        %v2792 = vld [vmem:[#allocation9 + $0x140] sm:$0xf]
        %v2793 = vld [vmem:[#allocation9 + $0x144] sm:$0xf]
        %v2794 = vld [vmem:[#allocation9 + $0x148] sm:$0xf]
        %v2795 = vld [vmem:[#allocation9 + $0x14c] sm:$0xf]
        %v2796 = vld [vmem:[#allocation9 + $0x150] sm:$0xf]
        %v2797 = vld [vmem:[#allocation9 + $0x154] sm:$0xf]
        %v2798 = vld [vmem:[#allocation9 + $0x158] sm:$0xf]
        %v2799 = vld [vmem:[#allocation9 + $0x15c] sm:$0xf]
        %v2800 = vld [vmem:[#allocation9 + $0x160] sm:$0xf]
        %v2801 = vld [vmem:[#allocation9 + $0x164] sm:$0xf]
        %v2802 = vld [vmem:[#allocation9 + $0x168] sm:$0xf]
        %v2803 = vld [vmem:[#allocation9 + $0x16c] sm:$0xf]
        %v2804 = vld [vmem:[#allocation9 + $0x170] sm:$0xf]
        %v2805 = vld [vmem:[#allocation9 + $0x174] sm:$0xf]
        %v2806 = vld [vmem:[#allocation9 + $0x178] sm:$0xf]
        %v2807 = vld [vmem:[#allocation9 + $0x17c] sm:$0xf]
        %v2808 = vld [vmem:[#allocation4] sm:$0xff]
        %v2809 = vld [vmem:[#allocation4 + $0x8] sm:$0xff]
        %v2810 = vld [vmem:[#allocation4 + $0x10] sm:$0xff]
        %v2811 = vld [vmem:[#allocation4 + $0x18] sm:$0xff]
        %v2812 = vld [vmem:[#allocation4 + $0x20] sm:$0xff]
        %v2813 = vld [vmem:[#allocation4 + $0x28] sm:$0xff]
        %v2814 = vld [vmem:[#allocation4 + $0x30] sm:$0xff]
        %v2815 = vld [vmem:[#allocation4 + $0x38] sm:$0xff]
        %v2816 = vld [vmem:[#allocation4 + $0x40] sm:$0xff]
        %v2817 = vld [vmem:[#allocation4 + $0x48] sm:$0xff]
        %v2818 = vld [vmem:[#allocation4 + $0x50] sm:$0xff]
        %v2819 = vld [vmem:[#allocation4 + $0x58] sm:$0xff]
        %v2820 = vld [vmem:[#allocation4 + $0x60] sm:$0xff]
        %v2821 = vld [vmem:[#allocation4 + $0x68] sm:$0xff]
        %v2822 = vld [vmem:[#allocation4 + $0x70] sm:$0xff]
        %v2823 = vld [vmem:[#allocation4 + $0x78] sm:$0xff]
        %v2824 = vld [vmem:[#allocation4 + $0x80] sm:$0xff]
        %v2825 = vld [vmem:[#allocation4 + $0x88] sm:$0xff]
        %v2826 = vld [vmem:[#allocation4 + $0x90] sm:$0xff]
        %v2827 = vld [vmem:[#allocation4 + $0x98] sm:$0xff]
        %v2828 = vld [vmem:[#allocation4 + $0xa0] sm:$0xff]
        %v2829 = vld [vmem:[#allocation4 + $0xa8] sm:$0xff]
        %v2830 = vld [vmem:[#allocation4 + $0xb0] sm:$0xff]
        %v2831 = vld [vmem:[#allocation4 + $0xb8] sm:$0xff]
        %v2832 = vld [vmem:[#allocation4 + $0xc0] sm:$0xff]
        %v2833 = vld [vmem:[#allocation4 + $0xc8] sm:$0xff]
        %v2834 = vld [vmem:[#allocation4 + $0xd0] sm:$0xff]
        %v2835 = vld [vmem:[#allocation4 + $0xd8] sm:$0xff]
        %v2836 = vld [vmem:[#allocation4 + $0xe0] sm:$0xff]
        %v2837 = vld [vmem:[#allocation4 + $0xe8] sm:$0xff]
        %v2838 = vld [vmem:[#allocation4 + $0xf0] sm:$0xff]
        %v2839 = vld [vmem:[#allocation4 + $0xf8] sm:$0xff]
        %v2840 = vld [vmem:[#allocation4 + $0x100] sm:$0xff]
        %v2841 = vld [vmem:[#allocation4 + $0x108] sm:$0xff]
        %v2842 = vld [vmem:[#allocation4 + $0x110] sm:$0xff]
        %v2843 = vld [vmem:[#allocation4 + $0x118] sm:$0xff]
        %v2844 = vld [vmem:[#allocation4 + $0x120] sm:$0xff]
        %v2845 = vld [vmem:[#allocation4 + $0x128] sm:$0xff]
        %v2846 = vld [vmem:[#allocation4 + $0x130] sm:$0xff]
        %v2847 = vld [vmem:[#allocation4 + $0x138] sm:$0xff]
        %v2848 = vld [vmem:[#allocation4 + $0x140] sm:$0xff]
        %v2849 = vld [vmem:[#allocation4 + $0x148] sm:$0xff]
        %v2850 = vld [vmem:[#allocation4 + $0x150] sm:$0xff]
        %v2851 = vld [vmem:[#allocation4 + $0x158] sm:$0xff]
        %v2852 = vld [vmem:[#allocation4 + $0x160] sm:$0xff]
        %v2853 = vld [vmem:[#allocation4 + $0x168] sm:$0xff]
        %v2854 = vld [vmem:[#allocation4 + $0x170] sm:$0xff]
        %v2855 = vld [vmem:[#allocation4 + $0x178] sm:$0xff]
        %v2872 = vunpack.c.l.b16 %v2792
        %v2873 = vunpack.c.l.b16 %v2793
        %v2874 = vunpack.c.l.b16 %v2794
        %v2875 = vunpack.c.l.b16 %v2795
        %v2876 = vunpack.c.l.b16 %v2796
        %v2877 = vunpack.c.l.b16 %v2797
        %v2878 = vunpack.c.l.b16 %v2798
        %v2879 = vunpack.c.l.b16 %v2799
        %v2880 = vunpack.c.l.b16 %v2800
        %v2881 = vunpack.c.l.b16 %v2801
        %v2882 = vunpack.c.l.b16 %v2802
        %v2883 = vunpack.c.l.b16 %v2803
        %v2884 = vunpack.c.l.b16 %v2804
        %v2885 = vunpack.c.l.b16 %v2805
        %v2886 = vunpack.c.l.b16 %v2806
        %v2887 = vunpack.c.l.b16 %v2807
        %v2888 = vpack.c.b16 %v2873, %v2872
        %v2889 = vpack.c.b16 %v2875, %v2874
        %v2890 = vpack.c.b16 %v2877, %v2876
        %v2891 = vpack.c.b16 %v2879, %v2878
        %v2892 = vpack.c.b16 %v2881, %v2880
        %v2893 = vpack.c.b16 %v2883, %v2882
        %v2894 = vpack.c.b16 %v2885, %v2884
        %v2895 = vpack.c.b16 %v2887, %v2886
        %2904 = vmatpush.bf16.msra.mxu0 %v2895
        %2905 = vmatpush.bf16.msra.mxu0 %v2894
        %2906 = vmatpush.bf16.msra.mxu0 %v2893
        %2907 = vmatpush.bf16.msra.mxu0 %v2892
        %2908 = vmatpush.bf16.msra.mxu0 %v2891
        %2909 = vmatpush.bf16.msra.mxu0 %v2890
        %2910 = vmatpush.bf16.msra.mxu0 %v2889
        %2911 = vmatpush.bf16.msra.mxu0 %v2888
        %2912 = vmatmul.bf16.gmra.mxu0 %v2768
        %v2913 = vpop.f32.mrf.mxu0
        %v2914 = vadd.f32 0.0, %v2913
        %v2915 = vpop.f32.mrf.mxu0
        %v2916 = vadd.f32 0.0, %v2915
        %2917 = vmatmul.bf16.gmra.mxu0 %v2769
        %v2918 = vpop.f32.mrf.mxu0
        %v2919 = vadd.f32 0.0, %v2918
        %v2920 = vpop.f32.mrf.mxu0
        %v2921 = vadd.f32 0.0, %v2920
        %2922 = vmatmul.bf16.gmra.mxu0 %v2770
        %v2923 = vpop.f32.mrf.mxu0
        %v2924 = vadd.f32 0.0, %v2923
        %v2925 = vpop.f32.mrf.mxu0
        %v2926 = vadd.f32 0.0, %v2925
        %2927 = vmatmul.bf16.gmra.mxu0 %v2771
        %v2928 = vpop.f32.mrf.mxu0
        %v2929 = vadd.f32 0.0, %v2928
        %v2930 = vpop.f32.mrf.mxu0
        %v2931 = vadd.f32 0.0, %v2930
        %2932 = vmatmul.bf16.gmra.mxu0 %v2772
        %v2933 = vpop.f32.mrf.mxu0
        %v2934 = vadd.f32 0.0, %v2933
        %v2935 = vpop.f32.mrf.mxu0
        %v2936 = vadd.f32 0.0, %v2935
        %2937 = vmatmul.bf16.gmra.mxu0 %v2773
        %v2938 = vpop.f32.mrf.mxu0
        %v2939 = vadd.f32 0.0, %v2938
        %v2940 = vpop.f32.mrf.mxu0
        %v2941 = vadd.f32 0.0, %v2940
        %2942 = vmatmul.bf16.gmra.mxu0 %v2774
        %v2943 = vpop.f32.mrf.mxu0
        %v2944 = vadd.f32 0.0, %v2943
        %v2945 = vpop.f32.mrf.mxu0
        %v2946 = vadd.f32 0.0, %v2945
        %2947 = vmatmul.bf16.gmra.mxu0 %v2775
        %v2948 = vpop.f32.mrf.mxu0
        %v2949 = vadd.f32 0.0, %v2948
        %v2950 = vpop.f32.mrf.mxu0
        %v2951 = vadd.f32 0.0, %v2950
        %2952 = vmatmul.bf16.gmra.mxu0 %v2776
        %v2953 = vpop.f32.mrf.mxu0
        %v2954 = vadd.f32 0.0, %v2953
        %v2955 = vpop.f32.mrf.mxu0
        %v2956 = vadd.f32 0.0, %v2955
        %2957 = vmatmul.bf16.gmra.mxu0 %v2777
        %v2958 = vpop.f32.mrf.mxu0
        %v2959 = vadd.f32 0.0, %v2958
        %v2960 = vpop.f32.mrf.mxu0
        %v2961 = vadd.f32 0.0, %v2960
        %2962 = vmatmul.bf16.gmra.mxu0 %v2778
        %v2963 = vpop.f32.mrf.mxu0
        %v2964 = vadd.f32 0.0, %v2963
        %v2965 = vpop.f32.mrf.mxu0
        %v2966 = vadd.f32 0.0, %v2965
        %2967 = vmatmul.bf16.gmra.mxu0 %v2779
        %v2968 = vpop.f32.mrf.mxu0
        %v2969 = vadd.f32 0.0, %v2968
        %v2970 = vpop.f32.mrf.mxu0
        %v2971 = vadd.f32 0.0, %v2970
        %2972 = vmatmul.bf16.gmra.mxu0 %v2780
        %v2973 = vpop.f32.mrf.mxu0
        %v2974 = vadd.f32 0.0, %v2973
        %v2975 = vpop.f32.mrf.mxu0
        %v2976 = vadd.f32 0.0, %v2975
        %2977 = vmatmul.bf16.gmra.mxu0 %v2781
        %v2978 = vpop.f32.mrf.mxu0
        %v2979 = vadd.f32 0.0, %v2978
        %v2980 = vpop.f32.mrf.mxu0
        %v2981 = vadd.f32 0.0, %v2980
        %2982 = vmatmul.bf16.gmra.mxu0 %v2782
        %v2983 = vpop.f32.mrf.mxu0
        %v2984 = vadd.f32 0.0, %v2983
        %v2985 = vpop.f32.mrf.mxu0
        %v2986 = vadd.f32 0.0, %v2985
        %2987 = vmatmul.bf16.gmra.mxu0 %v2783
        %v2988 = vpop.f32.mrf.mxu0
        %v2989 = vadd.f32 0.0, %v2988
        %v2990 = vpop.f32.mrf.mxu0
        %v2991 = vadd.f32 0.0, %v2990
        %2992 = vmatmul.bf16.gmra.mxu0 %v2784
        %v2993 = vpop.f32.mrf.mxu0
        %v2994 = vadd.f32 0.0, %v2993
        %v2995 = vpop.f32.mrf.mxu0
        %v2996 = vadd.f32 0.0, %v2995
        %2997 = vmatmul.bf16.gmra.mxu0 %v2785
        %v2998 = vpop.f32.mrf.mxu0
        %v2999 = vadd.f32 0.0, %v2998
        %v3000 = vpop.f32.mrf.mxu0
        %v3001 = vadd.f32 0.0, %v3000
        %3002 = vmatmul.bf16.gmra.mxu0 %v2786
        %v3003 = vpop.f32.mrf.mxu0
        %v3004 = vadd.f32 0.0, %v3003
        %v3005 = vpop.f32.mrf.mxu0
        %v3006 = vadd.f32 0.0, %v3005
        %3007 = vmatmul.bf16.gmra.mxu0 %v2787
        %v3008 = vpop.f32.mrf.mxu0
        %v3009 = vadd.f32 0.0, %v3008
        %v3010 = vpop.f32.mrf.mxu0
        %v3011 = vadd.f32 0.0, %v3010
        %3012 = vmatmul.bf16.gmra.mxu0 %v2788
        %v3013 = vpop.f32.mrf.mxu0
        %v3014 = vadd.f32 0.0, %v3013
        %v3015 = vpop.f32.mrf.mxu0
        %v3016 = vadd.f32 0.0, %v3015
        %3017 = vmatmul.bf16.gmra.mxu0 %v2789
        %v3018 = vpop.f32.mrf.mxu0
        %v3019 = vadd.f32 0.0, %v3018
        %v3020 = vpop.f32.mrf.mxu0
        %v3021 = vadd.f32 0.0, %v3020
        %3022 = vmatmul.bf16.gmra.mxu0 %v2790
        %v3023 = vpop.f32.mrf.mxu0
        %v3024 = vadd.f32 0.0, %v3023
        %v3025 = vpop.f32.mrf.mxu0
        %v3026 = vadd.f32 0.0, %v3025
        %3027 = vmatmul.bf16.gmra.mxu0 %v2791
        %v3028 = vpop.f32.mrf.mxu0
        %v3029 = vadd.f32 0.0, %v3028
        %v3030 = vpop.f32.mrf.mxu0
        %v3031 = vadd.f32 0.0, %v3030
        %3032 = vdwg.mxu0
        %v3033 = vadd.f32 %v2808, %v2914
        %v3034 = vadd.f32 %v2809, %v2916
        %v3035 = vadd.f32 %v2810, %v2919
        %v3036 = vadd.f32 %v2811, %v2921
        %v3037 = vadd.f32 %v2812, %v2924
        %v3038 = vadd.f32 %v2813, %v2926
        %v3039 = vadd.f32 %v2814, %v2929
        %v3040 = vadd.f32 %v2815, %v2931
        %v3041 = vadd.f32 %v2816, %v2934
        %v3042 = vadd.f32 %v2817, %v2936
        %v3043 = vadd.f32 %v2818, %v2939
        %v3044 = vadd.f32 %v2819, %v2941
        %v3045 = vadd.f32 %v2820, %v2944
        %v3046 = vadd.f32 %v2821, %v2946
        %v3047 = vadd.f32 %v2822, %v2949
        %v3048 = vadd.f32 %v2823, %v2951
        %v3049 = vadd.f32 %v2824, %v2954
        %v3050 = vadd.f32 %v2825, %v2956
        %v3051 = vadd.f32 %v2826, %v2959
        %v3052 = vadd.f32 %v2827, %v2961
        %v3053 = vadd.f32 %v2828, %v2964
        %v3054 = vadd.f32 %v2829, %v2966
        %v3055 = vadd.f32 %v2830, %v2969
        %v3056 = vadd.f32 %v2831, %v2971
        %v3057 = vadd.f32 %v2832, %v2974
        %v3058 = vadd.f32 %v2833, %v2976
        %v3059 = vadd.f32 %v2834, %v2979
        %v3060 = vadd.f32 %v2835, %v2981
        %v3061 = vadd.f32 %v2836, %v2984
        %v3062 = vadd.f32 %v2837, %v2986
        %v3063 = vadd.f32 %v2838, %v2989
        %v3064 = vadd.f32 %v2839, %v2991
        %v3065 = vadd.f32 %v2840, %v2994
        %v3066 = vadd.f32 %v2841, %v2996
        %v3067 = vadd.f32 %v2842, %v2999
        %v3068 = vadd.f32 %v2843, %v3001
        %v3069 = vadd.f32 %v2844, %v3004
        %v3070 = vadd.f32 %v2845, %v3006
        %v3071 = vadd.f32 %v2846, %v3009
        %v3072 = vadd.f32 %v2847, %v3011
        %v3073 = vadd.f32 %v2848, %v3014
        %v3074 = vadd.f32 %v2849, %v3016
        %v3075 = vadd.f32 %v2850, %v3019
        %v3076 = vadd.f32 %v2851, %v3021
        %v3077 = vadd.f32 %v2852, %v3024
        %v3078 = vadd.f32 %v2853, %v3026
        %v3079 = vadd.f32 %v2854, %v3029
        %v3080 = vadd.f32 %v2855, %v3031
        %3081 = vst [vmem:[#allocation4] sm:$0xff] %v3033
        %3082 = vst [vmem:[#allocation4 + $0x8] sm:$0xff] %v3034
        %3083 = vst [vmem:[#allocation4 + $0x10] sm:$0xff] %v3035
        %3084 = vst [vmem:[#allocation4 + $0x18] sm:$0xff] %v3036
        %3085 = vst [vmem:[#allocation4 + $0x20] sm:$0xff] %v3037
        %3086 = vst [vmem:[#allocation4 + $0x28] sm:$0xff] %v3038
        %3087 = vst [vmem:[#allocation4 + $0x30] sm:$0xff] %v3039
        %3088 = vst [vmem:[#allocation4 + $0x38] sm:$0xff] %v3040
        %3089 = vst [vmem:[#allocation4 + $0x40] sm:$0xff] %v3041
        %3090 = vst [vmem:[#allocation4 + $0x48] sm:$0xff] %v3042
        %3091 = vst [vmem:[#allocation4 + $0x50] sm:$0xff] %v3043
        %3092 = vst [vmem:[#allocation4 + $0x58] sm:$0xff] %v3044
        %3093 = vst [vmem:[#allocation4 + $0x60] sm:$0xff] %v3045
        %3094 = vst [vmem:[#allocation4 + $0x68] sm:$0xff] %v3046
        %3095 = vst [vmem:[#allocation4 + $0x70] sm:$0xff] %v3047
        %3096 = vst [vmem:[#allocation4 + $0x78] sm:$0xff] %v3048
        %3097 = vst [vmem:[#allocation4 + $0x80] sm:$0xff] %v3049
        %3098 = vst [vmem:[#allocation4 + $0x88] sm:$0xff] %v3050
        %3099 = vst [vmem:[#allocation4 + $0x90] sm:$0xff] %v3051
        %3100 = vst [vmem:[#allocation4 + $0x98] sm:$0xff] %v3052
        %3101 = vst [vmem:[#allocation4 + $0xa0] sm:$0xff] %v3053
        %3102 = vst [vmem:[#allocation4 + $0xa8] sm:$0xff] %v3054
        %3103 = vst [vmem:[#allocation4 + $0xb0] sm:$0xff] %v3055
        %3104 = vst [vmem:[#allocation4 + $0xb8] sm:$0xff] %v3056
        %3105 = vst [vmem:[#allocation4 + $0xc0] sm:$0xff] %v3057
        %3106 = vst [vmem:[#allocation4 + $0xc8] sm:$0xff] %v3058
        %3107 = vst [vmem:[#allocation4 + $0xd0] sm:$0xff] %v3059
        %3108 = vst [vmem:[#allocation4 + $0xd8] sm:$0xff] %v3060
        %3109 = vst [vmem:[#allocation4 + $0xe0] sm:$0xff] %v3061
        %3110 = vst [vmem:[#allocation4 + $0xe8] sm:$0xff] %v3062
        %3111 = vst [vmem:[#allocation4 + $0xf0] sm:$0xff] %v3063
        %3112 = vst [vmem:[#allocation4 + $0xf8] sm:$0xff] %v3064
        %3113 = vst [vmem:[#allocation4 + $0x100] sm:$0xff] %v3065
        %3114 = vst [vmem:[#allocation4 + $0x108] sm:$0xff] %v3066
        %3115 = vst [vmem:[#allocation4 + $0x110] sm:$0xff] %v3067
        %3116 = vst [vmem:[#allocation4 + $0x118] sm:$0xff] %v3068
        %3117 = vst [vmem:[#allocation4 + $0x120] sm:$0xff] %v3069
        %3118 = vst [vmem:[#allocation4 + $0x128] sm:$0xff] %v3070
        %3119 = vst [vmem:[#allocation4 + $0x130] sm:$0xff] %v3071
        %3120 = vst [vmem:[#allocation4 + $0x138] sm:$0xff] %v3072
        %3121 = vst [vmem:[#allocation4 + $0x140] sm:$0xff] %v3073
        %3122 = vst [vmem:[#allocation4 + $0x148] sm:$0xff] %v3074
        %3123 = vst [vmem:[#allocation4 + $0x150] sm:$0xff] %v3075
        %3124 = vst [vmem:[#allocation4 + $0x158] sm:$0xff] %v3076
        %3125 = vst [vmem:[#allocation4 + $0x160] sm:$0xff] %v3077
        %3126 = vst [vmem:[#allocation4 + $0x168] sm:$0xff] %v3078
        %3127 = vst [vmem:[#allocation4 + $0x170] sm:$0xff] %v3079
        %3128 = vst [vmem:[#allocation4 + $0x178] sm:$0xff] %v3080
        %v3129 = vld [vmem:[#allocation2 + $0x47] sm:$0xff]
        %v3130 = vld [vmem:[#allocation2 + $0x4f] sm:$0xff]
        %v3131 = vld [vmem:[#allocation2 + $0x57] sm:$0xff]
        %v3132 = vld [vmem:[#allocation2 + $0x5f] sm:$0xff]
        %v3133 = vld [vmem:[#allocation2 + $0x67] sm:$0xff]
        %v3134 = vld [vmem:[#allocation2 + $0x6f] sm:$0xff]
        %v3135 = vld [vmem:[#allocation2 + $0x77] sm:$0xff]
        %v3136 = vld [vmem:[#allocation2 + $0x7f] sm:$0xff]
        %v3137 = vld [vmem:[#allocation2 + $0x87] sm:$0xff]
        %v3138 = vld [vmem:[#allocation2 + $0x8f] sm:$0xff]
        %v3139 = vld [vmem:[#allocation2 + $0x97] sm:$0xff]
        %v3140 = vld [vmem:[#allocation2 + $0x9f] sm:$0xff]
        %v3141 = vld [vmem:[#allocation2 + $0xa7] sm:$0xff]
        %v3142 = vld [vmem:[#allocation2 + $0xaf] sm:$0xff]
        %v3143 = vld [vmem:[#allocation2 + $0xb7] sm:$0xff]
        %v3144 = vld [vmem:[#allocation2 + $0xbf] sm:$0xff]
        %v3145 = vld [vmem:[#allocation2 + $0xc7] sm:$0xff]
        %v3146 = vld [vmem:[#allocation2 + $0xcf] sm:$0xff]
        %v3147 = vld [vmem:[#allocation2 + $0xd7] sm:$0xff]
        %v3148 = vld [vmem:[#allocation2 + $0xdf] sm:$0xff]
        %v3149 = vld [vmem:[#allocation2 + $0xe7] sm:$0xff]
        %v3150 = vld [vmem:[#allocation2 + $0xef] sm:$0xff]
        %v3151 = vld [vmem:[#allocation2 + $0xf7] sm:$0xff]
        %v3152 = vld [vmem:[#allocation2 + $0xff] sm:$0xff]
        %v3153 = vld [vmem:[#allocation2 + $0x107] sm:$0xff]
        %v3154 = vld [vmem:[#allocation2 + $0x10f] sm:$0xff]
        %v3155 = vld [vmem:[#allocation2 + $0x117] sm:$0xff]
        %v3156 = vld [vmem:[#allocation2 + $0x11f] sm:$0xff]
        %v3157 = vld [vmem:[#allocation2 + $0x127] sm:$0xff]
        %v3158 = vld [vmem:[#allocation2 + $0x12f] sm:$0xff]
        %v3159 = vld [vmem:[#allocation2 + $0x137] sm:$0xff]
        %v3160 = vld [vmem:[#allocation2 + $0x13f] sm:$0xff]
        %v3161 = vld [vmem:[#allocation2 + $0x147] sm:$0xff]
        %v3162 = vld [vmem:[#allocation2 + $0x14f] sm:$0xff]
        %v3163 = vld [vmem:[#allocation2 + $0x157] sm:$0xff]
        %v3164 = vld [vmem:[#allocation2 + $0x15f] sm:$0xff]
        %v3165 = vld [vmem:[#allocation2 + $0x167] sm:$0xff]
        %v3166 = vld [vmem:[#allocation2 + $0x16f] sm:$0xff]
        %v3167 = vld [vmem:[#allocation2 + $0x177] sm:$0xff]
        %v3168 = vld [vmem:[#allocation2 + $0x17f] sm:$0xff]
        %v3169 = vld [vmem:[#allocation2 + $0x187] sm:$0xff]
        %v3170 = vld [vmem:[#allocation2 + $0x18f] sm:$0xff]
        %v3171 = vld [vmem:[#allocation2 + $0x197] sm:$0xff]
        %v3172 = vld [vmem:[#allocation2 + $0x19f] sm:$0xff]
        %v3173 = vld [vmem:[#allocation2 + $0x1a7] sm:$0xff]
        %v3174 = vld [vmem:[#allocation2 + $0x1af] sm:$0xff]
        %v3175 = vld [vmem:[#allocation2 + $0x1b7] sm:$0xff]
        %v3176 = vld [vmem:[#allocation2 + $0x1bf] sm:$0xff]
        %v3177 = vpack.c.bf16 %v3130, %v3129
        %v3178 = vpack.c.bf16 %v3132, %v3131
        %v3179 = vpack.c.bf16 %v3134, %v3133
        %v3180 = vpack.c.bf16 %v3136, %v3135
        %v3181 = vpack.c.bf16 %v3138, %v3137
        %v3182 = vpack.c.bf16 %v3140, %v3139
        %v3183 = vpack.c.bf16 %v3142, %v3141
        %v3184 = vpack.c.bf16 %v3144, %v3143
        %v3185 = vpack.c.bf16 %v3146, %v3145
        %v3186 = vpack.c.bf16 %v3148, %v3147
        %v3187 = vpack.c.bf16 %v3150, %v3149
        %v3188 = vpack.c.bf16 %v3152, %v3151
        %v3189 = vpack.c.bf16 %v3154, %v3153
        %v3190 = vpack.c.bf16 %v3156, %v3155
        %v3191 = vpack.c.bf16 %v3158, %v3157
        %v3192 = vpack.c.bf16 %v3160, %v3159
        %v3193 = vpack.c.bf16 %v3162, %v3161
        %v3194 = vpack.c.bf16 %v3164, %v3163
        %v3195 = vpack.c.bf16 %v3166, %v3165
        %v3196 = vpack.c.bf16 %v3168, %v3167
        %v3197 = vpack.c.bf16 %v3170, %v3169
        %v3198 = vpack.c.bf16 %v3172, %v3171
        %v3199 = vpack.c.bf16 %v3174, %v3173
        %v3200 = vpack.c.bf16 %v3176, %v3175
        %v3201 = vld [vmem:[#allocation9 + $0x180] sm:$0xf]
        %v3202 = vld [vmem:[#allocation9 + $0x184] sm:$0xf]
        %v3203 = vld [vmem:[#allocation9 + $0x188] sm:$0xf]
        %v3204 = vld [vmem:[#allocation9 + $0x18c] sm:$0xf]
        %v3205 = vld [vmem:[#allocation9 + $0x190] sm:$0xf]
        %v3206 = vld [vmem:[#allocation9 + $0x194] sm:$0xf]
        %v3207 = vld [vmem:[#allocation9 + $0x198] sm:$0xf]
        %v3208 = vld [vmem:[#allocation9 + $0x19c] sm:$0xf]
        %v3209 = vld [vmem:[#allocation9 + $0x1a0] sm:$0xf]
        %v3210 = vld [vmem:[#allocation9 + $0x1a4] sm:$0xf]
        %v3211 = vld [vmem:[#allocation9 + $0x1a8] sm:$0xf]
        %v3212 = vld [vmem:[#allocation9 + $0x1ac] sm:$0xf]
        %v3213 = vld [vmem:[#allocation9 + $0x1b0] sm:$0xf]
        %v3214 = vld [vmem:[#allocation9 + $0x1b4] sm:$0xf]
        %v3215 = vld [vmem:[#allocation9 + $0x1b8] sm:$0xf]
        %v3216 = vld [vmem:[#allocation9 + $0x1bc] sm:$0xf]
        %v3217 = vld [vmem:[#allocation4] sm:$0xff]
        %v3218 = vld [vmem:[#allocation4 + $0x8] sm:$0xff]
        %v3219 = vld [vmem:[#allocation4 + $0x10] sm:$0xff]
        %v3220 = vld [vmem:[#allocation4 + $0x18] sm:$0xff]
        %v3221 = vld [vmem:[#allocation4 + $0x20] sm:$0xff]
        %v3222 = vld [vmem:[#allocation4 + $0x28] sm:$0xff]
        %v3223 = vld [vmem:[#allocation4 + $0x30] sm:$0xff]
        %v3224 = vld [vmem:[#allocation4 + $0x38] sm:$0xff]
        %v3225 = vld [vmem:[#allocation4 + $0x40] sm:$0xff]
        %v3226 = vld [vmem:[#allocation4 + $0x48] sm:$0xff]
        %v3227 = vld [vmem:[#allocation4 + $0x50] sm:$0xff]
        %v3228 = vld [vmem:[#allocation4 + $0x58] sm:$0xff]
        %v3229 = vld [vmem:[#allocation4 + $0x60] sm:$0xff]
        %v3230 = vld [vmem:[#allocation4 + $0x68] sm:$0xff]
        %v3231 = vld [vmem:[#allocation4 + $0x70] sm:$0xff]
        %v3232 = vld [vmem:[#allocation4 + $0x78] sm:$0xff]
        %v3233 = vld [vmem:[#allocation4 + $0x80] sm:$0xff]
        %v3234 = vld [vmem:[#allocation4 + $0x88] sm:$0xff]
        %v3235 = vld [vmem:[#allocation4 + $0x90] sm:$0xff]
        %v3236 = vld [vmem:[#allocation4 + $0x98] sm:$0xff]
        %v3237 = vld [vmem:[#allocation4 + $0xa0] sm:$0xff]
        %v3238 = vld [vmem:[#allocation4 + $0xa8] sm:$0xff]
        %v3239 = vld [vmem:[#allocation4 + $0xb0] sm:$0xff]
        %v3240 = vld [vmem:[#allocation4 + $0xb8] sm:$0xff]
        %v3241 = vld [vmem:[#allocation4 + $0xc0] sm:$0xff]
        %v3242 = vld [vmem:[#allocation4 + $0xc8] sm:$0xff]
        %v3243 = vld [vmem:[#allocation4 + $0xd0] sm:$0xff]
        %v3244 = vld [vmem:[#allocation4 + $0xd8] sm:$0xff]
        %v3245 = vld [vmem:[#allocation4 + $0xe0] sm:$0xff]
        %v3246 = vld [vmem:[#allocation4 + $0xe8] sm:$0xff]
        %v3247 = vld [vmem:[#allocation4 + $0xf0] sm:$0xff]
        %v3248 = vld [vmem:[#allocation4 + $0xf8] sm:$0xff]
        %v3249 = vld [vmem:[#allocation4 + $0x100] sm:$0xff]
        %v3250 = vld [vmem:[#allocation4 + $0x108] sm:$0xff]
        %v3251 = vld [vmem:[#allocation4 + $0x110] sm:$0xff]
        %v3252 = vld [vmem:[#allocation4 + $0x118] sm:$0xff]
        %v3253 = vld [vmem:[#allocation4 + $0x120] sm:$0xff]
        %v3254 = vld [vmem:[#allocation4 + $0x128] sm:$0xff]
        %v3255 = vld [vmem:[#allocation4 + $0x130] sm:$0xff]
        %v3256 = vld [vmem:[#allocation4 + $0x138] sm:$0xff]
        %v3257 = vld [vmem:[#allocation4 + $0x140] sm:$0xff]
        %v3258 = vld [vmem:[#allocation4 + $0x148] sm:$0xff]
        %v3259 = vld [vmem:[#allocation4 + $0x150] sm:$0xff]
        %v3260 = vld [vmem:[#allocation4 + $0x158] sm:$0xff]
        %v3261 = vld [vmem:[#allocation4 + $0x160] sm:$0xff]
        %v3262 = vld [vmem:[#allocation4 + $0x168] sm:$0xff]
        %v3263 = vld [vmem:[#allocation4 + $0x170] sm:$0xff]
        %v3264 = vld [vmem:[#allocation4 + $0x178] sm:$0xff]
        %v3281 = vunpack.c.l.b16 %v3201
        %v3282 = vunpack.c.l.b16 %v3202
        %v3283 = vunpack.c.l.b16 %v3203
        %v3284 = vunpack.c.l.b16 %v3204
        %v3285 = vunpack.c.l.b16 %v3205
        %v3286 = vunpack.c.l.b16 %v3206
        %v3287 = vunpack.c.l.b16 %v3207
        %v3288 = vunpack.c.l.b16 %v3208
        %v3289 = vunpack.c.l.b16 %v3209
        %v3290 = vunpack.c.l.b16 %v3210
        %v3291 = vunpack.c.l.b16 %v3211
        %v3292 = vunpack.c.l.b16 %v3212
        %v3293 = vunpack.c.l.b16 %v3213
        %v3294 = vunpack.c.l.b16 %v3214
        %v3295 = vunpack.c.l.b16 %v3215
        %v3296 = vunpack.c.l.b16 %v3216
        %v3297 = vpack.c.b16 %v3282, %v3281
        %v3298 = vpack.c.b16 %v3284, %v3283
        %v3299 = vpack.c.b16 %v3286, %v3285
        %v3300 = vpack.c.b16 %v3288, %v3287
        %v3301 = vpack.c.b16 %v3290, %v3289
        %v3302 = vpack.c.b16 %v3292, %v3291
        %v3303 = vpack.c.b16 %v3294, %v3293
        %v3304 = vpack.c.b16 %v3296, %v3295
        %3313 = vmatpush.bf16.msra.mxu0 %v3304
        %3314 = vmatpush.bf16.msra.mxu0 %v3303
        %3315 = vmatpush.bf16.msra.mxu0 %v3302
        %3316 = vmatpush.bf16.msra.mxu0 %v3301
        %3317 = vmatpush.bf16.msra.mxu0 %v3300
        %3318 = vmatpush.bf16.msra.mxu0 %v3299
        %3319 = vmatpush.bf16.msra.mxu0 %v3298
        %3320 = vmatpush.bf16.msra.mxu0 %v3297
        %3321 = vmatmul.bf16.gmra.mxu0 %v3177
        %v3322 = vpop.f32.mrf.mxu0
        %v3323 = vadd.f32 0.0, %v3322
        %v3324 = vpop.f32.mrf.mxu0
        %v3325 = vadd.f32 0.0, %v3324
        %3326 = vmatmul.bf16.gmra.mxu0 %v3178
        %v3327 = vpop.f32.mrf.mxu0
        %v3328 = vadd.f32 0.0, %v3327
        %v3329 = vpop.f32.mrf.mxu0
        %v3330 = vadd.f32 0.0, %v3329
        %3331 = vmatmul.bf16.gmra.mxu0 %v3179
        %v3332 = vpop.f32.mrf.mxu0
        %v3333 = vadd.f32 0.0, %v3332
        %v3334 = vpop.f32.mrf.mxu0
        %v3335 = vadd.f32 0.0, %v3334
        %3336 = vmatmul.bf16.gmra.mxu0 %v3180
        %v3337 = vpop.f32.mrf.mxu0
        %v3338 = vadd.f32 0.0, %v3337
        %v3339 = vpop.f32.mrf.mxu0
        %v3340 = vadd.f32 0.0, %v3339
        %3341 = vmatmul.bf16.gmra.mxu0 %v3181
        %v3342 = vpop.f32.mrf.mxu0
        %v3343 = vadd.f32 0.0, %v3342
        %v3344 = vpop.f32.mrf.mxu0
        %v3345 = vadd.f32 0.0, %v3344
        %3346 = vmatmul.bf16.gmra.mxu0 %v3182
        %v3347 = vpop.f32.mrf.mxu0
        %v3348 = vadd.f32 0.0, %v3347
        %v3349 = vpop.f32.mrf.mxu0
        %v3350 = vadd.f32 0.0, %v3349
        %3351 = vmatmul.bf16.gmra.mxu0 %v3183
        %v3352 = vpop.f32.mrf.mxu0
        %v3353 = vadd.f32 0.0, %v3352
        %v3354 = vpop.f32.mrf.mxu0
        %v3355 = vadd.f32 0.0, %v3354
        %3356 = vmatmul.bf16.gmra.mxu0 %v3184
        %v3357 = vpop.f32.mrf.mxu0
        %v3358 = vadd.f32 0.0, %v3357
        %v3359 = vpop.f32.mrf.mxu0
        %v3360 = vadd.f32 0.0, %v3359
        %3361 = vmatmul.bf16.gmra.mxu0 %v3185
        %v3362 = vpop.f32.mrf.mxu0
        %v3363 = vadd.f32 0.0, %v3362
        %v3364 = vpop.f32.mrf.mxu0
        %v3365 = vadd.f32 0.0, %v3364
        %3366 = vmatmul.bf16.gmra.mxu0 %v3186
        %v3367 = vpop.f32.mrf.mxu0
        %v3368 = vadd.f32 0.0, %v3367
        %v3369 = vpop.f32.mrf.mxu0
        %v3370 = vadd.f32 0.0, %v3369
        %3371 = vmatmul.bf16.gmra.mxu0 %v3187
        %v3372 = vpop.f32.mrf.mxu0
        %v3373 = vadd.f32 0.0, %v3372
        %v3374 = vpop.f32.mrf.mxu0
        %v3375 = vadd.f32 0.0, %v3374
        %3376 = vmatmul.bf16.gmra.mxu0 %v3188
        %v3377 = vpop.f32.mrf.mxu0
        %v3378 = vadd.f32 0.0, %v3377
        %v3379 = vpop.f32.mrf.mxu0
        %v3380 = vadd.f32 0.0, %v3379
        %3381 = vmatmul.bf16.gmra.mxu0 %v3189
        %v3382 = vpop.f32.mrf.mxu0
        %v3383 = vadd.f32 0.0, %v3382
        %v3384 = vpop.f32.mrf.mxu0
        %v3385 = vadd.f32 0.0, %v3384
        %3386 = vmatmul.bf16.gmra.mxu0 %v3190
        %v3387 = vpop.f32.mrf.mxu0
        %v3388 = vadd.f32 0.0, %v3387
        %v3389 = vpop.f32.mrf.mxu0
        %v3390 = vadd.f32 0.0, %v3389
        %3391 = vmatmul.bf16.gmra.mxu0 %v3191
        %v3392 = vpop.f32.mrf.mxu0
        %v3393 = vadd.f32 0.0, %v3392
        %v3394 = vpop.f32.mrf.mxu0
        %v3395 = vadd.f32 0.0, %v3394
        %3396 = vmatmul.bf16.gmra.mxu0 %v3192
        %v3397 = vpop.f32.mrf.mxu0
        %v3398 = vadd.f32 0.0, %v3397
        %v3399 = vpop.f32.mrf.mxu0
        %v3400 = vadd.f32 0.0, %v3399
        %3401 = vmatmul.bf16.gmra.mxu0 %v3193
        %v3402 = vpop.f32.mrf.mxu0
        %v3403 = vadd.f32 0.0, %v3402
        %v3404 = vpop.f32.mrf.mxu0
        %v3405 = vadd.f32 0.0, %v3404
        %3406 = vmatmul.bf16.gmra.mxu0 %v3194
        %v3407 = vpop.f32.mrf.mxu0
        %v3408 = vadd.f32 0.0, %v3407
        %v3409 = vpop.f32.mrf.mxu0
        %v3410 = vadd.f32 0.0, %v3409
        %3411 = vmatmul.bf16.gmra.mxu0 %v3195
        %v3412 = vpop.f32.mrf.mxu0
        %v3413 = vadd.f32 0.0, %v3412
        %v3414 = vpop.f32.mrf.mxu0
        %v3415 = vadd.f32 0.0, %v3414
        %3416 = vmatmul.bf16.gmra.mxu0 %v3196
        %v3417 = vpop.f32.mrf.mxu0
        %v3418 = vadd.f32 0.0, %v3417
        %v3419 = vpop.f32.mrf.mxu0
        %v3420 = vadd.f32 0.0, %v3419
        %3421 = vmatmul.bf16.gmra.mxu0 %v3197
        %v3422 = vpop.f32.mrf.mxu0
        %v3423 = vadd.f32 0.0, %v3422
        %v3424 = vpop.f32.mrf.mxu0
        %v3425 = vadd.f32 0.0, %v3424
        %3426 = vmatmul.bf16.gmra.mxu0 %v3198
        %v3427 = vpop.f32.mrf.mxu0
        %v3428 = vadd.f32 0.0, %v3427
        %v3429 = vpop.f32.mrf.mxu0
        %v3430 = vadd.f32 0.0, %v3429
        %3431 = vmatmul.bf16.gmra.mxu0 %v3199
        %v3432 = vpop.f32.mrf.mxu0
        %v3433 = vadd.f32 0.0, %v3432
        %v3434 = vpop.f32.mrf.mxu0
        %v3435 = vadd.f32 0.0, %v3434
        %3436 = vmatmul.bf16.gmra.mxu0 %v3200
        %v3437 = vpop.f32.mrf.mxu0
        %v3438 = vadd.f32 0.0, %v3437
        %v3439 = vpop.f32.mrf.mxu0
        %v3440 = vadd.f32 0.0, %v3439
        %3441 = vdwg.mxu0
        %v3442 = vadd.f32 %v3217, %v3323
        %v3443 = vadd.f32 %v3218, %v3325
        %v3444 = vadd.f32 %v3219, %v3328
        %v3445 = vadd.f32 %v3220, %v3330
        %v3446 = vadd.f32 %v3221, %v3333
        %v3447 = vadd.f32 %v3222, %v3335
        %v3448 = vadd.f32 %v3223, %v3338
        %v3449 = vadd.f32 %v3224, %v3340
        %v3450 = vadd.f32 %v3225, %v3343
        %v3451 = vadd.f32 %v3226, %v3345
        %v3452 = vadd.f32 %v3227, %v3348
        %v3453 = vadd.f32 %v3228, %v3350
        %v3454 = vadd.f32 %v3229, %v3353
        %v3455 = vadd.f32 %v3230, %v3355
        %v3456 = vadd.f32 %v3231, %v3358
        %v3457 = vadd.f32 %v3232, %v3360
        %v3458 = vadd.f32 %v3233, %v3363
        %v3459 = vadd.f32 %v3234, %v3365
        %v3460 = vadd.f32 %v3235, %v3368
        %v3461 = vadd.f32 %v3236, %v3370
        %v3462 = vadd.f32 %v3237, %v3373
        %v3463 = vadd.f32 %v3238, %v3375
        %v3464 = vadd.f32 %v3239, %v3378
        %v3465 = vadd.f32 %v3240, %v3380
        %v3466 = vadd.f32 %v3241, %v3383
        %v3467 = vadd.f32 %v3242, %v3385
        %v3468 = vadd.f32 %v3243, %v3388
        %v3469 = vadd.f32 %v3244, %v3390
        %v3470 = vadd.f32 %v3245, %v3393
        %v3471 = vadd.f32 %v3246, %v3395
        %v3472 = vadd.f32 %v3247, %v3398
        %v3473 = vadd.f32 %v3248, %v3400
        %v3474 = vadd.f32 %v3249, %v3403
        %v3475 = vadd.f32 %v3250, %v3405
        %v3476 = vadd.f32 %v3251, %v3408
        %v3477 = vadd.f32 %v3252, %v3410
        %v3478 = vadd.f32 %v3253, %v3413
        %v3479 = vadd.f32 %v3254, %v3415
        %v3480 = vadd.f32 %v3255, %v3418
        %v3481 = vadd.f32 %v3256, %v3420
        %v3482 = vadd.f32 %v3257, %v3423
        %v3483 = vadd.f32 %v3258, %v3425
        %v3484 = vadd.f32 %v3259, %v3428
        %v3485 = vadd.f32 %v3260, %v3430
        %v3486 = vadd.f32 %v3261, %v3433
        %v3487 = vadd.f32 %v3262, %v3435
        %v3488 = vadd.f32 %v3263, %v3438
        %v3489 = vadd.f32 %v3264, %v3440
        %3490 = vst [vmem:[#allocation4] sm:$0xff] %v3442
        %3491 = vst [vmem:[#allocation4 + $0x8] sm:$0xff] %v3443
        %3492 = vst [vmem:[#allocation4 + $0x10] sm:$0xff] %v3444
        %3493 = vst [vmem:[#allocation4 + $0x18] sm:$0xff] %v3445
        %3494 = vst [vmem:[#allocation4 + $0x20] sm:$0xff] %v3446
        %3495 = vst [vmem:[#allocation4 + $0x28] sm:$0xff] %v3447
        %3496 = vst [vmem:[#allocation4 + $0x30] sm:$0xff] %v3448
        %3497 = vst [vmem:[#allocation4 + $0x38] sm:$0xff] %v3449
        %3498 = vst [vmem:[#allocation4 + $0x40] sm:$0xff] %v3450
        %3499 = vst [vmem:[#allocation4 + $0x48] sm:$0xff] %v3451
        %3500 = vst [vmem:[#allocation4 + $0x50] sm:$0xff] %v3452
        %3501 = vst [vmem:[#allocation4 + $0x58] sm:$0xff] %v3453
        %3502 = vst [vmem:[#allocation4 + $0x60] sm:$0xff] %v3454
        %3503 = vst [vmem:[#allocation4 + $0x68] sm:$0xff] %v3455
        %3504 = vst [vmem:[#allocation4 + $0x70] sm:$0xff] %v3456
        %3505 = vst [vmem:[#allocation4 + $0x78] sm:$0xff] %v3457
        %3506 = vst [vmem:[#allocation4 + $0x80] sm:$0xff] %v3458
        %3507 = vst [vmem:[#allocation4 + $0x88] sm:$0xff] %v3459
        %3508 = vst [vmem:[#allocation4 + $0x90] sm:$0xff] %v3460
        %3509 = vst [vmem:[#allocation4 + $0x98] sm:$0xff] %v3461
        %3510 = vst [vmem:[#allocation4 + $0xa0] sm:$0xff] %v3462
        %3511 = vst [vmem:[#allocation4 + $0xa8] sm:$0xff] %v3463
        %3512 = vst [vmem:[#allocation4 + $0xb0] sm:$0xff] %v3464
        %3513 = vst [vmem:[#allocation4 + $0xb8] sm:$0xff] %v3465
        %3514 = vst [vmem:[#allocation4 + $0xc0] sm:$0xff] %v3466
        %3515 = vst [vmem:[#allocation4 + $0xc8] sm:$0xff] %v3467
        %3516 = vst [vmem:[#allocation4 + $0xd0] sm:$0xff] %v3468
        %3517 = vst [vmem:[#allocation4 + $0xd8] sm:$0xff] %v3469
        %3518 = vst [vmem:[#allocation4 + $0xe0] sm:$0xff] %v3470
        %3519 = vst [vmem:[#allocation4 + $0xe8] sm:$0xff] %v3471
        %3520 = vst [vmem:[#allocation4 + $0xf0] sm:$0xff] %v3472
        %3521 = vst [vmem:[#allocation4 + $0xf8] sm:$0xff] %v3473
        %3522 = vst [vmem:[#allocation4 + $0x100] sm:$0xff] %v3474
        %3523 = vst [vmem:[#allocation4 + $0x108] sm:$0xff] %v3475
        %3524 = vst [vmem:[#allocation4 + $0x110] sm:$0xff] %v3476
        %3525 = vst [vmem:[#allocation4 + $0x118] sm:$0xff] %v3477
        %3526 = vst [vmem:[#allocation4 + $0x120] sm:$0xff] %v3478
        %3527 = vst [vmem:[#allocation4 + $0x128] sm:$0xff] %v3479
        %3528 = vst [vmem:[#allocation4 + $0x130] sm:$0xff] %v3480
        %3529 = vst [vmem:[#allocation4 + $0x138] sm:$0xff] %v3481
        %3530 = vst [vmem:[#allocation4 + $0x140] sm:$0xff] %v3482
        %3531 = vst [vmem:[#allocation4 + $0x148] sm:$0xff] %v3483
        %3532 = vst [vmem:[#allocation4 + $0x150] sm:$0xff] %v3484
        %3533 = vst [vmem:[#allocation4 + $0x158] sm:$0xff] %v3485
        %3534 = vst [vmem:[#allocation4 + $0x160] sm:$0xff] %v3486
        %3535 = vst [vmem:[#allocation4 + $0x168] sm:$0xff] %v3487
        %3536 = vst [vmem:[#allocation4 + $0x170] sm:$0xff] %v3488
        %3537 = vst [vmem:[#allocation4 + $0x178] sm:$0xff] %v3489
        %v3538 = vld [vmem:[#allocation2 + $0x48] sm:$0xff]
        %v3539 = vld [vmem:[#allocation2 + $0x50] sm:$0xff]
        %v3540 = vld [vmem:[#allocation2 + $0x58] sm:$0xff]
        %v3541 = vld [vmem:[#allocation2 + $0x60] sm:$0xff]
        %v3542 = vld [vmem:[#allocation2 + $0x68] sm:$0xff]
        %v3543 = vld [vmem:[#allocation2 + $0x70] sm:$0xff]
        %v3544 = vld [vmem:[#allocation2 + $0x78] sm:$0xff]
        %v3545 = vld [vmem:[#allocation2 + $0x80] sm:$0xff]
        %v3546 = vld [vmem:[#allocation2 + $0x88] sm:$0xff]
        %v3547 = vld [vmem:[#allocation2 + $0x90] sm:$0xff]
        %v3548 = vld [vmem:[#allocation2 + $0x98] sm:$0xff]
        %v3549 = vld [vmem:[#allocation2 + $0xa0] sm:$0xff]
        %v3550 = vld [vmem:[#allocation2 + $0xa8] sm:$0xff]
        %v3551 = vld [vmem:[#allocation2 + $0xb0] sm:$0xff]
        %v3552 = vld [vmem:[#allocation2 + $0xb8] sm:$0xff]
        %v3553 = vld [vmem:[#allocation2 + $0xc0] sm:$0xff]
        %v3554 = vld [vmem:[#allocation2 + $0xc8] sm:$0xff]
        %v3555 = vld [vmem:[#allocation2 + $0xd0] sm:$0xff]
        %v3556 = vld [vmem:[#allocation2 + $0xd8] sm:$0xff]
        %v3557 = vld [vmem:[#allocation2 + $0xe0] sm:$0xff]
        %v3558 = vld [vmem:[#allocation2 + $0xe8] sm:$0xff]
        %v3559 = vld [vmem:[#allocation2 + $0xf0] sm:$0xff]
        %v3560 = vld [vmem:[#allocation2 + $0xf8] sm:$0xff]
        %v3561 = vld [vmem:[#allocation2 + $0x100] sm:$0xff]
        %v3562 = vld [vmem:[#allocation2 + $0x108] sm:$0xff]
        %v3563 = vld [vmem:[#allocation2 + $0x110] sm:$0xff]
        %v3564 = vld [vmem:[#allocation2 + $0x118] sm:$0xff]
        %v3565 = vld [vmem:[#allocation2 + $0x120] sm:$0xff]
        %v3566 = vld [vmem:[#allocation2 + $0x128] sm:$0xff]
        %v3567 = vld [vmem:[#allocation2 + $0x130] sm:$0xff]
        %v3568 = vld [vmem:[#allocation2 + $0x138] sm:$0xff]
        %v3569 = vld [vmem:[#allocation2 + $0x140] sm:$0xff]
        %v3570 = vld [vmem:[#allocation2 + $0x148] sm:$0xff]
        %v3571 = vld [vmem:[#allocation2 + $0x150] sm:$0xff]
        %v3572 = vld [vmem:[#allocation2 + $0x158] sm:$0xff]
        %v3573 = vld [vmem:[#allocation2 + $0x160] sm:$0xff]
        %v3574 = vld [vmem:[#allocation2 + $0x168] sm:$0xff]
        %v3575 = vld [vmem:[#allocation2 + $0x170] sm:$0xff]
        %v3576 = vld [vmem:[#allocation2 + $0x178] sm:$0xff]
        %v3577 = vld [vmem:[#allocation2 + $0x180] sm:$0xff]
        %v3578 = vld [vmem:[#allocation2 + $0x188] sm:$0xff]
        %v3579 = vld [vmem:[#allocation2 + $0x190] sm:$0xff]
        %v3580 = vld [vmem:[#allocation2 + $0x198] sm:$0xff]
        %v3581 = vld [vmem:[#allocation2 + $0x1a0] sm:$0xff]
        %v3582 = vld [vmem:[#allocation2 + $0x1a8] sm:$0xff]
        %v3583 = vld [vmem:[#allocation2 + $0x1b0] sm:$0xff]
        %v3584 = vld [vmem:[#allocation2 + $0x1b8] sm:$0xff]
        %v3585 = vld [vmem:[#allocation2 + $0x1c0] sm:$0xff]
        %v3586 = vpack.c.bf16 %v3539, %v3538
        %v3587 = vpack.c.bf16 %v3541, %v3540
        %v3588 = vpack.c.bf16 %v3543, %v3542
        %v3589 = vpack.c.bf16 %v3545, %v3544
        %v3590 = vpack.c.bf16 %v3547, %v3546
        %v3591 = vpack.c.bf16 %v3549, %v3548
        %v3592 = vpack.c.bf16 %v3551, %v3550
        %v3593 = vpack.c.bf16 %v3553, %v3552
        %v3594 = vpack.c.bf16 %v3555, %v3554
        %v3595 = vpack.c.bf16 %v3557, %v3556
        %v3596 = vpack.c.bf16 %v3559, %v3558
        %v3597 = vpack.c.bf16 %v3561, %v3560
        %v3598 = vpack.c.bf16 %v3563, %v3562
        %v3599 = vpack.c.bf16 %v3565, %v3564
        %v3600 = vpack.c.bf16 %v3567, %v3566
        %v3601 = vpack.c.bf16 %v3569, %v3568
        %v3602 = vpack.c.bf16 %v3571, %v3570
        %v3603 = vpack.c.bf16 %v3573, %v3572
        %v3604 = vpack.c.bf16 %v3575, %v3574
        %v3605 = vpack.c.bf16 %v3577, %v3576
        %v3606 = vpack.c.bf16 %v3579, %v3578
        %v3607 = vpack.c.bf16 %v3581, %v3580
        %v3608 = vpack.c.bf16 %v3583, %v3582
        %v3609 = vpack.c.bf16 %v3585, %v3584
        %v3610 = vld [vmem:[#allocation9 + $0x1c0] sm:$0xf]
        %v3611 = vld [vmem:[#allocation9 + $0x1c4] sm:$0xf]
        %v3612 = vld [vmem:[#allocation9 + $0x1c8] sm:$0xf]
        %v3613 = vld [vmem:[#allocation9 + $0x1cc] sm:$0xf]
        %v3614 = vld [vmem:[#allocation9 + $0x1d0] sm:$0xf]
        %v3615 = vld [vmem:[#allocation9 + $0x1d4] sm:$0xf]
        %v3616 = vld [vmem:[#allocation9 + $0x1d8] sm:$0xf]
        %v3617 = vld [vmem:[#allocation9 + $0x1dc] sm:$0xf]
        %v3618 = vld [vmem:[#allocation9 + $0x1e0] sm:$0xf]
        %v3619 = vld [vmem:[#allocation9 + $0x1e4] sm:$0xf]
        %v3620 = vld [vmem:[#allocation9 + $0x1e8] sm:$0xf]
        %v3621 = vld [vmem:[#allocation9 + $0x1ec] sm:$0xf]
        %v3622 = vld [vmem:[#allocation9 + $0x1f0] sm:$0xf]
        %v3623 = vld [vmem:[#allocation9 + $0x1f4] sm:$0xf]
        %v3624 = vld [vmem:[#allocation9 + $0x1f8] sm:$0xf]
        %v3625 = vld [vmem:[#allocation9 + $0x1fc] sm:$0xf]
        %v3626 = vld [vmem:[#allocation4] sm:$0xff]
        %v3627 = vld [vmem:[#allocation4 + $0x8] sm:$0xff]
        %v3628 = vld [vmem:[#allocation4 + $0x10] sm:$0xff]
        %v3629 = vld [vmem:[#allocation4 + $0x18] sm:$0xff]
        %v3630 = vld [vmem:[#allocation4 + $0x20] sm:$0xff]
        %v3631 = vld [vmem:[#allocation4 + $0x28] sm:$0xff]
        %v3632 = vld [vmem:[#allocation4 + $0x30] sm:$0xff]
        %v3633 = vld [vmem:[#allocation4 + $0x38] sm:$0xff]
        %v3634 = vld [vmem:[#allocation4 + $0x40] sm:$0xff]
        %v3635 = vld [vmem:[#allocation4 + $0x48] sm:$0xff]
        %v3636 = vld [vmem:[#allocation4 + $0x50] sm:$0xff]
        %v3637 = vld [vmem:[#allocation4 + $0x58] sm:$0xff]
        %v3638 = vld [vmem:[#allocation4 + $0x60] sm:$0xff]
        %v3639 = vld [vmem:[#allocation4 + $0x68] sm:$0xff]
        %v3640 = vld [vmem:[#allocation4 + $0x70] sm:$0xff]
        %v3641 = vld [vmem:[#allocation4 + $0x78] sm:$0xff]
        %v3642 = vld [vmem:[#allocation4 + $0x80] sm:$0xff]
        %v3643 = vld [vmem:[#allocation4 + $0x88] sm:$0xff]
        %v3644 = vld [vmem:[#allocation4 + $0x90] sm:$0xff]
        %v3645 = vld [vmem:[#allocation4 + $0x98] sm:$0xff]
        %v3646 = vld [vmem:[#allocation4 + $0xa0] sm:$0xff]
        %v3647 = vld [vmem:[#allocation4 + $0xa8] sm:$0xff]
        %v3648 = vld [vmem:[#allocation4 + $0xb0] sm:$0xff]
        %v3649 = vld [vmem:[#allocation4 + $0xb8] sm:$0xff]
        %v3650 = vld [vmem:[#allocation4 + $0xc0] sm:$0xff]
        %v3651 = vld [vmem:[#allocation4 + $0xc8] sm:$0xff]
        %v3652 = vld [vmem:[#allocation4 + $0xd0] sm:$0xff]
        %v3653 = vld [vmem:[#allocation4 + $0xd8] sm:$0xff]
        %v3654 = vld [vmem:[#allocation4 + $0xe0] sm:$0xff]
        %v3655 = vld [vmem:[#allocation4 + $0xe8] sm:$0xff]
        %v3656 = vld [vmem:[#allocation4 + $0xf0] sm:$0xff]
        %v3657 = vld [vmem:[#allocation4 + $0xf8] sm:$0xff]
        %v3658 = vld [vmem:[#allocation4 + $0x100] sm:$0xff]
        %v3659 = vld [vmem:[#allocation4 + $0x108] sm:$0xff]
        %v3660 = vld [vmem:[#allocation4 + $0x110] sm:$0xff]
        %v3661 = vld [vmem:[#allocation4 + $0x118] sm:$0xff]
        %v3662 = vld [vmem:[#allocation4 + $0x120] sm:$0xff]
        %v3663 = vld [vmem:[#allocation4 + $0x128] sm:$0xff]
        %v3664 = vld [vmem:[#allocation4 + $0x130] sm:$0xff]
        %v3665 = vld [vmem:[#allocation4 + $0x138] sm:$0xff]
        %v3666 = vld [vmem:[#allocation4 + $0x140] sm:$0xff]
        %v3667 = vld [vmem:[#allocation4 + $0x148] sm:$0xff]
        %v3668 = vld [vmem:[#allocation4 + $0x150] sm:$0xff]
        %v3669 = vld [vmem:[#allocation4 + $0x158] sm:$0xff]
        %v3670 = vld [vmem:[#allocation4 + $0x160] sm:$0xff]
        %v3671 = vld [vmem:[#allocation4 + $0x168] sm:$0xff]
        %v3672 = vld [vmem:[#allocation4 + $0x170] sm:$0xff]
        %v3673 = vld [vmem:[#allocation4 + $0x178] sm:$0xff]
        %v3690 = vunpack.c.l.b16 %v3610
        %v3691 = vunpack.c.l.b16 %v3611
        %v3692 = vunpack.c.l.b16 %v3612
        %v3693 = vunpack.c.l.b16 %v3613
        %v3694 = vunpack.c.l.b16 %v3614
        %v3695 = vunpack.c.l.b16 %v3615
        %v3696 = vunpack.c.l.b16 %v3616
        %v3697 = vunpack.c.l.b16 %v3617
        %v3698 = vunpack.c.l.b16 %v3618
        %v3699 = vunpack.c.l.b16 %v3619
        %v3700 = vunpack.c.l.b16 %v3620
        %v3701 = vunpack.c.l.b16 %v3621
        %v3702 = vunpack.c.l.b16 %v3622
        %v3703 = vunpack.c.l.b16 %v3623
        %v3704 = vunpack.c.l.b16 %v3624
        %v3705 = vunpack.c.l.b16 %v3625
        %v3706 = vpack.c.b16 %v3691, %v3690
        %v3707 = vpack.c.b16 %v3693, %v3692
        %v3708 = vpack.c.b16 %v3695, %v3694
        %v3709 = vpack.c.b16 %v3697, %v3696
        %v3710 = vpack.c.b16 %v3699, %v3698
        %v3711 = vpack.c.b16 %v3701, %v3700
        %v3712 = vpack.c.b16 %v3703, %v3702
        %v3713 = vpack.c.b16 %v3705, %v3704
        %3722 = vmatpush.bf16.msra.mxu0 %v3713
        %3723 = vmatpush.bf16.msra.mxu0 %v3712
        %3724 = vmatpush.bf16.msra.mxu0 %v3711
        %3725 = vmatpush.bf16.msra.mxu0 %v3710
        %3726 = vmatpush.bf16.msra.mxu0 %v3709
        %3727 = vmatpush.bf16.msra.mxu0 %v3708
        %3728 = vmatpush.bf16.msra.mxu0 %v3707
        %3729 = vmatpush.bf16.msra.mxu0 %v3706
        %3730 = vmatmul.bf16.gmra.mxu0 %v3586
        %v3731 = vpop.f32.mrf.mxu0
        %v3732 = vadd.f32 0.0, %v3731
        %v3733 = vpop.f32.mrf.mxu0
        %v3734 = vadd.f32 0.0, %v3733
        %3735 = vmatmul.bf16.gmra.mxu0 %v3587
        %v3736 = vpop.f32.mrf.mxu0
        %v3737 = vadd.f32 0.0, %v3736
        %v3738 = vpop.f32.mrf.mxu0
        %v3739 = vadd.f32 0.0, %v3738
        %3740 = vmatmul.bf16.gmra.mxu0 %v3588
        %v3741 = vpop.f32.mrf.mxu0
        %v3742 = vadd.f32 0.0, %v3741
        %v3743 = vpop.f32.mrf.mxu0
        %v3744 = vadd.f32 0.0, %v3743
        %3745 = vmatmul.bf16.gmra.mxu0 %v3589
        %v3746 = vpop.f32.mrf.mxu0
        %v3747 = vadd.f32 0.0, %v3746
        %v3748 = vpop.f32.mrf.mxu0
        %v3749 = vadd.f32 0.0, %v3748
        %3750 = vmatmul.bf16.gmra.mxu0 %v3590
        %v3751 = vpop.f32.mrf.mxu0
        %v3752 = vadd.f32 0.0, %v3751
        %v3753 = vpop.f32.mrf.mxu0
        %v3754 = vadd.f32 0.0, %v3753
        %3755 = vmatmul.bf16.gmra.mxu0 %v3591
        %v3756 = vpop.f32.mrf.mxu0
        %v3757 = vadd.f32 0.0, %v3756
        %v3758 = vpop.f32.mrf.mxu0
        %v3759 = vadd.f32 0.0, %v3758
        %3760 = vmatmul.bf16.gmra.mxu0 %v3592
        %v3761 = vpop.f32.mrf.mxu0
        %v3762 = vadd.f32 0.0, %v3761
        %v3763 = vpop.f32.mrf.mxu0
        %v3764 = vadd.f32 0.0, %v3763
        %3765 = vmatmul.bf16.gmra.mxu0 %v3593
        %v3766 = vpop.f32.mrf.mxu0
        %v3767 = vadd.f32 0.0, %v3766
        %v3768 = vpop.f32.mrf.mxu0
        %v3769 = vadd.f32 0.0, %v3768
        %3770 = vmatmul.bf16.gmra.mxu0 %v3594
        %v3771 = vpop.f32.mrf.mxu0
        %v3772 = vadd.f32 0.0, %v3771
        %v3773 = vpop.f32.mrf.mxu0
        %v3774 = vadd.f32 0.0, %v3773
        %3775 = vmatmul.bf16.gmra.mxu0 %v3595
        %v3776 = vpop.f32.mrf.mxu0
        %v3777 = vadd.f32 0.0, %v3776
        %v3778 = vpop.f32.mrf.mxu0
        %v3779 = vadd.f32 0.0, %v3778
        %3780 = vmatmul.bf16.gmra.mxu0 %v3596
        %v3781 = vpop.f32.mrf.mxu0
        %v3782 = vadd.f32 0.0, %v3781
        %v3783 = vpop.f32.mrf.mxu0
        %v3784 = vadd.f32 0.0, %v3783
        %3785 = vmatmul.bf16.gmra.mxu0 %v3597
        %v3786 = vpop.f32.mrf.mxu0
        %v3787 = vadd.f32 0.0, %v3786
        %v3788 = vpop.f32.mrf.mxu0
        %v3789 = vadd.f32 0.0, %v3788
        %3790 = vmatmul.bf16.gmra.mxu0 %v3598
        %v3791 = vpop.f32.mrf.mxu0
        %v3792 = vadd.f32 0.0, %v3791
        %v3793 = vpop.f32.mrf.mxu0
        %v3794 = vadd.f32 0.0, %v3793
        %3795 = vmatmul.bf16.gmra.mxu0 %v3599
        %v3796 = vpop.f32.mrf.mxu0
        %v3797 = vadd.f32 0.0, %v3796
        %v3798 = vpop.f32.mrf.mxu0
        %v3799 = vadd.f32 0.0, %v3798
        %3800 = vmatmul.bf16.gmra.mxu0 %v3600
        %v3801 = vpop.f32.mrf.mxu0
        %v3802 = vadd.f32 0.0, %v3801
        %v3803 = vpop.f32.mrf.mxu0
        %v3804 = vadd.f32 0.0, %v3803
        %3805 = vmatmul.bf16.gmra.mxu0 %v3601
        %v3806 = vpop.f32.mrf.mxu0
        %v3807 = vadd.f32 0.0, %v3806
        %v3808 = vpop.f32.mrf.mxu0
        %v3809 = vadd.f32 0.0, %v3808
        %3810 = vmatmul.bf16.gmra.mxu0 %v3602
        %v3811 = vpop.f32.mrf.mxu0
        %v3812 = vadd.f32 0.0, %v3811
        %v3813 = vpop.f32.mrf.mxu0
        %v3814 = vadd.f32 0.0, %v3813
        %3815 = vmatmul.bf16.gmra.mxu0 %v3603
        %v3816 = vpop.f32.mrf.mxu0
        %v3817 = vadd.f32 0.0, %v3816
        %v3818 = vpop.f32.mrf.mxu0
        %v3819 = vadd.f32 0.0, %v3818
        %3820 = vmatmul.bf16.gmra.mxu0 %v3604
        %v3821 = vpop.f32.mrf.mxu0
        %v3822 = vadd.f32 0.0, %v3821
        %v3823 = vpop.f32.mrf.mxu0
        %v3824 = vadd.f32 0.0, %v3823
        %3825 = vmatmul.bf16.gmra.mxu0 %v3605
        %v3826 = vpop.f32.mrf.mxu0
        %v3827 = vadd.f32 0.0, %v3826
        %v3828 = vpop.f32.mrf.mxu0
        %v3829 = vadd.f32 0.0, %v3828
        %3830 = vmatmul.bf16.gmra.mxu0 %v3606
        %v3831 = vpop.f32.mrf.mxu0
        %v3832 = vadd.f32 0.0, %v3831
        %v3833 = vpop.f32.mrf.mxu0
        %v3834 = vadd.f32 0.0, %v3833
        %3835 = vmatmul.bf16.gmra.mxu0 %v3607
        %v3836 = vpop.f32.mrf.mxu0
        %v3837 = vadd.f32 0.0, %v3836
        %v3838 = vpop.f32.mrf.mxu0
        %v3839 = vadd.f32 0.0, %v3838
        %3840 = vmatmul.bf16.gmra.mxu0 %v3608
        %v3841 = vpop.f32.mrf.mxu0
        %v3842 = vadd.f32 0.0, %v3841
        %v3843 = vpop.f32.mrf.mxu0
        %v3844 = vadd.f32 0.0, %v3843
        %3845 = vmatmul.bf16.gmra.mxu0 %v3609
        %v3846 = vpop.f32.mrf.mxu0
        %v3847 = vadd.f32 0.0, %v3846
        %v3848 = vpop.f32.mrf.mxu0
        %v3849 = vadd.f32 0.0, %v3848
        %3850 = vdwg.mxu0
        %v3851 = vadd.f32 %v3626, %v3732
        %v3852 = vadd.f32 %v3627, %v3734
        %v3853 = vadd.f32 %v3628, %v3737
        %v3854 = vadd.f32 %v3629, %v3739
        %v3855 = vadd.f32 %v3630, %v3742
        %v3856 = vadd.f32 %v3631, %v3744
        %v3857 = vadd.f32 %v3632, %v3747
        %v3858 = vadd.f32 %v3633, %v3749
        %v3859 = vadd.f32 %v3634, %v3752
        %v3860 = vadd.f32 %v3635, %v3754
        %v3861 = vadd.f32 %v3636, %v3757
        %v3862 = vadd.f32 %v3637, %v3759
        %v3863 = vadd.f32 %v3638, %v3762
        %v3864 = vadd.f32 %v3639, %v3764
        %v3865 = vadd.f32 %v3640, %v3767
        %v3866 = vadd.f32 %v3641, %v3769
        %v3867 = vadd.f32 %v3642, %v3772
        %v3868 = vadd.f32 %v3643, %v3774
        %v3869 = vadd.f32 %v3644, %v3777
        %v3870 = vadd.f32 %v3645, %v3779
        %v3871 = vadd.f32 %v3646, %v3782
        %v3872 = vadd.f32 %v3647, %v3784
        %v3873 = vadd.f32 %v3648, %v3787
        %v3874 = vadd.f32 %v3649, %v3789
        %v3875 = vadd.f32 %v3650, %v3792
        %v3876 = vadd.f32 %v3651, %v3794
        %v3877 = vadd.f32 %v3652, %v3797
        %v3878 = vadd.f32 %v3653, %v3799
        %v3879 = vadd.f32 %v3654, %v3802
        %v3880 = vadd.f32 %v3655, %v3804
        %v3881 = vadd.f32 %v3656, %v3807
        %v3882 = vadd.f32 %v3657, %v3809
        %v3883 = vadd.f32 %v3658, %v3812
        %v3884 = vadd.f32 %v3659, %v3814
        %v3885 = vadd.f32 %v3660, %v3817
        %v3886 = vadd.f32 %v3661, %v3819
        %v3887 = vadd.f32 %v3662, %v3822
        %v3888 = vadd.f32 %v3663, %v3824
        %v3889 = vadd.f32 %v3664, %v3827
        %v3890 = vadd.f32 %v3665, %v3829
        %v3891 = vadd.f32 %v3666, %v3832
        %v3892 = vadd.f32 %v3667, %v3834
        %v3893 = vadd.f32 %v3668, %v3837
        %v3894 = vadd.f32 %v3669, %v3839
        %v3895 = vadd.f32 %v3670, %v3842
        %v3896 = vadd.f32 %v3671, %v3844
        %v3897 = vadd.f32 %v3672, %v3847
        %v3898 = vadd.f32 %v3673, %v3849
        %3899 = vst [vmem:[#allocation4] sm:$0xff] %v3851
        %3900 = vst [vmem:[#allocation4 + $0x8] sm:$0xff] %v3852
        %3901 = vst [vmem:[#allocation4 + $0x10] sm:$0xff] %v3853
        %3902 = vst [vmem:[#allocation4 + $0x18] sm:$0xff] %v3854
        %3903 = vst [vmem:[#allocation4 + $0x20] sm:$0xff] %v3855
        %3904 = vst [vmem:[#allocation4 + $0x28] sm:$0xff] %v3856
        %3905 = vst [vmem:[#allocation4 + $0x30] sm:$0xff] %v3857
        %3906 = vst [vmem:[#allocation4 + $0x38] sm:$0xff] %v3858
        %3907 = vst [vmem:[#allocation4 + $0x40] sm:$0xff] %v3859
        %3908 = vst [vmem:[#allocation4 + $0x48] sm:$0xff] %v3860
        %3909 = vst [vmem:[#allocation4 + $0x50] sm:$0xff] %v3861
        %3910 = vst [vmem:[#allocation4 + $0x58] sm:$0xff] %v3862
        %3911 = vst [vmem:[#allocation4 + $0x60] sm:$0xff] %v3863
        %3912 = vst [vmem:[#allocation4 + $0x68] sm:$0xff] %v3864
        %3913 = vst [vmem:[#allocation4 + $0x70] sm:$0xff] %v3865
        %3914 = vst [vmem:[#allocation4 + $0x78] sm:$0xff] %v3866
        %3915 = vst [vmem:[#allocation4 + $0x80] sm:$0xff] %v3867
        %3916 = vst [vmem:[#allocation4 + $0x88] sm:$0xff] %v3868
        %3917 = vst [vmem:[#allocation4 + $0x90] sm:$0xff] %v3869
        %3918 = vst [vmem:[#allocation4 + $0x98] sm:$0xff] %v3870
        %3919 = vst [vmem:[#allocation4 + $0xa0] sm:$0xff] %v3871
        %3920 = vst [vmem:[#allocation4 + $0xa8] sm:$0xff] %v3872
        %3921 = vst [vmem:[#allocation4 + $0xb0] sm:$0xff] %v3873
        %3922 = vst [vmem:[#allocation4 + $0xb8] sm:$0xff] %v3874
        %3923 = vst [vmem:[#allocation4 + $0xc0] sm:$0xff] %v3875
        %3924 = vst [vmem:[#allocation4 + $0xc8] sm:$0xff] %v3876
        %3925 = vst [vmem:[#allocation4 + $0xd0] sm:$0xff] %v3877
        %3926 = vst [vmem:[#allocation4 + $0xd8] sm:$0xff] %v3878
        %3927 = vst [vmem:[#allocation4 + $0xe0] sm:$0xff] %v3879
        %3928 = vst [vmem:[#allocation4 + $0xe8] sm:$0xff] %v3880
        %3929 = vst [vmem:[#allocation4 + $0xf0] sm:$0xff] %v3881
        %3930 = vst [vmem:[#allocation4 + $0xf8] sm:$0xff] %v3882
        %3931 = vst [vmem:[#allocation4 + $0x100] sm:$0xff] %v3883
        %3932 = vst [vmem:[#allocation4 + $0x108] sm:$0xff] %v3884
        %3933 = vst [vmem:[#allocation4 + $0x110] sm:$0xff] %v3885
        %3934 = vst [vmem:[#allocation4 + $0x118] sm:$0xff] %v3886
        %3935 = vst [vmem:[#allocation4 + $0x120] sm:$0xff] %v3887
        %3936 = vst [vmem:[#allocation4 + $0x128] sm:$0xff] %v3888
        %3937 = vst [vmem:[#allocation4 + $0x130] sm:$0xff] %v3889
        %3938 = vst [vmem:[#allocation4 + $0x138] sm:$0xff] %v3890
        %3939 = vst [vmem:[#allocation4 + $0x140] sm:$0xff] %v3891
        %3940 = vst [vmem:[#allocation4 + $0x148] sm:$0xff] %v3892
        %3941 = vst [vmem:[#allocation4 + $0x150] sm:$0xff] %v3893
        %3942 = vst [vmem:[#allocation4 + $0x158] sm:$0xff] %v3894
        %3943 = vst [vmem:[#allocation4 + $0x160] sm:$0xff] %v3895
        %3944 = vst [vmem:[#allocation4 + $0x168] sm:$0xff] %v3896
        %3945 = vst [vmem:[#allocation4 + $0x170] sm:$0xff] %v3897
        %3946 = vst [vmem:[#allocation4 + $0x178] sm:$0xff] %v3898
        %v3947 = vld [vmem:[#allocation2 + $0x49] sm:$0xff]
        %v3948 = vld [vmem:[#allocation2 + $0x51] sm:$0xff]
        %v3949 = vld [vmem:[#allocation2 + $0x59] sm:$0xff]
        %v3950 = vld [vmem:[#allocation2 + $0x61] sm:$0xff]
        %v3951 = vld [vmem:[#allocation2 + $0x69] sm:$0xff]
        %v3952 = vld [vmem:[#allocation2 + $0x71] sm:$0xff]
        %v3953 = vld [vmem:[#allocation2 + $0x79] sm:$0xff]
        %v3954 = vld [vmem:[#allocation2 + $0x81] sm:$0xff]
        %v3955 = vld [vmem:[#allocation2 + $0x89] sm:$0xff]
        %v3956 = vld [vmem:[#allocation2 + $0x91] sm:$0xff]
        %v3957 = vld [vmem:[#allocation2 + $0x99] sm:$0xff]
        %v3958 = vld [vmem:[#allocation2 + $0xa1] sm:$0xff]
        %v3959 = vld [vmem:[#allocation2 + $0xa9] sm:$0xff]
        %v3960 = vld [vmem:[#allocation2 + $0xb1] sm:$0xff]
        %v3961 = vld [vmem:[#allocation2 + $0xb9] sm:$0xff]
        %v3962 = vld [vmem:[#allocation2 + $0xc1] sm:$0xff]
        %v3963 = vld [vmem:[#allocation2 + $0xc9] sm:$0xff]
        %v3964 = vld [vmem:[#allocation2 + $0xd1] sm:$0xff]
        %v3965 = vld [vmem:[#allocation2 + $0xd9] sm:$0xff]
        %v3966 = vld [vmem:[#allocation2 + $0xe1] sm:$0xff]
        %v3967 = vld [vmem:[#allocation2 + $0xe9] sm:$0xff]
        %v3968 = vld [vmem:[#allocation2 + $0xf1] sm:$0xff]
        %v3969 = vld [vmem:[#allocation2 + $0xf9] sm:$0xff]
        %v3970 = vld [vmem:[#allocation2 + $0x101] sm:$0xff]
        %v3971 = vld [vmem:[#allocation2 + $0x109] sm:$0xff]
        %v3972 = vld [vmem:[#allocation2 + $0x111] sm:$0xff]
        %v3973 = vld [vmem:[#allocation2 + $0x119] sm:$0xff]
        %v3974 = vld [vmem:[#allocation2 + $0x121] sm:$0xff]
        %v3975 = vld [vmem:[#allocation2 + $0x129] sm:$0xff]
        %v3976 = vld [vmem:[#allocation2 + $0x131] sm:$0xff]
        %v3977 = vld [vmem:[#allocation2 + $0x139] sm:$0xff]
        %v3978 = vld [vmem:[#allocation2 + $0x141] sm:$0xff]
        %v3979 = vld [vmem:[#allocation2 + $0x149] sm:$0xff]
        %v3980 = vld [vmem:[#allocation2 + $0x151] sm:$0xff]
        %v3981 = vld [vmem:[#allocation2 + $0x159] sm:$0xff]
        %v3982 = vld [vmem:[#allocation2 + $0x161] sm:$0xff]
        %v3983 = vld [vmem:[#allocation2 + $0x169] sm:$0xff]
        %v3984 = vld [vmem:[#allocation2 + $0x171] sm:$0xff]
        %v3985 = vld [vmem:[#allocation2 + $0x179] sm:$0xff]
        %v3986 = vld [vmem:[#allocation2 + $0x181] sm:$0xff]
        %v3987 = vld [vmem:[#allocation2 + $0x189] sm:$0xff]
        %v3988 = vld [vmem:[#allocation2 + $0x191] sm:$0xff]
        %v3989 = vld [vmem:[#allocation2 + $0x199] sm:$0xff]
        %v3990 = vld [vmem:[#allocation2 + $0x1a1] sm:$0xff]
        %v3991 = vld [vmem:[#allocation2 + $0x1a9] sm:$0xff]
        %v3992 = vld [vmem:[#allocation2 + $0x1b1] sm:$0xff]
        %v3993 = vld [vmem:[#allocation2 + $0x1b9] sm:$0xff]
        %v3994 = vld [vmem:[#allocation2 + $0x1c1] sm:$0xff]
        %v3995 = vpack.c.bf16 %v3948, %v3947
        %v3996 = vpack.c.bf16 %v3950, %v3949
        %v3997 = vpack.c.bf16 %v3952, %v3951
        %v3998 = vpack.c.bf16 %v3954, %v3953
        %v3999 = vpack.c.bf16 %v3956, %v3955
        %v4000 = vpack.c.bf16 %v3958, %v3957
        %v4001 = vpack.c.bf16 %v3960, %v3959
        %v4002 = vpack.c.bf16 %v3962, %v3961
        %v4003 = vpack.c.bf16 %v3964, %v3963
        %v4004 = vpack.c.bf16 %v3966, %v3965
        %v4005 = vpack.c.bf16 %v3968, %v3967
        %v4006 = vpack.c.bf16 %v3970, %v3969
        %v4007 = vpack.c.bf16 %v3972, %v3971
        %v4008 = vpack.c.bf16 %v3974, %v3973
        %v4009 = vpack.c.bf16 %v3976, %v3975
        %v4010 = vpack.c.bf16 %v3978, %v3977
        %v4011 = vpack.c.bf16 %v3980, %v3979
        %v4012 = vpack.c.bf16 %v3982, %v3981
        %v4013 = vpack.c.bf16 %v3984, %v3983
        %v4014 = vpack.c.bf16 %v3986, %v3985
        %v4015 = vpack.c.bf16 %v3988, %v3987
        %v4016 = vpack.c.bf16 %v3990, %v3989
        %v4017 = vpack.c.bf16 %v3992, %v3991
        %v4018 = vpack.c.bf16 %v3994, %v3993
        %v4019 = vld [vmem:[#allocation9 + $0x200] sm:$0xf]
        %v4020 = vld [vmem:[#allocation9 + $0x204] sm:$0xf]
        %v4021 = vld [vmem:[#allocation9 + $0x208] sm:$0xf]
        %v4022 = vld [vmem:[#allocation9 + $0x20c] sm:$0xf]
        %v4023 = vld [vmem:[#allocation9 + $0x210] sm:$0xf]
        %v4024 = vld [vmem:[#allocation9 + $0x214] sm:$0xf]
        %v4025 = vld [vmem:[#allocation9 + $0x218] sm:$0xf]
        %v4026 = vld [vmem:[#allocation9 + $0x21c] sm:$0xf]
        %v4027 = vld [vmem:[#allocation9 + $0x220] sm:$0xf]
        %v4028 = vld [vmem:[#allocation9 + $0x224] sm:$0xf]
        %v4029 = vld [vmem:[#allocation9 + $0x228] sm:$0xf]
        %v4030 = vld [vmem:[#allocation9 + $0x22c] sm:$0xf]
        %v4031 = vld [vmem:[#allocation9 + $0x230] sm:$0xf]
        %v4032 = vld [vmem:[#allocation9 + $0x234] sm:$0xf]
        %v4033 = vld [vmem:[#allocation9 + $0x238] sm:$0xf]
        %v4034 = vld [vmem:[#allocation9 + $0x23c] sm:$0xf]
        %v4035 = vld [vmem:[#allocation4] sm:$0xff]
        %v4036 = vld [vmem:[#allocation4 + $0x8] sm:$0xff]
        %v4037 = vld [vmem:[#allocation4 + $0x10] sm:$0xff]
        %v4038 = vld [vmem:[#allocation4 + $0x18] sm:$0xff]
        %v4039 = vld [vmem:[#allocation4 + $0x20] sm:$0xff]
        %v4040 = vld [vmem:[#allocation4 + $0x28] sm:$0xff]
        %v4041 = vld [vmem:[#allocation4 + $0x30] sm:$0xff]
        %v4042 = vld [vmem:[#allocation4 + $0x38] sm:$0xff]
        %v4043 = vld [vmem:[#allocation4 + $0x40] sm:$0xff]
        %v4044 = vld [vmem:[#allocation4 + $0x48] sm:$0xff]
        %v4045 = vld [vmem:[#allocation4 + $0x50] sm:$0xff]
        %v4046 = vld [vmem:[#allocation4 + $0x58] sm:$0xff]
        %v4047 = vld [vmem:[#allocation4 + $0x60] sm:$0xff]
        %v4048 = vld [vmem:[#allocation4 + $0x68] sm:$0xff]
        %v4049 = vld [vmem:[#allocation4 + $0x70] sm:$0xff]
        %v4050 = vld [vmem:[#allocation4 + $0x78] sm:$0xff]
        %v4051 = vld [vmem:[#allocation4 + $0x80] sm:$0xff]
        %v4052 = vld [vmem:[#allocation4 + $0x88] sm:$0xff]
        %v4053 = vld [vmem:[#allocation4 + $0x90] sm:$0xff]
        %v4054 = vld [vmem:[#allocation4 + $0x98] sm:$0xff]
        %v4055 = vld [vmem:[#allocation4 + $0xa0] sm:$0xff]
        %v4056 = vld [vmem:[#allocation4 + $0xa8] sm:$0xff]
        %v4057 = vld [vmem:[#allocation4 + $0xb0] sm:$0xff]
        %v4058 = vld [vmem:[#allocation4 + $0xb8] sm:$0xff]
        %v4059 = vld [vmem:[#allocation4 + $0xc0] sm:$0xff]
        %v4060 = vld [vmem:[#allocation4 + $0xc8] sm:$0xff]
        %v4061 = vld [vmem:[#allocation4 + $0xd0] sm:$0xff]
        %v4062 = vld [vmem:[#allocation4 + $0xd8] sm:$0xff]
        %v4063 = vld [vmem:[#allocation4 + $0xe0] sm:$0xff]
        %v4064 = vld [vmem:[#allocation4 + $0xe8] sm:$0xff]
        %v4065 = vld [vmem:[#allocation4 + $0xf0] sm:$0xff]
        %v4066 = vld [vmem:[#allocation4 + $0xf8] sm:$0xff]
        %v4067 = vld [vmem:[#allocation4 + $0x100] sm:$0xff]
        %v4068 = vld [vmem:[#allocation4 + $0x108] sm:$0xff]
        %v4069 = vld [vmem:[#allocation4 + $0x110] sm:$0xff]
        %v4070 = vld [vmem:[#allocation4 + $0x118] sm:$0xff]
        %v4071 = vld [vmem:[#allocation4 + $0x120] sm:$0xff]
        %v4072 = vld [vmem:[#allocation4 + $0x128] sm:$0xff]
        %v4073 = vld [vmem:[#allocation4 + $0x130] sm:$0xff]
        %v4074 = vld [vmem:[#allocation4 + $0x138] sm:$0xff]
        %v4075 = vld [vmem:[#allocation4 + $0x140] sm:$0xff]
        %v4076 = vld [vmem:[#allocation4 + $0x148] sm:$0xff]
        %v4077 = vld [vmem:[#allocation4 + $0x150] sm:$0xff]
        %v4078 = vld [vmem:[#allocation4 + $0x158] sm:$0xff]
        %v4079 = vld [vmem:[#allocation4 + $0x160] sm:$0xff]
        %v4080 = vld [vmem:[#allocation4 + $0x168] sm:$0xff]
        %v4081 = vld [vmem:[#allocation4 + $0x170] sm:$0xff]
        %v4082 = vld [vmem:[#allocation4 + $0x178] sm:$0xff]
        %v4099 = vunpack.c.l.b16 %v4019
        %v4100 = vunpack.c.l.b16 %v4020
        %v4101 = vunpack.c.l.b16 %v4021
        %v4102 = vunpack.c.l.b16 %v4022
        %v4103 = vunpack.c.l.b16 %v4023
        %v4104 = vunpack.c.l.b16 %v4024
        %v4105 = vunpack.c.l.b16 %v4025
        %v4106 = vunpack.c.l.b16 %v4026
        %v4107 = vunpack.c.l.b16 %v4027
        %v4108 = vunpack.c.l.b16 %v4028
        %v4109 = vunpack.c.l.b16 %v4029
        %v4110 = vunpack.c.l.b16 %v4030
        %v4111 = vunpack.c.l.b16 %v4031
        %v4112 = vunpack.c.l.b16 %v4032
        %v4113 = vunpack.c.l.b16 %v4033
        %v4114 = vunpack.c.l.b16 %v4034
        %v4115 = vpack.c.b16 %v4100, %v4099
        %v4116 = vpack.c.b16 %v4102, %v4101
        %v4117 = vpack.c.b16 %v4104, %v4103
        %v4118 = vpack.c.b16 %v4106, %v4105
        %v4119 = vpack.c.b16 %v4108, %v4107
        %v4120 = vpack.c.b16 %v4110, %v4109
        %v4121 = vpack.c.b16 %v4112, %v4111
        %v4122 = vpack.c.b16 %v4114, %v4113
        %4131 = vmatpush.bf16.msra.mxu0 %v4122
        %4132 = vmatpush.bf16.msra.mxu0 %v4121
        %4133 = vmatpush.bf16.msra.mxu0 %v4120
        %4134 = vmatpush.bf16.msra.mxu0 %v4119
        %4135 = vmatpush.bf16.msra.mxu0 %v4118
        %4136 = vmatpush.bf16.msra.mxu0 %v4117
        %4137 = vmatpush.bf16.msra.mxu0 %v4116
        %4138 = vmatpush.bf16.msra.mxu0 %v4115
        %4139 = vmatmul.bf16.gmra.mxu0 %v3995
        %v4140 = vpop.f32.mrf.mxu0
        %v4141 = vadd.f32 0.0, %v4140
        %v4142 = vpop.f32.mrf.mxu0
        %v4143 = vadd.f32 0.0, %v4142
        %4144 = vmatmul.bf16.gmra.mxu0 %v3996
        %v4145 = vpop.f32.mrf.mxu0
        %v4146 = vadd.f32 0.0, %v4145
        %v4147 = vpop.f32.mrf.mxu0
        %v4148 = vadd.f32 0.0, %v4147
        %4149 = vmatmul.bf16.gmra.mxu0 %v3997
        %v4150 = vpop.f32.mrf.mxu0
        %v4151 = vadd.f32 0.0, %v4150
        %v4152 = vpop.f32.mrf.mxu0
        %v4153 = vadd.f32 0.0, %v4152
        %4154 = vmatmul.bf16.gmra.mxu0 %v3998
        %v4155 = vpop.f32.mrf.mxu0
        %v4156 = vadd.f32 0.0, %v4155
        %v4157 = vpop.f32.mrf.mxu0
        %v4158 = vadd.f32 0.0, %v4157
        %4159 = vmatmul.bf16.gmra.mxu0 %v3999
        %v4160 = vpop.f32.mrf.mxu0
        %v4161 = vadd.f32 0.0, %v4160
        %v4162 = vpop.f32.mrf.mxu0
        %v4163 = vadd.f32 0.0, %v4162
        %4164 = vmatmul.bf16.gmra.mxu0 %v4000
        %v4165 = vpop.f32.mrf.mxu0
        %v4166 = vadd.f32 0.0, %v4165
        %v4167 = vpop.f32.mrf.mxu0
        %v4168 = vadd.f32 0.0, %v4167
        %4169 = vmatmul.bf16.gmra.mxu0 %v4001
        %v4170 = vpop.f32.mrf.mxu0
        %v4171 = vadd.f32 0.0, %v4170
        %v4172 = vpop.f32.mrf.mxu0
        %v4173 = vadd.f32 0.0, %v4172
        %4174 = vmatmul.bf16.gmra.mxu0 %v4002
        %v4175 = vpop.f32.mrf.mxu0
        %v4176 = vadd.f32 0.0, %v4175
        %v4177 = vpop.f32.mrf.mxu0
        %v4178 = vadd.f32 0.0, %v4177
        %4179 = vmatmul.bf16.gmra.mxu0 %v4003
        %v4180 = vpop.f32.mrf.mxu0
        %v4181 = vadd.f32 0.0, %v4180
        %v4182 = vpop.f32.mrf.mxu0
        %v4183 = vadd.f32 0.0, %v4182
        %4184 = vmatmul.bf16.gmra.mxu0 %v4004
        %v4185 = vpop.f32.mrf.mxu0
        %v4186 = vadd.f32 0.0, %v4185
        %v4187 = vpop.f32.mrf.mxu0
        %v4188 = vadd.f32 0.0, %v4187
        %4189 = vmatmul.bf16.gmra.mxu0 %v4005
        %v4190 = vpop.f32.mrf.mxu0
        %v4191 = vadd.f32 0.0, %v4190
        %v4192 = vpop.f32.mrf.mxu0
        %v4193 = vadd.f32 0.0, %v4192
        %4194 = vmatmul.bf16.gmra.mxu0 %v4006
        %v4195 = vpop.f32.mrf.mxu0
        %v4196 = vadd.f32 0.0, %v4195
        %v4197 = vpop.f32.mrf.mxu0
        %v4198 = vadd.f32 0.0, %v4197
        %4199 = vmatmul.bf16.gmra.mxu0 %v4007
        %v4200 = vpop.f32.mrf.mxu0
        %v4201 = vadd.f32 0.0, %v4200
        %v4202 = vpop.f32.mrf.mxu0
        %v4203 = vadd.f32 0.0, %v4202
        %4204 = vmatmul.bf16.gmra.mxu0 %v4008
        %v4205 = vpop.f32.mrf.mxu0
        %v4206 = vadd.f32 0.0, %v4205
        %v4207 = vpop.f32.mrf.mxu0
        %v4208 = vadd.f32 0.0, %v4207
        %4209 = vmatmul.bf16.gmra.mxu0 %v4009
        %v4210 = vpop.f32.mrf.mxu0
        %v4211 = vadd.f32 0.0, %v4210
        %v4212 = vpop.f32.mrf.mxu0
        %v4213 = vadd.f32 0.0, %v4212
        %4214 = vmatmul.bf16.gmra.mxu0 %v4010
        %v4215 = vpop.f32.mrf.mxu0
        %v4216 = vadd.f32 0.0, %v4215
        %v4217 = vpop.f32.mrf.mxu0
        %v4218 = vadd.f32 0.0, %v4217
        %4219 = vmatmul.bf16.gmra.mxu0 %v4011
        %v4220 = vpop.f32.mrf.mxu0
        %v4221 = vadd.f32 0.0, %v4220
        %v4222 = vpop.f32.mrf.mxu0
        %v4223 = vadd.f32 0.0, %v4222
        %4224 = vmatmul.bf16.gmra.mxu0 %v4012
        %v4225 = vpop.f32.mrf.mxu0
        %v4226 = vadd.f32 0.0, %v4225
        %v4227 = vpop.f32.mrf.mxu0
        %v4228 = vadd.f32 0.0, %v4227
        %4229 = vmatmul.bf16.gmra.mxu0 %v4013
        %v4230 = vpop.f32.mrf.mxu0
        %v4231 = vadd.f32 0.0, %v4230
        %v4232 = vpop.f32.mrf.mxu0
        %v4233 = vadd.f32 0.0, %v4232
        %4234 = vmatmul.bf16.gmra.mxu0 %v4014
        %v4235 = vpop.f32.mrf.mxu0
        %v4236 = vadd.f32 0.0, %v4235
        %v4237 = vpop.f32.mrf.mxu0
        %v4238 = vadd.f32 0.0, %v4237
        %4239 = vmatmul.bf16.gmra.mxu0 %v4015
        %v4240 = vpop.f32.mrf.mxu0
        %v4241 = vadd.f32 0.0, %v4240
        %v4242 = vpop.f32.mrf.mxu0
        %v4243 = vadd.f32 0.0, %v4242
        %4244 = vmatmul.bf16.gmra.mxu0 %v4016
        %v4245 = vpop.f32.mrf.mxu0
        %v4246 = vadd.f32 0.0, %v4245
        %v4247 = vpop.f32.mrf.mxu0
        %v4248 = vadd.f32 0.0, %v4247
        %4249 = vmatmul.bf16.gmra.mxu0 %v4017
        %v4250 = vpop.f32.mrf.mxu0
        %v4251 = vadd.f32 0.0, %v4250
        %v4252 = vpop.f32.mrf.mxu0
        %v4253 = vadd.f32 0.0, %v4252
        %4254 = vmatmul.bf16.gmra.mxu0 %v4018
        %v4255 = vpop.f32.mrf.mxu0
        %v4256 = vadd.f32 0.0, %v4255
        %v4257 = vpop.f32.mrf.mxu0
        %v4258 = vadd.f32 0.0, %v4257
        %4259 = vdwg.mxu0
        %v4260 = vadd.f32 %v4035, %v4141
        %v4261 = vadd.f32 %v4036, %v4143
        %v4262 = vadd.f32 %v4037, %v4146
        %v4263 = vadd.f32 %v4038, %v4148
        %v4264 = vadd.f32 %v4039, %v4151
        %v4265 = vadd.f32 %v4040, %v4153
        %v4266 = vadd.f32 %v4041, %v4156
        %v4267 = vadd.f32 %v4042, %v4158
        %v4268 = vadd.f32 %v4043, %v4161
        %v4269 = vadd.f32 %v4044, %v4163
        %v4270 = vadd.f32 %v4045, %v4166
        %v4271 = vadd.f32 %v4046, %v4168
        %v4272 = vadd.f32 %v4047, %v4171
        %v4273 = vadd.f32 %v4048, %v4173
        %v4274 = vadd.f32 %v4049, %v4176
        %v4275 = vadd.f32 %v4050, %v4178
        %v4276 = vadd.f32 %v4051, %v4181
        %v4277 = vadd.f32 %v4052, %v4183
        %v4278 = vadd.f32 %v4053, %v4186
        %v4279 = vadd.f32 %v4054, %v4188
        %v4280 = vadd.f32 %v4055, %v4191
        %v4281 = vadd.f32 %v4056, %v4193
        %v4282 = vadd.f32 %v4057, %v4196
        %v4283 = vadd.f32 %v4058, %v4198
        %v4284 = vadd.f32 %v4059, %v4201
        %v4285 = vadd.f32 %v4060, %v4203
        %v4286 = vadd.f32 %v4061, %v4206
        %v4287 = vadd.f32 %v4062, %v4208
        %v4288 = vadd.f32 %v4063, %v4211
        %v4289 = vadd.f32 %v4064, %v4213
        %v4290 = vadd.f32 %v4065, %v4216
        %v4291 = vadd.f32 %v4066, %v4218
        %v4292 = vadd.f32 %v4067, %v4221
        %v4293 = vadd.f32 %v4068, %v4223
        %v4294 = vadd.f32 %v4069, %v4226
        %v4295 = vadd.f32 %v4070, %v4228
        %v4296 = vadd.f32 %v4071, %v4231
        %v4297 = vadd.f32 %v4072, %v4233
        %v4298 = vadd.f32 %v4073, %v4236
        %v4299 = vadd.f32 %v4074, %v4238
        %v4300 = vadd.f32 %v4075, %v4241
        %v4301 = vadd.f32 %v4076, %v4243
        %v4302 = vadd.f32 %v4077, %v4246
        %v4303 = vadd.f32 %v4078, %v4248
        %v4304 = vadd.f32 %v4079, %v4251
        %v4305 = vadd.f32 %v4080, %v4253
        %v4306 = vadd.f32 %v4081, %v4256
        %v4307 = vadd.f32 %v4082, %v4258
        %4308 = vst [vmem:[#allocation4] sm:$0xff] %v4260
        %4309 = vst [vmem:[#allocation4 + $0x8] sm:$0xff] %v4261
        %4310 = vst [vmem:[#allocation4 + $0x10] sm:$0xff] %v4262
        %4311 = vst [vmem:[#allocation4 + $0x18] sm:$0xff] %v4263
        %4312 = vst [vmem:[#allocation4 + $0x20] sm:$0xff] %v4264
        %4313 = vst [vmem:[#allocation4 + $0x28] sm:$0xff] %v4265
        %4314 = vst [vmem:[#allocation4 + $0x30] sm:$0xff] %v4266
        %4315 = vst [vmem:[#allocation4 + $0x38] sm:$0xff] %v4267
        %4316 = vst [vmem:[#allocation4 + $0x40] sm:$0xff] %v4268
        %4317 = vst [vmem:[#allocation4 + $0x48] sm:$0xff] %v4269
        %4318 = vst [vmem:[#allocation4 + $0x50] sm:$0xff] %v4270
        %4319 = vst [vmem:[#allocation4 + $0x58] sm:$0xff] %v4271
        %4320 = vst [vmem:[#allocation4 + $0x60] sm:$0xff] %v4272
        %4321 = vst [vmem:[#allocation4 + $0x68] sm:$0xff] %v4273
        %4322 = vst [vmem:[#allocation4 + $0x70] sm:$0xff] %v4274
        %4323 = vst [vmem:[#allocation4 + $0x78] sm:$0xff] %v4275
        %4324 = vst [vmem:[#allocation4 + $0x80] sm:$0xff] %v4276
        %4325 = vst [vmem:[#allocation4 + $0x88] sm:$0xff] %v4277
        %4326 = vst [vmem:[#allocation4 + $0x90] sm:$0xff] %v4278
        %4327 = vst [vmem:[#allocation4 + $0x98] sm:$0xff] %v4279
        %4328 = vst [vmem:[#allocation4 + $0xa0] sm:$0xff] %v4280
        %4329 = vst [vmem:[#allocation4 + $0xa8] sm:$0xff] %v4281
        %4330 = vst [vmem:[#allocation4 + $0xb0] sm:$0xff] %v4282
        %4331 = vst [vmem:[#allocation4 + $0xb8] sm:$0xff] %v4283
        %4332 = vst [vmem:[#allocation4 + $0xc0] sm:$0xff] %v4284
        %4333 = vst [vmem:[#allocation4 + $0xc8] sm:$0xff] %v4285
        %4334 = vst [vmem:[#allocation4 + $0xd0] sm:$0xff] %v4286
        %4335 = vst [vmem:[#allocation4 + $0xd8] sm:$0xff] %v4287
        %4336 = vst [vmem:[#allocation4 + $0xe0] sm:$0xff] %v4288
        %4337 = vst [vmem:[#allocation4 + $0xe8] sm:$0xff] %v4289
        %4338 = vst [vmem:[#allocation4 + $0xf0] sm:$0xff] %v4290
        %4339 = vst [vmem:[#allocation4 + $0xf8] sm:$0xff] %v4291
        %4340 = vst [vmem:[#allocation4 + $0x100] sm:$0xff] %v4292
        %4341 = vst [vmem:[#allocation4 + $0x108] sm:$0xff] %v4293
        %4342 = vst [vmem:[#allocation4 + $0x110] sm:$0xff] %v4294
        %4343 = vst [vmem:[#allocation4 + $0x118] sm:$0xff] %v4295
        %4344 = vst [vmem:[#allocation4 + $0x120] sm:$0xff] %v4296
        %4345 = vst [vmem:[#allocation4 + $0x128] sm:$0xff] %v4297
        %4346 = vst [vmem:[#allocation4 + $0x130] sm:$0xff] %v4298
        %4347 = vst [vmem:[#allocation4 + $0x138] sm:$0xff] %v4299
        %4348 = vst [vmem:[#allocation4 + $0x140] sm:$0xff] %v4300
        %4349 = vst [vmem:[#allocation4 + $0x148] sm:$0xff] %v4301
        %4350 = vst [vmem:[#allocation4 + $0x150] sm:$0xff] %v4302
        %4351 = vst [vmem:[#allocation4 + $0x158] sm:$0xff] %v4303
        %4352 = vst [vmem:[#allocation4 + $0x160] sm:$0xff] %v4304
        %4353 = vst [vmem:[#allocation4 + $0x168] sm:$0xff] %v4305
        %4354 = vst [vmem:[#allocation4 + $0x170] sm:$0xff] %v4306
        %4355 = vst [vmem:[#allocation4 + $0x178] sm:$0xff] %v4307
        %v4356 = vld [vmem:[#allocation4] sm:$0xff]
        %v4357 = vld [vmem:[#allocation4 + $0x8] sm:$0x7f]
        %v4359 = vperm.slane %v501, 0
        %v4361 = vadd.f32 %v4356, %v4359
        %v4362 = vadd.f32 %v4357, %v4359
        %v4363 = vmax.f32 %v4361, 0.0
        %v4364 = vmax.f32 %v4362, 0.0
        %vm4365 = vcmask 121856
        %v4367 = vsel %vm4365, %v508, 0
        %vm4369 = vcmask 1046528
        %v4371 = vsel %vm4369, %v4364, 0
        %4373 = vmatpush.msra.mxu0 0.0
        %4374 = vmatpush.msra.mxu0 0.0
        %4375 = vmatpush.msra.mxu0 0.0
        %4376 = vmatpush.msra.mxu0 0.0
        %4377 = vmatpush.msra.mxu0 0.0
        %4378 = vmatpush.msra.mxu0 0.0
        %4379 = vmatpush.msra.mxu0 0.0
        %4380 = vmatpush.msra.mxu0 0.0
        %4381 = vmatpush.msra.mxu0 0.0
        %4382 = vmatpush.msra.mxu0 0.0
        %4383 = vmatpush.msra.mxu0 0.0
        %4384 = vmatpush.msra.mxu0 0.0
        %4385 = vmatpush.msra.mxu0 0.0
        %4386 = vmatpush.msra.mxu0 0.0
        %4387 = vmatpush.msra.mxu0 %v4371
        %4388 = vmatpush.msra.mxu0 %v4363
        %4389 = vmatmul.f32.gmra.mxu0 %v4367
        %v4390 = vpop.f32.mrf.mxu0
        %v4391 = vadd.f32 0.0, %v4390
        %4392 = vdwg.mxu0
        %4393 = vst [vmem:[#allocation3 + $0x20] sm:$0xff] %v4391
        %v4394 = vld [vmem:[#allocation4 + $0x30] sm:$0xff]
        %v4395 = vld [vmem:[#allocation4 + $0x38] sm:$0x7f]
        %v4396 = vadd.f32 %v4394, %v4359
        %v4397 = vadd.f32 %v4395, %v4359
        %v4398 = vmax.f32 %v4396, 0.0
        %v4399 = vmax.f32 %v4397, 0.0
        %v4401 = vsel %vm4369, %v4399, 0
        %4403 = vmatpush.msra.mxu0 0.0
        %4404 = vmatpush.msra.mxu0 0.0
        %4405 = vmatpush.msra.mxu0 0.0
        %4406 = vmatpush.msra.mxu0 0.0
        %4407 = vmatpush.msra.mxu0 0.0
        %4408 = vmatpush.msra.mxu0 0.0
        %4409 = vmatpush.msra.mxu0 0.0
        %4410 = vmatpush.msra.mxu0 0.0
        %4411 = vmatpush.msra.mxu0 0.0
        %4412 = vmatpush.msra.mxu0 0.0
        %4413 = vmatpush.msra.mxu0 0.0
        %4414 = vmatpush.msra.mxu0 0.0
        %4415 = vmatpush.msra.mxu0 0.0
        %4416 = vmatpush.msra.mxu0 0.0
        %4417 = vmatpush.msra.mxu0 %v4401
        %4418 = vmatpush.msra.mxu0 %v4398
        %4419 = vmatmul.f32.gmra.mxu0 %v4367
        %v4420 = vpop.f32.mrf.mxu0
        %v4421 = vadd.f32 0.0, %v4420
        %4422 = vdwg.mxu0
        %4423 = vst [vmem:[#allocation3 + $0x30] sm:$0xff] %v4421
        %v4424 = vld [vmem:[#allocation4 + $0x60] sm:$0xff]
        %v4425 = vld [vmem:[#allocation4 + $0x68] sm:$0x7f]
        %v4426 = vadd.f32 %v4424, %v4359
        %v4427 = vadd.f32 %v4425, %v4359
        %v4428 = vmax.f32 %v4426, 0.0
        %v4429 = vmax.f32 %v4427, 0.0
        %v4431 = vsel %vm4369, %v4429, 0
        %4433 = vmatpush.msra.mxu0 0.0
        %4434 = vmatpush.msra.mxu0 0.0
        %4435 = vmatpush.msra.mxu0 0.0
        %4436 = vmatpush.msra.mxu0 0.0
        %4437 = vmatpush.msra.mxu0 0.0
        %4438 = vmatpush.msra.mxu0 0.0
        %4439 = vmatpush.msra.mxu0 0.0
        %4440 = vmatpush.msra.mxu0 0.0
        %4441 = vmatpush.msra.mxu0 0.0
        %4442 = vmatpush.msra.mxu0 0.0
        %4443 = vmatpush.msra.mxu0 0.0
        %4444 = vmatpush.msra.mxu0 0.0
        %4445 = vmatpush.msra.mxu0 0.0
        %4446 = vmatpush.msra.mxu0 0.0
        %4447 = vmatpush.msra.mxu0 %v4431
        %4448 = vmatpush.msra.mxu0 %v4428
        %4449 = vmatmul.f32.gmra.mxu0 %v4367
        %v4450 = vpop.f32.mrf.mxu0
        %v4451 = vadd.f32 0.0, %v4450
        %4452 = vdwg.mxu0
        %4453 = vst [vmem:[#allocation3 + $0x40] sm:$0xff] %v4451
        %v4454 = vld [vmem:[#allocation4 + $0x90] sm:$0xff]
        %v4455 = vld [vmem:[#allocation4 + $0x98] sm:$0x7f]
        %v4456 = vadd.f32 %v4454, %v4359
        %v4457 = vadd.f32 %v4455, %v4359
        %v4458 = vmax.f32 %v4456, 0.0
        %v4459 = vmax.f32 %v4457, 0.0
        %v4461 = vsel %vm4369, %v4459, 0
        %4463 = vmatpush.msra.mxu0 0.0
        %4464 = vmatpush.msra.mxu0 0.0
        %4465 = vmatpush.msra.mxu0 0.0
        %4466 = vmatpush.msra.mxu0 0.0
        %4467 = vmatpush.msra.mxu0 0.0
        %4468 = vmatpush.msra.mxu0 0.0
        %4469 = vmatpush.msra.mxu0 0.0
        %4470 = vmatpush.msra.mxu0 0.0
        %4471 = vmatpush.msra.mxu0 0.0
        %4472 = vmatpush.msra.mxu0 0.0
        %4473 = vmatpush.msra.mxu0 0.0
        %4474 = vmatpush.msra.mxu0 0.0
        %4475 = vmatpush.msra.mxu0 0.0
        %4476 = vmatpush.msra.mxu0 0.0
        %4477 = vmatpush.msra.mxu0 %v4461
        %4478 = vmatpush.msra.mxu0 %v4458
        %4479 = vmatmul.f32.gmra.mxu0 %v4367
        %v4480 = vpop.f32.mrf.mxu0
        %v4481 = vadd.f32 0.0, %v4480
        %4482 = vdwg.mxu0
        %4483 = vst [vmem:[#allocation3 + $0x50] sm:$0xff] %v4481
        %v4484 = vld [vmem:[#allocation4 + $0xc0] sm:$0xff]
        %v4485 = vld [vmem:[#allocation4 + $0xc8] sm:$0x7f]
        %v4486 = vadd.f32 %v4484, %v4359
        %v4487 = vadd.f32 %v4485, %v4359
        %v4488 = vmax.f32 %v4486, 0.0
        %v4489 = vmax.f32 %v4487, 0.0
        %v4491 = vsel %vm4369, %v4489, 0
        %4493 = vmatpush.msra.mxu0 0.0
        %4494 = vmatpush.msra.mxu0 0.0
        %4495 = vmatpush.msra.mxu0 0.0
        %4496 = vmatpush.msra.mxu0 0.0
        %4497 = vmatpush.msra.mxu0 0.0
        %4498 = vmatpush.msra.mxu0 0.0
        %4499 = vmatpush.msra.mxu0 0.0
        %4500 = vmatpush.msra.mxu0 0.0
        %4501 = vmatpush.msra.mxu0 0.0
        %4502 = vmatpush.msra.mxu0 0.0
        %4503 = vmatpush.msra.mxu0 0.0
        %4504 = vmatpush.msra.mxu0 0.0
        %4505 = vmatpush.msra.mxu0 0.0
        %4506 = vmatpush.msra.mxu0 0.0
        %4507 = vmatpush.msra.mxu0 %v4491
        %4508 = vmatpush.msra.mxu0 %v4488
        %4509 = vmatmul.f32.gmra.mxu0 %v4367
        %v4510 = vpop.f32.mrf.mxu0
        %v4511 = vadd.f32 0.0, %v4510
        %4512 = vdwg.mxu0
        %4513 = vst [vmem:[#allocation3 + $0x60] sm:$0xff] %v4511
        %v4514 = vld [vmem:[#allocation4 + $0xf0] sm:$0xff]
        %v4515 = vld [vmem:[#allocation4 + $0xf8] sm:$0x7f]
        %v4516 = vadd.f32 %v4514, %v4359
        %v4517 = vadd.f32 %v4515, %v4359
        %v4518 = vmax.f32 %v4516, 0.0
        %v4519 = vmax.f32 %v4517, 0.0
        %v4521 = vsel %vm4369, %v4519, 0
        %4523 = vmatpush.msra.mxu0 0.0
        %4524 = vmatpush.msra.mxu0 0.0
        %4525 = vmatpush.msra.mxu0 0.0
        %4526 = vmatpush.msra.mxu0 0.0
        %4527 = vmatpush.msra.mxu0 0.0
        %4528 = vmatpush.msra.mxu0 0.0
        %4529 = vmatpush.msra.mxu0 0.0
        %4530 = vmatpush.msra.mxu0 0.0
        %4531 = vmatpush.msra.mxu0 0.0
        %4532 = vmatpush.msra.mxu0 0.0
        %4533 = vmatpush.msra.mxu0 0.0
        %4534 = vmatpush.msra.mxu0 0.0
        %4535 = vmatpush.msra.mxu0 0.0
        %4536 = vmatpush.msra.mxu0 0.0
        %4537 = vmatpush.msra.mxu0 %v4521
        %4538 = vmatpush.msra.mxu0 %v4518
        %4539 = vmatmul.f32.gmra.mxu0 %v4367
        %v4540 = vpop.f32.mrf.mxu0
        %v4541 = vadd.f32 0.0, %v4540
        %4542 = vdwg.mxu0
        %4543 = vst [vmem:[#allocation3 + $0x70] sm:$0xff] %v4541
        %v4544 = vld [vmem:[#allocation4 + $0x120] sm:$0xff]
        %v4545 = vld [vmem:[#allocation4 + $0x128] sm:$0x7f]
        %v4546 = vadd.f32 %v4544, %v4359
        %v4547 = vadd.f32 %v4545, %v4359
        %v4548 = vmax.f32 %v4546, 0.0
        %v4549 = vmax.f32 %v4547, 0.0
        %v4551 = vsel %vm4369, %v4549, 0
        %4553 = vmatpush.msra.mxu0 0.0
        %4554 = vmatpush.msra.mxu0 0.0
        %4555 = vmatpush.msra.mxu0 0.0
        %4556 = vmatpush.msra.mxu0 0.0
        %4557 = vmatpush.msra.mxu0 0.0
        %4558 = vmatpush.msra.mxu0 0.0
        %4559 = vmatpush.msra.mxu0 0.0
        %4560 = vmatpush.msra.mxu0 0.0
        %4561 = vmatpush.msra.mxu0 0.0
        %4562 = vmatpush.msra.mxu0 0.0
        %4563 = vmatpush.msra.mxu0 0.0
        %4564 = vmatpush.msra.mxu0 0.0
        %4565 = vmatpush.msra.mxu0 0.0
        %4566 = vmatpush.msra.mxu0 0.0
        %4567 = vmatpush.msra.mxu0 %v4551
        %4568 = vmatpush.msra.mxu0 %v4548
        %4569 = vmatmul.f32.gmra.mxu0 %v4367
        %v4570 = vpop.f32.mrf.mxu0
        %v4571 = vadd.f32 0.0, %v4570
        %4572 = vdwg.mxu0
        %4573 = vst [vmem:[#allocation3 + $0x80] sm:$0xff] %v4571
        %v4574 = vld [vmem:[#allocation4 + $0x150] sm:$0xff]
        %v4575 = vld [vmem:[#allocation4 + $0x158] sm:$0x7f]
        %v4576 = vadd.f32 %v4574, %v4359
        %v4577 = vadd.f32 %v4575, %v4359
        %v4578 = vmax.f32 %v4576, 0.0
        %v4579 = vmax.f32 %v4577, 0.0
        %v4581 = vsel %vm4369, %v4579, 0
        %4583 = vmatpush.msra.mxu0 0.0
        %4584 = vmatpush.msra.mxu0 0.0
        %4585 = vmatpush.msra.mxu0 0.0
        %4586 = vmatpush.msra.mxu0 0.0
        %4587 = vmatpush.msra.mxu0 0.0
        %4588 = vmatpush.msra.mxu0 0.0
        %4589 = vmatpush.msra.mxu0 0.0
        %4590 = vmatpush.msra.mxu0 0.0
        %4591 = vmatpush.msra.mxu0 0.0
        %4592 = vmatpush.msra.mxu0 0.0
        %4593 = vmatpush.msra.mxu0 0.0
        %4594 = vmatpush.msra.mxu0 0.0
        %4595 = vmatpush.msra.mxu0 0.0
        %4596 = vmatpush.msra.mxu0 0.0
        %4597 = vmatpush.msra.mxu0 %v4581
        %4598 = vmatpush.msra.mxu0 %v4578
        %4599 = vmatmul.f32.gmra.mxu0 %v4367
        %v4600 = vpop.f32.mrf.mxu0
        %v4601 = vadd.f32 0.0, %v4600
        %4602 = vdwg.mxu0
        %4603 = vst [vmem:[#allocation3 + $0x90] sm:$0xff] %v4601
        %v4604 = vld [vmem:[#allocation3 + $0xf] sm:$0xff]
        %v4605 = vld [vmem:[#allocation3 + $0x17] sm:$0xff]
        %v4606 = vld [vmem:[#allocation3 + $0x1f] sm:$0xff]
        %v4607 = vld [vmem:[#allocation3 + $0x27] sm:$0xff]
        %v4608 = vld [vmem:[#allocation3 + $0x2f] sm:$0xff]
        %v4609 = vld [vmem:[#allocation3 + $0x37] sm:$0xff]
        %v4610 = vld [vmem:[#allocation3 + $0x3f] sm:$0xff]
        %v4611 = vld [vmem:[#allocation3 + $0x47] sm:$0xff]
        %v4612 = vld [vmem:[#allocation3 + $0x4f] sm:$0xff]
        %v4613 = vld [vmem:[#allocation3 + $0x57] sm:$0xff]
        %v4614 = vld [vmem:[#allocation3 + $0x5f] sm:$0xff]
        %v4615 = vld [vmem:[#allocation3 + $0x67] sm:$0xff]
        %v4616 = vld [vmem:[#allocation3 + $0x6f] sm:$0xff]
        %v4617 = vld [vmem:[#allocation3 + $0x77] sm:$0xff]
        %v4618 = vld [vmem:[#allocation3 + $0x7f] sm:$0xff]
        %v4619 = vld [vmem:[#allocation3 + $0x87] sm:$0xff]
        %v4620 = vpack.c.bf16 %v4605, %v4604
        %v4621 = vpack.c.bf16 %v4607, %v4606
        %v4622 = vpack.c.bf16 %v4609, %v4608
        %v4623 = vpack.c.bf16 %v4611, %v4610
        %v4624 = vpack.c.bf16 %v4613, %v4612
        %v4625 = vpack.c.bf16 %v4615, %v4614
        %v4626 = vpack.c.bf16 %v4617, %v4616
        %v4627 = vpack.c.bf16 %v4619, %v4618
        %v4628 = vld [vmem:[#allocation11] sm:$0xf]
        %v4629 = vld [vmem:[#allocation11 + $0x4] sm:$0xf]
        %v4630 = vld [vmem:[#allocation11 + $0x8] sm:$0xf]
        %v4631 = vld [vmem:[#allocation11 + $0xc] sm:$0xf]
        %v4632 = vld [vmem:[#allocation11 + $0x10] sm:$0xf]
        %v4633 = vld [vmem:[#allocation11 + $0x14] sm:$0xf]
        %v4634 = vld [vmem:[#allocation11 + $0x18] sm:$0xf]
        %v4635 = vld [vmem:[#allocation11 + $0x1c] sm:$0xf]
        %v4636 = vld [vmem:[#allocation11 + $0x20] sm:$0xf]
        %v4637 = vld [vmem:[#allocation11 + $0x24] sm:$0xf]
        %v4638 = vld [vmem:[#allocation11 + $0x28] sm:$0xf]
        %v4639 = vld [vmem:[#allocation11 + $0x2c] sm:$0xf]
        %v4640 = vld [vmem:[#allocation11 + $0x30] sm:$0xf]
        %v4641 = vld [vmem:[#allocation11 + $0x34] sm:$0xf]
        %v4642 = vld [vmem:[#allocation11 + $0x38] sm:$0xf]
        %v4643 = vld [vmem:[#allocation11 + $0x3c] sm:$0xf]
        %v4644 = vld [vmem:[#allocation5] sm:$0xff]
        %v4645 = vld [vmem:[#allocation5 + $0x8] sm:$0xff]
        %v4646 = vld [vmem:[#allocation5 + $0x10] sm:$0xff]
        %v4647 = vld [vmem:[#allocation5 + $0x18] sm:$0xff]
        %v4648 = vld [vmem:[#allocation5 + $0x20] sm:$0xff]
        %v4649 = vld [vmem:[#allocation5 + $0x28] sm:$0xff]
        %v4650 = vld [vmem:[#allocation5 + $0x30] sm:$0xff]
        %v4651 = vld [vmem:[#allocation5 + $0x38] sm:$0xff]
        %v4652 = vld [vmem:[#allocation5 + $0x40] sm:$0xff]
        %v4653 = vld [vmem:[#allocation5 + $0x48] sm:$0xff]
        %v4654 = vld [vmem:[#allocation5 + $0x50] sm:$0xff]
        %v4655 = vld [vmem:[#allocation5 + $0x58] sm:$0xff]
        %v4656 = vld [vmem:[#allocation5 + $0x60] sm:$0xff]
        %v4657 = vld [vmem:[#allocation5 + $0x68] sm:$0xff]
        %v4658 = vld [vmem:[#allocation5 + $0x70] sm:$0xff]
        %v4659 = vld [vmem:[#allocation5 + $0x78] sm:$0xff]
        %v4676 = vunpack.c.l.b16 %v4628
        %v4677 = vunpack.c.l.b16 %v4629
        %v4678 = vunpack.c.l.b16 %v4630
        %v4679 = vunpack.c.l.b16 %v4631
        %v4680 = vunpack.c.l.b16 %v4632
        %v4681 = vunpack.c.l.b16 %v4633
        %v4682 = vunpack.c.l.b16 %v4634
        %v4683 = vunpack.c.l.b16 %v4635
        %v4684 = vunpack.c.l.b16 %v4636
        %v4685 = vunpack.c.l.b16 %v4637
        %v4686 = vunpack.c.l.b16 %v4638
        %v4687 = vunpack.c.l.b16 %v4639
        %v4688 = vunpack.c.l.b16 %v4640
        %v4689 = vunpack.c.l.b16 %v4641
        %v4690 = vunpack.c.l.b16 %v4642
        %v4691 = vunpack.c.l.b16 %v4643
        %v4692 = vpack.c.b16 %v4677, %v4676
        %v4693 = vpack.c.b16 %v4679, %v4678
        %v4694 = vpack.c.b16 %v4681, %v4680
        %v4695 = vpack.c.b16 %v4683, %v4682
        %v4696 = vpack.c.b16 %v4685, %v4684
        %v4697 = vpack.c.b16 %v4687, %v4686
        %v4698 = vpack.c.b16 %v4689, %v4688
        %v4699 = vpack.c.b16 %v4691, %v4690
        %4708 = vmatpush.bf16.msra.mxu0 %v4699
        %4709 = vmatpush.bf16.msra.mxu0 %v4698
        %4710 = vmatpush.bf16.msra.mxu0 %v4697
        %4711 = vmatpush.bf16.msra.mxu0 %v4696
        %4712 = vmatpush.bf16.msra.mxu0 %v4695
        %4713 = vmatpush.bf16.msra.mxu0 %v4694
        %4714 = vmatpush.bf16.msra.mxu0 %v4693
        %4715 = vmatpush.bf16.msra.mxu0 %v4692
        %4716 = vmatmul.bf16.gmra.mxu0 %v4620
        %v4717 = vpop.f32.mrf.mxu0
        %v4718 = vadd.f32 0.0, %v4717
        %v4719 = vpop.f32.mrf.mxu0
        %v4720 = vadd.f32 0.0, %v4719
        %4721 = vmatmul.bf16.gmra.mxu0 %v4621
        %v4722 = vpop.f32.mrf.mxu0
        %v4723 = vadd.f32 0.0, %v4722
        %v4724 = vpop.f32.mrf.mxu0
        %v4725 = vadd.f32 0.0, %v4724
        %4726 = vmatmul.bf16.gmra.mxu0 %v4622
        %v4727 = vpop.f32.mrf.mxu0
        %v4728 = vadd.f32 0.0, %v4727
        %v4729 = vpop.f32.mrf.mxu0
        %v4730 = vadd.f32 0.0, %v4729
        %4731 = vmatmul.bf16.gmra.mxu0 %v4623
        %v4732 = vpop.f32.mrf.mxu0
        %v4733 = vadd.f32 0.0, %v4732
        %v4734 = vpop.f32.mrf.mxu0
        %v4735 = vadd.f32 0.0, %v4734
        %4736 = vmatmul.bf16.gmra.mxu0 %v4624
        %v4737 = vpop.f32.mrf.mxu0
        %v4738 = vadd.f32 0.0, %v4737
        %v4739 = vpop.f32.mrf.mxu0
        %v4740 = vadd.f32 0.0, %v4739
        %4741 = vmatmul.bf16.gmra.mxu0 %v4625
        %v4742 = vpop.f32.mrf.mxu0
        %v4743 = vadd.f32 0.0, %v4742
        %v4744 = vpop.f32.mrf.mxu0
        %v4745 = vadd.f32 0.0, %v4744
        %4746 = vmatmul.bf16.gmra.mxu0 %v4626
        %v4747 = vpop.f32.mrf.mxu0
        %v4748 = vadd.f32 0.0, %v4747
        %v4749 = vpop.f32.mrf.mxu0
        %v4750 = vadd.f32 0.0, %v4749
        %4751 = vmatmul.bf16.gmra.mxu0 %v4627
        %v4752 = vpop.f32.mrf.mxu0
        %v4753 = vadd.f32 0.0, %v4752
        %v4754 = vpop.f32.mrf.mxu0
        %v4755 = vadd.f32 0.0, %v4754
        %4756 = vdwg.mxu0
        %v4757 = vadd.f32 %v4644, %v4718
        %v4758 = vadd.f32 %v4645, %v4720
        %v4759 = vadd.f32 %v4646, %v4723
        %v4760 = vadd.f32 %v4647, %v4725
        %v4761 = vadd.f32 %v4648, %v4728
        %v4762 = vadd.f32 %v4649, %v4730
        %v4763 = vadd.f32 %v4650, %v4733
        %v4764 = vadd.f32 %v4651, %v4735
        %v4765 = vadd.f32 %v4652, %v4738
        %v4766 = vadd.f32 %v4653, %v4740
        %v4767 = vadd.f32 %v4654, %v4743
        %v4768 = vadd.f32 %v4655, %v4745
        %v4769 = vadd.f32 %v4656, %v4748
        %v4770 = vadd.f32 %v4657, %v4750
        %v4771 = vadd.f32 %v4658, %v4753
        %v4772 = vadd.f32 %v4659, %v4755
        %4773 = vst [vmem:[#allocation5] sm:$0xff] %v4757
        %4774 = vst [vmem:[#allocation5 + $0x8] sm:$0xff] %v4758
        %4775 = vst [vmem:[#allocation5 + $0x10] sm:$0xff] %v4759
        %4776 = vst [vmem:[#allocation5 + $0x18] sm:$0xff] %v4760
        %4777 = vst [vmem:[#allocation5 + $0x20] sm:$0xff] %v4761
        %4778 = vst [vmem:[#allocation5 + $0x28] sm:$0xff] %v4762
        %4779 = vst [vmem:[#allocation5 + $0x30] sm:$0xff] %v4763
        %4780 = vst [vmem:[#allocation5 + $0x38] sm:$0xff] %v4764
        %4781 = vst [vmem:[#allocation5 + $0x40] sm:$0xff] %v4765
        %4782 = vst [vmem:[#allocation5 + $0x48] sm:$0xff] %v4766
        %4783 = vst [vmem:[#allocation5 + $0x50] sm:$0xff] %v4767
        %4784 = vst [vmem:[#allocation5 + $0x58] sm:$0xff] %v4768
        %4785 = vst [vmem:[#allocation5 + $0x60] sm:$0xff] %v4769
        %4786 = vst [vmem:[#allocation5 + $0x68] sm:$0xff] %v4770
        %4787 = vst [vmem:[#allocation5 + $0x70] sm:$0xff] %v4771
        %4788 = vst [vmem:[#allocation5 + $0x78] sm:$0xff] %v4772
        %v4789 = vld [vmem:[#allocation3 + $0x10] sm:$0xff]
        %v4790 = vld [vmem:[#allocation3 + $0x18] sm:$0xff]
        %v4791 = vld [vmem:[#allocation3 + $0x20] sm:$0xff]
        %v4792 = vld [vmem:[#allocation3 + $0x28] sm:$0xff]
        %v4793 = vld [vmem:[#allocation3 + $0x30] sm:$0xff]
        %v4794 = vld [vmem:[#allocation3 + $0x38] sm:$0xff]
        %v4795 = vld [vmem:[#allocation3 + $0x40] sm:$0xff]
        %v4796 = vld [vmem:[#allocation3 + $0x48] sm:$0xff]
        %v4797 = vld [vmem:[#allocation3 + $0x50] sm:$0xff]
        %v4798 = vld [vmem:[#allocation3 + $0x58] sm:$0xff]
        %v4799 = vld [vmem:[#allocation3 + $0x60] sm:$0xff]
        %v4800 = vld [vmem:[#allocation3 + $0x68] sm:$0xff]
        %v4801 = vld [vmem:[#allocation3 + $0x70] sm:$0xff]
        %v4802 = vld [vmem:[#allocation3 + $0x78] sm:$0xff]
        %v4803 = vld [vmem:[#allocation3 + $0x80] sm:$0xff]
        %v4804 = vld [vmem:[#allocation3 + $0x88] sm:$0xff]
        %v4805 = vpack.c.bf16 %v4790, %v4789
        %v4806 = vpack.c.bf16 %v4792, %v4791
        %v4807 = vpack.c.bf16 %v4794, %v4793
        %v4808 = vpack.c.bf16 %v4796, %v4795
        %v4809 = vpack.c.bf16 %v4798, %v4797
        %v4810 = vpack.c.bf16 %v4800, %v4799
        %v4811 = vpack.c.bf16 %v4802, %v4801
        %v4812 = vpack.c.bf16 %v4804, %v4803
        %v4813 = vld [vmem:[#allocation11 + $0x40] sm:$0xf]
        %v4814 = vld [vmem:[#allocation11 + $0x44] sm:$0xf]
        %v4815 = vld [vmem:[#allocation11 + $0x48] sm:$0xf]
        %v4816 = vld [vmem:[#allocation11 + $0x4c] sm:$0xf]
        %v4817 = vld [vmem:[#allocation11 + $0x50] sm:$0xf]
        %v4818 = vld [vmem:[#allocation11 + $0x54] sm:$0xf]
        %v4819 = vld [vmem:[#allocation11 + $0x58] sm:$0xf]
        %v4820 = vld [vmem:[#allocation11 + $0x5c] sm:$0xf]
        %v4821 = vld [vmem:[#allocation11 + $0x60] sm:$0xf]
        %v4822 = vld [vmem:[#allocation11 + $0x64] sm:$0xf]
        %v4823 = vld [vmem:[#allocation11 + $0x68] sm:$0xf]
        %v4824 = vld [vmem:[#allocation11 + $0x6c] sm:$0xf]
        %v4825 = vld [vmem:[#allocation11 + $0x70] sm:$0xf]
        %v4826 = vld [vmem:[#allocation11 + $0x74] sm:$0xf]
        %v4827 = vld [vmem:[#allocation11 + $0x78] sm:$0xf]
        %v4828 = vld [vmem:[#allocation11 + $0x7c] sm:$0xf]
        %v4829 = vld [vmem:[#allocation5] sm:$0xff]
        %v4830 = vld [vmem:[#allocation5 + $0x8] sm:$0xff]
        %v4831 = vld [vmem:[#allocation5 + $0x10] sm:$0xff]
        %v4832 = vld [vmem:[#allocation5 + $0x18] sm:$0xff]
        %v4833 = vld [vmem:[#allocation5 + $0x20] sm:$0xff]
        %v4834 = vld [vmem:[#allocation5 + $0x28] sm:$0xff]
        %v4835 = vld [vmem:[#allocation5 + $0x30] sm:$0xff]
        %v4836 = vld [vmem:[#allocation5 + $0x38] sm:$0xff]
        %v4837 = vld [vmem:[#allocation5 + $0x40] sm:$0xff]
        %v4838 = vld [vmem:[#allocation5 + $0x48] sm:$0xff]
        %v4839 = vld [vmem:[#allocation5 + $0x50] sm:$0xff]
        %v4840 = vld [vmem:[#allocation5 + $0x58] sm:$0xff]
        %v4841 = vld [vmem:[#allocation5 + $0x60] sm:$0xff]
        %v4842 = vld [vmem:[#allocation5 + $0x68] sm:$0xff]
        %v4843 = vld [vmem:[#allocation5 + $0x70] sm:$0xff]
        %v4844 = vld [vmem:[#allocation5 + $0x78] sm:$0xff]
        %v4861 = vunpack.c.l.b16 %v4813
        %v4862 = vunpack.c.l.b16 %v4814
        %v4863 = vunpack.c.l.b16 %v4815
        %v4864 = vunpack.c.l.b16 %v4816
        %v4865 = vunpack.c.l.b16 %v4817
        %v4866 = vunpack.c.l.b16 %v4818
        %v4867 = vunpack.c.l.b16 %v4819
        %v4868 = vunpack.c.l.b16 %v4820
        %v4869 = vunpack.c.l.b16 %v4821
        %v4870 = vunpack.c.l.b16 %v4822
        %v4871 = vunpack.c.l.b16 %v4823
        %v4872 = vunpack.c.l.b16 %v4824
        %v4873 = vunpack.c.l.b16 %v4825
        %v4874 = vunpack.c.l.b16 %v4826
        %v4875 = vunpack.c.l.b16 %v4827
        %v4876 = vunpack.c.l.b16 %v4828
        %v4877 = vpack.c.b16 %v4862, %v4861
        %v4878 = vpack.c.b16 %v4864, %v4863
        %v4879 = vpack.c.b16 %v4866, %v4865
        %v4880 = vpack.c.b16 %v4868, %v4867
        %v4881 = vpack.c.b16 %v4870, %v4869
        %v4882 = vpack.c.b16 %v4872, %v4871
        %v4883 = vpack.c.b16 %v4874, %v4873
        %v4884 = vpack.c.b16 %v4876, %v4875
        %4893 = vmatpush.bf16.msra.mxu0 %v4884
        %4894 = vmatpush.bf16.msra.mxu0 %v4883
        %4895 = vmatpush.bf16.msra.mxu0 %v4882
        %4896 = vmatpush.bf16.msra.mxu0 %v4881
        %4897 = vmatpush.bf16.msra.mxu0 %v4880
        %4898 = vmatpush.bf16.msra.mxu0 %v4879
        %4899 = vmatpush.bf16.msra.mxu0 %v4878
        %4900 = vmatpush.bf16.msra.mxu0 %v4877
        %4901 = vmatmul.bf16.gmra.mxu0 %v4805
        %v4902 = vpop.f32.mrf.mxu0
        %v4903 = vadd.f32 0.0, %v4902
        %v4904 = vpop.f32.mrf.mxu0
        %v4905 = vadd.f32 0.0, %v4904
        %4906 = vmatmul.bf16.gmra.mxu0 %v4806
        %v4907 = vpop.f32.mrf.mxu0
        %v4908 = vadd.f32 0.0, %v4907
        %v4909 = vpop.f32.mrf.mxu0
        %v4910 = vadd.f32 0.0, %v4909
        %4911 = vmatmul.bf16.gmra.mxu0 %v4807
        %v4912 = vpop.f32.mrf.mxu0
        %v4913 = vadd.f32 0.0, %v4912
        %v4914 = vpop.f32.mrf.mxu0
        %v4915 = vadd.f32 0.0, %v4914
        %4916 = vmatmul.bf16.gmra.mxu0 %v4808
        %v4917 = vpop.f32.mrf.mxu0
        %v4918 = vadd.f32 0.0, %v4917
        %v4919 = vpop.f32.mrf.mxu0
        %v4920 = vadd.f32 0.0, %v4919
        %4921 = vmatmul.bf16.gmra.mxu0 %v4809
        %v4922 = vpop.f32.mrf.mxu0
        %v4923 = vadd.f32 0.0, %v4922
        %v4924 = vpop.f32.mrf.mxu0
        %v4925 = vadd.f32 0.0, %v4924
        %4926 = vmatmul.bf16.gmra.mxu0 %v4810
        %v4927 = vpop.f32.mrf.mxu0
        %v4928 = vadd.f32 0.0, %v4927
        %v4929 = vpop.f32.mrf.mxu0
        %v4930 = vadd.f32 0.0, %v4929
        %4931 = vmatmul.bf16.gmra.mxu0 %v4811
        %v4932 = vpop.f32.mrf.mxu0
        %v4933 = vadd.f32 0.0, %v4932
        %v4934 = vpop.f32.mrf.mxu0
        %v4935 = vadd.f32 0.0, %v4934
        %4936 = vmatmul.bf16.gmra.mxu0 %v4812
        %v4937 = vpop.f32.mrf.mxu0
        %v4938 = vadd.f32 0.0, %v4937
        %v4939 = vpop.f32.mrf.mxu0
        %v4940 = vadd.f32 0.0, %v4939
        %4941 = vdwg.mxu0
        %v4942 = vadd.f32 %v4829, %v4903
        %v4943 = vadd.f32 %v4830, %v4905
        %v4944 = vadd.f32 %v4831, %v4908
        %v4945 = vadd.f32 %v4832, %v4910
        %v4946 = vadd.f32 %v4833, %v4913
        %v4947 = vadd.f32 %v4834, %v4915
        %v4948 = vadd.f32 %v4835, %v4918
        %v4949 = vadd.f32 %v4836, %v4920
        %v4950 = vadd.f32 %v4837, %v4923
        %v4951 = vadd.f32 %v4838, %v4925
        %v4952 = vadd.f32 %v4839, %v4928
        %v4953 = vadd.f32 %v4840, %v4930
        %v4954 = vadd.f32 %v4841, %v4933
        %v4955 = vadd.f32 %v4842, %v4935
        %v4956 = vadd.f32 %v4843, %v4938
        %v4957 = vadd.f32 %v4844, %v4940
        %4958 = vst [vmem:[#allocation5] sm:$0xff] %v4942
        %4959 = vst [vmem:[#allocation5 + $0x8] sm:$0xff] %v4943
        %4960 = vst [vmem:[#allocation5 + $0x10] sm:$0xff] %v4944
        %4961 = vst [vmem:[#allocation5 + $0x18] sm:$0xff] %v4945
        %4962 = vst [vmem:[#allocation5 + $0x20] sm:$0xff] %v4946
        %4963 = vst [vmem:[#allocation5 + $0x28] sm:$0xff] %v4947
        %4964 = vst [vmem:[#allocation5 + $0x30] sm:$0xff] %v4948
        %4965 = vst [vmem:[#allocation5 + $0x38] sm:$0xff] %v4949
        %4966 = vst [vmem:[#allocation5 + $0x40] sm:$0xff] %v4950
        %4967 = vst [vmem:[#allocation5 + $0x48] sm:$0xff] %v4951
        %4968 = vst [vmem:[#allocation5 + $0x50] sm:$0xff] %v4952
        %4969 = vst [vmem:[#allocation5 + $0x58] sm:$0xff] %v4953
        %4970 = vst [vmem:[#allocation5 + $0x60] sm:$0xff] %v4954
        %4971 = vst [vmem:[#allocation5 + $0x68] sm:$0xff] %v4955
        %4972 = vst [vmem:[#allocation5 + $0x70] sm:$0xff] %v4956
        %4973 = vst [vmem:[#allocation5 + $0x78] sm:$0xff] %v4957
        %v4974 = vld [vmem:[#allocation3 + $0x11] sm:$0xff]
        %v4975 = vld [vmem:[#allocation3 + $0x19] sm:$0xff]
        %v4976 = vld [vmem:[#allocation3 + $0x21] sm:$0xff]
        %v4977 = vld [vmem:[#allocation3 + $0x29] sm:$0xff]
        %v4978 = vld [vmem:[#allocation3 + $0x31] sm:$0xff]
        %v4979 = vld [vmem:[#allocation3 + $0x39] sm:$0xff]
        %v4980 = vld [vmem:[#allocation3 + $0x41] sm:$0xff]
        %v4981 = vld [vmem:[#allocation3 + $0x49] sm:$0xff]
        %v4982 = vld [vmem:[#allocation3 + $0x51] sm:$0xff]
        %v4983 = vld [vmem:[#allocation3 + $0x59] sm:$0xff]
        %v4984 = vld [vmem:[#allocation3 + $0x61] sm:$0xff]
        %v4985 = vld [vmem:[#allocation3 + $0x69] sm:$0xff]
        %v4986 = vld [vmem:[#allocation3 + $0x71] sm:$0xff]
        %v4987 = vld [vmem:[#allocation3 + $0x79] sm:$0xff]
        %v4988 = vld [vmem:[#allocation3 + $0x81] sm:$0xff]
        %v4989 = vld [vmem:[#allocation3 + $0x89] sm:$0xff]
        %v4990 = vpack.c.bf16 %v4975, %v4974
        %v4991 = vpack.c.bf16 %v4977, %v4976
        %v4992 = vpack.c.bf16 %v4979, %v4978
        %v4993 = vpack.c.bf16 %v4981, %v4980
        %v4994 = vpack.c.bf16 %v4983, %v4982
        %v4995 = vpack.c.bf16 %v4985, %v4984
        %v4996 = vpack.c.bf16 %v4987, %v4986
        %v4997 = vpack.c.bf16 %v4989, %v4988
        %v4998 = vld [vmem:[#allocation11 + $0x80] sm:$0xf]
        %v4999 = vld [vmem:[#allocation11 + $0x84] sm:$0xf]
        %v5000 = vld [vmem:[#allocation11 + $0x88] sm:$0xf]
        %v5001 = vld [vmem:[#allocation11 + $0x8c] sm:$0xf]
        %v5002 = vld [vmem:[#allocation11 + $0x90] sm:$0xf]
        %v5003 = vld [vmem:[#allocation11 + $0x94] sm:$0xf]
        %v5004 = vld [vmem:[#allocation11 + $0x98] sm:$0xf]
        %v5005 = vld [vmem:[#allocation11 + $0x9c] sm:$0xf]
        %v5006 = vld [vmem:[#allocation11 + $0xa0] sm:$0xf]
        %v5007 = vld [vmem:[#allocation11 + $0xa4] sm:$0xf]
        %v5008 = vld [vmem:[#allocation11 + $0xa8] sm:$0xf]
        %v5009 = vld [vmem:[#allocation11 + $0xac] sm:$0xf]
        %v5010 = vld [vmem:[#allocation11 + $0xb0] sm:$0xf]
        %v5011 = vld [vmem:[#allocation11 + $0xb4] sm:$0xf]
        %v5012 = vld [vmem:[#allocation11 + $0xb8] sm:$0xf]
        %v5013 = vld [vmem:[#allocation11 + $0xbc] sm:$0xf]
        %v5014 = vld [vmem:[#allocation5] sm:$0xff]
        %v5015 = vld [vmem:[#allocation5 + $0x8] sm:$0xff]
        %v5016 = vld [vmem:[#allocation5 + $0x10] sm:$0xff]
        %v5017 = vld [vmem:[#allocation5 + $0x18] sm:$0xff]
        %v5018 = vld [vmem:[#allocation5 + $0x20] sm:$0xff]
        %v5019 = vld [vmem:[#allocation5 + $0x28] sm:$0xff]
        %v5020 = vld [vmem:[#allocation5 + $0x30] sm:$0xff]
        %v5021 = vld [vmem:[#allocation5 + $0x38] sm:$0xff]
        %v5022 = vld [vmem:[#allocation5 + $0x40] sm:$0xff]
        %v5023 = vld [vmem:[#allocation5 + $0x48] sm:$0xff]
        %v5024 = vld [vmem:[#allocation5 + $0x50] sm:$0xff]
        %v5025 = vld [vmem:[#allocation5 + $0x58] sm:$0xff]
        %v5026 = vld [vmem:[#allocation5 + $0x60] sm:$0xff]
        %v5027 = vld [vmem:[#allocation5 + $0x68] sm:$0xff]
        %v5028 = vld [vmem:[#allocation5 + $0x70] sm:$0xff]
        %v5029 = vld [vmem:[#allocation5 + $0x78] sm:$0xff]
        %v5046 = vunpack.c.l.b16 %v4998
        %v5047 = vunpack.c.l.b16 %v4999
        %v5048 = vunpack.c.l.b16 %v5000
        %v5049 = vunpack.c.l.b16 %v5001
        %v5050 = vunpack.c.l.b16 %v5002
        %v5051 = vunpack.c.l.b16 %v5003
        %v5052 = vunpack.c.l.b16 %v5004
        %v5053 = vunpack.c.l.b16 %v5005
        %v5054 = vunpack.c.l.b16 %v5006
        %v5055 = vunpack.c.l.b16 %v5007
        %v5056 = vunpack.c.l.b16 %v5008
        %v5057 = vunpack.c.l.b16 %v5009
        %v5058 = vunpack.c.l.b16 %v5010
        %v5059 = vunpack.c.l.b16 %v5011
        %v5060 = vunpack.c.l.b16 %v5012
        %v5061 = vunpack.c.l.b16 %v5013
        %v5062 = vpack.c.b16 %v5047, %v5046
        %v5063 = vpack.c.b16 %v5049, %v5048
        %v5064 = vpack.c.b16 %v5051, %v5050
        %v5065 = vpack.c.b16 %v5053, %v5052
        %v5066 = vpack.c.b16 %v5055, %v5054
        %v5067 = vpack.c.b16 %v5057, %v5056
        %v5068 = vpack.c.b16 %v5059, %v5058
        %v5069 = vpack.c.b16 %v5061, %v5060
        %5078 = vmatpush.bf16.msra.mxu0 %v5069
        %5079 = vmatpush.bf16.msra.mxu0 %v5068
        %5080 = vmatpush.bf16.msra.mxu0 %v5067
        %5081 = vmatpush.bf16.msra.mxu0 %v5066
        %5082 = vmatpush.bf16.msra.mxu0 %v5065
        %5083 = vmatpush.bf16.msra.mxu0 %v5064
        %5084 = vmatpush.bf16.msra.mxu0 %v5063
        %5085 = vmatpush.bf16.msra.mxu0 %v5062
        %5086 = vmatmul.bf16.gmra.mxu0 %v4990
        %v5087 = vpop.f32.mrf.mxu0
        %v5088 = vadd.f32 0.0, %v5087
        %v5089 = vpop.f32.mrf.mxu0
        %v5090 = vadd.f32 0.0, %v5089
        %5091 = vmatmul.bf16.gmra.mxu0 %v4991
        %v5092 = vpop.f32.mrf.mxu0
        %v5093 = vadd.f32 0.0, %v5092
        %v5094 = vpop.f32.mrf.mxu0
        %v5095 = vadd.f32 0.0, %v5094
        %5096 = vmatmul.bf16.gmra.mxu0 %v4992
        %v5097 = vpop.f32.mrf.mxu0
        %v5098 = vadd.f32 0.0, %v5097
        %v5099 = vpop.f32.mrf.mxu0
        %v5100 = vadd.f32 0.0, %v5099
        %5101 = vmatmul.bf16.gmra.mxu0 %v4993
        %v5102 = vpop.f32.mrf.mxu0
        %v5103 = vadd.f32 0.0, %v5102
        %v5104 = vpop.f32.mrf.mxu0
        %v5105 = vadd.f32 0.0, %v5104
        %5106 = vmatmul.bf16.gmra.mxu0 %v4994
        %v5107 = vpop.f32.mrf.mxu0
        %v5108 = vadd.f32 0.0, %v5107
        %v5109 = vpop.f32.mrf.mxu0
        %v5110 = vadd.f32 0.0, %v5109
        %5111 = vmatmul.bf16.gmra.mxu0 %v4995
        %v5112 = vpop.f32.mrf.mxu0
        %v5113 = vadd.f32 0.0, %v5112
        %v5114 = vpop.f32.mrf.mxu0
        %v5115 = vadd.f32 0.0, %v5114
        %5116 = vmatmul.bf16.gmra.mxu0 %v4996
        %v5117 = vpop.f32.mrf.mxu0
        %v5118 = vadd.f32 0.0, %v5117
        %v5119 = vpop.f32.mrf.mxu0
        %v5120 = vadd.f32 0.0, %v5119
        %5121 = vmatmul.bf16.gmra.mxu0 %v4997
        %v5122 = vpop.f32.mrf.mxu0
        %v5123 = vadd.f32 0.0, %v5122
        %v5124 = vpop.f32.mrf.mxu0
        %v5125 = vadd.f32 0.0, %v5124
        %5126 = vdwg.mxu0
        %v5127 = vadd.f32 %v5014, %v5088
        %v5128 = vadd.f32 %v5015, %v5090
        %v5129 = vadd.f32 %v5016, %v5093
        %v5130 = vadd.f32 %v5017, %v5095
        %v5131 = vadd.f32 %v5018, %v5098
        %v5132 = vadd.f32 %v5019, %v5100
        %v5133 = vadd.f32 %v5020, %v5103
        %v5134 = vadd.f32 %v5021, %v5105
        %v5135 = vadd.f32 %v5022, %v5108
        %v5136 = vadd.f32 %v5023, %v5110
        %v5137 = vadd.f32 %v5024, %v5113
        %v5138 = vadd.f32 %v5025, %v5115
        %v5139 = vadd.f32 %v5026, %v5118
        %v5140 = vadd.f32 %v5027, %v5120
        %v5141 = vadd.f32 %v5028, %v5123
        %v5142 = vadd.f32 %v5029, %v5125
        %5143 = vst [vmem:[#allocation5] sm:$0xff] %v5127
        %5144 = vst [vmem:[#allocation5 + $0x8] sm:$0xff] %v5128
        %5145 = vst [vmem:[#allocation5 + $0x10] sm:$0xff] %v5129
        %5146 = vst [vmem:[#allocation5 + $0x18] sm:$0xff] %v5130
        %5147 = vst [vmem:[#allocation5 + $0x20] sm:$0xff] %v5131
        %5148 = vst [vmem:[#allocation5 + $0x28] sm:$0xff] %v5132
        %5149 = vst [vmem:[#allocation5 + $0x30] sm:$0xff] %v5133
        %5150 = vst [vmem:[#allocation5 + $0x38] sm:$0xff] %v5134
        %5151 = vst [vmem:[#allocation5 + $0x40] sm:$0xff] %v5135
        %5152 = vst [vmem:[#allocation5 + $0x48] sm:$0xff] %v5136
        %5153 = vst [vmem:[#allocation5 + $0x50] sm:$0xff] %v5137
        %5154 = vst [vmem:[#allocation5 + $0x58] sm:$0xff] %v5138
        %5155 = vst [vmem:[#allocation5 + $0x60] sm:$0xff] %v5139
        %5156 = vst [vmem:[#allocation5 + $0x68] sm:$0xff] %v5140
        %5157 = vst [vmem:[#allocation5 + $0x70] sm:$0xff] %v5141
        %5158 = vst [vmem:[#allocation5 + $0x78] sm:$0xff] %v5142
        %v5159 = vld [vmem:[#allocation3 + $0x1f] sm:$0xff]
        %v5160 = vld [vmem:[#allocation3 + $0x27] sm:$0xff]
        %v5161 = vld [vmem:[#allocation3 + $0x2f] sm:$0xff]
        %v5162 = vld [vmem:[#allocation3 + $0x37] sm:$0xff]
        %v5163 = vld [vmem:[#allocation3 + $0x3f] sm:$0xff]
        %v5164 = vld [vmem:[#allocation3 + $0x47] sm:$0xff]
        %v5165 = vld [vmem:[#allocation3 + $0x4f] sm:$0xff]
        %v5166 = vld [vmem:[#allocation3 + $0x57] sm:$0xff]
        %v5167 = vld [vmem:[#allocation3 + $0x5f] sm:$0xff]
        %v5168 = vld [vmem:[#allocation3 + $0x67] sm:$0xff]
        %v5169 = vld [vmem:[#allocation3 + $0x6f] sm:$0xff]
        %v5170 = vld [vmem:[#allocation3 + $0x77] sm:$0xff]
        %v5171 = vld [vmem:[#allocation3 + $0x7f] sm:$0xff]
        %v5172 = vld [vmem:[#allocation3 + $0x87] sm:$0xff]
        %v5173 = vld [vmem:[#allocation3 + $0x8f] sm:$0xff]
        %v5174 = vld [vmem:[#allocation3 + $0x97] sm:$0xff]
        %v5175 = vpack.c.bf16 %v5160, %v5159
        %v5176 = vpack.c.bf16 %v5162, %v5161
        %v5177 = vpack.c.bf16 %v5164, %v5163
        %v5178 = vpack.c.bf16 %v5166, %v5165
        %v5179 = vpack.c.bf16 %v5168, %v5167
        %v5180 = vpack.c.bf16 %v5170, %v5169
        %v5181 = vpack.c.bf16 %v5172, %v5171
        %v5182 = vpack.c.bf16 %v5174, %v5173
        %v5183 = vld [vmem:[#allocation11 + $0xc0] sm:$0xf]
        %v5184 = vld [vmem:[#allocation11 + $0xc4] sm:$0xf]
        %v5185 = vld [vmem:[#allocation11 + $0xc8] sm:$0xf]
        %v5186 = vld [vmem:[#allocation11 + $0xcc] sm:$0xf]
        %v5187 = vld [vmem:[#allocation11 + $0xd0] sm:$0xf]
        %v5188 = vld [vmem:[#allocation11 + $0xd4] sm:$0xf]
        %v5189 = vld [vmem:[#allocation11 + $0xd8] sm:$0xf]
        %v5190 = vld [vmem:[#allocation11 + $0xdc] sm:$0xf]
        %v5191 = vld [vmem:[#allocation11 + $0xe0] sm:$0xf]
        %v5192 = vld [vmem:[#allocation11 + $0xe4] sm:$0xf]
        %v5193 = vld [vmem:[#allocation11 + $0xe8] sm:$0xf]
        %v5194 = vld [vmem:[#allocation11 + $0xec] sm:$0xf]
        %v5195 = vld [vmem:[#allocation11 + $0xf0] sm:$0xf]
        %v5196 = vld [vmem:[#allocation11 + $0xf4] sm:$0xf]
        %v5197 = vld [vmem:[#allocation11 + $0xf8] sm:$0xf]
        %v5198 = vld [vmem:[#allocation11 + $0xfc] sm:$0xf]
        %v5199 = vld [vmem:[#allocation5] sm:$0xff]
        %v5200 = vld [vmem:[#allocation5 + $0x8] sm:$0xff]
        %v5201 = vld [vmem:[#allocation5 + $0x10] sm:$0xff]
        %v5202 = vld [vmem:[#allocation5 + $0x18] sm:$0xff]
        %v5203 = vld [vmem:[#allocation5 + $0x20] sm:$0xff]
        %v5204 = vld [vmem:[#allocation5 + $0x28] sm:$0xff]
        %v5205 = vld [vmem:[#allocation5 + $0x30] sm:$0xff]
        %v5206 = vld [vmem:[#allocation5 + $0x38] sm:$0xff]
        %v5207 = vld [vmem:[#allocation5 + $0x40] sm:$0xff]
        %v5208 = vld [vmem:[#allocation5 + $0x48] sm:$0xff]
        %v5209 = vld [vmem:[#allocation5 + $0x50] sm:$0xff]
        %v5210 = vld [vmem:[#allocation5 + $0x58] sm:$0xff]
        %v5211 = vld [vmem:[#allocation5 + $0x60] sm:$0xff]
        %v5212 = vld [vmem:[#allocation5 + $0x68] sm:$0xff]
        %v5213 = vld [vmem:[#allocation5 + $0x70] sm:$0xff]
        %v5214 = vld [vmem:[#allocation5 + $0x78] sm:$0xff]
        %v5231 = vunpack.c.l.b16 %v5183
        %v5232 = vunpack.c.l.b16 %v5184
        %v5233 = vunpack.c.l.b16 %v5185
        %v5234 = vunpack.c.l.b16 %v5186
        %v5235 = vunpack.c.l.b16 %v5187
        %v5236 = vunpack.c.l.b16 %v5188
        %v5237 = vunpack.c.l.b16 %v5189
        %v5238 = vunpack.c.l.b16 %v5190
        %v5239 = vunpack.c.l.b16 %v5191
        %v5240 = vunpack.c.l.b16 %v5192
        %v5241 = vunpack.c.l.b16 %v5193
        %v5242 = vunpack.c.l.b16 %v5194
        %v5243 = vunpack.c.l.b16 %v5195
        %v5244 = vunpack.c.l.b16 %v5196
        %v5245 = vunpack.c.l.b16 %v5197
        %v5246 = vunpack.c.l.b16 %v5198
        %v5247 = vpack.c.b16 %v5232, %v5231
        %v5248 = vpack.c.b16 %v5234, %v5233
        %v5249 = vpack.c.b16 %v5236, %v5235
        %v5250 = vpack.c.b16 %v5238, %v5237
        %v5251 = vpack.c.b16 %v5240, %v5239
        %v5252 = vpack.c.b16 %v5242, %v5241
        %v5253 = vpack.c.b16 %v5244, %v5243
        %v5254 = vpack.c.b16 %v5246, %v5245
        %5263 = vmatpush.bf16.msra.mxu0 %v5254
        %5264 = vmatpush.bf16.msra.mxu0 %v5253
        %5265 = vmatpush.bf16.msra.mxu0 %v5252
        %5266 = vmatpush.bf16.msra.mxu0 %v5251
        %5267 = vmatpush.bf16.msra.mxu0 %v5250
        %5268 = vmatpush.bf16.msra.mxu0 %v5249
        %5269 = vmatpush.bf16.msra.mxu0 %v5248
        %5270 = vmatpush.bf16.msra.mxu0 %v5247
        %5271 = vmatmul.bf16.gmra.mxu0 %v5175
        %v5272 = vpop.f32.mrf.mxu0
        %v5273 = vadd.f32 0.0, %v5272
        %v5274 = vpop.f32.mrf.mxu0
        %v5275 = vadd.f32 0.0, %v5274
        %5276 = vmatmul.bf16.gmra.mxu0 %v5176
        %v5277 = vpop.f32.mrf.mxu0
        %v5278 = vadd.f32 0.0, %v5277
        %v5279 = vpop.f32.mrf.mxu0
        %v5280 = vadd.f32 0.0, %v5279
        %5281 = vmatmul.bf16.gmra.mxu0 %v5177
        %v5282 = vpop.f32.mrf.mxu0
        %v5283 = vadd.f32 0.0, %v5282
        %v5284 = vpop.f32.mrf.mxu0
        %v5285 = vadd.f32 0.0, %v5284
        %5286 = vmatmul.bf16.gmra.mxu0 %v5178
        %v5287 = vpop.f32.mrf.mxu0
        %v5288 = vadd.f32 0.0, %v5287
        %v5289 = vpop.f32.mrf.mxu0
        %v5290 = vadd.f32 0.0, %v5289
        %5291 = vmatmul.bf16.gmra.mxu0 %v5179
        %v5292 = vpop.f32.mrf.mxu0
        %v5293 = vadd.f32 0.0, %v5292
        %v5294 = vpop.f32.mrf.mxu0
        %v5295 = vadd.f32 0.0, %v5294
        %5296 = vmatmul.bf16.gmra.mxu0 %v5180
        %v5297 = vpop.f32.mrf.mxu0
        %v5298 = vadd.f32 0.0, %v5297
        %v5299 = vpop.f32.mrf.mxu0
        %v5300 = vadd.f32 0.0, %v5299
        %5301 = vmatmul.bf16.gmra.mxu0 %v5181
        %v5302 = vpop.f32.mrf.mxu0
        %v5303 = vadd.f32 0.0, %v5302
        %v5304 = vpop.f32.mrf.mxu0
        %v5305 = vadd.f32 0.0, %v5304
        %5306 = vmatmul.bf16.gmra.mxu0 %v5182
        %v5307 = vpop.f32.mrf.mxu0
        %v5308 = vadd.f32 0.0, %v5307
        %v5309 = vpop.f32.mrf.mxu0
        %v5310 = vadd.f32 0.0, %v5309
        %5311 = vdwg.mxu0
        %v5312 = vadd.f32 %v5199, %v5273
        %v5313 = vadd.f32 %v5200, %v5275
        %v5314 = vadd.f32 %v5201, %v5278
        %v5315 = vadd.f32 %v5202, %v5280
        %v5316 = vadd.f32 %v5203, %v5283
        %v5317 = vadd.f32 %v5204, %v5285
        %v5318 = vadd.f32 %v5205, %v5288
        %v5319 = vadd.f32 %v5206, %v5290
        %v5320 = vadd.f32 %v5207, %v5293
        %v5321 = vadd.f32 %v5208, %v5295
        %v5322 = vadd.f32 %v5209, %v5298
        %v5323 = vadd.f32 %v5210, %v5300
        %v5324 = vadd.f32 %v5211, %v5303
        %v5325 = vadd.f32 %v5212, %v5305
        %v5326 = vadd.f32 %v5213, %v5308
        %v5327 = vadd.f32 %v5214, %v5310
        %5328 = vst [vmem:[#allocation5] sm:$0xff] %v5312
        %5329 = vst [vmem:[#allocation5 + $0x8] sm:$0xff] %v5313
        %5330 = vst [vmem:[#allocation5 + $0x10] sm:$0xff] %v5314
        %5331 = vst [vmem:[#allocation5 + $0x18] sm:$0xff] %v5315
        %5332 = vst [vmem:[#allocation5 + $0x20] sm:$0xff] %v5316
        %5333 = vst [vmem:[#allocation5 + $0x28] sm:$0xff] %v5317
        %5334 = vst [vmem:[#allocation5 + $0x30] sm:$0xff] %v5318
        %5335 = vst [vmem:[#allocation5 + $0x38] sm:$0xff] %v5319
        %5336 = vst [vmem:[#allocation5 + $0x40] sm:$0xff] %v5320
        %5337 = vst [vmem:[#allocation5 + $0x48] sm:$0xff] %v5321
        %5338 = vst [vmem:[#allocation5 + $0x50] sm:$0xff] %v5322
        %5339 = vst [vmem:[#allocation5 + $0x58] sm:$0xff] %v5323
        %5340 = vst [vmem:[#allocation5 + $0x60] sm:$0xff] %v5324
        %5341 = vst [vmem:[#allocation5 + $0x68] sm:$0xff] %v5325
        %5342 = vst [vmem:[#allocation5 + $0x70] sm:$0xff] %v5326
        %5343 = vst [vmem:[#allocation5 + $0x78] sm:$0xff] %v5327
        %v5344 = vld [vmem:[#allocation3 + $0x20] sm:$0xff]
        %v5345 = vld [vmem:[#allocation3 + $0x28] sm:$0xff]
        %v5346 = vld [vmem:[#allocation3 + $0x30] sm:$0xff]
        %v5347 = vld [vmem:[#allocation3 + $0x38] sm:$0xff]
        %v5348 = vld [vmem:[#allocation3 + $0x40] sm:$0xff]
        %v5349 = vld [vmem:[#allocation3 + $0x48] sm:$0xff]
        %v5350 = vld [vmem:[#allocation3 + $0x50] sm:$0xff]
        %v5351 = vld [vmem:[#allocation3 + $0x58] sm:$0xff]
        %v5352 = vld [vmem:[#allocation3 + $0x60] sm:$0xff]
        %v5353 = vld [vmem:[#allocation3 + $0x68] sm:$0xff]
        %v5354 = vld [vmem:[#allocation3 + $0x70] sm:$0xff]
        %v5355 = vld [vmem:[#allocation3 + $0x78] sm:$0xff]
        %v5356 = vld [vmem:[#allocation3 + $0x80] sm:$0xff]
        %v5357 = vld [vmem:[#allocation3 + $0x88] sm:$0xff]
        %v5358 = vld [vmem:[#allocation3 + $0x90] sm:$0xff]
        %v5359 = vld [vmem:[#allocation3 + $0x98] sm:$0xff]
        %v5360 = vpack.c.bf16 %v5345, %v5344
        %v5361 = vpack.c.bf16 %v5347, %v5346
        %v5362 = vpack.c.bf16 %v5349, %v5348
        %v5363 = vpack.c.bf16 %v5351, %v5350
        %v5364 = vpack.c.bf16 %v5353, %v5352
        %v5365 = vpack.c.bf16 %v5355, %v5354
        %v5366 = vpack.c.bf16 %v5357, %v5356
        %v5367 = vpack.c.bf16 %v5359, %v5358
        %v5368 = vld [vmem:[#allocation11 + $0x100] sm:$0xf]
        %v5369 = vld [vmem:[#allocation11 + $0x104] sm:$0xf]
        %v5370 = vld [vmem:[#allocation11 + $0x108] sm:$0xf]
        %v5371 = vld [vmem:[#allocation11 + $0x10c] sm:$0xf]
        %v5372 = vld [vmem:[#allocation11 + $0x110] sm:$0xf]
        %v5373 = vld [vmem:[#allocation11 + $0x114] sm:$0xf]
        %v5374 = vld [vmem:[#allocation11 + $0x118] sm:$0xf]
        %v5375 = vld [vmem:[#allocation11 + $0x11c] sm:$0xf]
        %v5376 = vld [vmem:[#allocation11 + $0x120] sm:$0xf]
        %v5377 = vld [vmem:[#allocation11 + $0x124] sm:$0xf]
        %v5378 = vld [vmem:[#allocation11 + $0x128] sm:$0xf]
        %v5379 = vld [vmem:[#allocation11 + $0x12c] sm:$0xf]
        %v5380 = vld [vmem:[#allocation11 + $0x130] sm:$0xf]
        %v5381 = vld [vmem:[#allocation11 + $0x134] sm:$0xf]
        %v5382 = vld [vmem:[#allocation11 + $0x138] sm:$0xf]
        %v5383 = vld [vmem:[#allocation11 + $0x13c] sm:$0xf]
        %v5384 = vld [vmem:[#allocation5] sm:$0xff]
        %v5385 = vld [vmem:[#allocation5 + $0x8] sm:$0xff]
        %v5386 = vld [vmem:[#allocation5 + $0x10] sm:$0xff]
        %v5387 = vld [vmem:[#allocation5 + $0x18] sm:$0xff]
        %v5388 = vld [vmem:[#allocation5 + $0x20] sm:$0xff]
        %v5389 = vld [vmem:[#allocation5 + $0x28] sm:$0xff]
        %v5390 = vld [vmem:[#allocation5 + $0x30] sm:$0xff]
        %v5391 = vld [vmem:[#allocation5 + $0x38] sm:$0xff]
        %v5392 = vld [vmem:[#allocation5 + $0x40] sm:$0xff]
        %v5393 = vld [vmem:[#allocation5 + $0x48] sm:$0xff]
        %v5394 = vld [vmem:[#allocation5 + $0x50] sm:$0xff]
        %v5395 = vld [vmem:[#allocation5 + $0x58] sm:$0xff]
        %v5396 = vld [vmem:[#allocation5 + $0x60] sm:$0xff]
        %v5397 = vld [vmem:[#allocation5 + $0x68] sm:$0xff]
        %v5398 = vld [vmem:[#allocation5 + $0x70] sm:$0xff]
        %v5399 = vld [vmem:[#allocation5 + $0x78] sm:$0xff]
        %v5416 = vunpack.c.l.b16 %v5368
        %v5417 = vunpack.c.l.b16 %v5369
        %v5418 = vunpack.c.l.b16 %v5370
        %v5419 = vunpack.c.l.b16 %v5371
        %v5420 = vunpack.c.l.b16 %v5372
        %v5421 = vunpack.c.l.b16 %v5373
        %v5422 = vunpack.c.l.b16 %v5374
        %v5423 = vunpack.c.l.b16 %v5375
        %v5424 = vunpack.c.l.b16 %v5376
        %v5425 = vunpack.c.l.b16 %v5377
        %v5426 = vunpack.c.l.b16 %v5378
        %v5427 = vunpack.c.l.b16 %v5379
        %v5428 = vunpack.c.l.b16 %v5380
        %v5429 = vunpack.c.l.b16 %v5381
        %v5430 = vunpack.c.l.b16 %v5382
        %v5431 = vunpack.c.l.b16 %v5383
        %v5432 = vpack.c.b16 %v5417, %v5416
        %v5433 = vpack.c.b16 %v5419, %v5418
        %v5434 = vpack.c.b16 %v5421, %v5420
        %v5435 = vpack.c.b16 %v5423, %v5422
        %v5436 = vpack.c.b16 %v5425, %v5424
        %v5437 = vpack.c.b16 %v5427, %v5426
        %v5438 = vpack.c.b16 %v5429, %v5428
        %v5439 = vpack.c.b16 %v5431, %v5430
        %5448 = vmatpush.bf16.msra.mxu0 %v5439
        %5449 = vmatpush.bf16.msra.mxu0 %v5438
        %5450 = vmatpush.bf16.msra.mxu0 %v5437
        %5451 = vmatpush.bf16.msra.mxu0 %v5436
        %5452 = vmatpush.bf16.msra.mxu0 %v5435
        %5453 = vmatpush.bf16.msra.mxu0 %v5434
        %5454 = vmatpush.bf16.msra.mxu0 %v5433
        %5455 = vmatpush.bf16.msra.mxu0 %v5432
        %5456 = vmatmul.bf16.gmra.mxu0 %v5360
        %v5457 = vpop.f32.mrf.mxu0
        %v5458 = vadd.f32 0.0, %v5457
        %v5459 = vpop.f32.mrf.mxu0
        %v5460 = vadd.f32 0.0, %v5459
        %5461 = vmatmul.bf16.gmra.mxu0 %v5361
        %v5462 = vpop.f32.mrf.mxu0
        %v5463 = vadd.f32 0.0, %v5462
        %v5464 = vpop.f32.mrf.mxu0
        %v5465 = vadd.f32 0.0, %v5464
        %5466 = vmatmul.bf16.gmra.mxu0 %v5362
        %v5467 = vpop.f32.mrf.mxu0
        %v5468 = vadd.f32 0.0, %v5467
        %v5469 = vpop.f32.mrf.mxu0
        %v5470 = vadd.f32 0.0, %v5469
        %5471 = vmatmul.bf16.gmra.mxu0 %v5363
        %v5472 = vpop.f32.mrf.mxu0
        %v5473 = vadd.f32 0.0, %v5472
        %v5474 = vpop.f32.mrf.mxu0
        %v5475 = vadd.f32 0.0, %v5474
        %5476 = vmatmul.bf16.gmra.mxu0 %v5364
        %v5477 = vpop.f32.mrf.mxu0
        %v5478 = vadd.f32 0.0, %v5477
        %v5479 = vpop.f32.mrf.mxu0
        %v5480 = vadd.f32 0.0, %v5479
        %5481 = vmatmul.bf16.gmra.mxu0 %v5365
        %v5482 = vpop.f32.mrf.mxu0
        %v5483 = vadd.f32 0.0, %v5482
        %v5484 = vpop.f32.mrf.mxu0
        %v5485 = vadd.f32 0.0, %v5484
        %5486 = vmatmul.bf16.gmra.mxu0 %v5366
        %v5487 = vpop.f32.mrf.mxu0
        %v5488 = vadd.f32 0.0, %v5487
        %v5489 = vpop.f32.mrf.mxu0
        %v5490 = vadd.f32 0.0, %v5489
        %5491 = vmatmul.bf16.gmra.mxu0 %v5367
        %v5492 = vpop.f32.mrf.mxu0
        %v5493 = vadd.f32 0.0, %v5492
        %v5494 = vpop.f32.mrf.mxu0
        %v5495 = vadd.f32 0.0, %v5494
        %5496 = vdwg.mxu0
        %v5497 = vadd.f32 %v5384, %v5458
        %v5498 = vadd.f32 %v5385, %v5460
        %v5499 = vadd.f32 %v5386, %v5463
        %v5500 = vadd.f32 %v5387, %v5465
        %v5501 = vadd.f32 %v5388, %v5468
        %v5502 = vadd.f32 %v5389, %v5470
        %v5503 = vadd.f32 %v5390, %v5473
        %v5504 = vadd.f32 %v5391, %v5475
        %v5505 = vadd.f32 %v5392, %v5478
        %v5506 = vadd.f32 %v5393, %v5480
        %v5507 = vadd.f32 %v5394, %v5483
        %v5508 = vadd.f32 %v5395, %v5485
        %v5509 = vadd.f32 %v5396, %v5488
        %v5510 = vadd.f32 %v5397, %v5490
        %v5511 = vadd.f32 %v5398, %v5493
        %v5512 = vadd.f32 %v5399, %v5495
        %5513 = vst [vmem:[#allocation5] sm:$0xff] %v5497
        %5514 = vst [vmem:[#allocation5 + $0x8] sm:$0xff] %v5498
        %5515 = vst [vmem:[#allocation5 + $0x10] sm:$0xff] %v5499
        %5516 = vst [vmem:[#allocation5 + $0x18] sm:$0xff] %v5500
        %5517 = vst [vmem:[#allocation5 + $0x20] sm:$0xff] %v5501
        %5518 = vst [vmem:[#allocation5 + $0x28] sm:$0xff] %v5502
        %5519 = vst [vmem:[#allocation5 + $0x30] sm:$0xff] %v5503
        %5520 = vst [vmem:[#allocation5 + $0x38] sm:$0xff] %v5504
        %5521 = vst [vmem:[#allocation5 + $0x40] sm:$0xff] %v5505
        %5522 = vst [vmem:[#allocation5 + $0x48] sm:$0xff] %v5506
        %5523 = vst [vmem:[#allocation5 + $0x50] sm:$0xff] %v5507
        %5524 = vst [vmem:[#allocation5 + $0x58] sm:$0xff] %v5508
        %5525 = vst [vmem:[#allocation5 + $0x60] sm:$0xff] %v5509
        %5526 = vst [vmem:[#allocation5 + $0x68] sm:$0xff] %v5510
        %5527 = vst [vmem:[#allocation5 + $0x70] sm:$0xff] %v5511
        %5528 = vst [vmem:[#allocation5 + $0x78] sm:$0xff] %v5512
        %v5529 = vld [vmem:[#allocation3 + $0x21] sm:$0xff]
        %v5530 = vld [vmem:[#allocation3 + $0x29] sm:$0xff]
        %v5531 = vld [vmem:[#allocation3 + $0x31] sm:$0xff]
        %v5532 = vld [vmem:[#allocation3 + $0x39] sm:$0xff]
        %v5533 = vld [vmem:[#allocation3 + $0x41] sm:$0xff]
        %v5534 = vld [vmem:[#allocation3 + $0x49] sm:$0xff]
        %v5535 = vld [vmem:[#allocation3 + $0x51] sm:$0xff]
        %v5536 = vld [vmem:[#allocation3 + $0x59] sm:$0xff]
        %v5537 = vld [vmem:[#allocation3 + $0x61] sm:$0xff]
        %v5538 = vld [vmem:[#allocation3 + $0x69] sm:$0xff]
        %v5539 = vld [vmem:[#allocation3 + $0x71] sm:$0xff]
        %v5540 = vld [vmem:[#allocation3 + $0x79] sm:$0xff]
        %v5541 = vld [vmem:[#allocation3 + $0x81] sm:$0xff]
        %v5542 = vld [vmem:[#allocation3 + $0x89] sm:$0xff]
        %v5543 = vld [vmem:[#allocation3 + $0x91] sm:$0xff]
        %v5544 = vld [vmem:[#allocation3 + $0x99] sm:$0xff]
        %v5545 = vpack.c.bf16 %v5530, %v5529
        %v5546 = vpack.c.bf16 %v5532, %v5531
        %v5547 = vpack.c.bf16 %v5534, %v5533
        %v5548 = vpack.c.bf16 %v5536, %v5535
        %v5549 = vpack.c.bf16 %v5538, %v5537
        %v5550 = vpack.c.bf16 %v5540, %v5539
        %v5551 = vpack.c.bf16 %v5542, %v5541
        %v5552 = vpack.c.bf16 %v5544, %v5543
        %v5553 = vld [vmem:[#allocation11 + $0x140] sm:$0xf]
        %v5554 = vld [vmem:[#allocation11 + $0x144] sm:$0xf]
        %v5555 = vld [vmem:[#allocation11 + $0x148] sm:$0xf]
        %v5556 = vld [vmem:[#allocation11 + $0x14c] sm:$0xf]
        %v5557 = vld [vmem:[#allocation11 + $0x150] sm:$0xf]
        %v5558 = vld [vmem:[#allocation11 + $0x154] sm:$0xf]
        %v5559 = vld [vmem:[#allocation11 + $0x158] sm:$0xf]
        %v5560 = vld [vmem:[#allocation11 + $0x15c] sm:$0xf]
        %v5561 = vld [vmem:[#allocation11 + $0x160] sm:$0xf]
        %v5562 = vld [vmem:[#allocation11 + $0x164] sm:$0xf]
        %v5563 = vld [vmem:[#allocation11 + $0x168] sm:$0xf]
        %v5564 = vld [vmem:[#allocation11 + $0x16c] sm:$0xf]
        %v5565 = vld [vmem:[#allocation11 + $0x170] sm:$0xf]
        %v5566 = vld [vmem:[#allocation11 + $0x174] sm:$0xf]
        %v5567 = vld [vmem:[#allocation11 + $0x178] sm:$0xf]
        %v5568 = vld [vmem:[#allocation11 + $0x17c] sm:$0xf]
        %v5569 = vld [vmem:[#allocation5] sm:$0xff]
        %v5570 = vld [vmem:[#allocation5 + $0x8] sm:$0xff]
        %v5571 = vld [vmem:[#allocation5 + $0x10] sm:$0xff]
        %v5572 = vld [vmem:[#allocation5 + $0x18] sm:$0xff]
        %v5573 = vld [vmem:[#allocation5 + $0x20] sm:$0xff]
        %v5574 = vld [vmem:[#allocation5 + $0x28] sm:$0xff]
        %v5575 = vld [vmem:[#allocation5 + $0x30] sm:$0xff]
        %v5576 = vld [vmem:[#allocation5 + $0x38] sm:$0xff]
        %v5577 = vld [vmem:[#allocation5 + $0x40] sm:$0xff]
        %v5578 = vld [vmem:[#allocation5 + $0x48] sm:$0xff]
        %v5579 = vld [vmem:[#allocation5 + $0x50] sm:$0xff]
        %v5580 = vld [vmem:[#allocation5 + $0x58] sm:$0xff]
        %v5581 = vld [vmem:[#allocation5 + $0x60] sm:$0xff]
        %v5582 = vld [vmem:[#allocation5 + $0x68] sm:$0xff]
        %v5583 = vld [vmem:[#allocation5 + $0x70] sm:$0xff]
        %v5584 = vld [vmem:[#allocation5 + $0x78] sm:$0xff]
        %v5601 = vunpack.c.l.b16 %v5553
        %v5602 = vunpack.c.l.b16 %v5554
        %v5603 = vunpack.c.l.b16 %v5555
        %v5604 = vunpack.c.l.b16 %v5556
        %v5605 = vunpack.c.l.b16 %v5557
        %v5606 = vunpack.c.l.b16 %v5558
        %v5607 = vunpack.c.l.b16 %v5559
        %v5608 = vunpack.c.l.b16 %v5560
        %v5609 = vunpack.c.l.b16 %v5561
        %v5610 = vunpack.c.l.b16 %v5562
        %v5611 = vunpack.c.l.b16 %v5563
        %v5612 = vunpack.c.l.b16 %v5564
        %v5613 = vunpack.c.l.b16 %v5565
        %v5614 = vunpack.c.l.b16 %v5566
        %v5615 = vunpack.c.l.b16 %v5567
        %v5616 = vunpack.c.l.b16 %v5568
        %v5617 = vpack.c.b16 %v5602, %v5601
        %v5618 = vpack.c.b16 %v5604, %v5603
        %v5619 = vpack.c.b16 %v5606, %v5605
        %v5620 = vpack.c.b16 %v5608, %v5607
        %v5621 = vpack.c.b16 %v5610, %v5609
        %v5622 = vpack.c.b16 %v5612, %v5611
        %v5623 = vpack.c.b16 %v5614, %v5613
        %v5624 = vpack.c.b16 %v5616, %v5615
        %5633 = vmatpush.bf16.msra.mxu0 %v5624
        %5634 = vmatpush.bf16.msra.mxu0 %v5623
        %5635 = vmatpush.bf16.msra.mxu0 %v5622
        %5636 = vmatpush.bf16.msra.mxu0 %v5621
        %5637 = vmatpush.bf16.msra.mxu0 %v5620
        %5638 = vmatpush.bf16.msra.mxu0 %v5619
        %5639 = vmatpush.bf16.msra.mxu0 %v5618
        %5640 = vmatpush.bf16.msra.mxu0 %v5617
        %5641 = vmatmul.bf16.gmra.mxu0 %v5545
        %v5642 = vpop.f32.mrf.mxu0
        %v5643 = vadd.f32 0.0, %v5642
        %v5644 = vpop.f32.mrf.mxu0
        %v5645 = vadd.f32 0.0, %v5644
        %5646 = vmatmul.bf16.gmra.mxu0 %v5546
        %v5647 = vpop.f32.mrf.mxu0
        %v5648 = vadd.f32 0.0, %v5647
        %v5649 = vpop.f32.mrf.mxu0
        %v5650 = vadd.f32 0.0, %v5649
        %5651 = vmatmul.bf16.gmra.mxu0 %v5547
        %v5652 = vpop.f32.mrf.mxu0
        %v5653 = vadd.f32 0.0, %v5652
        %v5654 = vpop.f32.mrf.mxu0
        %v5655 = vadd.f32 0.0, %v5654
        %5656 = vmatmul.bf16.gmra.mxu0 %v5548
        %v5657 = vpop.f32.mrf.mxu0
        %v5658 = vadd.f32 0.0, %v5657
        %v5659 = vpop.f32.mrf.mxu0
        %v5660 = vadd.f32 0.0, %v5659
        %5661 = vmatmul.bf16.gmra.mxu0 %v5549
        %v5662 = vpop.f32.mrf.mxu0
        %v5663 = vadd.f32 0.0, %v5662
        %v5664 = vpop.f32.mrf.mxu0
        %v5665 = vadd.f32 0.0, %v5664
        %5666 = vmatmul.bf16.gmra.mxu0 %v5550
        %v5667 = vpop.f32.mrf.mxu0
        %v5668 = vadd.f32 0.0, %v5667
        %v5669 = vpop.f32.mrf.mxu0
        %v5670 = vadd.f32 0.0, %v5669
        %5671 = vmatmul.bf16.gmra.mxu0 %v5551
        %v5672 = vpop.f32.mrf.mxu0
        %v5673 = vadd.f32 0.0, %v5672
        %v5674 = vpop.f32.mrf.mxu0
        %v5675 = vadd.f32 0.0, %v5674
        %5676 = vmatmul.bf16.gmra.mxu0 %v5552
        %v5677 = vpop.f32.mrf.mxu0
        %v5678 = vadd.f32 0.0, %v5677
        %v5679 = vpop.f32.mrf.mxu0
        %v5680 = vadd.f32 0.0, %v5679
        %5681 = vdwg.mxu0
        %v5682 = vadd.f32 %v5569, %v5643
        %v5683 = vadd.f32 %v5570, %v5645
        %v5684 = vadd.f32 %v5571, %v5648
        %v5685 = vadd.f32 %v5572, %v5650
        %v5686 = vadd.f32 %v5573, %v5653
        %v5687 = vadd.f32 %v5574, %v5655
        %v5688 = vadd.f32 %v5575, %v5658
        %v5689 = vadd.f32 %v5576, %v5660
        %v5690 = vadd.f32 %v5577, %v5663
        %v5691 = vadd.f32 %v5578, %v5665
        %v5692 = vadd.f32 %v5579, %v5668
        %v5693 = vadd.f32 %v5580, %v5670
        %v5694 = vadd.f32 %v5581, %v5673
        %v5695 = vadd.f32 %v5582, %v5675
        %v5696 = vadd.f32 %v5583, %v5678
        %v5697 = vadd.f32 %v5584, %v5680
        %5698 = vst [vmem:[#allocation5] sm:$0xff] %v5682
        %5699 = vst [vmem:[#allocation5 + $0x8] sm:$0xff] %v5683
        %5700 = vst [vmem:[#allocation5 + $0x10] sm:$0xff] %v5684
        %5701 = vst [vmem:[#allocation5 + $0x18] sm:$0xff] %v5685
        %5702 = vst [vmem:[#allocation5 + $0x20] sm:$0xff] %v5686
        %5703 = vst [vmem:[#allocation5 + $0x28] sm:$0xff] %v5687
        %5704 = vst [vmem:[#allocation5 + $0x30] sm:$0xff] %v5688
        %5705 = vst [vmem:[#allocation5 + $0x38] sm:$0xff] %v5689
        %5706 = vst [vmem:[#allocation5 + $0x40] sm:$0xff] %v5690
        %5707 = vst [vmem:[#allocation5 + $0x48] sm:$0xff] %v5691
        %5708 = vst [vmem:[#allocation5 + $0x50] sm:$0xff] %v5692
        %5709 = vst [vmem:[#allocation5 + $0x58] sm:$0xff] %v5693
        %5710 = vst [vmem:[#allocation5 + $0x60] sm:$0xff] %v5694
        %5711 = vst [vmem:[#allocation5 + $0x68] sm:$0xff] %v5695
        %5712 = vst [vmem:[#allocation5 + $0x70] sm:$0xff] %v5696
        %5713 = vst [vmem:[#allocation5 + $0x78] sm:$0xff] %v5697
        %v5714 = vld [vmem:[#allocation3 + $0x2f] sm:$0xff]
        %v5715 = vld [vmem:[#allocation3 + $0x37] sm:$0xff]
        %v5716 = vld [vmem:[#allocation3 + $0x3f] sm:$0xff]
        %v5717 = vld [vmem:[#allocation3 + $0x47] sm:$0xff]
        %v5718 = vld [vmem:[#allocation3 + $0x4f] sm:$0xff]
        %v5719 = vld [vmem:[#allocation3 + $0x57] sm:$0xff]
        %v5720 = vld [vmem:[#allocation3 + $0x5f] sm:$0xff]
        %v5721 = vld [vmem:[#allocation3 + $0x67] sm:$0xff]
        %v5722 = vld [vmem:[#allocation3 + $0x6f] sm:$0xff]
        %v5723 = vld [vmem:[#allocation3 + $0x77] sm:$0xff]
        %v5724 = vld [vmem:[#allocation3 + $0x7f] sm:$0xff]
        %v5725 = vld [vmem:[#allocation3 + $0x87] sm:$0xff]
        %v5726 = vld [vmem:[#allocation3 + $0x8f] sm:$0xff]
        %v5727 = vld [vmem:[#allocation3 + $0x97] sm:$0xff]
        %v5728 = vld [vmem:[#allocation3 + $0x9f] sm:$0xff]
        %v5729 = vld [vmem:[#allocation3 + $0xa7] sm:$0xff]
        %v5730 = vpack.c.bf16 %v5715, %v5714
        %v5731 = vpack.c.bf16 %v5717, %v5716
        %v5732 = vpack.c.bf16 %v5719, %v5718
        %v5733 = vpack.c.bf16 %v5721, %v5720
        %v5734 = vpack.c.bf16 %v5723, %v5722
        %v5735 = vpack.c.bf16 %v5725, %v5724
        %v5736 = vpack.c.bf16 %v5727, %v5726
        %v5737 = vpack.c.bf16 %v5729, %v5728
        %v5738 = vld [vmem:[#allocation11 + $0x180] sm:$0xf]
        %v5739 = vld [vmem:[#allocation11 + $0x184] sm:$0xf]
        %v5740 = vld [vmem:[#allocation11 + $0x188] sm:$0xf]
        %v5741 = vld [vmem:[#allocation11 + $0x18c] sm:$0xf]
        %v5742 = vld [vmem:[#allocation11 + $0x190] sm:$0xf]
        %v5743 = vld [vmem:[#allocation11 + $0x194] sm:$0xf]
        %v5744 = vld [vmem:[#allocation11 + $0x198] sm:$0xf]
        %v5745 = vld [vmem:[#allocation11 + $0x19c] sm:$0xf]
        %v5746 = vld [vmem:[#allocation11 + $0x1a0] sm:$0xf]
        %v5747 = vld [vmem:[#allocation11 + $0x1a4] sm:$0xf]
        %v5748 = vld [vmem:[#allocation11 + $0x1a8] sm:$0xf]
        %v5749 = vld [vmem:[#allocation11 + $0x1ac] sm:$0xf]
        %v5750 = vld [vmem:[#allocation11 + $0x1b0] sm:$0xf]
        %v5751 = vld [vmem:[#allocation11 + $0x1b4] sm:$0xf]
        %v5752 = vld [vmem:[#allocation11 + $0x1b8] sm:$0xf]
        %v5753 = vld [vmem:[#allocation11 + $0x1bc] sm:$0xf]
        %v5754 = vld [vmem:[#allocation5] sm:$0xff]
        %v5755 = vld [vmem:[#allocation5 + $0x8] sm:$0xff]
        %v5756 = vld [vmem:[#allocation5 + $0x10] sm:$0xff]
        %v5757 = vld [vmem:[#allocation5 + $0x18] sm:$0xff]
        %v5758 = vld [vmem:[#allocation5 + $0x20] sm:$0xff]
        %v5759 = vld [vmem:[#allocation5 + $0x28] sm:$0xff]
        %v5760 = vld [vmem:[#allocation5 + $0x30] sm:$0xff]
        %v5761 = vld [vmem:[#allocation5 + $0x38] sm:$0xff]
        %v5762 = vld [vmem:[#allocation5 + $0x40] sm:$0xff]
        %v5763 = vld [vmem:[#allocation5 + $0x48] sm:$0xff]
        %v5764 = vld [vmem:[#allocation5 + $0x50] sm:$0xff]
        %v5765 = vld [vmem:[#allocation5 + $0x58] sm:$0xff]
        %v5766 = vld [vmem:[#allocation5 + $0x60] sm:$0xff]
        %v5767 = vld [vmem:[#allocation5 + $0x68] sm:$0xff]
        %v5768 = vld [vmem:[#allocation5 + $0x70] sm:$0xff]
        %v5769 = vld [vmem:[#allocation5 + $0x78] sm:$0xff]
        %v5786 = vunpack.c.l.b16 %v5738
        %v5787 = vunpack.c.l.b16 %v5739
        %v5788 = vunpack.c.l.b16 %v5740
        %v5789 = vunpack.c.l.b16 %v5741
        %v5790 = vunpack.c.l.b16 %v5742
        %v5791 = vunpack.c.l.b16 %v5743
        %v5792 = vunpack.c.l.b16 %v5744
        %v5793 = vunpack.c.l.b16 %v5745
        %v5794 = vunpack.c.l.b16 %v5746
        %v5795 = vunpack.c.l.b16 %v5747
        %v5796 = vunpack.c.l.b16 %v5748
        %v5797 = vunpack.c.l.b16 %v5749
        %v5798 = vunpack.c.l.b16 %v5750
        %v5799 = vunpack.c.l.b16 %v5751
        %v5800 = vunpack.c.l.b16 %v5752
        %v5801 = vunpack.c.l.b16 %v5753
        %v5802 = vpack.c.b16 %v5787, %v5786
        %v5803 = vpack.c.b16 %v5789, %v5788
        %v5804 = vpack.c.b16 %v5791, %v5790
        %v5805 = vpack.c.b16 %v5793, %v5792
        %v5806 = vpack.c.b16 %v5795, %v5794
        %v5807 = vpack.c.b16 %v5797, %v5796
        %v5808 = vpack.c.b16 %v5799, %v5798
        %v5809 = vpack.c.b16 %v5801, %v5800
        %5818 = vmatpush.bf16.msra.mxu0 %v5809
        %5819 = vmatpush.bf16.msra.mxu0 %v5808
        %5820 = vmatpush.bf16.msra.mxu0 %v5807
        %5821 = vmatpush.bf16.msra.mxu0 %v5806
        %5822 = vmatpush.bf16.msra.mxu0 %v5805
        %5823 = vmatpush.bf16.msra.mxu0 %v5804
        %5824 = vmatpush.bf16.msra.mxu0 %v5803
        %5825 = vmatpush.bf16.msra.mxu0 %v5802
        %5826 = vmatmul.bf16.gmra.mxu0 %v5730
        %v5827 = vpop.f32.mrf.mxu0
        %v5828 = vadd.f32 0.0, %v5827
        %v5829 = vpop.f32.mrf.mxu0
        %v5830 = vadd.f32 0.0, %v5829
        %5831 = vmatmul.bf16.gmra.mxu0 %v5731
        %v5832 = vpop.f32.mrf.mxu0
        %v5833 = vadd.f32 0.0, %v5832
        %v5834 = vpop.f32.mrf.mxu0
        %v5835 = vadd.f32 0.0, %v5834
        %5836 = vmatmul.bf16.gmra.mxu0 %v5732
        %v5837 = vpop.f32.mrf.mxu0
        %v5838 = vadd.f32 0.0, %v5837
        %v5839 = vpop.f32.mrf.mxu0
        %v5840 = vadd.f32 0.0, %v5839
        %5841 = vmatmul.bf16.gmra.mxu0 %v5733
        %v5842 = vpop.f32.mrf.mxu0
        %v5843 = vadd.f32 0.0, %v5842
        %v5844 = vpop.f32.mrf.mxu0
        %v5845 = vadd.f32 0.0, %v5844
        %5846 = vmatmul.bf16.gmra.mxu0 %v5734
        %v5847 = vpop.f32.mrf.mxu0
        %v5848 = vadd.f32 0.0, %v5847
        %v5849 = vpop.f32.mrf.mxu0
        %v5850 = vadd.f32 0.0, %v5849
        %5851 = vmatmul.bf16.gmra.mxu0 %v5735
        %v5852 = vpop.f32.mrf.mxu0
        %v5853 = vadd.f32 0.0, %v5852
        %v5854 = vpop.f32.mrf.mxu0
        %v5855 = vadd.f32 0.0, %v5854
        %5856 = vmatmul.bf16.gmra.mxu0 %v5736
        %v5857 = vpop.f32.mrf.mxu0
        %v5858 = vadd.f32 0.0, %v5857
        %v5859 = vpop.f32.mrf.mxu0
        %v5860 = vadd.f32 0.0, %v5859
        %5861 = vmatmul.bf16.gmra.mxu0 %v5737
        %v5862 = vpop.f32.mrf.mxu0
        %v5863 = vadd.f32 0.0, %v5862
        %v5864 = vpop.f32.mrf.mxu0
        %v5865 = vadd.f32 0.0, %v5864
        %5866 = vdwg.mxu0
        %v5867 = vadd.f32 %v5754, %v5828
        %v5868 = vadd.f32 %v5755, %v5830
        %v5869 = vadd.f32 %v5756, %v5833
        %v5870 = vadd.f32 %v5757, %v5835
        %v5871 = vadd.f32 %v5758, %v5838
        %v5872 = vadd.f32 %v5759, %v5840
        %v5873 = vadd.f32 %v5760, %v5843
        %v5874 = vadd.f32 %v5761, %v5845
        %v5875 = vadd.f32 %v5762, %v5848
        %v5876 = vadd.f32 %v5763, %v5850
        %v5877 = vadd.f32 %v5764, %v5853
        %v5878 = vadd.f32 %v5765, %v5855
        %v5879 = vadd.f32 %v5766, %v5858
        %v5880 = vadd.f32 %v5767, %v5860
        %v5881 = vadd.f32 %v5768, %v5863
        %v5882 = vadd.f32 %v5769, %v5865
        %5883 = vst [vmem:[#allocation5] sm:$0xff] %v5867
        %5884 = vst [vmem:[#allocation5 + $0x8] sm:$0xff] %v5868
        %5885 = vst [vmem:[#allocation5 + $0x10] sm:$0xff] %v5869
        %5886 = vst [vmem:[#allocation5 + $0x18] sm:$0xff] %v5870
        %5887 = vst [vmem:[#allocation5 + $0x20] sm:$0xff] %v5871
        %5888 = vst [vmem:[#allocation5 + $0x28] sm:$0xff] %v5872
        %5889 = vst [vmem:[#allocation5 + $0x30] sm:$0xff] %v5873
        %5890 = vst [vmem:[#allocation5 + $0x38] sm:$0xff] %v5874
        %5891 = vst [vmem:[#allocation5 + $0x40] sm:$0xff] %v5875
        %5892 = vst [vmem:[#allocation5 + $0x48] sm:$0xff] %v5876
        %5893 = vst [vmem:[#allocation5 + $0x50] sm:$0xff] %v5877
        %5894 = vst [vmem:[#allocation5 + $0x58] sm:$0xff] %v5878
        %5895 = vst [vmem:[#allocation5 + $0x60] sm:$0xff] %v5879
        %5896 = vst [vmem:[#allocation5 + $0x68] sm:$0xff] %v5880
        %5897 = vst [vmem:[#allocation5 + $0x70] sm:$0xff] %v5881
        %5898 = vst [vmem:[#allocation5 + $0x78] sm:$0xff] %v5882
        %v5899 = vld [vmem:[#allocation3 + $0x30] sm:$0xff]
        %v5900 = vld [vmem:[#allocation3 + $0x38] sm:$0xff]
        %v5901 = vld [vmem:[#allocation3 + $0x40] sm:$0xff]
        %v5902 = vld [vmem:[#allocation3 + $0x48] sm:$0xff]
        %v5903 = vld [vmem:[#allocation3 + $0x50] sm:$0xff]
        %v5904 = vld [vmem:[#allocation3 + $0x58] sm:$0xff]
        %v5905 = vld [vmem:[#allocation3 + $0x60] sm:$0xff]
        %v5906 = vld [vmem:[#allocation3 + $0x68] sm:$0xff]
        %v5907 = vld [vmem:[#allocation3 + $0x70] sm:$0xff]
        %v5908 = vld [vmem:[#allocation3 + $0x78] sm:$0xff]
        %v5909 = vld [vmem:[#allocation3 + $0x80] sm:$0xff]
        %v5910 = vld [vmem:[#allocation3 + $0x88] sm:$0xff]
        %v5911 = vld [vmem:[#allocation3 + $0x90] sm:$0xff]
        %v5912 = vld [vmem:[#allocation3 + $0x98] sm:$0xff]
        %v5913 = vld [vmem:[#allocation3 + $0xa0] sm:$0xff]
        %v5914 = vld [vmem:[#allocation3 + $0xa8] sm:$0xff]
        %v5915 = vpack.c.bf16 %v5900, %v5899
        %v5916 = vpack.c.bf16 %v5902, %v5901
        %v5917 = vpack.c.bf16 %v5904, %v5903
        %v5918 = vpack.c.bf16 %v5906, %v5905
        %v5919 = vpack.c.bf16 %v5908, %v5907
        %v5920 = vpack.c.bf16 %v5910, %v5909
        %v5921 = vpack.c.bf16 %v5912, %v5911
        %v5922 = vpack.c.bf16 %v5914, %v5913
        %v5923 = vld [vmem:[#allocation11 + $0x1c0] sm:$0xf]
        %v5924 = vld [vmem:[#allocation11 + $0x1c4] sm:$0xf]
        %v5925 = vld [vmem:[#allocation11 + $0x1c8] sm:$0xf]
        %v5926 = vld [vmem:[#allocation11 + $0x1cc] sm:$0xf]
        %v5927 = vld [vmem:[#allocation11 + $0x1d0] sm:$0xf]
        %v5928 = vld [vmem:[#allocation11 + $0x1d4] sm:$0xf]
        %v5929 = vld [vmem:[#allocation11 + $0x1d8] sm:$0xf]
        %v5930 = vld [vmem:[#allocation11 + $0x1dc] sm:$0xf]
        %v5931 = vld [vmem:[#allocation11 + $0x1e0] sm:$0xf]
        %v5932 = vld [vmem:[#allocation11 + $0x1e4] sm:$0xf]
        %v5933 = vld [vmem:[#allocation11 + $0x1e8] sm:$0xf]
        %v5934 = vld [vmem:[#allocation11 + $0x1ec] sm:$0xf]
        %v5935 = vld [vmem:[#allocation11 + $0x1f0] sm:$0xf]
        %v5936 = vld [vmem:[#allocation11 + $0x1f4] sm:$0xf]
        %v5937 = vld [vmem:[#allocation11 + $0x1f8] sm:$0xf]
        %v5938 = vld [vmem:[#allocation11 + $0x1fc] sm:$0xf]
        %v5939 = vld [vmem:[#allocation5] sm:$0xff]
        %v5940 = vld [vmem:[#allocation5 + $0x8] sm:$0xff]
        %v5941 = vld [vmem:[#allocation5 + $0x10] sm:$0xff]
        %v5942 = vld [vmem:[#allocation5 + $0x18] sm:$0xff]
        %v5943 = vld [vmem:[#allocation5 + $0x20] sm:$0xff]
        %v5944 = vld [vmem:[#allocation5 + $0x28] sm:$0xff]
        %v5945 = vld [vmem:[#allocation5 + $0x30] sm:$0xff]
        %v5946 = vld [vmem:[#allocation5 + $0x38] sm:$0xff]
        %v5947 = vld [vmem:[#allocation5 + $0x40] sm:$0xff]
        %v5948 = vld [vmem:[#allocation5 + $0x48] sm:$0xff]
        %v5949 = vld [vmem:[#allocation5 + $0x50] sm:$0xff]
        %v5950 = vld [vmem:[#allocation5 + $0x58] sm:$0xff]
        %v5951 = vld [vmem:[#allocation5 + $0x60] sm:$0xff]
        %v5952 = vld [vmem:[#allocation5 + $0x68] sm:$0xff]
        %v5953 = vld [vmem:[#allocation5 + $0x70] sm:$0xff]
        %v5954 = vld [vmem:[#allocation5 + $0x78] sm:$0xff]
        %v5971 = vunpack.c.l.b16 %v5923
        %v5972 = vunpack.c.l.b16 %v5924
        %v5973 = vunpack.c.l.b16 %v5925
        %v5974 = vunpack.c.l.b16 %v5926
        %v5975 = vunpack.c.l.b16 %v5927
        %v5976 = vunpack.c.l.b16 %v5928
        %v5977 = vunpack.c.l.b16 %v5929
        %v5978 = vunpack.c.l.b16 %v5930
        %v5979 = vunpack.c.l.b16 %v5931
        %v5980 = vunpack.c.l.b16 %v5932
        %v5981 = vunpack.c.l.b16 %v5933
        %v5982 = vunpack.c.l.b16 %v5934
        %v5983 = vunpack.c.l.b16 %v5935
        %v5984 = vunpack.c.l.b16 %v5936
        %v5985 = vunpack.c.l.b16 %v5937
        %v5986 = vunpack.c.l.b16 %v5938
        %v5987 = vpack.c.b16 %v5972, %v5971
        %v5988 = vpack.c.b16 %v5974, %v5973
        %v5989 = vpack.c.b16 %v5976, %v5975
        %v5990 = vpack.c.b16 %v5978, %v5977
        %v5991 = vpack.c.b16 %v5980, %v5979
        %v5992 = vpack.c.b16 %v5982, %v5981
        %v5993 = vpack.c.b16 %v5984, %v5983
        %v5994 = vpack.c.b16 %v5986, %v5985
        %6003 = vmatpush.bf16.msra.mxu0 %v5994
        %6004 = vmatpush.bf16.msra.mxu0 %v5993
        %6005 = vmatpush.bf16.msra.mxu0 %v5992
        %6006 = vmatpush.bf16.msra.mxu0 %v5991
        %6007 = vmatpush.bf16.msra.mxu0 %v5990
        %6008 = vmatpush.bf16.msra.mxu0 %v5989
        %6009 = vmatpush.bf16.msra.mxu0 %v5988
        %6010 = vmatpush.bf16.msra.mxu0 %v5987
        %6011 = vmatmul.bf16.gmra.mxu0 %v5915
        %v6012 = vpop.f32.mrf.mxu0
        %v6013 = vadd.f32 0.0, %v6012
        %v6014 = vpop.f32.mrf.mxu0
        %v6015 = vadd.f32 0.0, %v6014
        %6016 = vmatmul.bf16.gmra.mxu0 %v5916
        %v6017 = vpop.f32.mrf.mxu0
        %v6018 = vadd.f32 0.0, %v6017
        %v6019 = vpop.f32.mrf.mxu0
        %v6020 = vadd.f32 0.0, %v6019
        %6021 = vmatmul.bf16.gmra.mxu0 %v5917
        %v6022 = vpop.f32.mrf.mxu0
        %v6023 = vadd.f32 0.0, %v6022
        %v6024 = vpop.f32.mrf.mxu0
        %v6025 = vadd.f32 0.0, %v6024
        %6026 = vmatmul.bf16.gmra.mxu0 %v5918
        %v6027 = vpop.f32.mrf.mxu0
        %v6028 = vadd.f32 0.0, %v6027
        %v6029 = vpop.f32.mrf.mxu0
        %v6030 = vadd.f32 0.0, %v6029
        %6031 = vmatmul.bf16.gmra.mxu0 %v5919
        %v6032 = vpop.f32.mrf.mxu0
        %v6033 = vadd.f32 0.0, %v6032
        %v6034 = vpop.f32.mrf.mxu0
        %v6035 = vadd.f32 0.0, %v6034
        %6036 = vmatmul.bf16.gmra.mxu0 %v5920
        %v6037 = vpop.f32.mrf.mxu0
        %v6038 = vadd.f32 0.0, %v6037
        %v6039 = vpop.f32.mrf.mxu0
        %v6040 = vadd.f32 0.0, %v6039
        %6041 = vmatmul.bf16.gmra.mxu0 %v5921
        %v6042 = vpop.f32.mrf.mxu0
        %v6043 = vadd.f32 0.0, %v6042
        %v6044 = vpop.f32.mrf.mxu0
        %v6045 = vadd.f32 0.0, %v6044
        %6046 = vmatmul.bf16.gmra.mxu0 %v5922
        %v6047 = vpop.f32.mrf.mxu0
        %v6048 = vadd.f32 0.0, %v6047
        %v6049 = vpop.f32.mrf.mxu0
        %v6050 = vadd.f32 0.0, %v6049
        %6051 = vdwg.mxu0
        %v6052 = vadd.f32 %v5939, %v6013
        %v6053 = vadd.f32 %v5940, %v6015
        %v6054 = vadd.f32 %v5941, %v6018
        %v6055 = vadd.f32 %v5942, %v6020
        %v6056 = vadd.f32 %v5943, %v6023
        %v6057 = vadd.f32 %v5944, %v6025
        %v6058 = vadd.f32 %v5945, %v6028
        %v6059 = vadd.f32 %v5946, %v6030
        %v6060 = vadd.f32 %v5947, %v6033
        %v6061 = vadd.f32 %v5948, %v6035
        %v6062 = vadd.f32 %v5949, %v6038
        %v6063 = vadd.f32 %v5950, %v6040
        %v6064 = vadd.f32 %v5951, %v6043
        %v6065 = vadd.f32 %v5952, %v6045
        %v6066 = vadd.f32 %v5953, %v6048
        %v6067 = vadd.f32 %v5954, %v6050
        %6068 = vst [vmem:[#allocation5] sm:$0xff] %v6052
        %6069 = vst [vmem:[#allocation5 + $0x8] sm:$0xff] %v6053
        %6070 = vst [vmem:[#allocation5 + $0x10] sm:$0xff] %v6054
        %6071 = vst [vmem:[#allocation5 + $0x18] sm:$0xff] %v6055
        %6072 = vst [vmem:[#allocation5 + $0x20] sm:$0xff] %v6056
        %6073 = vst [vmem:[#allocation5 + $0x28] sm:$0xff] %v6057
        %6074 = vst [vmem:[#allocation5 + $0x30] sm:$0xff] %v6058
        %6075 = vst [vmem:[#allocation5 + $0x38] sm:$0xff] %v6059
        %6076 = vst [vmem:[#allocation5 + $0x40] sm:$0xff] %v6060
        %6077 = vst [vmem:[#allocation5 + $0x48] sm:$0xff] %v6061
        %6078 = vst [vmem:[#allocation5 + $0x50] sm:$0xff] %v6062
        %6079 = vst [vmem:[#allocation5 + $0x58] sm:$0xff] %v6063
        %6080 = vst [vmem:[#allocation5 + $0x60] sm:$0xff] %v6064
        %6081 = vst [vmem:[#allocation5 + $0x68] sm:$0xff] %v6065
        %6082 = vst [vmem:[#allocation5 + $0x70] sm:$0xff] %v6066
        %6083 = vst [vmem:[#allocation5 + $0x78] sm:$0xff] %v6067
        %v6084 = vld [vmem:[#allocation3 + $0x31] sm:$0xff]
        %v6085 = vld [vmem:[#allocation3 + $0x39] sm:$0xff]
        %v6086 = vld [vmem:[#allocation3 + $0x41] sm:$0xff]
        %v6087 = vld [vmem:[#allocation3 + $0x49] sm:$0xff]
        %v6088 = vld [vmem:[#allocation3 + $0x51] sm:$0xff]
        %v6089 = vld [vmem:[#allocation3 + $0x59] sm:$0xff]
        %v6090 = vld [vmem:[#allocation3 + $0x61] sm:$0xff]
        %v6091 = vld [vmem:[#allocation3 + $0x69] sm:$0xff]
        %v6092 = vld [vmem:[#allocation3 + $0x71] sm:$0xff]
        %v6093 = vld [vmem:[#allocation3 + $0x79] sm:$0xff]
        %v6094 = vld [vmem:[#allocation3 + $0x81] sm:$0xff]
        %v6095 = vld [vmem:[#allocation3 + $0x89] sm:$0xff]
        %v6096 = vld [vmem:[#allocation3 + $0x91] sm:$0xff]
        %v6097 = vld [vmem:[#allocation3 + $0x99] sm:$0xff]
        %v6098 = vld [vmem:[#allocation3 + $0xa1] sm:$0xff]
        %v6099 = vld [vmem:[#allocation3 + $0xa9] sm:$0xff]
        %v6100 = vpack.c.bf16 %v6085, %v6084
        %v6101 = vpack.c.bf16 %v6087, %v6086
        %v6102 = vpack.c.bf16 %v6089, %v6088
        %v6103 = vpack.c.bf16 %v6091, %v6090
        %v6104 = vpack.c.bf16 %v6093, %v6092
        %v6105 = vpack.c.bf16 %v6095, %v6094
        %v6106 = vpack.c.bf16 %v6097, %v6096
        %v6107 = vpack.c.bf16 %v6099, %v6098
        %v6108 = vld [vmem:[#allocation11 + $0x200] sm:$0xf]
        %v6109 = vld [vmem:[#allocation11 + $0x204] sm:$0xf]
        %v6110 = vld [vmem:[#allocation11 + $0x208] sm:$0xf]
        %v6111 = vld [vmem:[#allocation11 + $0x20c] sm:$0xf]
        %v6112 = vld [vmem:[#allocation11 + $0x210] sm:$0xf]
        %v6113 = vld [vmem:[#allocation11 + $0x214] sm:$0xf]
        %v6114 = vld [vmem:[#allocation11 + $0x218] sm:$0xf]
        %v6115 = vld [vmem:[#allocation11 + $0x21c] sm:$0xf]
        %v6116 = vld [vmem:[#allocation11 + $0x220] sm:$0xf]
        %v6117 = vld [vmem:[#allocation11 + $0x224] sm:$0xf]
        %v6118 = vld [vmem:[#allocation11 + $0x228] sm:$0xf]
        %v6119 = vld [vmem:[#allocation11 + $0x22c] sm:$0xf]
        %v6120 = vld [vmem:[#allocation11 + $0x230] sm:$0xf]
        %v6121 = vld [vmem:[#allocation11 + $0x234] sm:$0xf]
        %v6122 = vld [vmem:[#allocation11 + $0x238] sm:$0xf]
        %v6123 = vld [vmem:[#allocation11 + $0x23c] sm:$0xf]
        %v6124 = vld [vmem:[#allocation5] sm:$0xff]
        %v6125 = vld [vmem:[#allocation5 + $0x8] sm:$0xff]
        %v6126 = vld [vmem:[#allocation5 + $0x10] sm:$0xff]
        %v6127 = vld [vmem:[#allocation5 + $0x18] sm:$0xff]
        %v6128 = vld [vmem:[#allocation5 + $0x20] sm:$0xff]
        %v6129 = vld [vmem:[#allocation5 + $0x28] sm:$0xff]
        %v6130 = vld [vmem:[#allocation5 + $0x30] sm:$0xff]
        %v6131 = vld [vmem:[#allocation5 + $0x38] sm:$0xff]
        %v6132 = vld [vmem:[#allocation5 + $0x40] sm:$0xff]
        %v6133 = vld [vmem:[#allocation5 + $0x48] sm:$0xff]
        %v6134 = vld [vmem:[#allocation5 + $0x50] sm:$0xff]
        %v6135 = vld [vmem:[#allocation5 + $0x58] sm:$0xff]
        %v6136 = vld [vmem:[#allocation5 + $0x60] sm:$0xff]
        %v6137 = vld [vmem:[#allocation5 + $0x68] sm:$0xff]
        %v6138 = vld [vmem:[#allocation5 + $0x70] sm:$0xff]
        %v6139 = vld [vmem:[#allocation5 + $0x78] sm:$0xff]
        %v6156 = vunpack.c.l.b16 %v6108
        %v6157 = vunpack.c.l.b16 %v6109
        %v6158 = vunpack.c.l.b16 %v6110
        %v6159 = vunpack.c.l.b16 %v6111
        %v6160 = vunpack.c.l.b16 %v6112
        %v6161 = vunpack.c.l.b16 %v6113
        %v6162 = vunpack.c.l.b16 %v6114
        %v6163 = vunpack.c.l.b16 %v6115
        %v6164 = vunpack.c.l.b16 %v6116
        %v6165 = vunpack.c.l.b16 %v6117
        %v6166 = vunpack.c.l.b16 %v6118
        %v6167 = vunpack.c.l.b16 %v6119
        %v6168 = vunpack.c.l.b16 %v6120
        %v6169 = vunpack.c.l.b16 %v6121
        %v6170 = vunpack.c.l.b16 %v6122
        %v6171 = vunpack.c.l.b16 %v6123
        %v6172 = vpack.c.b16 %v6157, %v6156
        %v6173 = vpack.c.b16 %v6159, %v6158
        %v6174 = vpack.c.b16 %v6161, %v6160
        %v6175 = vpack.c.b16 %v6163, %v6162
        %v6176 = vpack.c.b16 %v6165, %v6164
        %v6177 = vpack.c.b16 %v6167, %v6166
        %v6178 = vpack.c.b16 %v6169, %v6168
        %v6179 = vpack.c.b16 %v6171, %v6170
        %6188 = vmatpush.bf16.msra.mxu0 %v6179
        %6189 = vmatpush.bf16.msra.mxu0 %v6178
        %6190 = vmatpush.bf16.msra.mxu0 %v6177
        %6191 = vmatpush.bf16.msra.mxu0 %v6176
        %6192 = vmatpush.bf16.msra.mxu0 %v6175
        %6193 = vmatpush.bf16.msra.mxu0 %v6174
        %6194 = vmatpush.bf16.msra.mxu0 %v6173
        %6195 = vmatpush.bf16.msra.mxu0 %v6172
        %6196 = vmatmul.bf16.gmra.mxu0 %v6100
        %v6197 = vpop.f32.mrf.mxu0
        %v6198 = vadd.f32 0.0, %v6197
        %v6199 = vpop.f32.mrf.mxu0
        %v6200 = vadd.f32 0.0, %v6199
        %6201 = vmatmul.bf16.gmra.mxu0 %v6101
        %v6202 = vpop.f32.mrf.mxu0
        %v6203 = vadd.f32 0.0, %v6202
        %v6204 = vpop.f32.mrf.mxu0
        %v6205 = vadd.f32 0.0, %v6204
        %6206 = vmatmul.bf16.gmra.mxu0 %v6102
        %v6207 = vpop.f32.mrf.mxu0
        %v6208 = vadd.f32 0.0, %v6207
        %v6209 = vpop.f32.mrf.mxu0
        %v6210 = vadd.f32 0.0, %v6209
        %6211 = vmatmul.bf16.gmra.mxu0 %v6103
        %v6212 = vpop.f32.mrf.mxu0
        %v6213 = vadd.f32 0.0, %v6212
        %v6214 = vpop.f32.mrf.mxu0
        %v6215 = vadd.f32 0.0, %v6214
        %6216 = vmatmul.bf16.gmra.mxu0 %v6104
        %v6217 = vpop.f32.mrf.mxu0
        %v6218 = vadd.f32 0.0, %v6217
        %v6219 = vpop.f32.mrf.mxu0
        %v6220 = vadd.f32 0.0, %v6219
        %6221 = vmatmul.bf16.gmra.mxu0 %v6105
        %v6222 = vpop.f32.mrf.mxu0
        %v6223 = vadd.f32 0.0, %v6222
        %v6224 = vpop.f32.mrf.mxu0
        %v6225 = vadd.f32 0.0, %v6224
        %6226 = vmatmul.bf16.gmra.mxu0 %v6106
        %v6227 = vpop.f32.mrf.mxu0
        %v6228 = vadd.f32 0.0, %v6227
        %v6229 = vpop.f32.mrf.mxu0
        %v6230 = vadd.f32 0.0, %v6229
        %6231 = vmatmul.bf16.gmra.mxu0 %v6107
        %v6232 = vpop.f32.mrf.mxu0
        %v6233 = vadd.f32 0.0, %v6232
        %v6234 = vpop.f32.mrf.mxu0
        %v6235 = vadd.f32 0.0, %v6234
        %6236 = vdwg.mxu0
        %v6237 = vadd.f32 %v6124, %v6198
        %v6238 = vadd.f32 %v6125, %v6200
        %v6239 = vadd.f32 %v6126, %v6203
        %v6240 = vadd.f32 %v6127, %v6205
        %v6241 = vadd.f32 %v6128, %v6208
        %v6242 = vadd.f32 %v6129, %v6210
        %v6243 = vadd.f32 %v6130, %v6213
        %v6244 = vadd.f32 %v6131, %v6215
        %v6245 = vadd.f32 %v6132, %v6218
        %v6246 = vadd.f32 %v6133, %v6220
        %v6247 = vadd.f32 %v6134, %v6223
        %v6248 = vadd.f32 %v6135, %v6225
        %v6249 = vadd.f32 %v6136, %v6228
        %v6250 = vadd.f32 %v6137, %v6230
        %v6251 = vadd.f32 %v6138, %v6233
        %v6252 = vadd.f32 %v6139, %v6235
        %6253 = vst [vmem:[#allocation5] sm:$0xff] %v6237
        %6254 = vst [vmem:[#allocation5 + $0x8] sm:$0xff] %v6238
        %6255 = vst [vmem:[#allocation5 + $0x10] sm:$0xff] %v6239
        %6256 = vst [vmem:[#allocation5 + $0x18] sm:$0xff] %v6240
        %6257 = vst [vmem:[#allocation5 + $0x20] sm:$0xff] %v6241
        %6258 = vst [vmem:[#allocation5 + $0x28] sm:$0xff] %v6242
        %6259 = vst [vmem:[#allocation5 + $0x30] sm:$0xff] %v6243
        %6260 = vst [vmem:[#allocation5 + $0x38] sm:$0xff] %v6244
        %6261 = vst [vmem:[#allocation5 + $0x40] sm:$0xff] %v6245
        %6262 = vst [vmem:[#allocation5 + $0x48] sm:$0xff] %v6246
        %6263 = vst [vmem:[#allocation5 + $0x50] sm:$0xff] %v6247
        %6264 = vst [vmem:[#allocation5 + $0x58] sm:$0xff] %v6248
        %6265 = vst [vmem:[#allocation5 + $0x60] sm:$0xff] %v6249
        %6266 = vst [vmem:[#allocation5 + $0x68] sm:$0xff] %v6250
        %6267 = vst [vmem:[#allocation5 + $0x70] sm:$0xff] %v6251
        %6268 = vst [vmem:[#allocation5 + $0x78] sm:$0xff] %v6252
        %v6269 = vld [vmem:[#allocation12] sm:$0xf]
        %v6270 = vld [vmem:[#allocation12 + $0x4] sm:$0xf]
        %v6271 = vld [vmem:[#allocation12 + $0x8] sm:$0xf]
        %v6272 = vld [vmem:[#allocation12 + $0xc] sm:$0xf]
        %v6273 = vld [vmem:[#allocation12 + $0x10] sm:$0xf]
        %v6274 = vld [vmem:[#allocation12 + $0x14] sm:$0xf]
        %v6275 = vld [vmem:[#allocation12 + $0x18] sm:$0xf]
        %v6276 = vld [vmem:[#allocation12 + $0x1c] sm:$0xf]
        %v6277 = vld [vmem:[#allocation12 + $0x20] sm:$0xf]
        %v6278 = vld [vmem:[#allocation12 + $0x24] sm:$0xf]
        %v6279 = vld [vmem:[#allocation12 + $0x28] sm:$0xf]
        %v6280 = vld [vmem:[#allocation12 + $0x2c] sm:$0xf]
        %v6281 = vld [vmem:[#allocation12 + $0x30] sm:$0xf]
        %v6282 = vld [vmem:[#allocation12 + $0x34] sm:$0xf]
        %v6283 = vld [vmem:[#allocation12 + $0x38] sm:$0xf]
        %v6284 = vld [vmem:[#allocation12 + $0x3c] sm:$0xf]
        %v6285 = vld [vmem:[#allocation5] sm:$0xff]
        %v6286 = vld [vmem:[#allocation2 + $0x30] sm:$0xff]
        %v6287 = vld [vmem:[#allocation2 + $0x38] sm:$0x7f]
        %v6289 = vsel %vm4369, %v6287, 0
        %6291 = vmatpush.msra.mxu0 0.0
        %6292 = vmatpush.msra.mxu0 0.0
        %6293 = vmatpush.msra.mxu0 0.0
        %6294 = vmatpush.msra.mxu0 0.0
        %6295 = vmatpush.msra.mxu0 0.0
        %6296 = vmatpush.msra.mxu0 0.0
        %6297 = vmatpush.msra.mxu0 0.0
        %6298 = vmatpush.msra.mxu0 0.0
        %6299 = vmatpush.msra.mxu0 0.0
        %6300 = vmatpush.msra.mxu0 0.0
        %6301 = vmatpush.msra.mxu0 0.0
        %6302 = vmatpush.msra.mxu0 0.0
        %6303 = vmatpush.msra.mxu0 0.0
        %6304 = vmatpush.msra.mxu0 0.0
        %6305 = vmatpush.msra.mxu0 %v6289
        %6306 = vmatpush.msra.mxu0 %v6286
        %6307 = vmatmul.f32.gmra.mxu0 %v4367
        %v6308 = vpop.f32.mrf.mxu0
        %v6309 = vadd.f32 0.0, %v6308
        %6310 = vdwg.mxu0
        %v6311 = vpack.c.bf16 %v6309, %v6309
        %v6328 = vunpack.c.l.b16 %v6269
        %v6329 = vunpack.c.l.b16 %v6270
        %v6330 = vunpack.c.l.b16 %v6271
        %v6331 = vunpack.c.l.b16 %v6272
        %v6332 = vunpack.c.l.b16 %v6273
        %v6333 = vunpack.c.l.b16 %v6274
        %v6334 = vunpack.c.l.b16 %v6275
        %v6335 = vunpack.c.l.b16 %v6276
        %v6336 = vunpack.c.l.b16 %v6277
        %v6337 = vunpack.c.l.b16 %v6278
        %v6338 = vunpack.c.l.b16 %v6279
        %v6339 = vunpack.c.l.b16 %v6280
        %v6340 = vunpack.c.l.b16 %v6281
        %v6341 = vunpack.c.l.b16 %v6282
        %v6342 = vunpack.c.l.b16 %v6283
        %v6343 = vunpack.c.l.b16 %v6284
        %v6344 = vpack.c.b16 %v6329, %v6328
        %v6345 = vpack.c.b16 %v6331, %v6330
        %v6346 = vpack.c.b16 %v6333, %v6332
        %v6347 = vpack.c.b16 %v6335, %v6334
        %v6348 = vpack.c.b16 %v6337, %v6336
        %v6349 = vpack.c.b16 %v6339, %v6338
        %v6350 = vpack.c.b16 %v6341, %v6340
        %v6351 = vpack.c.b16 %v6343, %v6342
        %6360 = vmatpush.bf16.msra.mxu0 %v6351
        %6361 = vmatpush.bf16.msra.mxu0 %v6350
        %6362 = vmatpush.bf16.msra.mxu0 %v6349
        %6363 = vmatpush.bf16.msra.mxu0 %v6348
        %6364 = vmatpush.bf16.msra.mxu0 %v6347
        %6365 = vmatpush.bf16.msra.mxu0 %v6346
        %6366 = vmatpush.bf16.msra.mxu0 %v6345
        %6367 = vmatpush.bf16.msra.mxu0 %v6344
        %6368 = vmatmul.bf16.gmra.mxu0 %v6311
        %v6369 = vpop.f32.mrf.mxu0
        %v6370 = vadd.f32 0.0, %v6369
        %v6371 = vpop.f32.mrf.mxu0
        %6372 = vdwg.mxu0
        %v6373 = vadd.f32 %v6285, %v6370
        %6374 = vst [vmem:[%s348] sm:$0xff] %v6373
        %v6375 = vld [vmem:[#allocation5 + $0x10] sm:$0xff]
        %v6376 = vld [vmem:[#allocation2 + $0x60] sm:$0xff]
        %v6377 = vld [vmem:[#allocation2 + $0x68] sm:$0x7f]
        %v6379 = vsel %vm4369, %v6377, 0
        %6381 = vmatpush.msra.mxu0 0.0
        %6382 = vmatpush.msra.mxu0 0.0
        %6383 = vmatpush.msra.mxu0 0.0
        %6384 = vmatpush.msra.mxu0 0.0
        %6385 = vmatpush.msra.mxu0 0.0
        %6386 = vmatpush.msra.mxu0 0.0
        %6387 = vmatpush.msra.mxu0 0.0
        %6388 = vmatpush.msra.mxu0 0.0
        %6389 = vmatpush.msra.mxu0 0.0
        %6390 = vmatpush.msra.mxu0 0.0
        %6391 = vmatpush.msra.mxu0 0.0
        %6392 = vmatpush.msra.mxu0 0.0
        %6393 = vmatpush.msra.mxu0 0.0
        %6394 = vmatpush.msra.mxu0 0.0
        %6395 = vmatpush.msra.mxu0 %v6379
        %6396 = vmatpush.msra.mxu0 %v6376
        %6397 = vmatmul.f32.gmra.mxu0 %v4367
        %v6398 = vpop.f32.mrf.mxu0
        %v6399 = vadd.f32 0.0, %v6398
        %6400 = vdwg.mxu0
        %v6401 = vpack.c.bf16 %v6399, %v6399
        %6402 = vmatpush.bf16.msra.mxu0 %v6351
        %6403 = vmatpush.bf16.msra.mxu0 %v6350
        %6404 = vmatpush.bf16.msra.mxu0 %v6349
        %6405 = vmatpush.bf16.msra.mxu0 %v6348
        %6406 = vmatpush.bf16.msra.mxu0 %v6347
        %6407 = vmatpush.bf16.msra.mxu0 %v6346
        %6408 = vmatpush.bf16.msra.mxu0 %v6345
        %6409 = vmatpush.bf16.msra.mxu0 %v6344
        %6410 = vmatmul.bf16.gmra.mxu0 %v6401
        %v6411 = vpop.f32.mrf.mxu0
        %v6412 = vadd.f32 0.0, %v6411
        %v6413 = vpop.f32.mrf.mxu0
        %6414 = vdwg.mxu0
        %v6415 = vadd.f32 %v6375, %v6412
        %6416 = vst [vmem:[%s348 + $0x8] sm:$0xff] %v6415
        %v6417 = vld [vmem:[#allocation5 + $0x20] sm:$0xff]
        %v6418 = vld [vmem:[#allocation2 + $0x90] sm:$0xff]
        %v6419 = vld [vmem:[#allocation2 + $0x98] sm:$0x7f]
        %v6421 = vsel %vm4369, %v6419, 0
        %6423 = vmatpush.msra.mxu0 0.0
        %6424 = vmatpush.msra.mxu0 0.0
        %6425 = vmatpush.msra.mxu0 0.0
        %6426 = vmatpush.msra.mxu0 0.0
        %6427 = vmatpush.msra.mxu0 0.0
        %6428 = vmatpush.msra.mxu0 0.0
        %6429 = vmatpush.msra.mxu0 0.0
        %6430 = vmatpush.msra.mxu0 0.0
        %6431 = vmatpush.msra.mxu0 0.0
        %6432 = vmatpush.msra.mxu0 0.0
        %6433 = vmatpush.msra.mxu0 0.0
        %6434 = vmatpush.msra.mxu0 0.0
        %6435 = vmatpush.msra.mxu0 0.0
        %6436 = vmatpush.msra.mxu0 0.0
        %6437 = vmatpush.msra.mxu0 %v6421
        %6438 = vmatpush.msra.mxu0 %v6418
        %6439 = vmatmul.f32.gmra.mxu0 %v4367
        %v6440 = vpop.f32.mrf.mxu0
        %v6441 = vadd.f32 0.0, %v6440
        %6442 = vdwg.mxu0
        %v6443 = vpack.c.bf16 %v6441, %v6441
        %6444 = vmatpush.bf16.msra.mxu0 %v6351
        %6445 = vmatpush.bf16.msra.mxu0 %v6350
        %6446 = vmatpush.bf16.msra.mxu0 %v6349
        %6447 = vmatpush.bf16.msra.mxu0 %v6348
        %6448 = vmatpush.bf16.msra.mxu0 %v6347
        %6449 = vmatpush.bf16.msra.mxu0 %v6346
        %6450 = vmatpush.bf16.msra.mxu0 %v6345
        %6451 = vmatpush.bf16.msra.mxu0 %v6344
        %6452 = vmatmul.bf16.gmra.mxu0 %v6443
        %v6453 = vpop.f32.mrf.mxu0
        %v6454 = vadd.f32 0.0, %v6453
        %v6455 = vpop.f32.mrf.mxu0
        %6456 = vdwg.mxu0
        %v6457 = vadd.f32 %v6417, %v6454
        %6458 = vst [vmem:[%s348 + $0x10] sm:$0xff] %v6457
        %v6459 = vld [vmem:[#allocation5 + $0x30] sm:$0xff]
        %v6460 = vld [vmem:[#allocation2 + $0xc0] sm:$0xff]
        %v6461 = vld [vmem:[#allocation2 + $0xc8] sm:$0x7f]
        %v6463 = vsel %vm4369, %v6461, 0
        %6465 = vmatpush.msra.mxu0 0.0
        %6466 = vmatpush.msra.mxu0 0.0
        %6467 = vmatpush.msra.mxu0 0.0
        %6468 = vmatpush.msra.mxu0 0.0
        %6469 = vmatpush.msra.mxu0 0.0
        %6470 = vmatpush.msra.mxu0 0.0
        %6471 = vmatpush.msra.mxu0 0.0
        %6472 = vmatpush.msra.mxu0 0.0
        %6473 = vmatpush.msra.mxu0 0.0
        %6474 = vmatpush.msra.mxu0 0.0
        %6475 = vmatpush.msra.mxu0 0.0
        %6476 = vmatpush.msra.mxu0 0.0
        %6477 = vmatpush.msra.mxu0 0.0
        %6478 = vmatpush.msra.mxu0 0.0
        %6479 = vmatpush.msra.mxu0 %v6463
        %6480 = vmatpush.msra.mxu0 %v6460
        %6481 = vmatmul.f32.gmra.mxu0 %v4367
        %v6482 = vpop.f32.mrf.mxu0
        %v6483 = vadd.f32 0.0, %v6482
        %6484 = vdwg.mxu0
        %v6485 = vpack.c.bf16 %v6483, %v6483
        %6486 = vmatpush.bf16.msra.mxu0 %v6351
        %6487 = vmatpush.bf16.msra.mxu0 %v6350
        %6488 = vmatpush.bf16.msra.mxu0 %v6349
        %6489 = vmatpush.bf16.msra.mxu0 %v6348
        %6490 = vmatpush.bf16.msra.mxu0 %v6347
        %6491 = vmatpush.bf16.msra.mxu0 %v6346
        %6492 = vmatpush.bf16.msra.mxu0 %v6345
        %6493 = vmatpush.bf16.msra.mxu0 %v6344
        %6494 = vmatmul.bf16.gmra.mxu0 %v6485
        %v6495 = vpop.f32.mrf.mxu0
        %v6496 = vadd.f32 0.0, %v6495
        %v6497 = vpop.f32.mrf.mxu0
        %6498 = vdwg.mxu0
        %v6499 = vadd.f32 %v6459, %v6496
        %6500 = vst [vmem:[%s348 + $0x18] sm:$0xff] %v6499
        %v6501 = vld [vmem:[#allocation5 + $0x40] sm:$0xff]
        %v6502 = vld [vmem:[#allocation2 + $0xf0] sm:$0xff]
        %v6503 = vld [vmem:[#allocation2 + $0xf8] sm:$0x7f]
        %v6505 = vsel %vm4369, %v6503, 0
        %6507 = vmatpush.msra.mxu0 0.0
        %6508 = vmatpush.msra.mxu0 0.0
        %6509 = vmatpush.msra.mxu0 0.0
        %6510 = vmatpush.msra.mxu0 0.0
        %6511 = vmatpush.msra.mxu0 0.0
        %6512 = vmatpush.msra.mxu0 0.0
        %6513 = vmatpush.msra.mxu0 0.0
        %6514 = vmatpush.msra.mxu0 0.0
        %6515 = vmatpush.msra.mxu0 0.0
        %6516 = vmatpush.msra.mxu0 0.0
        %6517 = vmatpush.msra.mxu0 0.0
        %6518 = vmatpush.msra.mxu0 0.0
        %6519 = vmatpush.msra.mxu0 0.0
        %6520 = vmatpush.msra.mxu0 0.0
        %6521 = vmatpush.msra.mxu0 %v6505
        %6522 = vmatpush.msra.mxu0 %v6502
        %6523 = vmatmul.f32.gmra.mxu0 %v4367
        %v6524 = vpop.f32.mrf.mxu0
        %v6525 = vadd.f32 0.0, %v6524
        %6526 = vdwg.mxu0
        %v6527 = vpack.c.bf16 %v6525, %v6525
        %6528 = vmatpush.bf16.msra.mxu0 %v6351
        %6529 = vmatpush.bf16.msra.mxu0 %v6350
        %6530 = vmatpush.bf16.msra.mxu0 %v6349
        %6531 = vmatpush.bf16.msra.mxu0 %v6348
        %6532 = vmatpush.bf16.msra.mxu0 %v6347
        %6533 = vmatpush.bf16.msra.mxu0 %v6346
        %6534 = vmatpush.bf16.msra.mxu0 %v6345
        %6535 = vmatpush.bf16.msra.mxu0 %v6344
        %6536 = vmatmul.bf16.gmra.mxu0 %v6527
        %v6537 = vpop.f32.mrf.mxu0
        %v6538 = vadd.f32 0.0, %v6537
        %v6539 = vpop.f32.mrf.mxu0
        %6540 = vdwg.mxu0
        %v6541 = vadd.f32 %v6501, %v6538
        %6542 = vst [vmem:[%s348 + $0x20] sm:$0xff] %v6541
        %v6543 = vld [vmem:[#allocation5 + $0x50] sm:$0xff]
        %v6544 = vld [vmem:[#allocation2 + $0x120] sm:$0xff]
        %v6545 = vld [vmem:[#allocation2 + $0x128] sm:$0x7f]
        %v6547 = vsel %vm4369, %v6545, 0
        %6549 = vmatpush.msra.mxu0 0.0
        %6550 = vmatpush.msra.mxu0 0.0
        %6551 = vmatpush.msra.mxu0 0.0
        %6552 = vmatpush.msra.mxu0 0.0
        %6553 = vmatpush.msra.mxu0 0.0
        %6554 = vmatpush.msra.mxu0 0.0
        %6555 = vmatpush.msra.mxu0 0.0
        %6556 = vmatpush.msra.mxu0 0.0
        %6557 = vmatpush.msra.mxu0 0.0
        %6558 = vmatpush.msra.mxu0 0.0
        %6559 = vmatpush.msra.mxu0 0.0
        %6560 = vmatpush.msra.mxu0 0.0
        %6561 = vmatpush.msra.mxu0 0.0
        %6562 = vmatpush.msra.mxu0 0.0
        %6563 = vmatpush.msra.mxu0 %v6547
        %6564 = vmatpush.msra.mxu0 %v6544
        %6565 = vmatmul.f32.gmra.mxu0 %v4367
        %v6566 = vpop.f32.mrf.mxu0
        %v6567 = vadd.f32 0.0, %v6566
        %6568 = vdwg.mxu0
        %v6569 = vpack.c.bf16 %v6567, %v6567
        %6570 = vmatpush.bf16.msra.mxu0 %v6351
        %6571 = vmatpush.bf16.msra.mxu0 %v6350
        %6572 = vmatpush.bf16.msra.mxu0 %v6349
        %6573 = vmatpush.bf16.msra.mxu0 %v6348
        %6574 = vmatpush.bf16.msra.mxu0 %v6347
        %6575 = vmatpush.bf16.msra.mxu0 %v6346
        %6576 = vmatpush.bf16.msra.mxu0 %v6345
        %6577 = vmatpush.bf16.msra.mxu0 %v6344
        %6578 = vmatmul.bf16.gmra.mxu0 %v6569
        %v6579 = vpop.f32.mrf.mxu0
        %v6580 = vadd.f32 0.0, %v6579
        %v6581 = vpop.f32.mrf.mxu0
        %6582 = vdwg.mxu0
        %v6583 = vadd.f32 %v6543, %v6580
        %6584 = vst [vmem:[%s348 + $0x28] sm:$0xff] %v6583
        %v6585 = vld [vmem:[#allocation5 + $0x60] sm:$0xff]
        %v6586 = vld [vmem:[#allocation2 + $0x150] sm:$0xff]
        %v6587 = vld [vmem:[#allocation2 + $0x158] sm:$0x7f]
        %v6589 = vsel %vm4369, %v6587, 0
        %6591 = vmatpush.msra.mxu0 0.0
        %6592 = vmatpush.msra.mxu0 0.0
        %6593 = vmatpush.msra.mxu0 0.0
        %6594 = vmatpush.msra.mxu0 0.0
        %6595 = vmatpush.msra.mxu0 0.0
        %6596 = vmatpush.msra.mxu0 0.0
        %6597 = vmatpush.msra.mxu0 0.0
        %6598 = vmatpush.msra.mxu0 0.0
        %6599 = vmatpush.msra.mxu0 0.0
        %6600 = vmatpush.msra.mxu0 0.0
        %6601 = vmatpush.msra.mxu0 0.0
        %6602 = vmatpush.msra.mxu0 0.0
        %6603 = vmatpush.msra.mxu0 0.0
        %6604 = vmatpush.msra.mxu0 0.0
        %6605 = vmatpush.msra.mxu0 %v6589
        %6606 = vmatpush.msra.mxu0 %v6586
        %6607 = vmatmul.f32.gmra.mxu0 %v4367
        %v6608 = vpop.f32.mrf.mxu0
        %v6609 = vadd.f32 0.0, %v6608
        %6610 = vdwg.mxu0
        %v6611 = vpack.c.bf16 %v6609, %v6609
        %6612 = vmatpush.bf16.msra.mxu0 %v6351
        %6613 = vmatpush.bf16.msra.mxu0 %v6350
        %6614 = vmatpush.bf16.msra.mxu0 %v6349
        %6615 = vmatpush.bf16.msra.mxu0 %v6348
        %6616 = vmatpush.bf16.msra.mxu0 %v6347
        %6617 = vmatpush.bf16.msra.mxu0 %v6346
        %6618 = vmatpush.bf16.msra.mxu0 %v6345
        %6619 = vmatpush.bf16.msra.mxu0 %v6344
        %6620 = vmatmul.bf16.gmra.mxu0 %v6611
        %v6621 = vpop.f32.mrf.mxu0
        %v6622 = vadd.f32 0.0, %v6621
        %v6623 = vpop.f32.mrf.mxu0
        %6624 = vdwg.mxu0
        %v6625 = vadd.f32 %v6585, %v6622
        %6626 = vst [vmem:[%s348 + $0x30] sm:$0xff] %v6625
        %v6627 = vld [vmem:[#allocation5 + $0x70] sm:$0xff]
        %v6628 = vld [vmem:[#allocation2 + $0x180] sm:$0xff]
        %v6629 = vld [vmem:[#allocation2 + $0x188] sm:$0x7f]
        %v6631 = vsel %vm4369, %v6629, 0
        %6633 = vmatpush.msra.mxu0 0.0
        %6634 = vmatpush.msra.mxu0 0.0
        %6635 = vmatpush.msra.mxu0 0.0
        %6636 = vmatpush.msra.mxu0 0.0
        %6637 = vmatpush.msra.mxu0 0.0
        %6638 = vmatpush.msra.mxu0 0.0
        %6639 = vmatpush.msra.mxu0 0.0
        %6640 = vmatpush.msra.mxu0 0.0
        %6641 = vmatpush.msra.mxu0 0.0
        %6642 = vmatpush.msra.mxu0 0.0
        %6643 = vmatpush.msra.mxu0 0.0
        %6644 = vmatpush.msra.mxu0 0.0
        %6645 = vmatpush.msra.mxu0 0.0
        %6646 = vmatpush.msra.mxu0 0.0
        %6647 = vmatpush.msra.mxu0 %v6631
        %6648 = vmatpush.msra.mxu0 %v6628
        %6649 = vmatmul.f32.gmra.mxu0 %v4367
        %v6650 = vpop.f32.mrf.mxu0
        %v6651 = vadd.f32 0.0, %v6650
        %6652 = vdwg.mxu0
        %v6653 = vpack.c.bf16 %v6651, %v6651
        %6654 = vmatpush.bf16.msra.mxu0 %v6351
        %6655 = vmatpush.bf16.msra.mxu0 %v6350
        %6656 = vmatpush.bf16.msra.mxu0 %v6349
        %6657 = vmatpush.bf16.msra.mxu0 %v6348
        %6658 = vmatpush.bf16.msra.mxu0 %v6347
        %6659 = vmatpush.bf16.msra.mxu0 %v6346
        %6660 = vmatpush.bf16.msra.mxu0 %v6345
        %6661 = vmatpush.bf16.msra.mxu0 %v6344
        %6662 = vmatmul.bf16.gmra.mxu0 %v6653
        %v6663 = vpop.f32.mrf.mxu0
        %v6664 = vadd.f32 0.0, %v6663
        %v6665 = vpop.f32.mrf.mxu0
        %6666 = vdwg.mxu0
        %v6667 = vadd.f32 %v6627, %v6664
        %6668 = vst [vmem:[%s348 + $0x38] sm:$0xff] %v6667
        %s6669 = sand.u32 %s186, 1
        %s6670 = scalar_lea.sflag [#allocation8], %s6669
        %s6671 = sand.u32 %s186, 1
        %s6672 = smul.addr %s6671, 64
        %s6673 = scalar_lea.vmem [#allocation14], %s6672
        // Predicated region
        $region65: #{tpu_custom_call.1} parent=47 // pred_check
          %p6674 = pneg %p196
        $region66: #{tpu_custom_call.1} parent=47 // pred_check_branch
          %6676 = sbr.rel (%p6674) target = $region68
        $region67: #{tpu_custom_call.1} parent=47 // pred_region
          %s6677 = smul.u32 8, %s26
          %6679 = vsyncadd %s6670, 0
          %s6680 = smul.addr %s6677, 8
          %s6681 = scalar_lea.hbm %s7, %s6680
          %s6682 = sshll.u32 %s6673, 4
          %s6683 = int_to_ptr.vmem [resolvable:$true] %s6682
          %s6684 = sshll.u32 %s6681, 4
          %s6685 = int_to_ptr.hbm [resolvable:$true] %s6684
          %6690 = dma.vmem_to_hbm [thread:$0]  %s6683, 1024, %s6685, %s6670, 128, 128, 8
        $region68: #{tpu_custom_call.1} parent=47 // pred_fallthru
          _
      $region48: #{tpu_custom_call.1} parent=5 // pred_fallthru
        _
      %p6691 = scmp.le.s32.totalorder 2, %s21
      // Predicated region
      $region69: #{tpu_custom_call.1} parent=5 // pred_check
        %p6692 = pneg %p6691
      $region70: #{tpu_custom_call.1} parent=5 // pred_check_branch
        %6694 = sbr.rel (%p6692) target = $region72
      $region71: #{tpu_custom_call.1} parent=5 // pred_region
        %s6695 = ssub.s32 %s21, 2
        // Predicated region
        $region73: #{tpu_custom_call.1} parent=71 // pred_check
          %p6696 = pneg %p202
        $region74: #{tpu_custom_call.1} parent=71 // pred_check_branch
          %6698 = sbr.rel (%p6696) target = $region76
        $region75: #{tpu_custom_call.1} parent=71 // pred_region
          %s6699 = sand.u32 %s187, 1
          %s6700 = scalar_lea.sflag [#allocation8], %s6699
          %s6701 = sand.u32 %s187, 1
          %s6702 = smul.addr %s6701, 64
          %s6703 = scalar_lea.vmem [#allocation14], %s6702
          %6705 = dma.done %s6700, 1024
        $region76: #{tpu_custom_call.1} parent=71 // pred_fallthru
          _
      $region72: #{tpu_custom_call.1} parent=5 // pred_fallthru
        _
    $region6: #{tpu_custom_call.1} parent=1 // loop_footer
      %s25 = sadd.s32 1, %s21
    $region7: #{tpu_custom_call.1} parent=1 // loop_footer_branch
      %20 = sbr.rel target = $region3
    $region8: #{tpu_custom_call.1} parent=1 // loop_exit
      _
    %6706 = vsyncpa [#allocation7], 1
    %s6707 = scalar_lea.sflag [#allocation7], 1
    %6708 = vsyncpa %s6707, 1
    %6709 = vsyncpa [#allocation10], 1
    %6710 = vsyncpa [#allocation13], 1
    %6711 = vsyncpa [#allocation8], 1
    %s6712 = scalar_lea.sflag [#allocation8], 1
    %6713 = vsyncpa %s6712, 1

</llo_original>
